<compile_context>
chip_gen: v5e
topology: v5e:2x2
jax: 0.10.0
libtpu: 0.0.40
codegen_flags: <defaults>
</compile_context>

<pallas_src>
import functools
import math

import jax
import jax.numpy as jnp
from jax.experimental import pallas as pl
from jax.experimental.pallas import tpu as pltpu


OCP = 128  # conv output channels are padded to a multiple of this (lane-dense stores)


# --------------------------------------------------------------------------
# Parameter preprocessing (tiny, one-time glue).
# --------------------------------------------------------------------------
def _prep_conv_weight(w_oihw, cin_padded, ocp):
    """OIHW conv weight -> (k*k*cin_padded, ocp) bf16 matrix (tap-major rows)."""
    oc, ic, kh, kw = w_oihw.shape
    w = jnp.transpose(w_oihw, (2, 3, 1, 0))                       # (kh, kw, ic, oc)
    w = jnp.pad(w, ((0, 0), (0, 0), (0, cin_padded - ic), (0, ocp - oc)))
    return w.reshape(kh * kw * cin_padded, ocp).astype(jnp.bfloat16)


def _prep_bias(b, ocp):
    return jnp.pad(b, (0, ocp - b.shape[0])).reshape(1, ocp).astype(jnp.float32)


def _pad_and_phase(x, k, stride, pre_padded):
    """Pad an NHWC input for a k x k / stride-s conv and split it into stride phases.

    Returns (phases, ho, wo) where phases has shape (B * stride**2, Lh, Lw, C) and
    phase p = (a*stride + b) holds rows a::stride / cols b::stride of the padded
    input.  Every k x k window of the strided conv is then a *contiguous* slice of
    one phase, so the in-kernel im2col needs no strided loads.
    """
    bsz, h, w, c = x.shape
    p = 0 if pre_padded else k // 2
    ho = (h + 2 * p - k) // stride + 1
    wo = (w + 2 * p - k) // stride + 1
    lh = ho + (k - 1) // stride
    lw = wo + (k - 1) // stride
    if stride == 1:
        xp = x if pre_padded else jnp.pad(x, ((0, 0), (p, p), (p, p), (0, 0)))
        return xp, ho, wo                                        # (B, lh, lw, C)
    xp = jnp.pad(x, ((0, 0), (p, p + stride), (p, p + stride), (0, 0)))
    phases = jnp.stack(
        [xp[:, a::stride, b::stride, :][:, :lh, :lw, :]
         for a in range(stride) for b in range(stride)], axis=1)  # (B, s*s, lh, lw, C)
    return phases.reshape(bsz * stride * stride, lh, lw, c), ho, wo


# --------------------------------------------------------------------------
# Kernel A: one conv layer = in-kernel im2col + GEMM + bias + ReLU,
# output written with the zero halo required by the next layer (bf16, 128 lanes).
# --------------------------------------------------------------------------
def _conv_relu_kernel(x_ref, w_ref, b_ref, o_ref, *, k, stride, ho, wo, out_pad):
    s = stride
    cin = x_ref.shape[-1]
    ocp = w_ref.shape[-1]
    hw = ho * wo

    acc = jnp.zeros((hw, ocp), jnp.float32)
    for ki in range(k):
        for kj in range(k):
            ph = (ki % s) * s + (kj % s)
            win = x_ref[ph, ki // s:ki // s + ho, kj // s:kj // s + wo, :]
            lhs = win.reshape(hw, cin).astype(w_ref.dtype)        # bf16 MXU operand
            t = ki * k + kj
            acc = acc + jnp.dot(lhs, w_ref[t * cin:(t + 1) * cin, :],
                                preferred_element_type=jnp.float32)
    y = jnp.maximum(acc + b_ref[...], 0.0).astype(o_ref.dtype)    # bias + ReLU in f32
    y4 = y.reshape(1, ho, wo, ocp)
    if out_pad == 0:
        o_ref[...] = y4
    else:
        o_ref[...] = jnp.zeros(o_ref.shape, o_ref.dtype)          # zero halo for next layer
        o_ref[:, out_pad:out_pad + ho, out_pad:out_pad + wo, :] = y4


def _conv_relu_block(phases, w_oihw, b, *, stride, ho, wo, out_pad):
    s2 = stride * stride
    bsz = phases.shape[0] // s2
    _, lh, lw, cin = phases.shape
    oc, _, k, _ = w_oihw.shape
    ocp = ((oc + OCP - 1) // OCP) * OCP
    wk = _prep_conv_weight(w_oihw, cin, ocp)
    bk = _prep_bias(b, ocp)
    hp, wp = ho + 2 * out_pad, wo + 2 * out_pad

    kern = functools.partial(_conv_relu_kernel, k=k, stride=stride,
                             ho=ho, wo=wo, out_pad=out_pad)
    return pl.pallas_call(
        kern,
        out_shape=jax.ShapeDtypeStruct((bsz, hp, wp, ocp), jnp.bfloat16),
        grid=(bsz,),
        in_specs=[
            pl.BlockSpec((s2, lh, lw, cin), lambda bi: (bi, 0, 0, 0)),
            pl.BlockSpec((k * k * cin, ocp), lambda bi: (0, 0)),
            pl.BlockSpec((1, ocp), lambda bi: (0, 0)),
        ],
        out_specs=pl.BlockSpec((1, hp, wp, ocp), lambda bi: (bi, 0, 0, 0)),
        compiler_params=pltpu.CompilerParams(dimension_semantics=("parallel",)),
    )(phases, wk, bk)


# --------------------------------------------------------------------------
# Kernel B: fused tail = last conv(+ReLU) + img_embedding_bias + 1x1 att conv
#           + per-capsule spatial softmax pooling + capsule head.
# Writes one packed (n_caps*slot)-wide lane-dense row per image:
#   [pose(6) | presence(1) | feature(n_special) | zero pad] per capsule.
# --------------------------------------------------------------------------
def _conv_att_pool_head_kernel(x_ref, w_ref, b_ref, emb_ref, wa_ref, ba_ref, o_ref, *,
                               k, stride, ho, wo, n_caps, n_poses, n_special,
                               similarity, slot):
    s = stride
    cin = x_ref.shape[-1]
    ocp = w_ref.shape[-1]
    hw = ho * wo
    d1 = n_poses + 1 + n_special + 1          # per-capsule dims incl. attention logit

    # ---- final conv layer (im2col fused), bias + ReLU (activate_final=True) ----
    acc = jnp.zeros((hw, ocp), jnp.float32)
    for ki in range(k):
        for kj in range(k):
            ph = (ki % s) * s + (kj % s)
            win = x_ref[ph, ki // s:ki // s + ho, kj // s:kj // s + wo, :]
            lhs = win.reshape(hw, cin).astype(w_ref.dtype)
            t = ki * k + kj
            acc = acc + jnp.dot(lhs, w_ref[t * cin:(t + 1) * cin, :],
                                preferred_element_type=jnp.float32)
    h = jnp.maximum(acc + b_ref[...], 0.0)                        # (HW, OCP) f32

    # ---- img_embedding_bias + 1x1 attention conv (kept in VMEM) ----
    h = h + emb_ref[...]
    att = jnp.dot(h.astype(wa_ref.dtype), wa_ref[...],
                  preferred_element_type=jnp.float32) + ba_ref[...]   # (HW, n_caps*d1)

    # ---- per-capsule spatial softmax pooling + capsule head ----
    pieces = []
    for c in range(n_caps):
        blk = att[:, c * d1:(c + 1) * d1]                         # (HW, d1)
        logit = blk[:, d1 - 1:d1]                                 # (HW, 1)
        mx = jnp.max(logit, axis=0, keepdims=True)
        e = jnp.exp(logit - mx)
        aw = e / jnp.sum(e, axis=0, keepdims=True)                # softmax over HW
        pooled = jnp.sum(blk[:, :d1 - 1] * aw, axis=0, keepdims=True)   # (1, d1-1)

        # geometric_transform(pose, similarity, nonlinear=True)
        sx = jax.nn.sigmoid(pooled[:, 0:1]) + 1e-2
        sy = jax.nn.sigmoid(pooled[:, 1:2]) + 1e-2
        theta = pooled[:, 2:3] * (2.0 * math.pi)
        shear = jnp.tanh(pooled[:, 3:4] * 5.0)
        tx = jnp.tanh(pooled[:, 4:5] * 5.0)
        ty = jnp.tanh(pooled[:, 5:6] * 5.0)
        cth = jnp.cos(theta)
        sth = jnp.sin(theta)
        if similarity:
            pose = jnp.concatenate(
                [sx * cth, -sx * sth, tx, sx * sth, sx * cth, ty], axis=-1)
        else:
            pose = jnp.concatenate(
                [sx * cth + shear * sy * sth, -sx * sth + shear * sy * cth, tx,
                 sy * sth, sy * cth, ty], axis=-1)
        pres = jax.nn.sigmoid(pooled[:, n_poses:n_poses + 1])

        parts = [pose, pres]
        if n_special > 0:
            parts.append(pooled[:, n_poses + 1:n_poses + 1 + n_special])
        pad_w = slot - (6 + 1 + n_special)
        if pad_w > 0:
            parts.append(jnp.zeros((1, pad_w), jnp.float32))
        pieces.append(jnp.concatenate(parts, axis=-1))            # (1, slot)

    o_ref[...] = jnp.concatenate(pieces, axis=-1).reshape(1, 1, n_caps * slot)


def _conv_att_pool_head_block(phases, w_oihw, b, emb_bias, att_w, att_b, *,
                              stride, ho, wo, n_caps, n_poses, n_special,
                              similarity, slot):
    s2 = stride * stride
    bsz = phases.shape[0] // s2
    _, lh, lw, cin = phases.shape
    oc, _, k, _ = w_oihw.shape
    ocp = ((oc + OCP - 1) // OCP) * OCP
    d1 = n_poses + 1 + n_special + 1

    wk = _prep_conv_weight(w_oihw, cin, ocp)
    bk = _prep_bias(b, ocp)

    c2, eh, ew = emb_bias.shape
    assert eh * ew == ho * wo and c2 == oc
    emb = jnp.transpose(emb_bias, (1, 2, 0)).reshape(eh * ew, c2)
    emb = jnp.pad(emb, ((0, 0), (0, ocp - c2))).astype(jnp.float32)

    na = att_w.shape[0]
    assert na == n_caps * d1
    wa = jnp.transpose(att_w.reshape(na, c2))                     # (c2, na)
    wa = jnp.pad(wa, ((0, ocp - c2), (0, 0))).astype(jnp.bfloat16)
    ba = att_b.reshape(1, na).astype(jnp.float32)

    kern = functools.partial(
        _conv_att_pool_head_kernel, k=k, stride=stride, ho=ho, wo=wo,
        n_caps=n_caps, n_poses=n_poses, n_special=n_special,
        similarity=similarity, slot=slot)
    return pl.pallas_call(
        kern,
        out_shape=jax.ShapeDtypeStruct((bsz, 1, n_caps * slot), jnp.float32),
        grid=(bsz,),
        in_specs=[
            pl.BlockSpec((s2, lh, lw, cin), lambda bi: (bi, 0, 0, 0)),
            pl.BlockSpec((k * k * cin, ocp), lambda bi: (0, 0)),
            pl.BlockSpec((1, ocp), lambda bi: (0, 0)),
            pl.BlockSpec((ho * wo, ocp), lambda bi: (0, 0)),
            pl.BlockSpec((ocp, na), lambda bi: (0, 0)),
            pl.BlockSpec((1, na), lambda bi: (0, 0)),
        ],
        out_specs=pl.BlockSpec((1, 1, n_caps * slot), lambda bi: (bi, 0, 0)),
        compiler_params=pltpu.CompilerParams(dimension_semantics=("parallel",)),
    )(phases, wk, bk, emb, wa, ba)


# --------------------------------------------------------------------------
# Full CapsuleImageEncoder forward.
# --------------------------------------------------------------------------
def capsule_image_encoder_forward(image_nchw, params, cfg):
    n_caps, n_poses = cfg["n_caps"], cfg["n_poses"]
    n_special, similarity = cfg["n_special"], cfg["similarity"]
    strides = cfg["strides"]
    n_layers = len(strides)
    slot = 16
    assert 6 + 1 + n_special <= slot

    # NCHW -> NHWC once at the module boundary; pad C to a multiple of 8; bf16 operands.
    x = jnp.transpose(image_nchw, (0, 2, 3, 1))
    bsz, cin = x.shape[0], x.shape[-1]
    cpad = ((cin + 7) // 8) * 8
    if cpad != cin:
        x = jnp.pad(x, ((0, 0), (0, 0), (0, 0), (0, cpad - cin)))
    x = x.astype(jnp.bfloat16)

    pre_padded = False
    for i in range(n_layers - 1):
        w, b = params["conv_w"][i], params["conv_b"][i]
        k_next = params["conv_w"][i + 1].shape[2]
        phases, ho, wo = _pad_and_phase(x, w.shape[2], strides[i], pre_padded)
        x = _conv_relu_block(phases, w, b, stride=strides[i], ho=ho, wo=wo,
                             out_pad=k_next // 2)
        pre_padded = True

    w, b = params["conv_w"][-1], params["conv_b"][-1]
    phases, ho, wo = _pad_and_phase(x, w.shape[2], strides[-1], pre_padded)
    packed = _conv_att_pool_head_block(
        phases, w, b, params["emb_bias"], params["att_w"], params["att_b"],
        stride=strides[-1], ho=ho, wo=wo, n_caps=n_caps, n_poses=n_poses,
        n_special=n_special, similarity=similarity, slot=slot)

    packed = packed.reshape(bsz, n_caps, slot)
    return dict(
        pose=packed[:, :, :6],
        presence=packed[:, :, 6],
        feature=packed[:, :, 7:7 + n_special] if n_special > 0 else None)


# --------------------------------------------------------------------------
# Pure-JAX reference (same bf16-operand / fp32-accumulation numerics as the
# kernel, so the comparison isolates layout / indexing correctness).
# --------------------------------------------------------------------------
def reference_forward(image, p, cfg):
    def conv(x, w, b, s, pad):
        y = jax.lax.conv_general_dilated(
            x.astype(jnp.bfloat16), w.astype(jnp.bfloat16), (s, s),
            [(pad, pad), (pad, pad)],
            dimension_numbers=("NCHW", "OIHW", "NCHW"),
            preferred_element_type=jnp.float32)
        return y + b[None, :, None, None].astype(jnp.float32)

    x = image
    for i, s in enumerate(cfg["strides"]):
        k = p["conv_w"][i].shape[2]
        x = jax.nn.relu(conv(x, p["conv_w"][i], p["conv_b"][i], s, k // 2))
    h = x + p["emb_bias"][None]
    att = conv(h, p["att_w"], p["att_b"], 1, 0)

    b_, _, hh, ww = att.shape
    nc = cfg["n_caps"]
    d1 = cfg["n_poses"] + 1 + cfg["n_special"] + 1
    a = att.reshape(b_ * nc, d1, hh * ww)
    attw = jax.nn.softmax(a[:, -1, :], axis=-1)
    pooled = jnp.sum(a[:, :-1, :] * attw[:, None, :], axis=-1).reshape(b_, nc, d1 - 1)

    pr = pooled[..., :6]
    sx = jax.nn.sigmoid(pr[..., 0]) + 1e-2
    sy = jax.nn.sigmoid(pr[..., 1]) + 1e-2
    theta = pr[..., 2] * (2.0 * math.pi)
    shear = jnp.tanh(pr[..., 3] * 5.0)
    tx = jnp.tanh(pr[..., 4] * 5.0)
    ty = jnp.tanh(pr[..., 5] * 5.0)
    c, s = jnp.cos(theta), jnp.sin(theta)
    if cfg["similarity"]:
        pose = jnp.stack([sx * c, -sx * s, tx, sx * s, sx * c, ty], axis=-1)
    else:
        pose = jnp.stack([sx * c + shear * sy * s, -sx * s + shear * sy * c, tx,
                          sy * s, sy * c, ty], axis=-1)
    presence = jax.nn.sigmoid(pooled[..., 6])
    feature = pooled[..., 7:]
    return pose, presence, feature


if __name__ == "__main__":
    import numpy as np

    key = jax.random.PRNGKey(0)
    B, C, H, W = 2, 1, 16, 16
    cfg = dict(out_channels=[8, 16], strides=[2, 1],
               n_caps=8, n_poses=6, n_special=4, similarity=False)

    ks = jax.random.split(key, 8)
    conv_w = [jax.random.normal(ks[0], (8, 1, 3, 3), jnp.float32) * 0.1,
              jax.random.normal(ks[1], (16, 8, 3, 3), jnp.float32) * 0.1]
    conv_b = [jax.random.normal(ks[2], (8,), jnp.float32) * 0.1,
              jax.random.normal(ks[3], (16,), jnp.float32) * 0.1]
    # encoder.output_shape = (16, 8, 8) for this config (16x16 input, strides 2,1)
    emb_bias = jax.random.normal(ks[4], (16, 8, 8), jnp.float32) * 0.1
    oc_att = cfg["n_caps"] * (cfg["n_poses"] + 1 + cfg["n_special"] + 1)   # 96
    att_w = jax.random.normal(ks[5], (oc_att, 16, 1, 1), jnp.float32) * 0.1
    att_b = jax.random.normal(ks[6], (oc_att,), jnp.float32) * 0.1
    image = jax.random.normal(ks[7], (B, C, H, W), jnp.float32)

    params = dict(conv_w=conv_w, conv_b=conv_b, emb_bias=emb_bias,
                  att_w=att_w, att_b=att_b)

    fwd = jax.jit(lambda img, prm: capsule_image_encoder_forward(img, prm, cfg))
    out = fwd(image, params)
    jax.block_until_ready(out)

    assert out["pose"].shape == (B, cfg["n_caps"], 6)
    assert out["presence"].shape == (B, cfg["n_caps"])
    assert out["feature"].shape == (B, cfg["n_caps"], cfg["n_special"])

    ref_pose, ref_pres, ref_feat = reference_forward(image, params, cfg)
    # Both kernel and reference use bf16 MXU operands with fp32 accumulation; the
    # residual is only fp32 accumulation-order noise, so the tolerance is 30x
    # tighter than the previous fp32-vs-fp32 check.
    np.testing.assert_allclose(np.asarray(out["pose"]), np.asarray(ref_pose),
                               rtol=1e-3, atol=1e-3)
    np.testing.assert_allclose(np.asarray(out["presence"]), np.asarray(ref_pres),
                               rtol=1e-3, atol=1e-3)
    np.testing.assert_allclose(np.asarray(out["feature"]), np.asarray(ref_feat),
                               rtol=1e-3, atol=1e-3)

    print("KERNEL_OK")
</pallas_src>

<mosaic_0001>
module attributes {stable_mosaic.version = 11 : i64} {
  func.func @_conv_relu_kernel(%arg0: i32, %arg1: memref<4x9x9x8xbf16, #tpu.memory_space<vmem>>, %arg2: memref<72x128xbf16, #tpu.memory_space<vmem>>, %arg3: memref<1x128xf32, #tpu.memory_space<vmem>>, %arg4: memref<1x10x10x128xbf16, #tpu.memory_space<vmem>>) attributes {dimension_semantics = [#tpu.dimension_semantics<parallel>], iteration_bounds = array<i64: 2>, scalar_prefetch = 0 : i64, scratch_operands = 0 : i64, tpu.core_type = #tpu.core_type<tc>, window_params = [{transform_indices = @transform_0, window_bounds = array<i64: 4, 9, 9, 8>}, {pipeline_mode = #tpu.pipeline_mode<synchronous>, transform_indices = @transform_1, window_bounds = array<i64: 72, 128>}, {pipeline_mode = #tpu.pipeline_mode<synchronous>, transform_indices = @transform_2, window_bounds = array<i64: 1, 128>}, {transform_indices = @transform_3, window_bounds = array<i64: 1, 10, 10, 128>}]} {
    %cst = arith.constant 0.000000e+00 : f32
    %0 = vector.broadcast %cst : f32 to vector<64x128xf32>
    %c0 = arith.constant 0 : index
    %c0_0 = arith.constant 0 : index
    %c0_1 = arith.constant 0 : index
    %c0_2 = arith.constant 0 : index
    %1 = vector.load %arg1[%c0, %c0_0, %c0_1, %c0_2] : memref<4x9x9x8xbf16, #tpu.memory_space<vmem>>, vector<1x8x8x8xbf16>
    %2 = vector.shape_cast %1 : vector<1x8x8x8xbf16> to vector<8x8x8xbf16>
    %3 = vector.shape_cast %2 : vector<8x8x8xbf16> to vector<64x8xbf16>
    %c0_3 = arith.constant 0 : index
    %c0_4 = arith.constant 0 : index
    %4 = vector.load %arg2[%c0_3, %c0_4] : memref<72x128xbf16, #tpu.memory_space<vmem>>, vector<8x128xbf16>
    %cst_5 = arith.constant dense<0.000000e+00> : vector<64x128xf32>
    %5 = tpu.matmul %3, %4, %cst_5 {dimension_numbers = #tpu.dot_dimension_numbers<[1], [0], [0], [1], [0, 0, 1, 1], [], []>} : vector<64x8xbf16>, vector<8x128xbf16>, vector<64x128xf32> -> vector<64x128xf32>
    %6 = arith.addf %0, %5 : vector<64x128xf32>
    %c1 = arith.constant 1 : index
    %c0_6 = arith.constant 0 : index
    %c0_7 = arith.constant 0 : index
    %c0_8 = arith.constant 0 : index
    %7 = vector.load %arg1[%c1, %c0_6, %c0_7, %c0_8] : memref<4x9x9x8xbf16, #tpu.memory_space<vmem>>, vector<1x8x8x8xbf16>
    %8 = vector.shape_cast %7 : vector<1x8x8x8xbf16> to vector<8x8x8xbf16>
    %9 = vector.shape_cast %8 : vector<8x8x8xbf16> to vector<64x8xbf16>
    %c8 = arith.constant 8 : index
    %c0_9 = arith.constant 0 : index
    %10 = vector.load %arg2[%c8, %c0_9] : memref<72x128xbf16, #tpu.memory_space<vmem>>, vector<8x128xbf16>
    %cst_10 = arith.constant dense<0.000000e+00> : vector<64x128xf32>
    %11 = tpu.matmul %9, %10, %cst_10 {dimension_numbers = #tpu.dot_dimension_numbers<[1], [0], [0], [1], [0, 0, 1, 1], [], []>} : vector<64x8xbf16>, vector<8x128xbf16>, vector<64x128xf32> -> vector<64x128xf32>
    %12 = arith.addf %6, %11 : vector<64x128xf32>
    %c0_11 = arith.constant 0 : index
    %c0_12 = arith.constant 0 : index
    %c1_13 = arith.constant 1 : index
    %c0_14 = arith.constant 0 : index
    %13 = vector.load %arg1[%c0_11, %c0_12, %c1_13, %c0_14] : memref<4x9x9x8xbf16, #tpu.memory_space<vmem>>, vector<1x8x8x8xbf16>
    %14 = vector.shape_cast %13 : vector<1x8x8x8xbf16> to vector<8x8x8xbf16>
    %15 = vector.shape_cast %14 : vector<8x8x8xbf16> to vector<64x8xbf16>
    %c16 = arith.constant 16 : index
    %c0_15 = arith.constant 0 : index
    %16 = vector.load %arg2[%c16, %c0_15] : memref<72x128xbf16, #tpu.memory_space<vmem>>, vector<8x128xbf16>
    %cst_16 = arith.constant dense<0.000000e+00> : vector<64x128xf32>
    %17 = tpu.matmul %15, %16, %cst_16 {dimension_numbers = #tpu.dot_dimension_numbers<[1], [0], [0], [1], [0, 0, 1, 1], [], []>} : vector<64x8xbf16>, vector<8x128xbf16>, vector<64x128xf32> -> vector<64x128xf32>
    %18 = arith.addf %12, %17 : vector<64x128xf32>
    %c2 = arith.constant 2 : index
    %c0_17 = arith.constant 0 : index
    %c0_18 = arith.constant 0 : index
    %c0_19 = arith.constant 0 : index
    %19 = vector.load %arg1[%c2, %c0_17, %c0_18, %c0_19] : memref<4x9x9x8xbf16, #tpu.memory_space<vmem>>, vector<1x8x8x8xbf16>
    %20 = vector.shape_cast %19 : vector<1x8x8x8xbf16> to vector<8x8x8xbf16>
    %21 = vector.shape_cast %20 : vector<8x8x8xbf16> to vector<64x8xbf16>
    %c24 = arith.constant 24 : index
    %c0_20 = arith.constant 0 : index
    %22 = vector.load %arg2[%c24, %c0_20] : memref<72x128xbf16, #tpu.memory_space<vmem>>, vector<8x128xbf16>
    %cst_21 = arith.constant dense<0.000000e+00> : vector<64x128xf32>
    %23 = tpu.matmul %21, %22, %cst_21 {dimension_numbers = #tpu.dot_dimension_numbers<[1], [0], [0], [1], [0, 0, 1, 1], [], []>} : vector<64x8xbf16>, vector<8x128xbf16>, vector<64x128xf32> -> vector<64x128xf32>
    %24 = arith.addf %18, %23 : vector<64x128xf32>
    %c3 = arith.constant 3 : index
    %c0_22 = arith.constant 0 : index
    %c0_23 = arith.constant 0 : index
    %c0_24 = arith.constant 0 : index
    %25 = vector.load %arg1[%c3, %c0_22, %c0_23, %c0_24] : memref<4x9x9x8xbf16, #tpu.memory_space<vmem>>, vector<1x8x8x8xbf16>
    %26 = vector.shape_cast %25 : vector<1x8x8x8xbf16> to vector<8x8x8xbf16>
    %27 = vector.shape_cast %26 : vector<8x8x8xbf16> to vector<64x8xbf16>
    %c32 = arith.constant 32 : index
    %c0_25 = arith.constant 0 : index
    %28 = vector.load %arg2[%c32, %c0_25] : memref<72x128xbf16, #tpu.memory_space<vmem>>, vector<8x128xbf16>
    %cst_26 = arith.constant dense<0.000000e+00> : vector<64x128xf32>
    %29 = tpu.matmul %27, %28, %cst_26 {dimension_numbers = #tpu.dot_dimension_numbers<[1], [0], [0], [1], [0, 0, 1, 1], [], []>} : vector<64x8xbf16>, vector<8x128xbf16>, vector<64x128xf32> -> vector<64x128xf32>
    %30 = arith.addf %24, %29 : vector<64x128xf32>
    %c2_27 = arith.constant 2 : index
    %c0_28 = arith.constant 0 : index
    %c1_29 = arith.constant 1 : index
    %c0_30 = arith.constant 0 : index
    %31 = vector.load %arg1[%c2_27, %c0_28, %c1_29, %c0_30] : memref<4x9x9x8xbf16, #tpu.memory_space<vmem>>, vector<1x8x8x8xbf16>
    %32 = vector.shape_cast %31 : vector<1x8x8x8xbf16> to vector<8x8x8xbf16>
    %33 = vector.shape_cast %32 : vector<8x8x8xbf16> to vector<64x8xbf16>
    %c40 = arith.constant 40 : index
    %c0_31 = arith.constant 0 : index
    %34 = vector.load %arg2[%c40, %c0_31] : memref<72x128xbf16, #tpu.memory_space<vmem>>, vector<8x128xbf16>
    %cst_32 = arith.constant dense<0.000000e+00> : vector<64x128xf32>
    %35 = tpu.matmul %33, %34, %cst_32 {dimension_numbers = #tpu.dot_dimension_numbers<[1], [0], [0], [1], [0, 0, 1, 1], [], []>} : vector<64x8xbf16>, vector<8x128xbf16>, vector<64x128xf32> -> vector<64x128xf32>
    %36 = arith.addf %30, %35 : vector<64x128xf32>
    %c0_33 = arith.constant 0 : index
    %c1_34 = arith.constant 1 : index
    %c0_35 = arith.constant 0 : index
    %c0_36 = arith.constant 0 : index
    %37 = vector.load %arg1[%c0_33, %c1_34, %c0_35, %c0_36] : memref<4x9x9x8xbf16, #tpu.memory_space<vmem>>, vector<1x8x8x8xbf16>
    %38 = vector.shape_cast %37 : vector<1x8x8x8xbf16> to vector<8x8x8xbf16>
    %39 = vector.shape_cast %38 : vector<8x8x8xbf16> to vector<64x8xbf16>
    %c48 = arith.constant 48 : index
    %c0_37 = arith.constant 0 : index
    %40 = vector.load %arg2[%c48, %c0_37] : memref<72x128xbf16, #tpu.memory_space<vmem>>, vector<8x128xbf16>
    %cst_38 = arith.constant dense<0.000000e+00> : vector<64x128xf32>
    %41 = tpu.matmul %39, %40, %cst_38 {dimension_numbers = #tpu.dot_dimension_numbers<[1], [0], [0], [1], [0, 0, 1, 1], [], []>} : vector<64x8xbf16>, vector<8x128xbf16>, vector<64x128xf32> -> vector<64x128xf32>
    %42 = arith.addf %36, %41 : vector<64x128xf32>
    %c1_39 = arith.constant 1 : index
    %c1_40 = arith.constant 1 : index
    %c0_41 = arith.constant 0 : index
    %c0_42 = arith.constant 0 : index
    %43 = vector.load %arg1[%c1_39, %c1_40, %c0_41, %c0_42] : memref<4x9x9x8xbf16, #tpu.memory_space<vmem>>, vector<1x8x8x8xbf16>
    %44 = vector.shape_cast %43 : vector<1x8x8x8xbf16> to vector<8x8x8xbf16>
    %45 = vector.shape_cast %44 : vector<8x8x8xbf16> to vector<64x8xbf16>
    %c56 = arith.constant 56 : index
    %c0_43 = arith.constant 0 : index
    %46 = vector.load %arg2[%c56, %c0_43] : memref<72x128xbf16, #tpu.memory_space<vmem>>, vector<8x128xbf16>
    %cst_44 = arith.constant dense<0.000000e+00> : vector<64x128xf32>
    %47 = tpu.matmul %45, %46, %cst_44 {dimension_numbers = #tpu.dot_dimension_numbers<[1], [0], [0], [1], [0, 0, 1, 1], [], []>} : vector<64x8xbf16>, vector<8x128xbf16>, vector<64x128xf32> -> vector<64x128xf32>
    %48 = arith.addf %42, %47 : vector<64x128xf32>
    %c0_45 = arith.constant 0 : index
    %c1_46 = arith.constant 1 : index
    %c1_47 = arith.constant 1 : index
    %c0_48 = arith.constant 0 : index
    %49 = vector.load %arg1[%c0_45, %c1_46, %c1_47, %c0_48] : memref<4x9x9x8xbf16, #tpu.memory_space<vmem>>, vector<1x8x8x8xbf16>
    %50 = vector.shape_cast %49 : vector<1x8x8x8xbf16> to vector<8x8x8xbf16>
    %51 = vector.shape_cast %50 : vector<8x8x8xbf16> to vector<64x8xbf16>
    %c64 = arith.constant 64 : index
    %c0_49 = arith.constant 0 : index
    %52 = vector.load %arg2[%c64, %c0_49] : memref<72x128xbf16, #tpu.memory_space<vmem>>, vector<8x128xbf16>
    %cst_50 = arith.constant dense<0.000000e+00> : vector<64x128xf32>
    %53 = tpu.matmul %51, %52, %cst_50 {dimension_numbers = #tpu.dot_dimension_numbers<[1], [0], [0], [1], [0, 0, 1, 1], [], []>} : vector<64x8xbf16>, vector<8x128xbf16>, vector<64x128xf32> -> vector<64x128xf32>
    %54 = arith.addf %48, %53 : vector<64x128xf32>
    %c0_51 = arith.constant 0 : index
    %c0_52 = arith.constant 0 : index
    %55 = vector.load %arg3[%c0_51, %c0_52] : memref<1x128xf32, #tpu.memory_space<vmem>>, vector<1x128xf32>
    %56 = vector.broadcast %55 : vector<1x128xf32> to vector<64x128xf32>
    %57 = arith.addf %54, %56 : vector<64x128xf32>
    %cst_53 = arith.constant 0.000000e+00 : f32
    %58 = vector.broadcast %cst_53 : f32 to vector<64x128xf32>
    %59 = arith.maximumf %57, %58 : vector<64x128xf32>
    %60 = arith.truncf %59 : vector<64x128xf32> to vector<64x128xbf16>
    %61 = vector.shape_cast %60 : vector<64x128xbf16> to vector<1x8x8x128xbf16>
    %cst_54 = arith.constant 0.000000e+00 : bf16
    %62 = vector.broadcast %cst_54 : bf16 to vector<1x10x10x128xbf16>
    %c0_55 = arith.constant 0 : index
    %c0_56 = arith.constant 0 : index
    %c0_57 = arith.constant 0 : index
    %c0_58 = arith.constant 0 : index
    %63 = vector.load %arg4[%c0_55, %c0_56, %c0_57, %c0_58] : memref<1x10x10x128xbf16, #tpu.memory_space<vmem>>, vector<1x10x10x128xbf16>
    tpu.vector_store %arg4[%c0_55, %c0_56, %c0_57, %c0_58], %62 {strides = array<i32>} : memref<1x10x10x128xbf16, #tpu.memory_space<vmem>>, vector<1x10x10x128xbf16>,
    %c0_59 = arith.constant 0 : index
    %c1_60 = arith.constant 1 : index
    %c1_61 = arith.constant 1 : index
    %c0_62 = arith.constant 0 : index
    %64 = vector.load %arg4[%c0_59, %c1_60, %c1_61, %c0_62] : memref<1x10x10x128xbf16, #tpu.memory_space<vmem>>, vector<1x8x8x128xbf16>
    tpu.vector_store %arg4[%c0_59, %c1_60, %c1_61, %c0_62], %61 {strides = array<i32>} : memref<1x10x10x128xbf16, #tpu.memory_space<vmem>>, vector<1x8x8x128xbf16>,
    return
  }
  func.func @transform_0(%arg0: i32) -> (i32, i32, i32, i32) {
    %c0_i32 = arith.constant 0 : i32
    %c0_i32_0 = arith.constant 0 : i32
    %c0_i32_1 = arith.constant 0 : i32
    %c0_i32_2 = arith.constant 0 : i32
    return %arg0, %c0_i32, %c0_i32_0, %c0_i32_1 : i32, i32, i32, i32
  }
  func.func @transform_1(%arg0: i32) -> (i32, i32) {
    %c0_i32 = arith.constant 0 : i32
    %c0_i32_0 = arith.constant 0 : i32
    %c0_i32_1 = arith.constant 0 : i32
    return %c0_i32, %c0_i32_0 : i32, i32
  }
  func.func @transform_2(%arg0: i32) -> (i32, i32) {
    %c0_i32 = arith.constant 0 : i32
    %c0_i32_0 = arith.constant 0 : i32
    %c0_i32_1 = arith.constant 0 : i32
    return %c0_i32, %c0_i32_0 : i32, i32
  }
  func.func @transform_3(%arg0: i32) -> (i32, i32, i32, i32) {
    %c0_i32 = arith.constant 0 : i32
    %c0_i32_0 = arith.constant 0 : i32
    %c0_i32_1 = arith.constant 0 : i32
    %c0_i32_2 = arith.constant 0 : i32
    return %arg0, %c0_i32, %c0_i32_0, %c0_i32_1 : i32, i32, i32, i32
  }
}

module attributes {stable_mosaic.version = 11 : i64} {
  func.func @_conv_att_pool_head_kernel(%arg0: i32, %arg1: memref<1x10x10x128xbf16, #tpu.memory_space<vmem>>, %arg2: memref<1152x128xbf16, #tpu.memory_space<vmem>>, %arg3: memref<1x128xf32, #tpu.memory_space<vmem>>, %arg4: memref<64x128xf32, #tpu.memory_space<vmem>>, %arg5: memref<128x96xbf16, #tpu.memory_space<vmem>>, %arg6: memref<1x96xf32, #tpu.memory_space<vmem>>, %arg7: memref<1x1x128xf32, #tpu.memory_space<vmem>>) attributes {dimension_semantics = [#tpu.dimension_semantics<parallel>], iteration_bounds = array<i64: 2>, scalar_prefetch = 0 : i64, scratch_operands = 0 : i64, tpu.core_type = #tpu.core_type<tc>, window_params = [{transform_indices = @transform_0, window_bounds = array<i64: 1, 10, 10, 128>}, {pipeline_mode = #tpu.pipeline_mode<synchronous>, transform_indices = @transform_1, window_bounds = array<i64: 1152, 128>}, {pipeline_mode = #tpu.pipeline_mode<synchronous>, transform_indices = @transform_2, window_bounds = array<i64: 1, 128>}, {pipeline_mode = #tpu.pipeline_mode<synchronous>, transform_indices = @transform_3, window_bounds = array<i64: 64, 128>}, {pipeline_mode = #tpu.pipeline_mode<synchronous>, transform_indices = @transform_4, window_bounds = array<i64: 128, 96>}, {pipeline_mode = #tpu.pipeline_mode<synchronous>, transform_indices = @transform_5, window_bounds = array<i64: 1, 96>}, {transform_indices = @transform_6, window_bounds = array<i64: 1, 1, 128>}]} {
    %cst = arith.constant 0.000000e+00 : f32
    %0 = vector.broadcast %cst : f32 to vector<64x128xf32>
    %c0 = arith.constant 0 : index
    %c0_0 = arith.constant 0 : index
    %c0_1 = arith.constant 0 : index
    %c0_2 = arith.constant 0 : index
    %1 = vector.load %arg1[%c0, %c0_0, %c0_1, %c0_2] : memref<1x10x10x128xbf16, #tpu.memory_space<vmem>>, vector<1x8x8x128xbf16>
    %2 = vector.shape_cast %1 : vector<1x8x8x128xbf16> to vector<8x8x128xbf16>
    %3 = vector.shape_cast %2 : vector<8x8x128xbf16> to vector<64x128xbf16>
    %c0_3 = arith.constant 0 : index
    %c0_4 = arith.constant 0 : index
    %4 = vector.load %arg2[%c0_3, %c0_4] : memref<1152x128xbf16, #tpu.memory_space<vmem>>, vector<128x128xbf16>
    %cst_5 = arith.constant dense<0.000000e+00> : vector<64x128xf32>
    %5 = tpu.matmul %3, %4, %cst_5 {dimension_numbers = #tpu.dot_dimension_numbers<[1], [0], [0], [1], [0, 0, 1, 1], [], []>} : vector<64x128xbf16>, vector<128x128xbf16>, vector<64x128xf32> -> vector<64x128xf32>
    %6 = arith.addf %0, %5 : vector<64x128xf32>
    %c0_6 = arith.constant 0 : index
    %c0_7 = arith.constant 0 : index
    %c1 = arith.constant 1 : index
    %c0_8 = arith.constant 0 : index
    %7 = vector.load %arg1[%c0_6, %c0_7, %c1, %c0_8] : memref<1x10x10x128xbf16, #tpu.memory_space<vmem>>, vector<1x8x8x128xbf16>
    %8 = vector.shape_cast %7 : vector<1x8x8x128xbf16> to vector<8x8x128xbf16>
    %9 = vector.shape_cast %8 : vector<8x8x128xbf16> to vector<64x128xbf16>
    %c128 = arith.constant 128 : index
    %c0_9 = arith.constant 0 : index
    %10 = vector.load %arg2[%c128, %c0_9] : memref<1152x128xbf16, #tpu.memory_space<vmem>>, vector<128x128xbf16>
    %cst_10 = arith.constant dense<0.000000e+00> : vector<64x128xf32>
    %11 = tpu.matmul %9, %10, %cst_10 {dimension_numbers = #tpu.dot_dimension_numbers<[1], [0], [0], [1], [0, 0, 1, 1], [], []>} : vector<64x128xbf16>, vector<128x128xbf16>, vector<64x128xf32> -> vector<64x128xf32>
    %12 = arith.addf %6, %11 : vector<64x128xf32>
    %c0_11 = arith.constant 0 : index
    %c0_12 = arith.constant 0 : index
    %c2 = arith.constant 2 : index
    %c0_13 = arith.constant 0 : index
    %13 = vector.load %arg1[%c0_11, %c0_12, %c2, %c0_13] : memref<1x10x10x128xbf16, #tpu.memory_space<vmem>>, vector<1x8x8x128xbf16>
    %14 = vector.shape_cast %13 : vector<1x8x8x128xbf16> to vector<8x8x128xbf16>
    %15 = vector.shape_cast %14 : vector<8x8x128xbf16> to vector<64x128xbf16>
    %c256 = arith.constant 256 : index
    %c0_14 = arith.constant 0 : index
    %16 = vector.load %arg2[%c256, %c0_14] : memref<1152x128xbf16, #tpu.memory_space<vmem>>, vector<128x128xbf16>
    %cst_15 = arith.constant dense<0.000000e+00> : vector<64x128xf32>
    %17 = tpu.matmul %15, %16, %cst_15 {dimension_numbers = #tpu.dot_dimension_numbers<[1], [0], [0], [1], [0, 0, 1, 1], [], []>} : vector<64x128xbf16>, vector<128x128xbf16>, vector<64x128xf32> -> vector<64x128xf32>
    %18 = arith.addf %12, %17 : vector<64x128xf32>
    %c0_16 = arith.constant 0 : index
    %c1_17 = arith.constant 1 : index
    %c0_18 = arith.constant 0 : index
    %c0_19 = arith.constant 0 : index
    %19 = vector.load %arg1[%c0_16, %c1_17, %c0_18, %c0_19] : memref<1x10x10x128xbf16, #tpu.memory_space<vmem>>, vector<1x8x8x128xbf16>
    %20 = vector.shape_cast %19 : vector<1x8x8x128xbf16> to vector<8x8x128xbf16>
    %21 = vector.shape_cast %20 : vector<8x8x128xbf16> to vector<64x128xbf16>
    %c384 = arith.constant 384 : index
    %c0_20 = arith.constant 0 : index
    %22 = vector.load %arg2[%c384, %c0_20] : memref<1152x128xbf16, #tpu.memory_space<vmem>>, vector<128x128xbf16>
    %cst_21 = arith.constant dense<0.000000e+00> : vector<64x128xf32>
    %23 = tpu.matmul %21, %22, %cst_21 {dimension_numbers = #tpu.dot_dimension_numbers<[1], [0], [0], [1], [0, 0, 1, 1], [], []>} : vector<64x128xbf16>, vector<128x128xbf16>, vector<64x128xf32> -> vector<64x128xf32>
    %24 = arith.addf %18, %23 : vector<64x128xf32>
    %c0_22 = arith.constant 0 : index
    %c1_23 = arith.constant 1 : index
    %c1_24 = arith.constant 1 : index
    %c0_25 = arith.constant 0 : index
    %25 = vector.load %arg1[%c0_22, %c1_23, %c1_24, %c0_25] : memref<1x10x10x128xbf16, #tpu.memory_space<vmem>>, vector<1x8x8x128xbf16>
    %26 = vector.shape_cast %25 : vector<1x8x8x128xbf16> to vector<8x8x128xbf16>
    %27 = vector.shape_cast %26 : vector<8x8x128xbf16> to vector<64x128xbf16>
    %c512 = arith.constant 512 : index
    %c0_26 = arith.constant 0 : index
    %28 = vector.load %arg2[%c512, %c0_26] : memref<1152x128xbf16, #tpu.memory_space<vmem>>, vector<128x128xbf16>
    %cst_27 = arith.constant dense<0.000000e+00> : vector<64x128xf32>
    %29 = tpu.matmul %27, %28, %cst_27 {dimension_numbers = #tpu.dot_dimension_numbers<[1], [0], [0], [1], [0, 0, 1, 1], [], []>} : vector<64x128xbf16>, vector<128x128xbf16>, vector<64x128xf32> -> vector<64x128xf32>
    %30 = arith.addf %24, %29 : vector<64x128xf32>
    %c0_28 = arith.constant 0 : index
    %c1_29 = arith.constant 1 : index
    %c2_30 = arith.constant 2 : index
    %c0_31 = arith.constant 0 : index
    %31 = vector.load %arg1[%c0_28, %c1_29, %c2_30, %c0_31] : memref<1x10x10x128xbf16, #tpu.memory_space<vmem>>, vector<1x8x8x128xbf16>
    %32 = vector.shape_cast %31 : vector<1x8x8x128xbf16> to vector<8x8x128xbf16>
    %33 = vector.shape_cast %32 : vector<8x8x128xbf16> to vector<64x128xbf16>
    %c640 = arith.constant 640 : index
    %c0_32 = arith.constant 0 : index
    %34 = vector.load %arg2[%c640, %c0_32] : memref<1152x128xbf16, #tpu.memory_space<vmem>>, vector<128x128xbf16>
    %cst_33 = arith.constant dense<0.000000e+00> : vector<64x128xf32>
    %35 = tpu.matmul %33, %34, %cst_33 {dimension_numbers = #tpu.dot_dimension_numbers<[1], [0], [0], [1], [0, 0, 1, 1], [], []>} : vector<64x128xbf16>, vector<128x128xbf16>, vector<64x128xf32> -> vector<64x128xf32>
    %36 = arith.addf %30, %35 : vector<64x128xf32>
    %c0_34 = arith.constant 0 : index
    %c2_35 = arith.constant 2 : index
    %c0_36 = arith.constant 0 : index
    %c0_37 = arith.constant 0 : index
    %37 = vector.load %arg1[%c0_34, %c2_35, %c0_36, %c0_37] : memref<1x10x10x128xbf16, #tpu.memory_space<vmem>>, vector<1x8x8x128xbf16>
    %38 = vector.shape_cast %37 : vector<1x8x8x128xbf16> to vector<8x8x128xbf16>
    %39 = vector.shape_cast %38 : vector<8x8x128xbf16> to vector<64x128xbf16>
    %c768 = arith.constant 768 : index
    %c0_38 = arith.constant 0 : index
    %40 = vector.load %arg2[%c768, %c0_38] : memref<1152x128xbf16, #tpu.memory_space<vmem>>, vector<128x128xbf16>
    %cst_39 = arith.constant dense<0.000000e+00> : vector<64x128xf32>
    %41 = tpu.matmul %39, %40, %cst_39 {dimension_numbers = #tpu.dot_dimension_numbers<[1], [0], [0], [1], [0, 0, 1, 1], [], []>} : vector<64x128xbf16>, vector<128x128xbf16>, vector<64x128xf32> -> vector<64x128xf32>
    %42 = arith.addf %36, %41 : vector<64x128xf32>
    %c0_40 = arith.constant 0 : index
    %c2_41 = arith.constant 2 : index
    %c1_42 = arith.constant 1 : index
    %c0_43 = arith.constant 0 : index
    %43 = vector.load %arg1[%c0_40, %c2_41, %c1_42, %c0_43] : memref<1x10x10x128xbf16, #tpu.memory_space<vmem>>, vector<1x8x8x128xbf16>
    %44 = vector.shape_cast %43 : vector<1x8x8x128xbf16> to vector<8x8x128xbf16>
    %45 = vector.shape_cast %44 : vector<8x8x128xbf16> to vector<64x128xbf16>
    %c896 = arith.constant 896 : index
    %c0_44 = arith.constant 0 : index
    %46 = vector.load %arg2[%c896, %c0_44] : memref<1152x128xbf16, #tpu.memory_space<vmem>>, vector<128x128xbf16>
    %cst_45 = arith.constant dense<0.000000e+00> : vector<64x128xf32>
    %47 = tpu.matmul %45, %46, %cst_45 {dimension_numbers = #tpu.dot_dimension_numbers<[1], [0], [0], [1], [0, 0, 1, 1], [], []>} : vector<64x128xbf16>, vector<128x128xbf16>, vector<64x128xf32> -> vector<64x128xf32>
    %48 = arith.addf %42, %47 : vector<64x128xf32>
    %c0_46 = arith.constant 0 : index
    %c2_47 = arith.constant 2 : index
    %c2_48 = arith.constant 2 : index
    %c0_49 = arith.constant 0 : index
    %49 = vector.load %arg1[%c0_46, %c2_47, %c2_48, %c0_49] : memref<1x10x10x128xbf16, #tpu.memory_space<vmem>>, vector<1x8x8x128xbf16>
    %50 = vector.shape_cast %49 : vector<1x8x8x128xbf16> to vector<8x8x128xbf16>
    %51 = vector.shape_cast %50 : vector<8x8x128xbf16> to vector<64x128xbf16>
    %c1024 = arith.constant 1024 : index
    %c0_50 = arith.constant 0 : index
    %52 = vector.load %arg2[%c1024, %c0_50] : memref<1152x128xbf16, #tpu.memory_space<vmem>>, vector<128x128xbf16>
    %cst_51 = arith.constant dense<0.000000e+00> : vector<64x128xf32>
    %53 = tpu.matmul %51, %52, %cst_51 {dimension_numbers = #tpu.dot_dimension_numbers<[1], [0], [0], [1], [0, 0, 1, 1], [], []>} : vector<64x128xbf16>, vector<128x128xbf16>, vector<64x128xf32> -> vector<64x128xf32>
    %54 = arith.addf %48, %53 : vector<64x128xf32>
    %c0_52 = arith.constant 0 : index
    %c0_53 = arith.constant 0 : index
    %55 = vector.load %arg3[%c0_52, %c0_53] : memref<1x128xf32, #tpu.memory_space<vmem>>, vector<1x128xf32>
    %56 = vector.broadcast %55 : vector<1x128xf32> to vector<64x128xf32>
    %57 = arith.addf %54, %56 : vector<64x128xf32>
    %cst_54 = arith.constant 0.000000e+00 : f32
    %58 = vector.broadcast %cst_54 : f32 to vector<64x128xf32>
    %59 = arith.maximumf %57, %58 : vector<64x128xf32>
    %c0_55 = arith.constant 0 : index
    %c0_56 = arith.constant 0 : index
    %60 = vector.load %arg4[%c0_55, %c0_56] : memref<64x128xf32, #tpu.memory_space<vmem>>, vector<64x128xf32>
    %61 = arith.addf %59, %60 : vector<64x128xf32>
    %62 = arith.truncf %61 : vector<64x128xf32> to vector<64x128xbf16>
    %c0_57 = arith.constant 0 : index
    %c0_58 = arith.constant 0 : index
    %63 = vector.load %arg5[%c0_57, %c0_58] : memref<128x96xbf16, #tpu.memory_space<vmem>>, vector<128x96xbf16>
    %cst_59 = arith.constant dense<0.000000e+00> : vector<64x96xf32>
    %64 = tpu.matmul %62, %63, %cst_59 {dimension_numbers = #tpu.dot_dimension_numbers<[1], [0], [0], [1], [0, 0, 1, 1], [], []>} : vector<64x128xbf16>, vector<128x96xbf16>, vector<64x96xf32> -> vector<64x96xf32>
    %c0_60 = arith.constant 0 : index
    %c0_61 = arith.constant 0 : index
    %65 = vector.load %arg6[%c0_60, %c0_61] : memref<1x96xf32, #tpu.memory_space<vmem>>, vector<1x96xf32>
    %66 = vector.broadcast %65 : vector<1x96xf32> to vector<64x96xf32>
    %67 = arith.addf %64, %66 : vector<64x96xf32>
    %68 = vector.extract_strided_slice %67 {offsets = [0, 0], sizes = [64, 12], strides = [1, 1]} : vector<64x96xf32> to vector<64x12xf32>
    %69 = vector.extract_strided_slice %68 {offsets = [0, 11], sizes = [64, 1], strides = [1, 1]} : vector<64x12xf32> to vector<64x1xf32>
    %cst_62 = arith.constant dense<0xFF800000> : vector<1xf32>
    %70 = vector.multi_reduction <maximumf>, %69, %cst_62 [0] : vector<64x1xf32> to vector<1xf32>
    %71 = vector.shape_cast %70 : vector<1xf32> to vector<1x1xf32>
    %72 = vector.broadcast %71 : vector<1x1xf32> to vector<64x1xf32>
    %73 = arith.subf %69, %72 : vector<64x1xf32>
    %74 = math.exp %73 : vector<64x1xf32>
    %cst_63 = arith.constant dense<0.000000e+00> : vector<1xf32>
    %75 = vector.multi_reduction <add>, %74, %cst_63 [0] : vector<64x1xf32> to vector<1xf32>
    %76 = vector.shape_cast %75 : vector<1xf32> to vector<1x1xf32>
    %77 = vector.broadcast %76 : vector<1x1xf32> to vector<64x1xf32>
    %78 = arith.divf %74, %77 : vector<64x1xf32>
    %79 = vector.extract_strided_slice %68 {offsets = [0, 0], sizes = [64, 11], strides = [1, 1]} : vector<64x12xf32> to vector<64x11xf32>
    %80 = vector.broadcast %78 : vector<64x1xf32> to vector<64x11xf32>
    %81 = arith.mulf %79, %80 : vector<64x11xf32>
    %cst_64 = arith.constant dense<0.000000e+00> : vector<11xf32>
    %82 = vector.multi_reduction <add>, %81, %cst_64 [0] : vector<64x11xf32> to vector<11xf32>
    %83 = vector.shape_cast %82 : vector<11xf32> to vector<1x11xf32>
    %84 = vector.extract_strided_slice %83 {offsets = [0, 0], sizes = [1, 1], strides = [1, 1]} : vector<1x11xf32> to vector<1x1xf32>
    %85 = arith.negf %84 : vector<1x1xf32>
    %86 = math.exp %85 : vector<1x1xf32>
    %cst_65 = arith.constant 1.000000e+00 : f32
    %87 = vector.broadcast %cst_65 : f32 to vector<1x1xf32>
    %88 = arith.addf %87, %86 : vector<1x1xf32>
    %89 = arith.divf %87, %88 : vector<1x1xf32>
    %cst_66 = arith.constant 0.00999999977 : f32
    %90 = vector.broadcast %cst_66 : f32 to vector<1x1xf32>
    %91 = arith.addf %89, %90 : vector<1x1xf32>
    %92 = vector.extract_strided_slice %83 {offsets = [0, 1], sizes = [1, 1], strides = [1, 1]} : vector<1x11xf32> to vector<1x1xf32>
    %93 = arith.negf %92 : vector<1x1xf32>
    %94 = math.exp %93 : vector<1x1xf32>
    %cst_67 = arith.constant 1.000000e+00 : f32
    %95 = vector.broadcast %cst_67 : f32 to vector<1x1xf32>
    %96 = arith.addf %95, %94 : vector<1x1xf32>
    %97 = arith.divf %95, %96 : vector<1x1xf32>
    %cst_68 = arith.constant 0.00999999977 : f32
    %98 = vector.broadcast %cst_68 : f32 to vector<1x1xf32>
    %99 = arith.addf %97, %98 : vector<1x1xf32>
    %100 = vector.extract_strided_slice %83 {offsets = [0, 2], sizes = [1, 1], strides = [1, 1]} : vector<1x11xf32> to vector<1x1xf32>
    %cst_69 = arith.constant 6.28318548 : f32
    %101 = vector.broadcast %cst_69 : f32 to vector<1x1xf32>
    %102 = arith.mulf %100, %101 : vector<1x1xf32>
    %103 = vector.extract_strided_slice %83 {offsets = [0, 3], sizes = [1, 1], strides = [1, 1]} : vector<1x11xf32> to vector<1x1xf32>
    %cst_70 = arith.constant 5.000000e+00 : f32
    %104 = vector.broadcast %cst_70 : f32 to vector<1x1xf32>
    %105 = arith.mulf %103, %104 : vector<1x1xf32>
    %106 = math.tanh %105 : vector<1x1xf32>
    %107 = vector.extract_strided_slice %83 {offsets = [0, 4], sizes = [1, 1], strides = [1, 1]} : vector<1x11xf32> to vector<1x1xf32>
    %cst_71 = arith.constant 5.000000e+00 : f32
    %108 = vector.broadcast %cst_71 : f32 to vector<1x1xf32>
    %109 = arith.mulf %107, %108 : vector<1x1xf32>
    %110 = math.tanh %109 : vector<1x1xf32>
    %111 = vector.extract_strided_slice %83 {offsets = [0, 5], sizes = [1, 1], strides = [1, 1]} : vector<1x11xf32> to vector<1x1xf32>
    %cst_72 = arith.constant 5.000000e+00 : f32
    %112 = vector.broadcast %cst_72 : f32 to vector<1x1xf32>
    %113 = arith.mulf %111, %112 : vector<1x1xf32>
    %114 = math.tanh %113 : vector<1x1xf32>
    %115 = math.cos %102 : vector<1x1xf32>
    %116 = math.sin %102 : vector<1x1xf32>
    %117 = arith.mulf %91, %115 : vector<1x1xf32>
    %118 = arith.mulf %106, %99 : vector<1x1xf32>
    %119 = arith.mulf %118, %116 : vector<1x1xf32>
    %120 = arith.addf %117, %119 : vector<1x1xf32>
    %cst_73 = arith.constant 0.000000e+00 : f32
    %121 = vector.broadcast %cst_73 : f32 to vector<1x1xf32>
    %122 = arith.subf %121, %91 : vector<1x1xf32>
    %123 = arith.mulf %122, %116 : vector<1x1xf32>
    %124 = arith.mulf %106, %99 : vector<1x1xf32>
    %125 = arith.mulf %124, %115 : vector<1x1xf32>
    %126 = arith.addf %123, %125 : vector<1x1xf32>
    %127 = arith.mulf %99, %116 : vector<1x1xf32>
    %128 = arith.mulf %99, %115 : vector<1x1xf32>
    %129 = tpu.concatenate %120, %126, %110, %127, %128, %114 in 1 : vector<1x1xf32>, vector<1x1xf32>, vector<1x1xf32>, vector<1x1xf32>, vector<1x1xf32>, vector<1x1xf32> -> vector<1x6xf32>
    %130 = vector.extract_strided_slice %83 {offsets = [0, 6], sizes = [1, 1], strides = [1, 1]} : vector<1x11xf32> to vector<1x1xf32>
    %131 = arith.negf %130 : vector<1x1xf32>
    %132 = math.exp %131 : vector<1x1xf32>
    %cst_74 = arith.constant 1.000000e+00 : f32
    %133 = vector.broadcast %cst_74 : f32 to vector<1x1xf32>
    %134 = arith.addf %133, %132 : vector<1x1xf32>
    %135 = arith.divf %133, %134 : vector<1x1xf32>
    %136 = vector.extract_strided_slice %83 {offsets = [0, 7], sizes = [1, 4], strides = [1, 1]} : vector<1x11xf32> to vector<1x4xf32>
    %cst_75 = arith.constant 0.000000e+00 : f32
    %137 = vector.broadcast %cst_75 : f32 to vector<1x5xf32>
    %138 = tpu.concatenate %129, %135, %136, %137 in 1 : vector<1x6xf32>, vector<1x1xf32>, vector<1x4xf32>, vector<1x5xf32> -> vector<1x16xf32>
    %139 = vector.extract_strided_slice %67 {offsets = [0, 12], sizes = [64, 12], strides = [1, 1]} : vector<64x96xf32> to vector<64x12xf32>
    %140 = vector.extract_strided_slice %139 {offsets = [0, 11], sizes = [64, 1], strides = [1, 1]} : vector<64x12xf32> to vector<64x1xf32>
    %cst_76 = arith.constant dense<0xFF800000> : vector<1xf32>
    %141 = vector.multi_reduction <maximumf>, %140, %cst_76 [0] : vector<64x1xf32> to vector<1xf32>
    %142 = vector.shape_cast %141 : vector<1xf32> to vector<1x1xf32>
    %143 = vector.broadcast %142 : vector<1x1xf32> to vector<64x1xf32>
    %144 = arith.subf %140, %143 : vector<64x1xf32>
    %145 = math.exp %144 : vector<64x1xf32>
    %cst_77 = arith.constant dense<0.000000e+00> : vector<1xf32>
    %146 = vector.multi_reduction <add>, %145, %cst_77 [0] : vector<64x1xf32> to vector<1xf32>
    %147 = vector.shape_cast %146 : vector<1xf32> to vector<1x1xf32>
    %148 = vector.broadcast %147 : vector<1x1xf32> to vector<64x1xf32>
    %149 = arith.divf %145, %148 : vector<64x1xf32>
    %150 = vector.extract_strided_slice %139 {offsets = [0, 0], sizes = [64, 11], strides = [1, 1]} : vector<64x12xf32> to vector<64x11xf32>
    %151 = vector.broadcast %149 : vector<64x1xf32> to vector<64x11xf32>
    %152 = arith.mulf %150, %151 : vector<64x11xf32>
    %cst_78 = arith.constant dense<0.000000e+00> : vector<11xf32>
    %153 = vector.multi_reduction <add>, %152, %cst_78 [0] : vector<64x11xf32> to vector<11xf32>
    %154 = vector.shape_cast %153 : vector<11xf32> to vector<1x11xf32>
    %155 = vector.extract_strided_slice %154 {offsets = [0, 0], sizes = [1, 1], strides = [1, 1]} : vector<1x11xf32> to vector<1x1xf32>
    %156 = arith.negf %155 : vector<1x1xf32>
    %157 = math.exp %156 : vector<1x1xf32>
    %cst_79 = arith.constant 1.000000e+00 : f32
    %158 = vector.broadcast %cst_79 : f32 to vector<1x1xf32>
    %159 = arith.addf %158, %157 : vector<1x1xf32>
    %160 = arith.divf %158, %159 : vector<1x1xf32>
    %cst_80 = arith.constant 0.00999999977 : f32
    %161 = vector.broadcast %cst_80 : f32 to vector<1x1xf32>
    %162 = arith.addf %160, %161 : vector<1x1xf32>
    %163 = vector.extract_strided_slice %154 {offsets = [0, 1], sizes = [1, 1], strides = [1, 1]} : vector<1x11xf32> to vector<1x1xf32>
    %164 = arith.negf %163 : vector<1x1xf32>
    %165 = math.exp %164 : vector<1x1xf32>
    %cst_81 = arith.constant 1.000000e+00 : f32
    %166 = vector.broadcast %cst_81 : f32 to vector<1x1xf32>
    %167 = arith.addf %166, %165 : vector<1x1xf32>
    %168 = arith.divf %166, %167 : vector<1x1xf32>
    %cst_82 = arith.constant 0.00999999977 : f32
    %169 = vector.broadcast %cst_82 : f32 to vector<1x1xf32>
    %170 = arith.addf %168, %169 : vector<1x1xf32>
    %171 = vector.extract_strided_slice %154 {offsets = [0, 2], sizes = [1, 1], strides = [1, 1]} : vector<1x11xf32> to vector<1x1xf32>
    %cst_83 = arith.constant 6.28318548 : f32
    %172 = vector.broadcast %cst_83 : f32 to vector<1x1xf32>
    %173 = arith.mulf %171, %172 : vector<1x1xf32>
    %174 = vector.extract_strided_slice %154 {offsets = [0, 3], sizes = [1, 1], strides = [1, 1]} : vector<1x11xf32> to vector<1x1xf32>
    %cst_84 = arith.constant 5.000000e+00 : f32
    %175 = vector.broadcast %cst_84 : f32 to vector<1x1xf32>
    %176 = arith.mulf %174, %175 : vector<1x1xf32>
    %177 = math.tanh %176 : vector<1x1xf32>
    %178 = vector.extract_strided_slice %154 {offsets = [0, 4], sizes = [1, 1], strides = [1, 1]} : vector<1x11xf32> to vector<1x1xf32>
    %cst_85 = arith.constant 5.000000e+00 : f32
    %179 = vector.broadcast %cst_85 : f32 to vector<1x1xf32>
    %180 = arith.mulf %178, %179 : vector<1x1xf32>
    %181 = math.tanh %180 : vector<1x1xf32>
    %182 = vector.extract_strided_slice %154 {offsets = [0, 5], sizes = [1, 1], strides = [1, 1]} : vector<1x11xf32> to vector<1x1xf32>
    %cst_86 = arith.constant 5.000000e+00 : f32
    %183 = vector.broadcast %cst_86 : f32 to vector<1x1xf32>
    %184 = arith.mulf %182, %183 : vector<1x1xf32>
    %185 = math.tanh %184 : vector<1x1xf32>
    %186 = math.cos %173 : vector<1x1xf32>
    %187 = math.sin %173 : vector<1x1xf32>
    %188 = arith.mulf %162, %186 : vector<1x1xf32>
    %189 = arith.mulf %177, %170 : vector<1x1xf32>
    %190 = arith.mulf %189, %187 : vector<1x1xf32>
    %191 = arith.addf %188, %190 : vector<1x1xf32>
    %cst_87 = arith.constant 0.000000e+00 : f32
    %192 = vector.broadcast %cst_87 : f32 to vector<1x1xf32>
    %193 = arith.subf %192, %162 : vector<1x1xf32>
    %194 = arith.mulf %193, %187 : vector<1x1xf32>
    %195 = arith.mulf %177, %170 : vector<1x1xf32>
    %196 = arith.mulf %195, %186 : vector<1x1xf32>
    %197 = arith.addf %194, %196 : vector<1x1xf32>
    %198 = arith.mulf %170, %187 : vector<1x1xf32>
    %199 = arith.mulf %170, %186 : vector<1x1xf32>
    %200 = tpu.concatenate %191, %197, %181, %198, %199, %185 in 1 : vector<1x1xf32>, vector<1x1xf32>, vector<1x1xf32>, vector<1x1xf32>, vector<1x1xf32>, vector<1x1xf32> -> vector<1x6xf32>
    %201 = vector.extract_strided_slice %154 {offsets = [0, 6], sizes = [1, 1], strides = [1, 1]} : vector<1x11xf32> to vector<1x1xf32>
    %202 = arith.negf %201 : vector<1x1xf32>
    %203 = math.exp %202 : vector<1x1xf32>
    %cst_88 = arith.constant 1.000000e+00 : f32
    %204 = vector.broadcast %cst_88 : f32 to vector<1x1xf32>
    %205 = arith.addf %204, %203 : vector<1x1xf32>
    %206 = arith.divf %204, %205 : vector<1x1xf32>
    %207 = vector.extract_strided_slice %154 {offsets = [0, 7], sizes = [1, 4], strides = [1, 1]} : vector<1x11xf32> to vector<1x4xf32>
    %cst_89 = arith.constant 0.000000e+00 : f32
    %208 = vector.broadcast %cst_89 : f32 to vector<1x5xf32>
    %209 = tpu.concatenate %200, %206, %207, %208 in 1 : vector<1x6xf32>, vector<1x1xf32>, vector<1x4xf32>, vector<1x5xf32> -> vector<1x16xf32>
    %210 = vector.extract_strided_slice %67 {offsets = [0, 24], sizes = [64, 12], strides = [1, 1]} : vector<64x96xf32> to vector<64x12xf32>
    %211 = vector.extract_strided_slice %210 {offsets = [0, 11], sizes = [64, 1], strides = [1, 1]} : vector<64x12xf32> to vector<64x1xf32>
    %cst_90 = arith.constant dense<0xFF800000> : vector<1xf32>
    %212 = vector.multi_reduction <maximumf>, %211, %cst_90 [0] : vector<64x1xf32> to vector<1xf32>
    %213 = vector.shape_cast %212 : vector<1xf32> to vector<1x1xf32>
    %214 = vector.broadcast %213 : vector<1x1xf32> to vector<64x1xf32>
    %215 = arith.subf %211, %214 : vector<64x1xf32>
    %216 = math.exp %215 : vector<64x1xf32>
    %cst_91 = arith.constant dense<0.000000e+00> : vector<1xf32>
    %217 = vector.multi_reduction <add>, %216, %cst_91 [0] : vector<64x1xf32> to vector<1xf32>
    %218 = vector.shape_cast %217 : vector<1xf32> to vector<1x1xf32>
    %219 = vector.broadcast %218 : vector<1x1xf32> to vector<64x1xf32>
    %220 = arith.divf %216, %219 : vector<64x1xf32>
    %221 = vector.extract_strided_slice %210 {offsets = [0, 0], sizes = [64, 11], strides = [1, 1]} : vector<64x12xf32> to vector<64x11xf32>
    %222 = vector.broadcast %220 : vector<64x1xf32> to vector<64x11xf32>
    %223 = arith.mulf %221, %222 : vector<64x11xf32>
    %cst_92 = arith.constant dense<0.000000e+00> : vector<11xf32>
    %224 = vector.multi_reduction <add>, %223, %cst_92 [0] : vector<64x11xf32> to vector<11xf32>
    %225 = vector.shape_cast %224 : vector<11xf32> to vector<1x11xf32>
    %226 = vector.extract_strided_slice %225 {offsets = [0, 0], sizes = [1, 1], strides = [1, 1]} : vector<1x11xf32> to vector<1x1xf32>
    %227 = arith.negf %226 : vector<1x1xf32>
    %228 = math.exp %227 : vector<1x1xf32>
    %cst_93 = arith.constant 1.000000e+00 : f32
    %229 = vector.broadcast %cst_93 : f32 to vector<1x1xf32>
    %230 = arith.addf %229, %228 : vector<1x1xf32>
    %231 = arith.divf %229, %230 : vector<1x1xf32>
    %cst_94 = arith.constant 0.00999999977 : f32
    %232 = vector.broadcast %cst_94 : f32 to vector<1x1xf32>
    %233 = arith.addf %231, %232 : vector<1x1xf32>
    %234 = vector.extract_strided_slice %225 {offsets = [0, 1], sizes = [1, 1], strides = [1, 1]} : vector<1x11xf32> to vector<1x1xf32>
    %235 = arith.negf %234 : vector<1x1xf32>
    %236 = math.exp %235 : vector<1x1xf32>
    %cst_95 = arith.constant 1.000000e+00 : f32
    %237 = vector.broadcast %cst_95 : f32 to vector<1x1xf32>
    %238 = arith.addf %237, %236 : vector<1x1xf32>
    %239 = arith.divf %237, %238 : vector<1x1xf32>
    %cst_96 = arith.constant 0.00999999977 : f32
    %240 = vector.broadcast %cst_96 : f32 to vector<1x1xf32>
    %241 = arith.addf %239, %240 : vector<1x1xf32>
    %242 = vector.extract_strided_slice %225 {offsets = [0, 2], sizes = [1, 1], strides = [1, 1]} : vector<1x11xf32> to vector<1x1xf32>
    %cst_97 = arith.constant 6.28318548 : f32
    %243 = vector.broadcast %cst_97 : f32 to vector<1x1xf32>
    %244 = arith.mulf %242, %243 : vector<1x1xf32>
    %245 = vector.extract_strided_slice %225 {offsets = [0, 3], sizes = [1, 1], strides = [1, 1]} : vector<1x11xf32> to vector<1x1xf32>
    %cst_98 = arith.constant 5.000000e+00 : f32
    %246 = vector.broadcast %cst_98 : f32 to vector<1x1xf32>
    %247 = arith.mulf %245, %246 : vector<1x1xf32>
    %248 = math.tanh %247 : vector<1x1xf32>
    %249 = vector.extract_strided_slice %225 {offsets = [0, 4], sizes = [1, 1], strides = [1, 1]} : vector<1x11xf32> to vector<1x1xf32>
    %cst_99 = arith.constant 5.000000e+00 : f32
    %250 = vector.broadcast %cst_99 : f32 to vector<1x1xf32>
    %251 = arith.mulf %249, %250 : vector<1x1xf32>
    %252 = math.tanh %251 : vector<1x1xf32>
    %253 = vector.extract_strided_slice %225 {offsets = [0, 5], sizes = [1, 1], strides = [1, 1]} : vector<1x11xf32> to vector<1x1xf32>
    %cst_100 = arith.constant 5.000000e+00 : f32
    %254 = vector.broadcast %cst_100 : f32 to vector<1x1xf32>
    %255 = arith.mulf %253, %254 : vector<1x1xf32>
    %256 = math.tanh %255 : vector<1x1xf32>
    %257 = math.cos %244 : vector<1x1xf32>
    %258 = math.sin %244 : vector<1x1xf32>
    %259 = arith.mulf %233, %257 : vector<1x1xf32>
    %260 = arith.mulf %248, %241 : vector<1x1xf32>
    %261 = arith.mulf %260, %258 : vector<1x1xf32>
    %262 = arith.addf %259, %261 : vector<1x1xf32>
    %cst_101 = arith.constant 0.000000e+00 : f32
    %263 = vector.broadcast %cst_101 : f32 to vector<1x1xf32>
    %264 = arith.subf %263, %233 : vector<1x1xf32>
    %265 = arith.mulf %264, %258 : vector<1x1xf32>
    %266 = arith.mulf %248, %241 : vector<1x1xf32>
    %267 = arith.mulf %266, %257 : vector<1x1xf32>
    %268 = arith.addf %265, %267 : vector<1x1xf32>
    %269 = arith.mulf %241, %258 : vector<1x1xf32>
    %270 = arith.mulf %241, %257 : vector<1x1xf32>
    %271 = tpu.concatenate %262, %268, %252, %269, %270, %256 in 1 : vector<1x1xf32>, vector<1x1xf32>, vector<1x1xf32>, vector<1x1xf32>, vector<1x1xf32>, vector<1x1xf32> -> vector<1x6xf32>
    %272 = vector.extract_strided_slice %225 {offsets = [0, 6], sizes = [1, 1], strides = [1, 1]} : vector<1x11xf32> to vector<1x1xf32>
    %273 = arith.negf %272 : vector<1x1xf32>
    %274 = math.exp %273 : vector<1x1xf32>
    %cst_102 = arith.constant 1.000000e+00 : f32
    %275 = vector.broadcast %cst_102 : f32 to vector<1x1xf32>
    %276 = arith.addf %275, %274 : vector<1x1xf32>
    %277 = arith.divf %275, %276 : vector<1x1xf32>
    %278 = vector.extract_strided_slice %225 {offsets = [0, 7], sizes = [1, 4], strides = [1, 1]} : vector<1x11xf32> to vector<1x4xf32>
    %cst_103 = arith.constant 0.000000e+00 : f32
    %279 = vector.broadcast %cst_103 : f32 to vector<1x5xf32>
    %280 = tpu.concatenate %271, %277, %278, %279 in 1 : vector<1x6xf32>, vector<1x1xf32>, vector<1x4xf32>, vector<1x5xf32> -> vector<1x16xf32>
    %281 = vector.extract_strided_slice %67 {offsets = [0, 36], sizes = [64, 12], strides = [1, 1]} : vector<64x96xf32> to vector<64x12xf32>
    %282 = vector.extract_strided_slice %281 {offsets = [0, 11], sizes = [64, 1], strides = [1, 1]} : vector<64x12xf32> to vector<64x1xf32>
    %cst_104 = arith.constant dense<0xFF800000> : vector<1xf32>
    %283 = vector.multi_reduction <maximumf>, %282, %cst_104 [0] : vector<64x1xf32> to vector<1xf32>
    %284 = vector.shape_cast %283 : vector<1xf32> to vector<1x1xf32>
    %285 = vector.broadcast %284 : vector<1x1xf32> to vector<64x1xf32>
    %286 = arith.subf %282, %285 : vector<64x1xf32>
    %287 = math.exp %286 : vector<64x1xf32>
    %cst_105 = arith.constant dense<0.000000e+00> : vector<1xf32>
    %288 = vector.multi_reduction <add>, %287, %cst_105 [0] : vector<64x1xf32> to vector<1xf32>
    %289 = vector.shape_cast %288 : vector<1xf32> to vector<1x1xf32>
    %290 = vector.broadcast %289 : vector<1x1xf32> to vector<64x1xf32>
    %291 = arith.divf %287, %290 : vector<64x1xf32>
    %292 = vector.extract_strided_slice %281 {offsets = [0, 0], sizes = [64, 11], strides = [1, 1]} : vector<64x12xf32> to vector<64x11xf32>
    %293 = vector.broadcast %291 : vector<64x1xf32> to vector<64x11xf32>
    %294 = arith.mulf %292, %293 : vector<64x11xf32>
    %cst_106 = arith.constant dense<0.000000e+00> : vector<11xf32>
    %295 = vector.multi_reduction <add>, %294, %cst_106 [0] : vector<64x11xf32> to vector<11xf32>
    %296 = vector.shape_cast %295 : vector<11xf32> to vector<1x11xf32>
    %297 = vector.extract_strided_slice %296 {offsets = [0, 0], sizes = [1, 1], strides = [1, 1]} : vector<1x11xf32> to vector<1x1xf32>
    %298 = arith.negf %297 : vector<1x1xf32>
    %299 = math.exp %298 : vector<1x1xf32>
    %cst_107 = arith.constant 1.000000e+00 : f32
    %300 = vector.broadcast %cst_107 : f32 to vector<1x1xf32>
    %301 = arith.addf %300, %299 : vector<1x1xf32>
    %302 = arith.divf %300, %301 : vector<1x1xf32>
    %cst_108 = arith.constant 0.00999999977 : f32
    %303 = vector.broadcast %cst_108 : f32 to vector<1x1xf32>
    %304 = arith.addf %302, %303 : vector<1x1xf32>
    %305 = vector.extract_strided_slice %296 {offsets = [0, 1], sizes = [1, 1], strides = [1, 1]} : vector<1x11xf32> to vector<1x1xf32>
    %306 = arith.negf %305 : vector<1x1xf32>
    %307 = math.exp %306 : vector<1x1xf32>
    %cst_109 = arith.constant 1.000000e+00 : f32
    %308 = vector.broadcast %cst_109 : f32 to vector<1x1xf32>
    %309 = arith.addf %308, %307 : vector<1x1xf32>
    %310 = arith.divf %308, %309 : vector<1x1xf32>
    %cst_110 = arith.constant 0.00999999977 : f32
    %311 = vector.broadcast %cst_110 : f32 to vector<1x1xf32>
    %312 = arith.addf %310, %311 : vector<1x1xf32>
    %313 = vector.extract_strided_slice %296 {offsets = [0, 2], sizes = [1, 1], strides = [1, 1]} : vector<1x11xf32> to vector<1x1xf32>
    %cst_111 = arith.constant 6.28318548 : f32
    %314 = vector.broadcast %cst_111 : f32 to vector<1x1xf32>
    %315 = arith.mulf %313, %314 : vector<1x1xf32>
    %316 = vector.extract_strided_slice %296 {offsets = [0, 3], sizes = [1, 1], strides = [1, 1]} : vector<1x11xf32> to vector<1x1xf32>
    %cst_112 = arith.constant 5.000000e+00 : f32
    %317 = vector.broadcast %cst_112 : f32 to vector<1x1xf32>
    %318 = arith.mulf %316, %317 : vector<1x1xf32>
    %319 = math.tanh %318 : vector<1x1xf32>
    %320 = vector.extract_strided_slice %296 {offsets = [0, 4], sizes = [1, 1], strides = [1, 1]} : vector<1x11xf32> to vector<1x1xf32>
    %cst_113 = arith.constant 5.000000e+00 : f32
    %321 = vector.broadcast %cst_113 : f32 to vector<1x1xf32>
    %322 = arith.mulf %320, %321 : vector<1x1xf32>
    %323 = math.tanh %322 : vector<1x1xf32>
    %324 = vector.extract_strided_slice %296 {offsets = [0, 5], sizes = [1, 1], strides = [1, 1]} : vector<1x11xf32> to vector<1x1xf32>
    %cst_114 = arith.constant 5.000000e+00 : f32
    %325 = vector.broadcast %cst_114 : f32 to vector<1x1xf32>
    %326 = arith.mulf %324, %325 : vector<1x1xf32>
    %327 = math.tanh %326 : vector<1x1xf32>
    %328 = math.cos %315 : vector<1x1xf32>
    %329 = math.sin %315 : vector<1x1xf32>
    %330 = arith.mulf %304, %328 : vector<1x1xf32>
    %331 = arith.mulf %319, %312 : vector<1x1xf32>
    %332 = arith.mulf %331, %329 : vector<1x1xf32>
    %333 = arith.addf %330, %332 : vector<1x1xf32>
    %cst_115 = arith.constant 0.000000e+00 : f32
    %334 = vector.broadcast %cst_115 : f32 to vector<1x1xf32>
    %335 = arith.subf %334, %304 : vector<1x1xf32>
    %336 = arith.mulf %335, %329 : vector<1x1xf32>
    %337 = arith.mulf %319, %312 : vector<1x1xf32>
    %338 = arith.mulf %337, %328 : vector<1x1xf32>
    %339 = arith.addf %336, %338 : vector<1x1xf32>
    %340 = arith.mulf %312, %329 : vector<1x1xf32>
    %341 = arith.mulf %312, %328 : vector<1x1xf32>
    %342 = tpu.concatenate %333, %339, %323, %340, %341, %327 in 1 : vector<1x1xf32>, vector<1x1xf32>, vector<1x1xf32>, vector<1x1xf32>, vector<1x1xf32>, vector<1x1xf32> -> vector<1x6xf32>
    %343 = vector.extract_strided_slice %296 {offsets = [0, 6], sizes = [1, 1], strides = [1, 1]} : vector<1x11xf32> to vector<1x1xf32>
    %344 = arith.negf %343 : vector<1x1xf32>
    %345 = math.exp %344 : vector<1x1xf32>
    %cst_116 = arith.constant 1.000000e+00 : f32
    %346 = vector.broadcast %cst_116 : f32 to vector<1x1xf32>
    %347 = arith.addf %346, %345 : vector<1x1xf32>
    %348 = arith.divf %346, %347 : vector<1x1xf32>
    %349 = vector.extract_strided_slice %296 {offsets = [0, 7], sizes = [1, 4], strides = [1, 1]} : vector<1x11xf32> to vector<1x4xf32>
    %cst_117 = arith.constant 0.000000e+00 : f32
    %350 = vector.broadcast %cst_117 : f32 to vector<1x5xf32>
    %351 = tpu.concatenate %342, %348, %349, %350 in 1 : vector<1x6xf32>, vector<1x1xf32>, vector<1x4xf32>, vector<1x5xf32> -> vector<1x16xf32>
    %352 = vector.extract_strided_slice %67 {offsets = [0, 48], sizes = [64, 12], strides = [1, 1]} : vector<64x96xf32> to vector<64x12xf32>
    %353 = vector.extract_strided_slice %352 {offsets = [0, 11], sizes = [64, 1], strides = [1, 1]} : vector<64x12xf32> to vector<64x1xf32>
    %cst_118 = arith.constant dense<0xFF800000> : vector<1xf32>
    %354 = vector.multi_reduction <maximumf>, %353, %cst_118 [0] : vector<64x1xf32> to vector<1xf32>
    %355 = vector.shape_cast %354 : vector<1xf32> to vector<1x1xf32>
    %356 = vector.broadcast %355 : vector<1x1xf32> to vector<64x1xf32>
    %357 = arith.subf %353, %356 : vector<64x1xf32>
    %358 = math.exp %357 : vector<64x1xf32>
    %cst_119 = arith.constant dense<0.000000e+00> : vector<1xf32>
    %359 = vector.multi_reduction <add>, %358, %cst_119 [0] : vector<64x1xf32> to vector<1xf32>
    %360 = vector.shape_cast %359 : vector<1xf32> to vector<1x1xf32>
    %361 = vector.broadcast %360 : vector<1x1xf32> to vector<64x1xf32>
    %362 = arith.divf %358, %361 : vector<64x1xf32>
    %363 = vector.extract_strided_slice %352 {offsets = [0, 0], sizes = [64, 11], strides = [1, 1]} : vector<64x12xf32> to vector<64x11xf32>
    %364 = vector.broadcast %362 : vector<64x1xf32> to vector<64x11xf32>
    %365 = arith.mulf %363, %364 : vector<64x11xf32>
    %cst_120 = arith.constant dense<0.000000e+00> : vector<11xf32>
    %366 = vector.multi_reduction <add>, %365, %cst_120 [0] : vector<64x11xf32> to vector<11xf32>
    %367 = vector.shape_cast %366 : vector<11xf32> to vector<1x11xf32>
    %368 = vector.extract_strided_slice %367 {offsets = [0, 0], sizes = [1, 1], strides = [1, 1]} : vector<1x11xf32> to vector<1x1xf32>
    %369 = arith.negf %368 : vector<1x1xf32>
    %370 = math.exp %369 : vector<1x1xf32>
    %cst_121 = arith.constant 1.000000e+00 : f32
    %371 = vector.broadcast %cst_121 : f32 to vector<1x1xf32>
    %372 = arith.addf %371, %370 : vector<1x1xf32>
    %373 = arith.divf %371, %372 : vector<1x1xf32>
    %cst_122 = arith.constant 0.00999999977 : f32
    %374 = vector.broadcast %cst_122 : f32 to vector<1x1xf32>
    %375 = arith.addf %373, %374 : vector<1x1xf32>
    %376 = vector.extract_strided_slice %367 {offsets = [0, 1], sizes = [1, 1], strides = [1, 1]} : vector<1x11xf32> to vector<1x1xf32>
    %377 = arith.negf %376 : vector<1x1xf32>
    %378 = math.exp %377 : vector<1x1xf32>
    %cst_123 = arith.constant 1.000000e+00 : f32
    %379 = vector.broadcast %cst_123 : f32 to vector<1x1xf32>
    %380 = arith.addf %379, %378 : vector<1x1xf32>
    %381 = arith.divf %379, %380 : vector<1x1xf32>
    %cst_124 = arith.constant 0.00999999977 : f32
    %382 = vector.broadcast %cst_124 : f32 to vector<1x1xf32>
    %383 = arith.addf %381, %382 : vector<1x1xf32>
    %384 = vector.extract_strided_slice %367 {offsets = [0, 2], sizes = [1, 1], strides = [1, 1]} : vector<1x11xf32> to vector<1x1xf32>
    %cst_125 = arith.constant 6.28318548 : f32
    %385 = vector.broadcast %cst_125 : f32 to vector<1x1xf32>
    %386 = arith.mulf %384, %385 : vector<1x1xf32>
    %387 = vector.extract_strided_slice %367 {offsets = [0, 3], sizes = [1, 1], strides = [1, 1]} : vector<1x11xf32> to vector<1x1xf32>
    %cst_126 = arith.constant 5.000000e+00 : f32
    %388 = vector.broadcast %cst_126 : f32 to vector<1x1xf32>
    %389 = arith.mulf %387, %388 : vector<1x1xf32>
    %390 = math.tanh %389 : vector<1x1xf32>
    %391 = vector.extract_strided_slice %367 {offsets = [0, 4], sizes = [1, 1], strides = [1, 1]} : vector<1x11xf32> to vector<1x1xf32>
    %cst_127 = arith.constant 5.000000e+00 : f32
    %392 = vector.broadcast %cst_127 : f32 to vector<1x1xf32>
    %393 = arith.mulf %391, %392 : vector<1x1xf32>
    %394 = math.tanh %393 : vector<1x1xf32>
    %395 = vector.extract_strided_slice %367 {offsets = [0, 5], sizes = [1, 1], strides = [1, 1]} : vector<1x11xf32> to vector<1x1xf32>
    %cst_128 = arith.constant 5.000000e+00 : f32
    %396 = vector.broadcast %cst_128 : f32 to vector<1x1xf32>
    %397 = arith.mulf %395, %396 : vector<1x1xf32>
    %398 = math.tanh %397 : vector<1x1xf32>
    %399 = math.cos %386 : vector<1x1xf32>
    %400 = math.sin %386 : vector<1x1xf32>
    %401 = arith.mulf %375, %399 : vector<1x1xf32>
    %402 = arith.mulf %390, %383 : vector<1x1xf32>
    %403 = arith.mulf %402, %400 : vector<1x1xf32>
    %404 = arith.addf %401, %403 : vector<1x1xf32>
    %cst_129 = arith.constant 0.000000e+00 : f32
    %405 = vector.broadcast %cst_129 : f32 to vector<1x1xf32>
    %406 = arith.subf %405, %375 : vector<1x1xf32>
    %407 = arith.mulf %406, %400 : vector<1x1xf32>
    %408 = arith.mulf %390, %383 : vector<1x1xf32>
    %409 = arith.mulf %408, %399 : vector<1x1xf32>
    %410 = arith.addf %407, %409 : vector<1x1xf32>
    %411 = arith.mulf %383, %400 : vector<1x1xf32>
    %412 = arith.mulf %383, %399 : vector<1x1xf32>
    %413 = tpu.concatenate %404, %410, %394, %411, %412, %398 in 1 : vector<1x1xf32>, vector<1x1xf32>, vector<1x1xf32>, vector<1x1xf32>, vector<1x1xf32>, vector<1x1xf32> -> vector<1x6xf32>
    %414 = vector.extract_strided_slice %367 {offsets = [0, 6], sizes = [1, 1], strides = [1, 1]} : vector<1x11xf32> to vector<1x1xf32>
    %415 = arith.negf %414 : vector<1x1xf32>
    %416 = math.exp %415 : vector<1x1xf32>
    %cst_130 = arith.constant 1.000000e+00 : f32
    %417 = vector.broadcast %cst_130 : f32 to vector<1x1xf32>
    %418 = arith.addf %417, %416 : vector<1x1xf32>
    %419 = arith.divf %417, %418 : vector<1x1xf32>
    %420 = vector.extract_strided_slice %367 {offsets = [0, 7], sizes = [1, 4], strides = [1, 1]} : vector<1x11xf32> to vector<1x4xf32>
    %cst_131 = arith.constant 0.000000e+00 : f32
    %421 = vector.broadcast %cst_131 : f32 to vector<1x5xf32>
    %422 = tpu.concatenate %413, %419, %420, %421 in 1 : vector<1x6xf32>, vector<1x1xf32>, vector<1x4xf32>, vector<1x5xf32> -> vector<1x16xf32>
    %423 = vector.extract_strided_slice %67 {offsets = [0, 60], sizes = [64, 12], strides = [1, 1]} : vector<64x96xf32> to vector<64x12xf32>
    %424 = vector.extract_strided_slice %423 {offsets = [0, 11], sizes = [64, 1], strides = [1, 1]} : vector<64x12xf32> to vector<64x1xf32>
    %cst_132 = arith.constant dense<0xFF800000> : vector<1xf32>
    %425 = vector.multi_reduction <maximumf>, %424, %cst_132 [0] : vector<64x1xf32> to vector<1xf32>
    %426 = vector.shape_cast %425 : vector<1xf32> to vector<1x1xf32>
    %427 = vector.broadcast %426 : vector<1x1xf32> to vector<64x1xf32>
    %428 = arith.subf %424, %427 : vector<64x1xf32>
    %429 = math.exp %428 : vector<64x1xf32>
    %cst_133 = arith.constant dense<0.000000e+00> : vector<1xf32>
    %430 = vector.multi_reduction <add>, %429, %cst_133 [0] : vector<64x1xf32> to vector<1xf32>
    %431 = vector.shape_cast %430 : vector<1xf32> to vector<1x1xf32>
    %432 = vector.broadcast %431 : vector<1x1xf32> to vector<64x1xf32>
    %433 = arith.divf %429, %432 : vector<64x1xf32>
    %434 = vector.extract_strided_slice %423 {offsets = [0, 0], sizes = [64, 11], strides = [1, 1]} : vector<64x12xf32> to vector<64x11xf32>
    %435 = vector.broadcast %433 : vector<64x1xf32> to vector<64x11xf32>
    %436 = arith.mulf %434, %435 : vector<64x11xf32>
    %cst_134 = arith.constant dense<0.000000e+00> : vector<11xf32>
    %437 = vector.multi_reduction <add>, %436, %cst_134 [0] : vector<64x11xf32> to vector<11xf32>
    %438 = vector.shape_cast %437 : vector<11xf32> to vector<1x11xf32>
    %439 = vector.extract_strided_slice %438 {offsets = [0, 0], sizes = [1, 1], strides = [1, 1]} : vector<1x11xf32> to vector<1x1xf32>
    %440 = arith.negf %439 : vector<1x1xf32>
    %441 = math.exp %440 : vector<1x1xf32>
    %cst_135 = arith.constant 1.000000e+00 : f32
    %442 = vector.broadcast %cst_135 : f32 to vector<1x1xf32>
    %443 = arith.addf %442, %441 : vector<1x1xf32>
    %444 = arith.divf %442, %443 : vector<1x1xf32>
    %cst_136 = arith.constant 0.00999999977 : f32
    %445 = vector.broadcast %cst_136 : f32 to vector<1x1xf32>
    %446 = arith.addf %444, %445 : vector<1x1xf32>
    %447 = vector.extract_strided_slice %438 {offsets = [0, 1], sizes = [1, 1], strides = [1, 1]} : vector<1x11xf32> to vector<1x1xf32>
    %448 = arith.negf %447 : vector<1x1xf32>
    %449 = math.exp %448 : vector<1x1xf32>
    %cst_137 = arith.constant 1.000000e+00 : f32
    %450 = vector.broadcast %cst_137 : f32 to vector<1x1xf32>
    %451 = arith.addf %450, %449 : vector<1x1xf32>
    %452 = arith.divf %450, %451 : vector<1x1xf32>
    %cst_138 = arith.constant 0.00999999977 : f32
    %453 = vector.broadcast %cst_138 : f32 to vector<1x1xf32>
    %454 = arith.addf %452, %453 : vector<1x1xf32>
    %455 = vector.extract_strided_slice %438 {offsets = [0, 2], sizes = [1, 1], strides = [1, 1]} : vector<1x11xf32> to vector<1x1xf32>
    %cst_139 = arith.constant 6.28318548 : f32
    %456 = vector.broadcast %cst_139 : f32 to vector<1x1xf32>
    %457 = arith.mulf %455, %456 : vector<1x1xf32>
    %458 = vector.extract_strided_slice %438 {offsets = [0, 3], sizes = [1, 1], strides = [1, 1]} : vector<1x11xf32> to vector<1x1xf32>
    %cst_140 = arith.constant 5.000000e+00 : f32
    %459 = vector.broadcast %cst_140 : f32 to vector<1x1xf32>
    %460 = arith.mulf %458, %459 : vector<1x1xf32>
    %461 = math.tanh %460 : vector<1x1xf32>
    %462 = vector.extract_strided_slice %438 {offsets = [0, 4], sizes = [1, 1], strides = [1, 1]} : vector<1x11xf32> to vector<1x1xf32>
    %cst_141 = arith.constant 5.000000e+00 : f32
    %463 = vector.broadcast %cst_141 : f32 to vector<1x1xf32>
    %464 = arith.mulf %462, %463 : vector<1x1xf32>
    %465 = math.tanh %464 : vector<1x1xf32>
    %466 = vector.extract_strided_slice %438 {offsets = [0, 5], sizes = [1, 1], strides = [1, 1]} : vector<1x11xf32> to vector<1x1xf32>
    %cst_142 = arith.constant 5.000000e+00 : f32
    %467 = vector.broadcast %cst_142 : f32 to vector<1x1xf32>
    %468 = arith.mulf %466, %467 : vector<1x1xf32>
    %469 = math.tanh %468 : vector<1x1xf32>
    %470 = math.cos %457 : vector<1x1xf32>
    %471 = math.sin %457 : vector<1x1xf32>
    %472 = arith.mulf %446, %470 : vector<1x1xf32>
    %473 = arith.mulf %461, %454 : vector<1x1xf32>
    %474 = arith.mulf %473, %471 : vector<1x1xf32>
    %475 = arith.addf %472, %474 : vector<1x1xf32>
    %cst_143 = arith.constant 0.000000e+00 : f32
    %476 = vector.broadcast %cst_143 : f32 to vector<1x1xf32>
    %477 = arith.subf %476, %446 : vector<1x1xf32>
    %478 = arith.mulf %477, %471 : vector<1x1xf32>
    %479 = arith.mulf %461, %454 : vector<1x1xf32>
    %480 = arith.mulf %479, %470 : vector<1x1xf32>
    %481 = arith.addf %478, %480 : vector<1x1xf32>
    %482 = arith.mulf %454, %471 : vector<1x1xf32>
    %483 = arith.mulf %454, %470 : vector<1x1xf32>
    %484 = tpu.concatenate %475, %481, %465, %482, %483, %469 in 1 : vector<1x1xf32>, vector<1x1xf32>, vector<1x1xf32>, vector<1x1xf32>, vector<1x1xf32>, vector<1x1xf32> -> vector<1x6xf32>
    %485 = vector.extract_strided_slice %438 {offsets = [0, 6], sizes = [1, 1], strides = [1, 1]} : vector<1x11xf32> to vector<1x1xf32>
    %486 = arith.negf %485 : vector<1x1xf32>
    %487 = math.exp %486 : vector<1x1xf32>
    %cst_144 = arith.constant 1.000000e+00 : f32
    %488 = vector.broadcast %cst_144 : f32 to vector<1x1xf32>
    %489 = arith.addf %488, %487 : vector<1x1xf32>
    %490 = arith.divf %488, %489 : vector<1x1xf32>
    %491 = vector.extract_strided_slice %438 {offsets = [0, 7], sizes = [1, 4], strides = [1, 1]} : vector<1x11xf32> to vector<1x4xf32>
    %cst_145 = arith.constant 0.000000e+00 : f32
    %492 = vector.broadcast %cst_145 : f32 to vector<1x5xf32>
    %493 = tpu.concatenate %484, %490, %491, %492 in 1 : vector<1x6xf32>, vector<1x1xf32>, vector<1x4xf32>, vector<1x5xf32> -> vector<1x16xf32>
    %494 = vector.extract_strided_slice %67 {offsets = [0, 72], sizes = [64, 12], strides = [1, 1]} : vector<64x96xf32> to vector<64x12xf32>
    %495 = vector.extract_strided_slice %494 {offsets = [0, 11], sizes = [64, 1], strides = [1, 1]} : vector<64x12xf32> to vector<64x1xf32>
    %cst_146 = arith.constant dense<0xFF800000> : vector<1xf32>
    %496 = vector.multi_reduction <maximumf>, %495, %cst_146 [0] : vector<64x1xf32> to vector<1xf32>
    %497 = vector.shape_cast %496 : vector<1xf32> to vector<1x1xf32>
    %498 = vector.broadcast %497 : vector<1x1xf32> to vector<64x1xf32>
    %499 = arith.subf %495, %498 : vector<64x1xf32>
    %500 = math.exp %499 : vector<64x1xf32>
    %cst_147 = arith.constant dense<0.000000e+00> : vector<1xf32>
    %501 = vector.multi_reduction <add>, %500, %cst_147 [0] : vector<64x1xf32> to vector<1xf32>
    %502 = vector.shape_cast %501 : vector<1xf32> to vector<1x1xf32>
    %503 = vector.broadcast %502 : vector<1x1xf32> to vector<64x1xf32>
    %504 = arith.divf %500, %503 : vector<64x1xf32>
    %505 = vector.extract_strided_slice %494 {offsets = [0, 0], sizes = [64, 11], strides = [1, 1]} : vector<64x12xf32> to vector<64x11xf32>
    %506 = vector.broadcast %504 : vector<64x1xf32> to vector<64x11xf32>
    %507 = arith.mulf %505, %506 : vector<64x11xf32>
    %cst_148 = arith.constant dense<0.000000e+00> : vector<11xf32>
    %508 = vector.multi_reduction <add>, %507, %cst_148 [0] : vector<64x11xf32> to vector<11xf32>
    %509 = vector.shape_cast %508 : vector<11xf32> to vector<1x11xf32>
    %510 = vector.extract_strided_slice %509 {offsets = [0, 0], sizes = [1, 1], strides = [1, 1]} : vector<1x11xf32> to vector<1x1xf32>
    %511 = arith.negf %510 : vector<1x1xf32>
    %512 = math.exp %511 : vector<1x1xf32>
    %cst_149 = arith.constant 1.000000e+00 : f32
    %513 = vector.broadcast %cst_149 : f32 to vector<1x1xf32>
    %514 = arith.addf %513, %512 : vector<1x1xf32>
    %515 = arith.divf %513, %514 : vector<1x1xf32>
    %cst_150 = arith.constant 0.00999999977 : f32
    %516 = vector.broadcast %cst_150 : f32 to vector<1x1xf32>
    %517 = arith.addf %515, %516 : vector<1x1xf32>
    %518 = vector.extract_strided_slice %509 {offsets = [0, 1], sizes = [1, 1], strides = [1, 1]} : vector<1x11xf32> to vector<1x1xf32>
    %519 = arith.negf %518 : vector<1x1xf32>
    %520 = math.exp %519 : vector<1x1xf32>
    %cst_151 = arith.constant 1.000000e+00 : f32
    %521 = vector.broadcast %cst_151 : f32 to vector<1x1xf32>
    %522 = arith.addf %521, %520 : vector<1x1xf32>
    %523 = arith.divf %521, %522 : vector<1x1xf32>
    %cst_152 = arith.constant 0.00999999977 : f32
    %524 = vector.broadcast %cst_152 : f32 to vector<1x1xf32>
    %525 = arith.addf %523, %524 : vector<1x1xf32>
    %526 = vector.extract_strided_slice %509 {offsets = [0, 2], sizes = [1, 1], strides = [1, 1]} : vector<1x11xf32> to vector<1x1xf32>
    %cst_153 = arith.constant 6.28318548 : f32
    %527 = vector.broadcast %cst_153 : f32 to vector<1x1xf32>
    %528 = arith.mulf %526, %527 : vector<1x1xf32>
    %529 = vector.extract_strided_slice %509 {offsets = [0, 3], sizes = [1, 1], strides = [1, 1]} : vector<1x11xf32> to vector<1x1xf32>
    %cst_154 = arith.constant 5.000000e+00 : f32
    %530 = vector.broadcast %cst_154 : f32 to vector<1x1xf32>
    %531 = arith.mulf %529, %530 : vector<1x1xf32>
    %532 = math.tanh %531 : vector<1x1xf32>
    %533 = vector.extract_strided_slice %509 {offsets = [0, 4], sizes = [1, 1], strides = [1, 1]} : vector<1x11xf32> to vector<1x1xf32>
    %cst_155 = arith.constant 5.000000e+00 : f32
    %534 = vector.broadcast %cst_155 : f32 to vector<1x1xf32>
    %535 = arith.mulf %533, %534 : vector<1x1xf32>
    %536 = math.tanh %535 : vector<1x1xf32>
    %537 = vector.extract_strided_slice %509 {offsets = [0, 5], sizes = [1, 1], strides = [1, 1]} : vector<1x11xf32> to vector<1x1xf32>
    %cst_156 = arith.constant 5.000000e+00 : f32
    %538 = vector.broadcast %cst_156 : f32 to vector<1x1xf32>
    %539 = arith.mulf %537, %538 : vector<1x1xf32>
    %540 = math.tanh %539 : vector<1x1xf32>
    %541 = math.cos %528 : vector<1x1xf32>
    %542 = math.sin %528 : vector<1x1xf32>
    %543 = arith.mulf %517, %541 : vector<1x1xf32>
    %544 = arith.mulf %532, %525 : vector<1x1xf32>
    %545 = arith.mulf %544, %542 : vector<1x1xf32>
    %546 = arith.addf %543, %545 : vector<1x1xf32>
    %cst_157 = arith.constant 0.000000e+00 : f32
    %547 = vector.broadcast %cst_157 : f32 to vector<1x1xf32>
    %548 = arith.subf %547, %517 : vector<1x1xf32>
    %549 = arith.mulf %548, %542 : vector<1x1xf32>
    %550 = arith.mulf %532, %525 : vector<1x1xf32>
    %551 = arith.mulf %550, %541 : vector<1x1xf32>
    %552 = arith.addf %549, %551 : vector<1x1xf32>
    %553 = arith.mulf %525, %542 : vector<1x1xf32>
    %554 = arith.mulf %525, %541 : vector<1x1xf32>
    %555 = tpu.concatenate %546, %552, %536, %553, %554, %540 in 1 : vector<1x1xf32>, vector<1x1xf32>, vector<1x1xf32>, vector<1x1xf32>, vector<1x1xf32>, vector<1x1xf32> -> vector<1x6xf32>
    %556 = vector.extract_strided_slice %509 {offsets = [0, 6], sizes = [1, 1], strides = [1, 1]} : vector<1x11xf32> to vector<1x1xf32>
    %557 = arith.negf %556 : vector<1x1xf32>
    %558 = math.exp %557 : vector<1x1xf32>
    %cst_158 = arith.constant 1.000000e+00 : f32
    %559 = vector.broadcast %cst_158 : f32 to vector<1x1xf32>
    %560 = arith.addf %559, %558 : vector<1x1xf32>
    %561 = arith.divf %559, %560 : vector<1x1xf32>
    %562 = vector.extract_strided_slice %509 {offsets = [0, 7], sizes = [1, 4], strides = [1, 1]} : vector<1x11xf32> to vector<1x4xf32>
    %cst_159 = arith.constant 0.000000e+00 : f32
    %563 = vector.broadcast %cst_159 : f32 to vector<1x5xf32>
    %564 = tpu.concatenate %555, %561, %562, %563 in 1 : vector<1x6xf32>, vector<1x1xf32>, vector<1x4xf32>, vector<1x5xf32> -> vector<1x16xf32>
    %565 = vector.extract_strided_slice %67 {offsets = [0, 84], sizes = [64, 12], strides = [1, 1]} : vector<64x96xf32> to vector<64x12xf32>
    %566 = vector.extract_strided_slice %565 {offsets = [0, 11], sizes = [64, 1], strides = [1, 1]} : vector<64x12xf32> to vector<64x1xf32>
    %cst_160 = arith.constant dense<0xFF800000> : vector<1xf32>
    %567 = vector.multi_reduction <maximumf>, %566, %cst_160 [0] : vector<64x1xf32> to vector<1xf32>
    %568 = vector.shape_cast %567 : vector<1xf32> to vector<1x1xf32>
    %569 = vector.broadcast %568 : vector<1x1xf32> to vector<64x1xf32>
    %570 = arith.subf %566, %569 : vector<64x1xf32>
    %571 = math.exp %570 : vector<64x1xf32>
    %cst_161 = arith.constant dense<0.000000e+00> : vector<1xf32>
    %572 = vector.multi_reduction <add>, %571, %cst_161 [0] : vector<64x1xf32> to vector<1xf32>
    %573 = vector.shape_cast %572 : vector<1xf32> to vector<1x1xf32>
    %574 = vector.broadcast %573 : vector<1x1xf32> to vector<64x1xf32>
    %575 = arith.divf %571, %574 : vector<64x1xf32>
    %576 = vector.extract_strided_slice %565 {offsets = [0, 0], sizes = [64, 11], strides = [1, 1]} : vector<64x12xf32> to vector<64x11xf32>
    %577 = vector.broadcast %575 : vector<64x1xf32> to vector<64x11xf32>
    %578 = arith.mulf %576, %577 : vector<64x11xf32>
    %cst_162 = arith.constant dense<0.000000e+00> : vector<11xf32>
    %579 = vector.multi_reduction <add>, %578, %cst_162 [0] : vector<64x11xf32> to vector<11xf32>
    %580 = vector.shape_cast %579 : vector<11xf32> to vector<1x11xf32>
    %581 = vector.extract_strided_slice %580 {offsets = [0, 0], sizes = [1, 1], strides = [1, 1]} : vector<1x11xf32> to vector<1x1xf32>
    %582 = arith.negf %581 : vector<1x1xf32>
    %583 = math.exp %582 : vector<1x1xf32>
    %cst_163 = arith.constant 1.000000e+00 : f32
    %584 = vector.broadcast %cst_163 : f32 to vector<1x1xf32>
    %585 = arith.addf %584, %583 : vector<1x1xf32>
    %586 = arith.divf %584, %585 : vector<1x1xf32>
    %cst_164 = arith.constant 0.00999999977 : f32
    %587 = vector.broadcast %cst_164 : f32 to vector<1x1xf32>
    %588 = arith.addf %586, %587 : vector<1x1xf32>
    %589 = vector.extract_strided_slice %580 {offsets = [0, 1], sizes = [1, 1], strides = [1, 1]} : vector<1x11xf32> to vector<1x1xf32>
    %590 = arith.negf %589 : vector<1x1xf32>
    %591 = math.exp %590 : vector<1x1xf32>
    %cst_165 = arith.constant 1.000000e+00 : f32
    %592 = vector.broadcast %cst_165 : f32 to vector<1x1xf32>
    %593 = arith.addf %592, %591 : vector<1x1xf32>
    %594 = arith.divf %592, %593 : vector<1x1xf32>
    %cst_166 = arith.constant 0.00999999977 : f32
    %595 = vector.broadcast %cst_166 : f32 to vector<1x1xf32>
    %596 = arith.addf %594, %595 : vector<1x1xf32>
    %597 = vector.extract_strided_slice %580 {offsets = [0, 2], sizes = [1, 1], strides = [1, 1]} : vector<1x11xf32> to vector<1x1xf32>
    %cst_167 = arith.constant 6.28318548 : f32
    %598 = vector.broadcast %cst_167 : f32 to vector<1x1xf32>
    %599 = arith.mulf %597, %598 : vector<1x1xf32>
    %600 = vector.extract_strided_slice %580 {offsets = [0, 3], sizes = [1, 1], strides = [1, 1]} : vector<1x11xf32> to vector<1x1xf32>
    %cst_168 = arith.constant 5.000000e+00 : f32
    %601 = vector.broadcast %cst_168 : f32 to vector<1x1xf32>
    %602 = arith.mulf %600, %601 : vector<1x1xf32>
    %603 = math.tanh %602 : vector<1x1xf32>
    %604 = vector.extract_strided_slice %580 {offsets = [0, 4], sizes = [1, 1], strides = [1, 1]} : vector<1x11xf32> to vector<1x1xf32>
    %cst_169 = arith.constant 5.000000e+00 : f32
    %605 = vector.broadcast %cst_169 : f32 to vector<1x1xf32>
    %606 = arith.mulf %604, %605 : vector<1x1xf32>
    %607 = math.tanh %606 : vector<1x1xf32>
    %608 = vector.extract_strided_slice %580 {offsets = [0, 5], sizes = [1, 1], strides = [1, 1]} : vector<1x11xf32> to vector<1x1xf32>
    %cst_170 = arith.constant 5.000000e+00 : f32
    %609 = vector.broadcast %cst_170 : f32 to vector<1x1xf32>
    %610 = arith.mulf %608, %609 : vector<1x1xf32>
    %611 = math.tanh %610 : vector<1x1xf32>
    %612 = math.cos %599 : vector<1x1xf32>
    %613 = math.sin %599 : vector<1x1xf32>
    %614 = arith.mulf %588, %612 : vector<1x1xf32>
    %615 = arith.mulf %603, %596 : vector<1x1xf32>
    %616 = arith.mulf %615, %613 : vector<1x1xf32>
    %617 = arith.addf %614, %616 : vector<1x1xf32>
    %cst_171 = arith.constant 0.000000e+00 : f32
    %618 = vector.broadcast %cst_171 : f32 to vector<1x1xf32>
    %619 = arith.subf %618, %588 : vector<1x1xf32>
    %620 = arith.mulf %619, %613 : vector<1x1xf32>
    %621 = arith.mulf %603, %596 : vector<1x1xf32>
    %622 = arith.mulf %621, %612 : vector<1x1xf32>
    %623 = arith.addf %620, %622 : vector<1x1xf32>
    %624 = arith.mulf %596, %613 : vector<1x1xf32>
    %625 = arith.mulf %596, %612 : vector<1x1xf32>
    %626 = tpu.concatenate %617, %623, %607, %624, %625, %611 in 1 : vector<1x1xf32>, vector<1x1xf32>, vector<1x1xf32>, vector<1x1xf32>, vector<1x1xf32>, vector<1x1xf32> -> vector<1x6xf32>
    %627 = vector.extract_strided_slice %580 {offsets = [0, 6], sizes = [1, 1], strides = [1, 1]} : vector<1x11xf32> to vector<1x1xf32>
    %628 = arith.negf %627 : vector<1x1xf32>
    %629 = math.exp %628 : vector<1x1xf32>
    %cst_172 = arith.constant 1.000000e+00 : f32
    %630 = vector.broadcast %cst_172 : f32 to vector<1x1xf32>
    %631 = arith.addf %630, %629 : vector<1x1xf32>
    %632 = arith.divf %630, %631 : vector<1x1xf32>
    %633 = vector.extract_strided_slice %580 {offsets = [0, 7], sizes = [1, 4], strides = [1, 1]} : vector<1x11xf32> to vector<1x4xf32>
    %cst_173 = arith.constant 0.000000e+00 : f32
    %634 = vector.broadcast %cst_173 : f32 to vector<1x5xf32>
    %635 = tpu.concatenate %626, %632, %633, %634 in 1 : vector<1x6xf32>, vector<1x1xf32>, vector<1x4xf32>, vector<1x5xf32> -> vector<1x16xf32>
    %636 = tpu.concatenate %138, %209, %280, %351, %422, %493, %564, %635 in 1 : vector<1x16xf32>, vector<1x16xf32>, vector<1x16xf32>, vector<1x16xf32>, vector<1x16xf32>, vector<1x16xf32>, vector<1x16xf32>, vector<1x16xf32> -> vector<1x128xf32>
    %637 = vector.shape_cast %636 : vector<1x128xf32> to vector<1x1x128xf32>
    %c0_174 = arith.constant 0 : index
    %c0_175 = arith.constant 0 : index
    %c0_176 = arith.constant 0 : index
    %638 = vector.load %arg7[%c0_174, %c0_175, %c0_176] : memref<1x1x128xf32, #tpu.memory_space<vmem>>, vector<1x1x128xf32>
    tpu.vector_store %arg7[%c0_174, %c0_175, %c0_176], %637 {strides = array<i32>} : memref<1x1x128xf32, #tpu.memory_space<vmem>>, vector<1x1x128xf32>,
    return
  }
  func.func @transform_0(%arg0: i32) -> (i32, i32, i32, i32) {
    %c0_i32 = arith.constant 0 : i32
    %c0_i32_0 = arith.constant 0 : i32
    %c0_i32_1 = arith.constant 0 : i32
    %c0_i32_2 = arith.constant 0 : i32
    return %arg0, %c0_i32, %c0_i32_0, %c0_i32_1 : i32, i32, i32, i32
  }
  func.func @transform_1(%arg0: i32) -> (i32, i32) {
    %c0_i32 = arith.constant 0 : i32
    %c0_i32_0 = arith.constant 0 : i32
    %c0_i32_1 = arith.constant 0 : i32
    return %c0_i32, %c0_i32_0 : i32, i32
  }
  func.func @transform_2(%arg0: i32) -> (i32, i32) {
    %c0_i32 = arith.constant 0 : i32
    %c0_i32_0 = arith.constant 0 : i32
    %c0_i32_1 = arith.constant 0 : i32
    return %c0_i32, %c0_i32_0 : i32, i32
  }
  func.func @transform_3(%arg0: i32) -> (i32, i32) {
    %c0_i32 = arith.constant 0 : i32
    %c0_i32_0 = arith.constant 0 : i32
    %c0_i32_1 = arith.constant 0 : i32
    return %c0_i32, %c0_i32_0 : i32, i32
  }
  func.func @transform_4(%arg0: i32) -> (i32, i32) {
    %c0_i32 = arith.constant 0 : i32
    %c0_i32_0 = arith.constant 0 : i32
    %c0_i32_1 = arith.constant 0 : i32
    return %c0_i32, %c0_i32_0 : i32, i32
  }
  func.func @transform_5(%arg0: i32) -> (i32, i32) {
    %c0_i32 = arith.constant 0 : i32
    %c0_i32_0 = arith.constant 0 : i32
    %c0_i32_1 = arith.constant 0 : i32
    return %c0_i32, %c0_i32_0 : i32, i32
  }
  func.func @transform_6(%arg0: i32) -> (i32, i32, i32) {
    %c0_i32 = arith.constant 0 : i32
    %c0_i32_0 = arith.constant 0 : i32
    %c0_i32_1 = arith.constant 0 : i32
    return %arg0, %c0_i32, %c0_i32_0 : i32, i32, i32
  }
}

</mosaic_0001>

<llo_original>
// kernel: _lambda_.2
$region0: #{_lambda_.2}
  #allocation0 [shape = 'u32[]', space=smem, size = 0x4, offset = 0x4, fixed_abs, tag = 'smem constant byte address 0x4 - core index']
  #allocation1 [shape = 'u32[72,128]{1,0:T(1,128)}', space=vmem, size = 0x9000, scoped, tag = 'internal scratch']
  %s0 = inlined_call_operand.vmem [shape: bf16[8,9,9,8], index: 0, kind: input, shape index: {}]
  %s1 = inlined_call_operand.vmem [shape: bf16[72,128], index: 1, kind: input, shape index: {}]
  %s2 = inlined_call_operand.vmem [shape: f32[1,128], index: 2, kind: input, shape index: {}]
  %s3 = inlined_call_operand.vmem [shape: bf16[2,10,10,128], index: 3, kind: output, shape index: {}]
  %s4 = sld [smem:[#allocation0]]
  $region45: #{_lambda_.2} parent=0
    _
  %s6 = ssub.s32 1, %s4
  %s7 = scalar_select 0, %s6, %s4
  loop: start=0, step=1, limit=4
  $region2: #{_lambda_.2} parent=0 // loop_pre_header
    _
  $region3: #{_lambda_.2} parent=0 // loop_header
    %s9 = sphi 0, %s13
    %p10 = scmp.ge.s32.totalorder %s9, 4
    %s19 = sphi 0, %s21
    %s22 = sphi 0, %s19
    %s23 = sphi 0, %s22
    %s39 = sphi 0, %s23
    %s43 = sphi 0, %s43
    %s45 = sphi 0, %s43
    %s46 = sphi 0, %s45
    %s60 = sphi 0, %s46
    %s64 = sphi 0, %s64
    %s66 = sphi 0, %s64
    %s67 = sphi 0, %s66
    %s81 = sphi 0, %s67
    %s87 = sphi 0, %s89
    %s90 = sphi 0, %s87
    %s91 = sphi 0, %s90
    %s107 = sphi 0, %s91
  $region4: #{_lambda_.2} parent=0 // loop_header_branch
    %12 = sbr.rel (%p10) target = $region8
  $region5: #{_lambda_.2} parent=0 // loop_body
    %s14 = ssub.s32 %s9, 1
    %s15 = ssub.s32 %s9, 2
    %s16 = sadd.s32 %s9, 1
    %s17 = ssub.s32 %s9, %s16
    %p18 = scmp.eq.s32.totalorder %s17, 0
    %s20 = sadd.s32 %s19, 1
    %s21 = scalar_select %p18, %s19, %s20
    %p24 = pneg %p18
    %p25 = scmp.eq.s32.totalorder %s9, 1
    %p26 = por %p24, %p25
    %p27 = scmp.ne.s32.totalorder %s19, %s22
    %p28 = scmp.eq.s32.totalorder %s9, 0
    %p29 = por %p27, %p28
    %p30 = scmp.ne.s32.totalorder %s19, %s22
    %p31 = scmp.eq.s32.totalorder %s14, 1
    %p32 = por %p30, %p31
    %p33 = scmp.ne.s32.totalorder %s22, %s23
    %p34 = scmp.eq.s32.totalorder %s14, 0
    %p35 = por %p33, %p34
    %p36 = scmp.ne.s32.totalorder %s22, %s23
    %p37 = scmp.eq.s32.totalorder %s15, 1
    %p38 = por %p36, %p37
    %p40 = scmp.ne.s32.totalorder %s23, %s39
    %p41 = scmp.eq.s32.totalorder %s15, 0
    %p42 = por %p40, %p41
    %s44 = sadd.s32 %s43, 1
    %p47 = scmp.eq.s32.totalorder %s9, 1
    %p48 = scmp.ne.s32.totalorder %s43, %s45
    %p49 = scmp.eq.s32.totalorder %s9, 0
    %p50 = por %p48, %p49
    %p51 = scmp.ne.s32.totalorder %s43, %s45
    %p52 = scmp.eq.s32.totalorder %s14, 1
    %p53 = por %p51, %p52
    %p54 = scmp.ne.s32.totalorder %s45, %s46
    %p55 = scmp.eq.s32.totalorder %s14, 0
    %p56 = por %p54, %p55
    %p57 = scmp.ne.s32.totalorder %s45, %s46
    %p58 = scmp.eq.s32.totalorder %s15, 1
    %p59 = por %p57, %p58
    %p61 = scmp.ne.s32.totalorder %s46, %s60
    %p62 = scmp.eq.s32.totalorder %s15, 0
    %p63 = por %p61, %p62
    %s65 = sadd.s32 %s64, 1
    %p68 = scmp.eq.s32.totalorder %s9, 1
    %p69 = scmp.ne.s32.totalorder %s64, %s66
    %p70 = scmp.eq.s32.totalorder %s9, 0
    %p71 = por %p69, %p70
    %p72 = scmp.ne.s32.totalorder %s64, %s66
    %p73 = scmp.eq.s32.totalorder %s14, 1
    %p74 = por %p72, %p73
    %p75 = scmp.ne.s32.totalorder %s66, %s67
    %p76 = scmp.eq.s32.totalorder %s14, 0
    %p77 = por %p75, %p76
    %p78 = scmp.ne.s32.totalorder %s66, %s67
    %p79 = scmp.eq.s32.totalorder %s15, 1
    %p80 = por %p78, %p79
    %p82 = scmp.ne.s32.totalorder %s67, %s81
    %p83 = scmp.eq.s32.totalorder %s15, 0
    %p84 = por %p82, %p83
    %s85 = ssub.s32 %s9, %s16
    %p86 = scmp.eq.s32.totalorder %s85, 0
    %s88 = sadd.s32 %s87, 1
    %s89 = scalar_select %p86, %s87, %s88
    %p92 = pneg %p86
    %p93 = scmp.eq.s32.totalorder %s9, 1
    %p94 = por %p92, %p93
    %p95 = scmp.ne.s32.totalorder %s87, %s90
    %p96 = scmp.eq.s32.totalorder %s9, 0
    %p97 = por %p95, %p96
    %p98 = scmp.ne.s32.totalorder %s87, %s90
    %p99 = scmp.eq.s32.totalorder %s14, 1
    %p100 = por %p98, %p99
    %p101 = scmp.ne.s32.totalorder %s90, %s91
    %p102 = scmp.eq.s32.totalorder %s14, 0
    %p103 = por %p101, %p102
    %p104 = scmp.ne.s32.totalorder %s90, %s91
    %p105 = scmp.eq.s32.totalorder %s15, 1
    %p106 = por %p104, %p105
    %p108 = scmp.ne.s32.totalorder %s91, %s107
    %p109 = scmp.eq.s32.totalorder %s15, 0
    %p110 = por %p108, %p109
    %p111 = scmp.le.s32.totalorder 1, %s9
    %p112 = scmp.lt.s32.totalorder %s9, 3
    %p113 = pnand %p111, %p112
    %p114 = pneg %p113
    // Predicated region
    $region9: #{_lambda_.2} parent=5 // pred_check
      _
    $region10: #{_lambda_.2} parent=5 // pred_check_branch
      %116 = sbr.rel (%p113) target = $region12
    $region11: #{_lambda_.2} parent=5 // pred_region
      %s117 = ssub.s32 %s9, 1
      // Predicated region
      $region13: #{_lambda_.2} parent=11 // pred_check
        %p118 = pneg %p56
      $region14: #{_lambda_.2} parent=11 // pred_check_branch
        %120 = sbr.rel (%p118) target = $region16
      $region15: #{_lambda_.2} parent=11 // pred_region
        _
      $region16: #{_lambda_.2} parent=11 // pred_fallthru
        _
      // Predicated region
      $region17: #{_lambda_.2} parent=11 // pred_check
        %p121 = pneg %p77
      $region18: #{_lambda_.2} parent=11 // pred_check_branch
        %123 = sbr.rel (%p121) target = $region20
      $region19: #{_lambda_.2} parent=11 // pred_region
        _
      $region20: #{_lambda_.2} parent=11 // pred_fallthru
        _
    $region12: #{_lambda_.2} parent=5 // pred_fallthru
      _
    %p124 = scmp.lt.s32.totalorder %s9, 2
    // Predicated region
    $region21: #{_lambda_.2} parent=5 // pred_check
      %p125 = pneg %p124
    $region22: #{_lambda_.2} parent=5 // pred_check_branch
      %127 = sbr.rel (%p125) target = $region24
    $region23: #{_lambda_.2} parent=5 // pred_region
      // Predicated region
      $region25: #{_lambda_.2} parent=23 // pred_check
        %p128 = pneg %p29
      $region26: #{_lambda_.2} parent=23 // pred_check_branch
        %130 = sbr.rel (%p128) target = $region28
      $region27: #{_lambda_.2} parent=23 // pred_region
        %s131 = smul.u32 4, %s9
        %p132 = scmp.lt.s32.totalorder %s131, 7
        %s133 = scalar_select %p132, %s131, 7
        %s134 = smul.addr %s133, 18
        %s135 = smul.addr %s134, 4
        %s136 = scalar_lea.vmem %s0, %s135
        %s137 = smul.u32 4, %s9
      $region28: #{_lambda_.2} parent=23 // pred_fallthru
        _
    $region24: #{_lambda_.2} parent=5 // pred_fallthru
      _
    %p138 = scmp.le.s32.totalorder 1, %s9
    %p139 = scmp.lt.s32.totalorder %s9, 3
    %p140 = pnand %p138, %p139
    %p141 = pneg %p140
    // Predicated region
    $region29: #{_lambda_.2} parent=5 // pred_check
      _
    $region30: #{_lambda_.2} parent=5 // pred_check_branch
      %143 = sbr.rel (%p140) target = $region32
    $region31: #{_lambda_.2} parent=5 // pred_region
      %s144 = ssub.s32 %s9, 1
      %s145 = smul.u32 4, %s14
      %p146 = scmp.lt.s32.totalorder %s145, 7
      %s147 = scalar_select %p146, %s145, 7
      %s148 = smul.addr %s147, 18
      %s149 = smul.addr %s148, 4
      %s150 = scalar_lea.vmem %s0, %s149
      %p151 = pneg %p35
      %p152 = pneg %p32
      %p153 = pneg %p56
      %p154 = pneg %p53
      %p155 = pneg %p77
      %p156 = pneg %p74
      %p157 = pneg %p103
      %p158 = pneg %p100
      %p159 = scmp.lt.s32.totalorder %s14, 1
      %s160 = scalar_select %p159, %s14, 1
      %s161 = smul.addr %s160, 20
      %s162 = smul.addr %s161, 4
      %s163 = scalar_lea.vmem %s3, %s162
      %s164 = smul.u32 4, %s14
      %p165 = scmp.lt.s32.totalorder %s164, 7
      %s166 = scalar_select %p165, %s164, 7
      %s167 = smul.addr %s166, 18
      %s168 = smul.addr %s167, 4
      %s169 = scalar_lea.vmem %s0, %s168
      %s170 = smul.u32 4, %s14
      %p171 = scmp.lt.s32.totalorder %s14, 1
      %s172 = scalar_select %p171, %s14, 1
      %s173 = smul.addr %s172, 20
      %s174 = smul.addr %s173, 4
      %s175 = scalar_lea.vmem %s3, %s174
      %v177 = vld [vmem:[%s169] sm:$0xf]
      %v178 = vld [vmem:[%s169 + $0x8] sm:$0xf]
      %v179 = vld [vmem:[%s169 + $0x10] sm:$0xf]
      %v180 = vld [vmem:[%s169 + $0x18] sm:$0xf]
      %v181 = vld [vmem:[%s169 + $0x20] sm:$0xf]
      %v182 = vld [vmem:[%s169 + $0x28] sm:$0xf]
      %v183 = vld [vmem:[%s169 + $0x30] sm:$0xf]
      %v184 = vld [vmem:[%s169 + $0x38] sm:$0xf]
      %v185 = vld [vmem:[%s1] sm:$0xf]
      %s186 = scalar_lea.vmem %s169, 72
      %v187 = vld [vmem:[%s186] sm:$0xf]
      %v188 = vld [vmem:[%s186 + $0x8] sm:$0xf]
      %v189 = vld [vmem:[%s186 + $0x10] sm:$0xf]
      %v190 = vld [vmem:[%s186 + $0x18] sm:$0xf]
      %v191 = vld [vmem:[%s186 + $0x20] sm:$0xf]
      %v192 = vld [vmem:[%s186 + $0x28] sm:$0xf]
      %v193 = vld [vmem:[%s186 + $0x30] sm:$0xf]
      %v194 = vld [vmem:[%s186 + $0x38] sm:$0xf]
      %v195 = vld [vmem:[%s1 + $0x4] sm:$0xf]
      %v204 = vunpack.c.l.b16 %v187
      %v205 = vunpack.c.l.b16 %v188
      %v206 = vunpack.c.l.b16 %v189
      %v207 = vunpack.c.l.b16 %v190
      %v208 = vunpack.c.l.b16 %v191
      %v209 = vunpack.c.l.b16 %v192
      %v210 = vunpack.c.l.b16 %v193
      %v211 = vunpack.c.l.b16 %v194
      %v212 = vpack.c.b16 %v205, %v204
      %v213 = vpack.c.b16 %v207, %v206
      %v214 = vpack.c.b16 %v209, %v208
      %v215 = vpack.c.b16 %v211, %v210
      %vm216 = vcmask 64512
      %v218 = vsel %vm216, %v212, 0
      %v221 = vsel %vm216, %v213, 0
      %v224 = vsel %vm216, %v214, 0
      %v227 = vsel %vm216, %v215, 0
      %vm229 = vcmask 1043456
      %v231 = vsel %vm229, %v195, 0
      %233 = vmatpush.bf16.msra.mxu0 0
      %234 = vmatpush.bf16.msra.mxu0 0
      %235 = vmatpush.bf16.msra.mxu0 0
      %236 = vmatpush.bf16.msra.mxu0 0
      %237 = vmatpush.bf16.msra.mxu0 0
      %238 = vmatpush.bf16.msra.mxu0 0
      %239 = vmatpush.bf16.msra.mxu0 0
      %240 = vmatpush.bf16.msra.mxu0 %v231
      %241 = vmatmul.bf16.gmra.mxu0 %v218
      %v242 = vpop.f32.mrf.mxu0
      %v243 = vadd.f32 0.0, %v242
      %v244 = vpop.f32.mrf.mxu0
      %v245 = vadd.f32 0.0, %v244
      %246 = vmatmul.bf16.gmra.mxu0 %v221
      %v247 = vpop.f32.mrf.mxu0
      %v248 = vadd.f32 0.0, %v247
      %v249 = vpop.f32.mrf.mxu0
      %v250 = vadd.f32 0.0, %v249
      %251 = vmatmul.bf16.gmra.mxu0 %v224
      %v252 = vpop.f32.mrf.mxu0
      %v253 = vadd.f32 0.0, %v252
      %v254 = vpop.f32.mrf.mxu0
      %v255 = vadd.f32 0.0, %v254
      %256 = vmatmul.bf16.gmra.mxu0 %v227
      %v257 = vpop.f32.mrf.mxu0
      %v258 = vadd.f32 0.0, %v257
      %v259 = vpop.f32.mrf.mxu0
      %v260 = vadd.f32 0.0, %v259
      %261 = vdwg.mxu0
      %v270 = vunpack.c.l.b16 %v177
      %v271 = vunpack.c.l.b16 %v178
      %v272 = vunpack.c.l.b16 %v179
      %v273 = vunpack.c.l.b16 %v180
      %v274 = vunpack.c.l.b16 %v181
      %v275 = vunpack.c.l.b16 %v182
      %v276 = vunpack.c.l.b16 %v183
      %v277 = vunpack.c.l.b16 %v184
      %v278 = vpack.c.b16 %v271, %v270
      %v279 = vpack.c.b16 %v273, %v272
      %v280 = vpack.c.b16 %v275, %v274
      %v281 = vpack.c.b16 %v277, %v276
      %v283 = vsel %vm216, %v278, 0
      %v286 = vsel %vm216, %v279, 0
      %v289 = vsel %vm216, %v280, 0
      %v292 = vsel %vm216, %v281, 0
      %v295 = vsel %vm229, %v185, 0
      %297 = vmatpush.bf16.msra.mxu0 0
      %298 = vmatpush.bf16.msra.mxu0 0
      %299 = vmatpush.bf16.msra.mxu0 0
      %300 = vmatpush.bf16.msra.mxu0 0
      %301 = vmatpush.bf16.msra.mxu0 0
      %302 = vmatpush.bf16.msra.mxu0 0
      %303 = vmatpush.bf16.msra.mxu0 0
      %304 = vmatpush.bf16.msra.mxu0 %v295
      %305 = vmatmul.bf16.gmra.mxu0 %v283
      %v306 = vpop.f32.mrf.mxu0
      %v307 = vadd.f32 %v243, %v306
      %v308 = vpop.f32.mrf.mxu0
      %v309 = vadd.f32 %v245, %v308
      %310 = vmatmul.bf16.gmra.mxu0 %v286
      %v311 = vpop.f32.mrf.mxu0
      %v312 = vadd.f32 %v248, %v311
      %v313 = vpop.f32.mrf.mxu0
      %v314 = vadd.f32 %v250, %v313
      %315 = vmatmul.bf16.gmra.mxu0 %v289
      %v316 = vpop.f32.mrf.mxu0
      %v317 = vadd.f32 %v253, %v316
      %v318 = vpop.f32.mrf.mxu0
      %v319 = vadd.f32 %v255, %v318
      %320 = vmatmul.bf16.gmra.mxu0 %v292
      %v321 = vpop.f32.mrf.mxu0
      %v322 = vadd.f32 %v258, %v321
      %v323 = vpop.f32.mrf.mxu0
      %v324 = vadd.f32 %v260, %v323
      %325 = vdwg.mxu0
      %v326 = vld [vmem:[%s169] sm:$0xf]
      %v327 = vld [vmem:[%s169 + $0x4] sm:$0x1]
      %v328 = vld [vmem:[%s169 + $0x8] sm:$0xf]
      %v329 = vld [vmem:[%s169 + $0xc] sm:$0x1]
      %v330 = vld [vmem:[%s169 + $0x10] sm:$0xf]
      %v331 = vld [vmem:[%s169 + $0x14] sm:$0x1]
      %v332 = vld [vmem:[%s169 + $0x18] sm:$0xf]
      %v333 = vld [vmem:[%s169 + $0x1c] sm:$0x1]
      %v334 = vld [vmem:[%s169 + $0x20] sm:$0xf]
      %v335 = vld [vmem:[%s169 + $0x24] sm:$0x1]
      %v336 = vld [vmem:[%s169 + $0x28] sm:$0xf]
      %v337 = vld [vmem:[%s169 + $0x2c] sm:$0x1]
      %v338 = vld [vmem:[%s169 + $0x30] sm:$0xf]
      %v339 = vld [vmem:[%s169 + $0x34] sm:$0x1]
      %v340 = vld [vmem:[%s169 + $0x38] sm:$0xf]
      %v341 = vld [vmem:[%s169 + $0x3c] sm:$0x1]
      %vm342 = vsmask.f32 3328
      %vm343 = vsmask.f32 7440
      %vm344 = vmor %vm342, %vm343
      %v346 = vshrl.u32 %v326, 16
      %v348 = vrot.slane %v346, 4
      %v349 = vshll.u32 %v326, 16
      %v351 = vrot.slane %v349, 5
      %v352 = vor.u32 %v348, %v351
      %v353 = vrot.slane %v352, 4
      %v355 = vshll.u32 %v327, 16
      %v357 = vrot.slane %v355, 5
      %v358 = vsel %vm344, %v353, %v357
      %v360 = vshrl.u32 %v328, 16
      %v362 = vrot.slane %v360, 4
      %v363 = vshll.u32 %v328, 16
      %v365 = vrot.slane %v363, 5
      %v366 = vor.u32 %v362, %v365
      %v367 = vrot.slane %v366, 4
      %v369 = vshll.u32 %v329, 16
      %v371 = vrot.slane %v369, 5
      %v372 = vsel %vm344, %v367, %v371
      %v374 = vshrl.u32 %v330, 16
      %v376 = vrot.slane %v374, 4
      %v377 = vshll.u32 %v330, 16
      %v379 = vrot.slane %v377, 5
      %v380 = vor.u32 %v376, %v379
      %v381 = vrot.slane %v380, 4
      %v383 = vshll.u32 %v331, 16
      %v385 = vrot.slane %v383, 5
      %v386 = vsel %vm344, %v381, %v385
      %v388 = vshrl.u32 %v332, 16
      %v390 = vrot.slane %v388, 4
      %v391 = vshll.u32 %v332, 16
      %v393 = vrot.slane %v391, 5
      %v394 = vor.u32 %v390, %v393
      %v395 = vrot.slane %v394, 4
      %v397 = vshll.u32 %v333, 16
      %v399 = vrot.slane %v397, 5
      %v400 = vsel %vm344, %v395, %v399
      %v402 = vshrl.u32 %v334, 16
      %v404 = vrot.slane %v402, 4
      %v405 = vshll.u32 %v334, 16
      %v407 = vrot.slane %v405, 5
      %v408 = vor.u32 %v404, %v407
      %v409 = vrot.slane %v408, 4
      %v411 = vshll.u32 %v335, 16
      %v413 = vrot.slane %v411, 5
      %v414 = vsel %vm344, %v409, %v413
      %v416 = vshrl.u32 %v336, 16
      %v418 = vrot.slane %v416, 4
      %v419 = vshll.u32 %v336, 16
      %v421 = vrot.slane %v419, 5
      %v422 = vor.u32 %v418, %v421
      %v423 = vrot.slane %v422, 4
      %v425 = vshll.u32 %v337, 16
      %v427 = vrot.slane %v425, 5
      %v428 = vsel %vm344, %v423, %v427
      %v430 = vshrl.u32 %v338, 16
      %v432 = vrot.slane %v430, 4
      %v433 = vshll.u32 %v338, 16
      %v435 = vrot.slane %v433, 5
      %v436 = vor.u32 %v432, %v435
      %v437 = vrot.slane %v436, 4
      %v439 = vshll.u32 %v339, 16
      %v441 = vrot.slane %v439, 5
      %v442 = vsel %vm344, %v437, %v441
      %v444 = vshrl.u32 %v340, 16
      %v446 = vrot.slane %v444, 4
      %v447 = vshll.u32 %v340, 16
      %v449 = vrot.slane %v447, 5
      %v450 = vor.u32 %v446, %v449
      %v451 = vrot.slane %v450, 4
      %v453 = vshll.u32 %v341, 16
      %v455 = vrot.slane %v453, 5
      %v456 = vsel %vm344, %v451, %v455
      %v457 = vld [vmem:[%s1 + $0x8] sm:$0xf]
      %v458 = vunpack.c.l.b16 %v358
      %v459 = vunpack.c.l.b16 %v372
      %v460 = vunpack.c.l.b16 %v386
      %v461 = vunpack.c.l.b16 %v400
      %v462 = vunpack.c.l.b16 %v414
      %v463 = vunpack.c.l.b16 %v428
      %v464 = vunpack.c.l.b16 %v442
      %v465 = vunpack.c.l.b16 %v456
      %v466 = vpack.c.b16 %v459, %v458
      %v467 = vpack.c.b16 %v461, %v460
      %v468 = vpack.c.b16 %v463, %v462
      %v469 = vpack.c.b16 %v465, %v464
      %v471 = vsel %vm216, %v466, 0
      %v474 = vsel %vm216, %v467, 0
      %v477 = vsel %vm216, %v468, 0
      %v480 = vsel %vm216, %v469, 0
      %v483 = vsel %vm229, %v457, 0
      %485 = vmatpush.bf16.msra.mxu0 0
      %486 = vmatpush.bf16.msra.mxu0 0
      %487 = vmatpush.bf16.msra.mxu0 0
      %488 = vmatpush.bf16.msra.mxu0 0
      %489 = vmatpush.bf16.msra.mxu0 0
      %490 = vmatpush.bf16.msra.mxu0 0
      %491 = vmatpush.bf16.msra.mxu0 0
      %492 = vmatpush.bf16.msra.mxu0 %v483
      %493 = vmatmul.bf16.gmra.mxu0 %v471
      %v494 = vpop.f32.mrf.mxu0
      %v495 = vadd.f32 0.0, %v494
      %v496 = vpop.f32.mrf.mxu0
      %v497 = vadd.f32 0.0, %v496
      %498 = vmatmul.bf16.gmra.mxu0 %v474
      %v499 = vpop.f32.mrf.mxu0
      %v500 = vadd.f32 0.0, %v499
      %v501 = vpop.f32.mrf.mxu0
      %v502 = vadd.f32 0.0, %v501
      %503 = vmatmul.bf16.gmra.mxu0 %v477
      %v504 = vpop.f32.mrf.mxu0
      %v505 = vadd.f32 0.0, %v504
      %v506 = vpop.f32.mrf.mxu0
      %v507 = vadd.f32 0.0, %v506
      %508 = vmatmul.bf16.gmra.mxu0 %v480
      %v509 = vpop.f32.mrf.mxu0
      %v510 = vadd.f32 0.0, %v509
      %v511 = vpop.f32.mrf.mxu0
      %v512 = vadd.f32 0.0, %v511
      %513 = vdwg.mxu0
      %v514 = vadd.f32 %v307, %v495
      %v515 = vadd.f32 %v309, %v497
      %v516 = vadd.f32 %v312, %v500
      %v517 = vadd.f32 %v314, %v502
      %v518 = vadd.f32 %v317, %v505
      %v519 = vadd.f32 %v319, %v507
      %v520 = vadd.f32 %v322, %v510
      %v521 = vadd.f32 %v324, %v512
      %s522 = scalar_lea.vmem %s169, 144
      %v523 = vld [vmem:[%s522] sm:$0xf]
      %v524 = vld [vmem:[%s522 + $0x8] sm:$0xf]
      %v525 = vld [vmem:[%s522 + $0x10] sm:$0xf]
      %v526 = vld [vmem:[%s522 + $0x18] sm:$0xf]
      %v527 = vld [vmem:[%s522 + $0x20] sm:$0xf]
      %v528 = vld [vmem:[%s522 + $0x28] sm:$0xf]
      %v529 = vld [vmem:[%s522 + $0x30] sm:$0xf]
      %v530 = vld [vmem:[%s522 + $0x38] sm:$0xf]
      %v531 = vld [vmem:[%s1 + $0xc] sm:$0xf]
      %v540 = vunpack.c.l.b16 %v523
      %v541 = vunpack.c.l.b16 %v524
      %v542 = vunpack.c.l.b16 %v525
      %v543 = vunpack.c.l.b16 %v526
      %v544 = vunpack.c.l.b16 %v527
      %v545 = vunpack.c.l.b16 %v528
      %v546 = vunpack.c.l.b16 %v529
      %v547 = vunpack.c.l.b16 %v530
      %v548 = vpack.c.b16 %v541, %v540
      %v549 = vpack.c.b16 %v543, %v542
      %v550 = vpack.c.b16 %v545, %v544
      %v551 = vpack.c.b16 %v547, %v546
      %v553 = vsel %vm216, %v548, 0
      %v556 = vsel %vm216, %v549, 0
      %v559 = vsel %vm216, %v550, 0
      %v562 = vsel %vm216, %v551, 0
      %v565 = vsel %vm229, %v531, 0
      %567 = vmatpush.bf16.msra.mxu0 0
      %568 = vmatpush.bf16.msra.mxu0 0
      %569 = vmatpush.bf16.msra.mxu0 0
      %570 = vmatpush.bf16.msra.mxu0 0
      %571 = vmatpush.bf16.msra.mxu0 0
      %572 = vmatpush.bf16.msra.mxu0 0
      %573 = vmatpush.bf16.msra.mxu0 0
      %574 = vmatpush.bf16.msra.mxu0 %v565
      %575 = vmatmul.bf16.gmra.mxu0 %v553
      %v576 = vpop.f32.mrf.mxu0
      %v577 = vadd.f32 0.0, %v576
      %v578 = vpop.f32.mrf.mxu0
      %v579 = vadd.f32 0.0, %v578
      %580 = vmatmul.bf16.gmra.mxu0 %v556
      %v581 = vpop.f32.mrf.mxu0
      %v582 = vadd.f32 0.0, %v581
      %v583 = vpop.f32.mrf.mxu0
      %v584 = vadd.f32 0.0, %v583
      %585 = vmatmul.bf16.gmra.mxu0 %v559
      %v586 = vpop.f32.mrf.mxu0
      %v587 = vadd.f32 0.0, %v586
      %v588 = vpop.f32.mrf.mxu0
      %v589 = vadd.f32 0.0, %v588
      %590 = vmatmul.bf16.gmra.mxu0 %v562
      %v591 = vpop.f32.mrf.mxu0
      %v592 = vadd.f32 0.0, %v591
      %v593 = vpop.f32.mrf.mxu0
      %v594 = vadd.f32 0.0, %v593
      %595 = vdwg.mxu0
      %v596 = vadd.f32 %v514, %v577
      %v597 = vadd.f32 %v515, %v579
      %v598 = vadd.f32 %v516, %v582
      %v599 = vadd.f32 %v517, %v584
      %v600 = vadd.f32 %v518, %v587
      %v601 = vadd.f32 %v519, %v589
      %v602 = vadd.f32 %v520, %v592
      %v603 = vadd.f32 %v521, %v594
      %s604 = scalar_lea.vmem %s169, 216
      %v605 = vld [vmem:[%s604] sm:$0xf]
      %v606 = vld [vmem:[%s604 + $0x8] sm:$0xf]
      %v607 = vld [vmem:[%s604 + $0x10] sm:$0xf]
      %v608 = vld [vmem:[%s604 + $0x18] sm:$0xf]
      %v609 = vld [vmem:[%s604 + $0x20] sm:$0xf]
      %v610 = vld [vmem:[%s604 + $0x28] sm:$0xf]
      %v611 = vld [vmem:[%s604 + $0x30] sm:$0xf]
      %v612 = vld [vmem:[%s604 + $0x38] sm:$0xf]
      %v613 = vld [vmem:[%s1 + $0x10] sm:$0xf]
      %v622 = vunpack.c.l.b16 %v605
      %v623 = vunpack.c.l.b16 %v606
      %v624 = vunpack.c.l.b16 %v607
      %v625 = vunpack.c.l.b16 %v608
      %v626 = vunpack.c.l.b16 %v609
      %v627 = vunpack.c.l.b16 %v610
      %v628 = vunpack.c.l.b16 %v611
      %v629 = vunpack.c.l.b16 %v612
      %v630 = vpack.c.b16 %v623, %v622
      %v631 = vpack.c.b16 %v625, %v624
      %v632 = vpack.c.b16 %v627, %v626
      %v633 = vpack.c.b16 %v629, %v628
      %v635 = vsel %vm216, %v630, 0
      %v638 = vsel %vm216, %v631, 0
      %v641 = vsel %vm216, %v632, 0
      %v644 = vsel %vm216, %v633, 0
      %v647 = vsel %vm229, %v613, 0
      %649 = vmatpush.bf16.msra.mxu0 0
      %650 = vmatpush.bf16.msra.mxu0 0
      %651 = vmatpush.bf16.msra.mxu0 0
      %652 = vmatpush.bf16.msra.mxu0 0
      %653 = vmatpush.bf16.msra.mxu0 0
      %654 = vmatpush.bf16.msra.mxu0 0
      %655 = vmatpush.bf16.msra.mxu0 0
      %656 = vmatpush.bf16.msra.mxu0 %v647
      %657 = vmatmul.bf16.gmra.mxu0 %v635
      %v658 = vpop.f32.mrf.mxu0
      %v659 = vadd.f32 0.0, %v658
      %v660 = vpop.f32.mrf.mxu0
      %v661 = vadd.f32 0.0, %v660
      %662 = vmatmul.bf16.gmra.mxu0 %v638
      %v663 = vpop.f32.mrf.mxu0
      %v664 = vadd.f32 0.0, %v663
      %v665 = vpop.f32.mrf.mxu0
      %v666 = vadd.f32 0.0, %v665
      %667 = vmatmul.bf16.gmra.mxu0 %v641
      %v668 = vpop.f32.mrf.mxu0
      %v669 = vadd.f32 0.0, %v668
      %v670 = vpop.f32.mrf.mxu0
      %v671 = vadd.f32 0.0, %v670
      %672 = vmatmul.bf16.gmra.mxu0 %v644
      %v673 = vpop.f32.mrf.mxu0
      %v674 = vadd.f32 0.0, %v673
      %v675 = vpop.f32.mrf.mxu0
      %v676 = vadd.f32 0.0, %v675
      %677 = vdwg.mxu0
      %v678 = vadd.f32 %v596, %v659
      %v679 = vadd.f32 %v597, %v661
      %v680 = vadd.f32 %v598, %v664
      %v681 = vadd.f32 %v599, %v666
      %v682 = vadd.f32 %v600, %v669
      %v683 = vadd.f32 %v601, %v671
      %v684 = vadd.f32 %v602, %v674
      %v685 = vadd.f32 %v603, %v676
      %v686 = vld [vmem:[%s522] sm:$0xf]
      %v687 = vld [vmem:[%s522 + $0x4] sm:$0x1]
      %v688 = vld [vmem:[%s522 + $0x8] sm:$0xf]
      %v689 = vld [vmem:[%s522 + $0xc] sm:$0x1]
      %v690 = vld [vmem:[%s522 + $0x10] sm:$0xf]
      %v691 = vld [vmem:[%s522 + $0x14] sm:$0x1]
      %v692 = vld [vmem:[%s522 + $0x18] sm:$0xf]
      %v693 = vld [vmem:[%s522 + $0x1c] sm:$0x1]
      %v694 = vld [vmem:[%s522 + $0x20] sm:$0xf]
      %v695 = vld [vmem:[%s522 + $0x24] sm:$0x1]
      %v696 = vld [vmem:[%s522 + $0x28] sm:$0xf]
      %v697 = vld [vmem:[%s522 + $0x2c] sm:$0x1]
      %v698 = vld [vmem:[%s522 + $0x30] sm:$0xf]
      %v699 = vld [vmem:[%s522 + $0x34] sm:$0x1]
      %v700 = vld [vmem:[%s522 + $0x38] sm:$0xf]
      %v701 = vld [vmem:[%s522 + $0x3c] sm:$0x1]
      %v703 = vshrl.u32 %v686, 16
      %v705 = vrot.slane %v703, 4
      %v706 = vshll.u32 %v686, 16
      %v708 = vrot.slane %v706, 5
      %v709 = vor.u32 %v705, %v708
      %v710 = vrot.slane %v709, 4
      %v712 = vshll.u32 %v687, 16
      %v714 = vrot.slane %v712, 5
      %v715 = vsel %vm344, %v710, %v714
      %v717 = vshrl.u32 %v688, 16
      %v719 = vrot.slane %v717, 4
      %v720 = vshll.u32 %v688, 16
      %v722 = vrot.slane %v720, 5
      %v723 = vor.u32 %v719, %v722
      %v724 = vrot.slane %v723, 4
      %v726 = vshll.u32 %v689, 16
      %v728 = vrot.slane %v726, 5
      %v729 = vsel %vm344, %v724, %v728
      %v731 = vshrl.u32 %v690, 16
      %v733 = vrot.slane %v731, 4
      %v734 = vshll.u32 %v690, 16
      %v736 = vrot.slane %v734, 5
      %v737 = vor.u32 %v733, %v736
      %v738 = vrot.slane %v737, 4
      %v740 = vshll.u32 %v691, 16
      %v742 = vrot.slane %v740, 5
      %v743 = vsel %vm344, %v738, %v742
      %v745 = vshrl.u32 %v692, 16
      %v747 = vrot.slane %v745, 4
      %v748 = vshll.u32 %v692, 16
      %v750 = vrot.slane %v748, 5
      %v751 = vor.u32 %v747, %v750
      %v752 = vrot.slane %v751, 4
      %v754 = vshll.u32 %v693, 16
      %v756 = vrot.slane %v754, 5
      %v757 = vsel %vm344, %v752, %v756
      %v759 = vshrl.u32 %v694, 16
      %v761 = vrot.slane %v759, 4
      %v762 = vshll.u32 %v694, 16
      %v764 = vrot.slane %v762, 5
      %v765 = vor.u32 %v761, %v764
      %v766 = vrot.slane %v765, 4
      %v768 = vshll.u32 %v695, 16
      %v770 = vrot.slane %v768, 5
      %v771 = vsel %vm344, %v766, %v770
      %v773 = vshrl.u32 %v696, 16
      %v775 = vrot.slane %v773, 4
      %v776 = vshll.u32 %v696, 16
      %v778 = vrot.slane %v776, 5
      %v779 = vor.u32 %v775, %v778
      %v780 = vrot.slane %v779, 4
      %v782 = vshll.u32 %v697, 16
      %v784 = vrot.slane %v782, 5
      %v785 = vsel %vm344, %v780, %v784
      %v787 = vshrl.u32 %v698, 16
      %v789 = vrot.slane %v787, 4
      %v790 = vshll.u32 %v698, 16
      %v792 = vrot.slane %v790, 5
      %v793 = vor.u32 %v789, %v792
      %v794 = vrot.slane %v793, 4
      %v796 = vshll.u32 %v699, 16
      %v798 = vrot.slane %v796, 5
      %v799 = vsel %vm344, %v794, %v798
      %v801 = vshrl.u32 %v700, 16
      %v803 = vrot.slane %v801, 4
      %v804 = vshll.u32 %v700, 16
      %v806 = vrot.slane %v804, 5
      %v807 = vor.u32 %v803, %v806
      %v808 = vrot.slane %v807, 4
      %v810 = vshll.u32 %v701, 16
      %v812 = vrot.slane %v810, 5
      %v813 = vsel %vm344, %v808, %v812
      %v814 = vld [vmem:[%s1 + $0x14] sm:$0xf]
      %v815 = vunpack.c.l.b16 %v715
      %v816 = vunpack.c.l.b16 %v729
      %v817 = vunpack.c.l.b16 %v743
      %v818 = vunpack.c.l.b16 %v757
      %v819 = vunpack.c.l.b16 %v771
      %v820 = vunpack.c.l.b16 %v785
      %v821 = vunpack.c.l.b16 %v799
      %v822 = vunpack.c.l.b16 %v813
      %v823 = vpack.c.b16 %v816, %v815
      %v824 = vpack.c.b16 %v818, %v817
      %v825 = vpack.c.b16 %v820, %v819
      %v826 = vpack.c.b16 %v822, %v821
      %v828 = vsel %vm216, %v823, 0
      %v831 = vsel %vm216, %v824, 0
      %v834 = vsel %vm216, %v825, 0
      %v837 = vsel %vm216, %v826, 0
      %v840 = vsel %vm229, %v814, 0
      %842 = vmatpush.bf16.msra.mxu0 0
      %843 = vmatpush.bf16.msra.mxu0 0
      %844 = vmatpush.bf16.msra.mxu0 0
      %845 = vmatpush.bf16.msra.mxu0 0
      %846 = vmatpush.bf16.msra.mxu0 0
      %847 = vmatpush.bf16.msra.mxu0 0
      %848 = vmatpush.bf16.msra.mxu0 0
      %849 = vmatpush.bf16.msra.mxu0 %v840
      %850 = vmatmul.bf16.gmra.mxu0 %v828
      %v851 = vpop.f32.mrf.mxu0
      %v852 = vadd.f32 0.0, %v851
      %v853 = vpop.f32.mrf.mxu0
      %v854 = vadd.f32 0.0, %v853
      %855 = vmatmul.bf16.gmra.mxu0 %v831
      %v856 = vpop.f32.mrf.mxu0
      %v857 = vadd.f32 0.0, %v856
      %v858 = vpop.f32.mrf.mxu0
      %v859 = vadd.f32 0.0, %v858
      %860 = vmatmul.bf16.gmra.mxu0 %v834
      %v861 = vpop.f32.mrf.mxu0
      %v862 = vadd.f32 0.0, %v861
      %v863 = vpop.f32.mrf.mxu0
      %v864 = vadd.f32 0.0, %v863
      %865 = vmatmul.bf16.gmra.mxu0 %v837
      %v866 = vpop.f32.mrf.mxu0
      %v867 = vadd.f32 0.0, %v866
      %v868 = vpop.f32.mrf.mxu0
      %v869 = vadd.f32 0.0, %v868
      %870 = vdwg.mxu0
      %v871 = vadd.f32 %v678, %v852
      %v872 = vadd.f32 %v679, %v854
      %v873 = vadd.f32 %v680, %v857
      %v874 = vadd.f32 %v681, %v859
      %v875 = vadd.f32 %v682, %v862
      %v876 = vadd.f32 %v683, %v864
      %v877 = vadd.f32 %v684, %v867
      %v878 = vadd.f32 %v685, %v869
      %s879 = scalar_lea.vmem %s169, 8
      %v880 = vld [vmem:[%s879] sm:$0xf]
      %v881 = vld [vmem:[%s879 + $0x8] sm:$0xf]
      %v882 = vld [vmem:[%s879 + $0x10] sm:$0xf]
      %v883 = vld [vmem:[%s879 + $0x18] sm:$0xf]
      %v884 = vld [vmem:[%s879 + $0x20] sm:$0xf]
      %v885 = vld [vmem:[%s879 + $0x28] sm:$0xf]
      %v886 = vld [vmem:[%s879 + $0x30] sm:$0xf]
      %v887 = vld [vmem:[%s879 + $0x38] sm:$0xf]
      %v888 = vld [vmem:[%s1 + $0x18] sm:$0xf]
      %v897 = vunpack.c.l.b16 %v880
      %v898 = vunpack.c.l.b16 %v881
      %v899 = vunpack.c.l.b16 %v882
      %v900 = vunpack.c.l.b16 %v883
      %v901 = vunpack.c.l.b16 %v884
      %v902 = vunpack.c.l.b16 %v885
      %v903 = vunpack.c.l.b16 %v886
      %v904 = vunpack.c.l.b16 %v887
      %v905 = vpack.c.b16 %v898, %v897
      %v906 = vpack.c.b16 %v900, %v899
      %v907 = vpack.c.b16 %v902, %v901
      %v908 = vpack.c.b16 %v904, %v903
      %v910 = vsel %vm216, %v905, 0
      %v913 = vsel %vm216, %v906, 0
      %v916 = vsel %vm216, %v907, 0
      %v919 = vsel %vm216, %v908, 0
      %v922 = vsel %vm229, %v888, 0
      %924 = vmatpush.bf16.msra.mxu0 0
      %925 = vmatpush.bf16.msra.mxu0 0
      %926 = vmatpush.bf16.msra.mxu0 0
      %927 = vmatpush.bf16.msra.mxu0 0
      %928 = vmatpush.bf16.msra.mxu0 0
      %929 = vmatpush.bf16.msra.mxu0 0
      %930 = vmatpush.bf16.msra.mxu0 0
      %931 = vmatpush.bf16.msra.mxu0 %v922
      %932 = vmatmul.bf16.gmra.mxu0 %v910
      %v933 = vpop.f32.mrf.mxu0
      %v934 = vadd.f32 0.0, %v933
      %v935 = vpop.f32.mrf.mxu0
      %v936 = vadd.f32 0.0, %v935
      %937 = vmatmul.bf16.gmra.mxu0 %v913
      %v938 = vpop.f32.mrf.mxu0
      %v939 = vadd.f32 0.0, %v938
      %v940 = vpop.f32.mrf.mxu0
      %v941 = vadd.f32 0.0, %v940
      %942 = vmatmul.bf16.gmra.mxu0 %v916
      %v943 = vpop.f32.mrf.mxu0
      %v944 = vadd.f32 0.0, %v943
      %v945 = vpop.f32.mrf.mxu0
      %v946 = vadd.f32 0.0, %v945
      %947 = vmatmul.bf16.gmra.mxu0 %v919
      %v948 = vpop.f32.mrf.mxu0
      %v949 = vadd.f32 0.0, %v948
      %v950 = vpop.f32.mrf.mxu0
      %v951 = vadd.f32 0.0, %v950
      %952 = vdwg.mxu0
      %v953 = vadd.f32 %v871, %v934
      %v954 = vadd.f32 %v872, %v936
      %v955 = vadd.f32 %v873, %v939
      %v956 = vadd.f32 %v874, %v941
      %v957 = vadd.f32 %v875, %v944
      %v958 = vadd.f32 %v876, %v946
      %v959 = vadd.f32 %v877, %v949
      %v960 = vadd.f32 %v878, %v951
      %s961 = scalar_lea.vmem %s169, 80
      %v962 = vld [vmem:[%s961] sm:$0xf]
      %v963 = vld [vmem:[%s961 + $0x8] sm:$0xf]
      %v964 = vld [vmem:[%s961 + $0x10] sm:$0xf]
      %v965 = vld [vmem:[%s961 + $0x18] sm:$0xf]
      %v966 = vld [vmem:[%s961 + $0x20] sm:$0xf]
      %v967 = vld [vmem:[%s961 + $0x28] sm:$0xf]
      %v968 = vld [vmem:[%s961 + $0x30] sm:$0xf]
      %v969 = vld [vmem:[%s961 + $0x38] sm:$0xf]
      %v970 = vld [vmem:[%s1 + $0x1c] sm:$0xf]
      %v979 = vunpack.c.l.b16 %v962
      %v980 = vunpack.c.l.b16 %v963
      %v981 = vunpack.c.l.b16 %v964
      %v982 = vunpack.c.l.b16 %v965
      %v983 = vunpack.c.l.b16 %v966
      %v984 = vunpack.c.l.b16 %v967
      %v985 = vunpack.c.l.b16 %v968
      %v986 = vunpack.c.l.b16 %v969
      %v987 = vpack.c.b16 %v980, %v979
      %v988 = vpack.c.b16 %v982, %v981
      %v989 = vpack.c.b16 %v984, %v983
      %v990 = vpack.c.b16 %v986, %v985
      %v992 = vsel %vm216, %v987, 0
      %v995 = vsel %vm216, %v988, 0
      %v998 = vsel %vm216, %v989, 0
      %v1001 = vsel %vm216, %v990, 0
      %v1004 = vsel %vm229, %v970, 0
      %1006 = vmatpush.bf16.msra.mxu0 0
      %1007 = vmatpush.bf16.msra.mxu0 0
      %1008 = vmatpush.bf16.msra.mxu0 0
      %1009 = vmatpush.bf16.msra.mxu0 0
      %1010 = vmatpush.bf16.msra.mxu0 0
      %1011 = vmatpush.bf16.msra.mxu0 0
      %1012 = vmatpush.bf16.msra.mxu0 0
      %1013 = vmatpush.bf16.msra.mxu0 %v1004
      %1014 = vmatmul.bf16.gmra.mxu0 %v992
      %v1015 = vpop.f32.mrf.mxu0
      %v1016 = vadd.f32 0.0, %v1015
      %v1017 = vpop.f32.mrf.mxu0
      %v1018 = vadd.f32 0.0, %v1017
      %1019 = vmatmul.bf16.gmra.mxu0 %v995
      %v1020 = vpop.f32.mrf.mxu0
      %v1021 = vadd.f32 0.0, %v1020
      %v1022 = vpop.f32.mrf.mxu0
      %v1023 = vadd.f32 0.0, %v1022
      %1024 = vmatmul.bf16.gmra.mxu0 %v998
      %v1025 = vpop.f32.mrf.mxu0
      %v1026 = vadd.f32 0.0, %v1025
      %v1027 = vpop.f32.mrf.mxu0
      %v1028 = vadd.f32 0.0, %v1027
      %1029 = vmatmul.bf16.gmra.mxu0 %v1001
      %v1030 = vpop.f32.mrf.mxu0
      %v1031 = vadd.f32 0.0, %v1030
      %v1032 = vpop.f32.mrf.mxu0
      %v1033 = vadd.f32 0.0, %v1032
      %1034 = vdwg.mxu0
      %v1035 = vadd.f32 %v953, %v1016
      %v1036 = vadd.f32 %v954, %v1018
      %v1037 = vadd.f32 %v955, %v1021
      %v1038 = vadd.f32 %v956, %v1023
      %v1039 = vadd.f32 %v957, %v1026
      %v1040 = vadd.f32 %v958, %v1028
      %v1041 = vadd.f32 %v959, %v1031
      %v1042 = vadd.f32 %v960, %v1033
      %v1043 = vld [vmem:[%s879] sm:$0xf]
      %v1044 = vld [vmem:[%s879 + $0x4] sm:$0x1]
      %v1045 = vld [vmem:[%s879 + $0x8] sm:$0xf]
      %v1046 = vld [vmem:[%s879 + $0xc] sm:$0x1]
      %v1047 = vld [vmem:[%s879 + $0x10] sm:$0xf]
      %v1048 = vld [vmem:[%s879 + $0x14] sm:$0x1]
      %v1049 = vld [vmem:[%s879 + $0x18] sm:$0xf]
      %v1050 = vld [vmem:[%s879 + $0x1c] sm:$0x1]
      %v1051 = vld [vmem:[%s879 + $0x20] sm:$0xf]
      %v1052 = vld [vmem:[%s879 + $0x24] sm:$0x1]
      %v1053 = vld [vmem:[%s879 + $0x28] sm:$0xf]
      %v1054 = vld [vmem:[%s879 + $0x2c] sm:$0x1]
      %v1055 = vld [vmem:[%s879 + $0x30] sm:$0xf]
      %v1056 = vld [vmem:[%s879 + $0x34] sm:$0x1]
      %v1057 = vld [vmem:[%s879 + $0x38] sm:$0xf]
      %v1058 = vld [vmem:[%s879 + $0x3c] sm:$0x1]
      %v1060 = vshrl.u32 %v1043, 16
      %v1062 = vrot.slane %v1060, 4
      %v1063 = vshll.u32 %v1043, 16
      %v1065 = vrot.slane %v1063, 5
      %v1066 = vor.u32 %v1062, %v1065
      %v1067 = vrot.slane %v1066, 4
      %v1069 = vshll.u32 %v1044, 16
      %v1071 = vrot.slane %v1069, 5
      %v1072 = vsel %vm344, %v1067, %v1071
      %v1074 = vshrl.u32 %v1045, 16
      %v1076 = vrot.slane %v1074, 4
      %v1077 = vshll.u32 %v1045, 16
      %v1079 = vrot.slane %v1077, 5
      %v1080 = vor.u32 %v1076, %v1079
      %v1081 = vrot.slane %v1080, 4
      %v1083 = vshll.u32 %v1046, 16
      %v1085 = vrot.slane %v1083, 5
      %v1086 = vsel %vm344, %v1081, %v1085
      %v1088 = vshrl.u32 %v1047, 16
      %v1090 = vrot.slane %v1088, 4
      %v1091 = vshll.u32 %v1047, 16
      %v1093 = vrot.slane %v1091, 5
      %v1094 = vor.u32 %v1090, %v1093
      %v1095 = vrot.slane %v1094, 4
      %v1097 = vshll.u32 %v1048, 16
      %v1099 = vrot.slane %v1097, 5
      %v1100 = vsel %vm344, %v1095, %v1099
      %v1102 = vshrl.u32 %v1049, 16
      %v1104 = vrot.slane %v1102, 4
      %v1105 = vshll.u32 %v1049, 16
      %v1107 = vrot.slane %v1105, 5
      %v1108 = vor.u32 %v1104, %v1107
      %v1109 = vrot.slane %v1108, 4
      %v1111 = vshll.u32 %v1050, 16
      %v1113 = vrot.slane %v1111, 5
      %v1114 = vsel %vm344, %v1109, %v1113
      %v1116 = vshrl.u32 %v1051, 16
      %v1118 = vrot.slane %v1116, 4
      %v1119 = vshll.u32 %v1051, 16
      %v1121 = vrot.slane %v1119, 5
      %v1122 = vor.u32 %v1118, %v1121
      %v1123 = vrot.slane %v1122, 4
      %v1125 = vshll.u32 %v1052, 16
      %v1127 = vrot.slane %v1125, 5
      %v1128 = vsel %vm344, %v1123, %v1127
      %v1130 = vshrl.u32 %v1053, 16
      %v1132 = vrot.slane %v1130, 4
      %v1133 = vshll.u32 %v1053, 16
      %v1135 = vrot.slane %v1133, 5
      %v1136 = vor.u32 %v1132, %v1135
      %v1137 = vrot.slane %v1136, 4
      %v1139 = vshll.u32 %v1054, 16
      %v1141 = vrot.slane %v1139, 5
      %v1142 = vsel %vm344, %v1137, %v1141
      %v1144 = vshrl.u32 %v1055, 16
      %v1146 = vrot.slane %v1144, 4
      %v1147 = vshll.u32 %v1055, 16
      %v1149 = vrot.slane %v1147, 5
      %v1150 = vor.u32 %v1146, %v1149
      %v1151 = vrot.slane %v1150, 4
      %v1153 = vshll.u32 %v1056, 16
      %v1155 = vrot.slane %v1153, 5
      %v1156 = vsel %vm344, %v1151, %v1155
      %v1158 = vshrl.u32 %v1057, 16
      %v1160 = vrot.slane %v1158, 4
      %v1161 = vshll.u32 %v1057, 16
      %v1163 = vrot.slane %v1161, 5
      %v1164 = vor.u32 %v1160, %v1163
      %v1165 = vrot.slane %v1164, 4
      %v1167 = vshll.u32 %v1058, 16
      %v1169 = vrot.slane %v1167, 5
      %v1170 = vsel %vm344, %v1165, %v1169
      %v1171 = vld [vmem:[%s1 + $0x20] sm:$0xf]
      %v1172 = vunpack.c.l.b16 %v1072
      %v1173 = vunpack.c.l.b16 %v1086
      %v1174 = vunpack.c.l.b16 %v1100
      %v1175 = vunpack.c.l.b16 %v1114
      %v1176 = vunpack.c.l.b16 %v1128
      %v1177 = vunpack.c.l.b16 %v1142
      %v1178 = vunpack.c.l.b16 %v1156
      %v1179 = vunpack.c.l.b16 %v1170
      %v1180 = vpack.c.b16 %v1173, %v1172
      %v1181 = vpack.c.b16 %v1175, %v1174
      %v1182 = vpack.c.b16 %v1177, %v1176
      %v1183 = vpack.c.b16 %v1179, %v1178
      %v1185 = vsel %vm216, %v1180, 0
      %v1188 = vsel %vm216, %v1181, 0
      %v1191 = vsel %vm216, %v1182, 0
      %v1194 = vsel %vm216, %v1183, 0
      %v1197 = vsel %vm229, %v1171, 0
      %1199 = vmatpush.bf16.msra.mxu0 0
      %1200 = vmatpush.bf16.msra.mxu0 0
      %1201 = vmatpush.bf16.msra.mxu0 0
      %1202 = vmatpush.bf16.msra.mxu0 0
      %1203 = vmatpush.bf16.msra.mxu0 0
      %1204 = vmatpush.bf16.msra.mxu0 0
      %1205 = vmatpush.bf16.msra.mxu0 0
      %1206 = vmatpush.bf16.msra.mxu0 %v1197
      %1207 = vmatmul.bf16.gmra.mxu0 %v1185
      %v1208 = vpop.f32.mrf.mxu0
      %v1209 = vadd.f32 0.0, %v1208
      %v1210 = vpop.f32.mrf.mxu0
      %v1211 = vadd.f32 0.0, %v1210
      %1212 = vmatmul.bf16.gmra.mxu0 %v1188
      %v1213 = vpop.f32.mrf.mxu0
      %v1214 = vadd.f32 0.0, %v1213
      %v1215 = vpop.f32.mrf.mxu0
      %v1216 = vadd.f32 0.0, %v1215
      %1217 = vmatmul.bf16.gmra.mxu0 %v1191
      %v1218 = vpop.f32.mrf.mxu0
      %v1219 = vadd.f32 0.0, %v1218
      %v1220 = vpop.f32.mrf.mxu0
      %v1221 = vadd.f32 0.0, %v1220
      %1222 = vmatmul.bf16.gmra.mxu0 %v1194
      %v1223 = vpop.f32.mrf.mxu0
      %v1224 = vadd.f32 0.0, %v1223
      %v1225 = vpop.f32.mrf.mxu0
      %v1226 = vadd.f32 0.0, %v1225
      %1227 = vdwg.mxu0
      %v1228 = vadd.f32 %v1035, %v1209
      %v1229 = vadd.f32 %v1036, %v1211
      %v1230 = vadd.f32 %v1037, %v1214
      %v1231 = vadd.f32 %v1038, %v1216
      %v1232 = vadd.f32 %v1039, %v1219
      %v1233 = vadd.f32 %v1040, %v1221
      %v1234 = vadd.f32 %v1041, %v1224
      %v1235 = vadd.f32 %v1042, %v1226
      %v1236 = vld [vmem:[%s2] sm:$0x1]
      %v1238 = vperm.slane %v1236, 0
      %v1240 = vadd.f32 %v1228, %v1238
      %v1241 = vadd.f32 %v1229, %v1238
      %v1242 = vadd.f32 %v1230, %v1238
      %v1243 = vadd.f32 %v1231, %v1238
      %v1244 = vadd.f32 %v1232, %v1238
      %v1245 = vadd.f32 %v1233, %v1238
      %v1246 = vadd.f32 %v1234, %v1238
      %v1247 = vadd.f32 %v1235, %v1238
      %v1248 = vmax.f32 %v1240, 0.0
      %v1249 = vmax.f32 %v1241, 0.0
      %v1250 = vmax.f32 %v1242, 0.0
      %v1251 = vmax.f32 %v1243, 0.0
      %v1252 = vmax.f32 %v1244, 0.0
      %v1253 = vmax.f32 %v1245, 0.0
      %v1254 = vmax.f32 %v1246, 0.0
      %v1255 = vmax.f32 %v1247, 0.0
      %v1256 = vpack.c.bf16 %v1248, %v1248
      %v1257 = vpack.c.bf16 %v1249, %v1249
      %v1258 = vpack.c.bf16 %v1250, %v1250
      %v1259 = vpack.c.bf16 %v1251, %v1251
      %v1260 = vpack.c.bf16 %v1252, %v1252
      %v1261 = vpack.c.bf16 %v1253, %v1253
      %v1262 = vpack.c.bf16 %v1254, %v1254
      %v1263 = vpack.c.bf16 %v1255, %v1255
      %1264 = vst [vmem:[%s175] sm:$0xf] 0
      %1265 = vst [vmem:[%s175 + $0x4] sm:$0x1] 0
      %1266 = vst [vmem:[%s175 + $0x8] sm:$0xf] 0
      %1267 = vst [vmem:[%s175 + $0xc] sm:$0x1] 0
      %1268 = vst [vmem:[%s175 + $0x10] sm:$0xf] 0
      %1269 = vst [vmem:[%s175 + $0x14] sm:$0x1] 0
      %1270 = vst [vmem:[%s175 + $0x18] sm:$0xf] 0
      %1271 = vst [vmem:[%s175 + $0x1c] sm:$0x1] 0
      %1272 = vst [vmem:[%s175 + $0x20] sm:$0xf] 0
      %1273 = vst [vmem:[%s175 + $0x24] sm:$0x1] 0
      %1274 = vst [vmem:[%s175 + $0x28] sm:$0xf] 0
      %1275 = vst [vmem:[%s175 + $0x2c] sm:$0x1] 0
      %1276 = vst [vmem:[%s175 + $0x30] sm:$0xf] 0
      %1277 = vst [vmem:[%s175 + $0x34] sm:$0x1] 0
      %1278 = vst [vmem:[%s175 + $0x38] sm:$0xf] 0
      %1279 = vst [vmem:[%s175 + $0x3c] sm:$0x1] 0
      %1280 = vst [vmem:[%s175 + $0x40] sm:$0xf] 0
      %1281 = vst [vmem:[%s175 + $0x44] sm:$0x1] 0
      %1282 = vst [vmem:[%s175 + $0x48] sm:$0xf] 0
      %1283 = vst [vmem:[%s175 + $0x4c] sm:$0x1] 0
      %v1285 = vshrl.u32 %v1256, 16
      %v1287 = vrot.slane %v1285, 7
      %v1288 = vshll.u32 %v1256, 16
      %v1290 = vor.u32 %v1287, %v1288
      %v1291 = vrot.slane %v1287, 4
      %v1293 = vshrl.u32 %v1257, 16
      %v1295 = vrot.slane %v1293, 7
      %v1296 = vshll.u32 %v1257, 16
      %v1298 = vor.u32 %v1295, %v1296
      %v1299 = vrot.slane %v1295, 4
      %v1301 = vshrl.u32 %v1258, 16
      %v1303 = vrot.slane %v1301, 7
      %v1304 = vshll.u32 %v1258, 16
      %v1306 = vor.u32 %v1303, %v1304
      %v1307 = vrot.slane %v1303, 4
      %v1309 = vshrl.u32 %v1259, 16
      %v1311 = vrot.slane %v1309, 7
      %v1312 = vshll.u32 %v1259, 16
      %v1314 = vor.u32 %v1311, %v1312
      %v1315 = vrot.slane %v1311, 4
      %v1317 = vshrl.u32 %v1260, 16
      %v1319 = vrot.slane %v1317, 7
      %v1320 = vshll.u32 %v1260, 16
      %v1322 = vor.u32 %v1319, %v1320
      %v1323 = vrot.slane %v1319, 4
      %v1325 = vshrl.u32 %v1261, 16
      %v1327 = vrot.slane %v1325, 7
      %v1328 = vshll.u32 %v1261, 16
      %v1330 = vor.u32 %v1327, %v1328
      %v1331 = vrot.slane %v1327, 4
      %v1333 = vshrl.u32 %v1262, 16
      %v1335 = vrot.slane %v1333, 7
      %v1336 = vshll.u32 %v1262, 16
      %v1338 = vor.u32 %v1335, %v1336
      %v1339 = vrot.slane %v1335, 4
      %v1341 = vshrl.u32 %v1263, 16
      %v1343 = vrot.slane %v1341, 7
      %v1344 = vshll.u32 %v1263, 16
      %v1346 = vor.u32 %v1343, %v1344
      %v1347 = vrot.slane %v1343, 4
      %s1364 = scalar_lea.vmem %s175, 8
      %vm1365 = vcmask 1043456
      %vm1366 = vsmask.f32 7938
      %vm1367 = vmand %vm1365, %vm1366
      %v1368 = vld [vmem:[%s1364] sm:$0xf]
      %v1369 = vsel %vm1367, %v1290, %v1368
      %1370 = vst [vmem:[%s1364] sm:$0xf] %v1369
      %vm1371 = vcmask 1040384
      %vm1372 = vsmask.f32 256
      %vm1373 = vmand %vm1371, %vm1372
      %v1374 = vld [vmem:[%s1364 + $0x4] sm:$0x1]
      %v1375 = vsel %vm1373, %v1291, %v1374
      %1376 = vst [vmem:[%s1364 + $0x4] sm:$0x1] %v1375
      %v1377 = vld [vmem:[%s1364 + $0x8] sm:$0xf]
      %v1378 = vsel %vm1367, %v1298, %v1377
      %1379 = vst [vmem:[%s1364 + $0x8] sm:$0xf] %v1378
      %v1380 = vld [vmem:[%s1364 + $0xc] sm:$0x1]
      %v1381 = vsel %vm1373, %v1299, %v1380
      %1382 = vst [vmem:[%s1364 + $0xc] sm:$0x1] %v1381
      %v1383 = vld [vmem:[%s1364 + $0x10] sm:$0xf]
      %v1384 = vsel %vm1367, %v1306, %v1383
      %1385 = vst [vmem:[%s1364 + $0x10] sm:$0xf] %v1384
      %v1386 = vld [vmem:[%s1364 + $0x14] sm:$0x1]
      %v1387 = vsel %vm1373, %v1307, %v1386
      %1388 = vst [vmem:[%s1364 + $0x14] sm:$0x1] %v1387
      %v1389 = vld [vmem:[%s1364 + $0x18] sm:$0xf]
      %v1390 = vsel %vm1367, %v1314, %v1389
      %1391 = vst [vmem:[%s1364 + $0x18] sm:$0xf] %v1390
      %v1392 = vld [vmem:[%s1364 + $0x1c] sm:$0x1]
      %v1393 = vsel %vm1373, %v1315, %v1392
      %1394 = vst [vmem:[%s1364 + $0x1c] sm:$0x1] %v1393
      %v1395 = vld [vmem:[%s1364 + $0x20] sm:$0xf]
      %v1396 = vsel %vm1367, %v1322, %v1395
      %1397 = vst [vmem:[%s1364 + $0x20] sm:$0xf] %v1396
      %v1398 = vld [vmem:[%s1364 + $0x24] sm:$0x1]
      %v1399 = vsel %vm1373, %v1323, %v1398
      %1400 = vst [vmem:[%s1364 + $0x24] sm:$0x1] %v1399
      %v1401 = vld [vmem:[%s1364 + $0x28] sm:$0xf]
      %v1402 = vsel %vm1367, %v1330, %v1401
      %1403 = vst [vmem:[%s1364 + $0x28] sm:$0xf] %v1402
      %v1404 = vld [vmem:[%s1364 + $0x2c] sm:$0x1]
      %v1405 = vsel %vm1373, %v1331, %v1404
      %1406 = vst [vmem:[%s1364 + $0x2c] sm:$0x1] %v1405
      %v1407 = vld [vmem:[%s1364 + $0x30] sm:$0xf]
      %v1408 = vsel %vm1367, %v1338, %v1407
      %1409 = vst [vmem:[%s1364 + $0x30] sm:$0xf] %v1408
      %v1410 = vld [vmem:[%s1364 + $0x34] sm:$0x1]
      %v1411 = vsel %vm1373, %v1339, %v1410
      %1412 = vst [vmem:[%s1364 + $0x34] sm:$0x1] %v1411
      %v1413 = vld [vmem:[%s1364 + $0x38] sm:$0xf]
      %v1414 = vsel %vm1367, %v1346, %v1413
      %1415 = vst [vmem:[%s1364 + $0x38] sm:$0xf] %v1414
      %v1416 = vld [vmem:[%s1364 + $0x3c] sm:$0x1]
      %v1417 = vsel %vm1373, %v1347, %v1416
      %1418 = vst [vmem:[%s1364 + $0x3c] sm:$0x1] %v1417
      %p1419 = scmp.lt.s32.totalorder %s14, 1
      %s1420 = scalar_select %p1419, %s14, 1
      %s1421 = smul.addr %s1420, 20
      %s1422 = smul.addr %s1421, 4
      %s1423 = scalar_lea.vmem %s3, %s1422
      // Predicated region
      $region33: #{_lambda_.2} parent=31 // pred_check
        %p1424 = pneg %p100
      $region34: #{_lambda_.2} parent=31 // pred_check_branch
        %1426 = sbr.rel (%p1424) target = $region36
      $region35: #{_lambda_.2} parent=31 // pred_region
        _
      $region36: #{_lambda_.2} parent=31 // pred_fallthru
        _
    $region32: #{_lambda_.2} parent=5 // pred_fallthru
      _
    %p1427 = scmp.le.s32.totalorder 2, %s9
    // Predicated region
    $region37: #{_lambda_.2} parent=5 // pred_check
      %p1428 = pneg %p1427
    $region38: #{_lambda_.2} parent=5 // pred_check_branch
      %1430 = sbr.rel (%p1428) target = $region40
    $region39: #{_lambda_.2} parent=5 // pred_region
      %s1431 = ssub.s32 %s9, 2
      // Predicated region
      $region41: #{_lambda_.2} parent=39 // pred_check
        %p1432 = pneg %p106
      $region42: #{_lambda_.2} parent=39 // pred_check_branch
        %1434 = sbr.rel (%p1432) target = $region44
      $region43: #{_lambda_.2} parent=39 // pred_region
        %p1435 = scmp.lt.s32.totalorder %s15, 1
        %s1436 = scalar_select %p1435, %s15, 1
        %s1437 = smul.addr %s1436, 20
        %s1438 = smul.addr %s1437, 4
        %s1439 = scalar_lea.vmem %s3, %s1438
      $region44: #{_lambda_.2} parent=39 // pred_fallthru
        _
    $region40: #{_lambda_.2} parent=5 // pred_fallthru
      _
  $region6: #{_lambda_.2} parent=0 // loop_footer
    %s13 = sadd.s32 1, %s9
  $region7: #{_lambda_.2} parent=0 // loop_footer_branch
    %8 = sbr.rel target = $region3
  $region8: #{_lambda_.2} parent=0 // loop_exit
    _

// kernel: _lambda_.3
$region0: #{_lambda_.3}
  #allocation0 [shape = 'u32[]', space=smem, size = 0x4, offset = 0x4, fixed_abs, tag = 'smem constant byte address 0x4 - core index']
  #allocation1 [shape = 'u32[72,128]{1,0:T(1,128)}', space=vmem, size = 0x9000, scoped, tag = 'internal scratch']
  %s0 = inlined_call_operand.vmem [shape: bf16[2,10,10,128], index: 0, kind: input, shape index: {}]
  %s1 = inlined_call_operand.vmem [shape: bf16[1152,128], index: 1, kind: input, shape index: {}]
  %s2 = inlined_call_operand.vmem [shape: f32[1,128], index: 2, kind: input, shape index: {}]
  %s3 = inlined_call_operand.vmem [shape: f32[64,128], index: 3, kind: input, shape index: {}]
  %s4 = inlined_call_operand.vmem [shape: bf16[128,96], index: 4, kind: input, shape index: {}]
  %s5 = inlined_call_operand.vmem [shape: f32[1,96], index: 5, kind: input, shape index: {}]
  %s6 = inlined_call_operand.vmem [shape: f32[2,1,128], index: 6, kind: output, shape index: {}]
  %s7 = sld [smem:[#allocation0]]
  $region57: #{_lambda_.3} parent=0
    _
  %s9 = ssub.s32 1, %s7
  %s10 = scalar_select 0, %s9, %s7
  loop: start=0, step=1, limit=4
  $region2: #{_lambda_.3} parent=0 // loop_pre_header
    _
  $region3: #{_lambda_.3} parent=0 // loop_header
    %s12 = sphi 0, %s16
    %p13 = scmp.ge.s32.totalorder %s12, 4
    %s22 = sphi 0, %s24
    %s25 = sphi 0, %s22
    %s26 = sphi 0, %s25
    %s42 = sphi 0, %s26
    %s46 = sphi 0, %s46
    %s48 = sphi 0, %s46
    %s49 = sphi 0, %s48
    %s63 = sphi 0, %s49
    %s67 = sphi 0, %s67
    %s69 = sphi 0, %s67
    %s70 = sphi 0, %s69
    %s84 = sphi 0, %s70
    %s88 = sphi 0, %s88
    %s90 = sphi 0, %s88
    %s91 = sphi 0, %s90
    %s105 = sphi 0, %s91
    %s109 = sphi 0, %s109
    %s111 = sphi 0, %s109
    %s112 = sphi 0, %s111
    %s126 = sphi 0, %s112
    %s130 = sphi 0, %s130
    %s132 = sphi 0, %s130
    %s133 = sphi 0, %s132
    %s147 = sphi 0, %s133
    %s153 = sphi 0, %s155
    %s156 = sphi 0, %s153
    %s157 = sphi 0, %s156
    %s173 = sphi 0, %s157
  $region4: #{_lambda_.3} parent=0 // loop_header_branch
    %15 = sbr.rel (%p13) target = $region8
  $region5: #{_lambda_.3} parent=0 // loop_body
    %s17 = ssub.s32 %s12, 1
    %s18 = ssub.s32 %s12, 2
    %s19 = sadd.s32 %s12, 1
    %s20 = ssub.s32 %s12, %s19
    %p21 = scmp.eq.s32.totalorder %s20, 0
    %s23 = sadd.s32 %s22, 1
    %s24 = scalar_select %p21, %s22, %s23
    %p27 = pneg %p21
    %p28 = scmp.eq.s32.totalorder %s12, 1
    %p29 = por %p27, %p28
    %p30 = scmp.ne.s32.totalorder %s22, %s25
    %p31 = scmp.eq.s32.totalorder %s12, 0
    %p32 = por %p30, %p31
    %p33 = scmp.ne.s32.totalorder %s22, %s25
    %p34 = scmp.eq.s32.totalorder %s17, 1
    %p35 = por %p33, %p34
    %p36 = scmp.ne.s32.totalorder %s25, %s26
    %p37 = scmp.eq.s32.totalorder %s17, 0
    %p38 = por %p36, %p37
    %p39 = scmp.ne.s32.totalorder %s25, %s26
    %p40 = scmp.eq.s32.totalorder %s18, 1
    %p41 = por %p39, %p40
    %p43 = scmp.ne.s32.totalorder %s26, %s42
    %p44 = scmp.eq.s32.totalorder %s18, 0
    %p45 = por %p43, %p44
    %s47 = sadd.s32 %s46, 1
    %p50 = scmp.eq.s32.totalorder %s12, 1
    %p51 = scmp.ne.s32.totalorder %s46, %s48
    %p52 = scmp.eq.s32.totalorder %s12, 0
    %p53 = por %p51, %p52
    %p54 = scmp.ne.s32.totalorder %s46, %s48
    %p55 = scmp.eq.s32.totalorder %s17, 1
    %p56 = por %p54, %p55
    %p57 = scmp.ne.s32.totalorder %s48, %s49
    %p58 = scmp.eq.s32.totalorder %s17, 0
    %p59 = por %p57, %p58
    %p60 = scmp.ne.s32.totalorder %s48, %s49
    %p61 = scmp.eq.s32.totalorder %s18, 1
    %p62 = por %p60, %p61
    %p64 = scmp.ne.s32.totalorder %s49, %s63
    %p65 = scmp.eq.s32.totalorder %s18, 0
    %p66 = por %p64, %p65
    %s68 = sadd.s32 %s67, 1
    %p71 = scmp.eq.s32.totalorder %s12, 1
    %p72 = scmp.ne.s32.totalorder %s67, %s69
    %p73 = scmp.eq.s32.totalorder %s12, 0
    %p74 = por %p72, %p73
    %p75 = scmp.ne.s32.totalorder %s67, %s69
    %p76 = scmp.eq.s32.totalorder %s17, 1
    %p77 = por %p75, %p76
    %p78 = scmp.ne.s32.totalorder %s69, %s70
    %p79 = scmp.eq.s32.totalorder %s17, 0
    %p80 = por %p78, %p79
    %p81 = scmp.ne.s32.totalorder %s69, %s70
    %p82 = scmp.eq.s32.totalorder %s18, 1
    %p83 = por %p81, %p82
    %p85 = scmp.ne.s32.totalorder %s70, %s84
    %p86 = scmp.eq.s32.totalorder %s18, 0
    %p87 = por %p85, %p86
    %s89 = sadd.s32 %s88, 1
    %p92 = scmp.eq.s32.totalorder %s12, 1
    %p93 = scmp.ne.s32.totalorder %s88, %s90
    %p94 = scmp.eq.s32.totalorder %s12, 0
    %p95 = por %p93, %p94
    %p96 = scmp.ne.s32.totalorder %s88, %s90
    %p97 = scmp.eq.s32.totalorder %s17, 1
    %p98 = por %p96, %p97
    %p99 = scmp.ne.s32.totalorder %s90, %s91
    %p100 = scmp.eq.s32.totalorder %s17, 0
    %p101 = por %p99, %p100
    %p102 = scmp.ne.s32.totalorder %s90, %s91
    %p103 = scmp.eq.s32.totalorder %s18, 1
    %p104 = por %p102, %p103
    %p106 = scmp.ne.s32.totalorder %s91, %s105
    %p107 = scmp.eq.s32.totalorder %s18, 0
    %p108 = por %p106, %p107
    %s110 = sadd.s32 %s109, 1
    %p113 = scmp.eq.s32.totalorder %s12, 1
    %p114 = scmp.ne.s32.totalorder %s109, %s111
    %p115 = scmp.eq.s32.totalorder %s12, 0
    %p116 = por %p114, %p115
    %p117 = scmp.ne.s32.totalorder %s109, %s111
    %p118 = scmp.eq.s32.totalorder %s17, 1
    %p119 = por %p117, %p118
    %p120 = scmp.ne.s32.totalorder %s111, %s112
    %p121 = scmp.eq.s32.totalorder %s17, 0
    %p122 = por %p120, %p121
    %p123 = scmp.ne.s32.totalorder %s111, %s112
    %p124 = scmp.eq.s32.totalorder %s18, 1
    %p125 = por %p123, %p124
    %p127 = scmp.ne.s32.totalorder %s112, %s126
    %p128 = scmp.eq.s32.totalorder %s18, 0
    %p129 = por %p127, %p128
    %s131 = sadd.s32 %s130, 1
    %p134 = scmp.eq.s32.totalorder %s12, 1
    %p135 = scmp.ne.s32.totalorder %s130, %s132
    %p136 = scmp.eq.s32.totalorder %s12, 0
    %p137 = por %p135, %p136
    %p138 = scmp.ne.s32.totalorder %s130, %s132
    %p139 = scmp.eq.s32.totalorder %s17, 1
    %p140 = por %p138, %p139
    %p141 = scmp.ne.s32.totalorder %s132, %s133
    %p142 = scmp.eq.s32.totalorder %s17, 0
    %p143 = por %p141, %p142
    %p144 = scmp.ne.s32.totalorder %s132, %s133
    %p145 = scmp.eq.s32.totalorder %s18, 1
    %p146 = por %p144, %p145
    %p148 = scmp.ne.s32.totalorder %s133, %s147
    %p149 = scmp.eq.s32.totalorder %s18, 0
    %p150 = por %p148, %p149
    %s151 = ssub.s32 %s12, %s19
    %p152 = scmp.eq.s32.totalorder %s151, 0
    %s154 = sadd.s32 %s153, 1
    %s155 = scalar_select %p152, %s153, %s154
    %p158 = pneg %p152
    %p159 = scmp.eq.s32.totalorder %s12, 1
    %p160 = por %p158, %p159
    %p161 = scmp.ne.s32.totalorder %s153, %s156
    %p162 = scmp.eq.s32.totalorder %s12, 0
    %p163 = por %p161, %p162
    %p164 = scmp.ne.s32.totalorder %s153, %s156
    %p165 = scmp.eq.s32.totalorder %s17, 1
    %p166 = por %p164, %p165
    %p167 = scmp.ne.s32.totalorder %s156, %s157
    %p168 = scmp.eq.s32.totalorder %s17, 0
    %p169 = por %p167, %p168
    %p170 = scmp.ne.s32.totalorder %s156, %s157
    %p171 = scmp.eq.s32.totalorder %s18, 1
    %p172 = por %p170, %p171
    %p174 = scmp.ne.s32.totalorder %s157, %s173
    %p175 = scmp.eq.s32.totalorder %s18, 0
    %p176 = por %p174, %p175
    %p177 = scmp.le.s32.totalorder 1, %s12
    %p178 = scmp.lt.s32.totalorder %s12, 3
    %p179 = pnand %p177, %p178
    %p180 = pneg %p179
    // Predicated region
    $region9: #{_lambda_.3} parent=5 // pred_check
      _
    $region10: #{_lambda_.3} parent=5 // pred_check_branch
      %182 = sbr.rel (%p179) target = $region12
    $region11: #{_lambda_.3} parent=5 // pred_region
      %s183 = ssub.s32 %s12, 1
      // Predicated region
      $region13: #{_lambda_.3} parent=11 // pred_check
        %p184 = pneg %p59
      $region14: #{_lambda_.3} parent=11 // pred_check_branch
        %186 = sbr.rel (%p184) target = $region16
      $region15: #{_lambda_.3} parent=11 // pred_region
        _
      $region16: #{_lambda_.3} parent=11 // pred_fallthru
        _
      // Predicated region
      $region17: #{_lambda_.3} parent=11 // pred_check
        %p187 = pneg %p80
      $region18: #{_lambda_.3} parent=11 // pred_check_branch
        %189 = sbr.rel (%p187) target = $region20
      $region19: #{_lambda_.3} parent=11 // pred_region
        _
      $region20: #{_lambda_.3} parent=11 // pred_fallthru
        _
      // Predicated region
      $region21: #{_lambda_.3} parent=11 // pred_check
        %p190 = pneg %p101
      $region22: #{_lambda_.3} parent=11 // pred_check_branch
        %192 = sbr.rel (%p190) target = $region24
      $region23: #{_lambda_.3} parent=11 // pred_region
        _
      $region24: #{_lambda_.3} parent=11 // pred_fallthru
        _
      // Predicated region
      $region25: #{_lambda_.3} parent=11 // pred_check
        %p193 = pneg %p122
      $region26: #{_lambda_.3} parent=11 // pred_check_branch
        %195 = sbr.rel (%p193) target = $region28
      $region27: #{_lambda_.3} parent=11 // pred_region
        _
      $region28: #{_lambda_.3} parent=11 // pred_fallthru
        _
      // Predicated region
      $region29: #{_lambda_.3} parent=11 // pred_check
        %p196 = pneg %p143
      $region30: #{_lambda_.3} parent=11 // pred_check_branch
        %198 = sbr.rel (%p196) target = $region32
      $region31: #{_lambda_.3} parent=11 // pred_region
        _
      $region32: #{_lambda_.3} parent=11 // pred_fallthru
        _
    $region12: #{_lambda_.3} parent=5 // pred_fallthru
      _
    %p199 = scmp.lt.s32.totalorder %s12, 2
    // Predicated region
    $region33: #{_lambda_.3} parent=5 // pred_check
      %p200 = pneg %p199
    $region34: #{_lambda_.3} parent=5 // pred_check_branch
      %202 = sbr.rel (%p200) target = $region36
    $region35: #{_lambda_.3} parent=5 // pred_region
      // Predicated region
      $region37: #{_lambda_.3} parent=35 // pred_check
        %p203 = pneg %p32
      $region38: #{_lambda_.3} parent=35 // pred_check_branch
        %205 = sbr.rel (%p203) target = $region40
      $region39: #{_lambda_.3} parent=35 // pred_region
        %p206 = scmp.lt.s32.totalorder %s12, 1
        %s207 = scalar_select %p206, %s12, 1
        %s208 = smul.addr %s207, 20
        %s209 = smul.addr %s208, 4
        %s210 = scalar_lea.vmem %s0, %s209
      $region40: #{_lambda_.3} parent=35 // pred_fallthru
        _
    $region36: #{_lambda_.3} parent=5 // pred_fallthru
      _
    %p211 = scmp.le.s32.totalorder 1, %s12
    %p212 = scmp.lt.s32.totalorder %s12, 3
    %p213 = pnand %p211, %p212
    %p214 = pneg %p213
    // Predicated region
    $region41: #{_lambda_.3} parent=5 // pred_check
      _
    $region42: #{_lambda_.3} parent=5 // pred_check_branch
      %216 = sbr.rel (%p213) target = $region44
    $region43: #{_lambda_.3} parent=5 // pred_region
      %s217 = ssub.s32 %s12, 1
      %p218 = scmp.lt.s32.totalorder %s17, 1
      %s219 = scalar_select %p218, %s17, 1
      %s220 = smul.addr %s219, 20
      %s221 = smul.addr %s220, 4
      %s222 = scalar_lea.vmem %s0, %s221
      %p223 = pneg %p38
      %p224 = pneg %p35
      %p225 = pneg %p59
      %p226 = pneg %p56
      %p227 = pneg %p80
      %p228 = pneg %p77
      %p229 = pneg %p101
      %p230 = pneg %p98
      %p231 = pneg %p122
      %p232 = pneg %p119
      %p233 = pneg %p143
      %p234 = pneg %p140
      %p235 = pneg %p169
      %p236 = pneg %p166
      %p237 = scmp.lt.s32.totalorder %s17, 1
      %s238 = scalar_select %p237, %s17, 1
      %s239 = scalar_lea.vmem %s6, %s238
      %p240 = scmp.lt.s32.totalorder %s17, 1
      %s241 = scalar_select %p240, %s17, 1
      %s242 = smul.addr %s241, 20
      %s243 = smul.addr %s242, 4
      %s244 = scalar_lea.vmem %s0, %s243
      %p245 = scmp.lt.s32.totalorder %s17, 1
      %s246 = scalar_select %p245, %s17, 1
      %s247 = scalar_lea.vmem %s6, %s246
      %v248 = vld [vmem:[%s244] sm:$0xf]
      %v249 = vld [vmem:[%s244 + $0x8] sm:$0xf]
      %v250 = vld [vmem:[%s244 + $0x10] sm:$0xf]
      %v251 = vld [vmem:[%s244 + $0x18] sm:$0xf]
      %v252 = vld [vmem:[%s244 + $0x20] sm:$0xf]
      %v253 = vld [vmem:[%s244 + $0x28] sm:$0xf]
      %v254 = vld [vmem:[%s244 + $0x30] sm:$0xf]
      %v255 = vld [vmem:[%s244 + $0x38] sm:$0xf]
      %v256 = vld [vmem:[%s1] sm:$0xf]
      %v257 = vld [vmem:[%s1 + $0x4] sm:$0xf]
      %v258 = vld [vmem:[%s1 + $0x8] sm:$0xf]
      %v259 = vld [vmem:[%s1 + $0xc] sm:$0xf]
      %v260 = vld [vmem:[%s1 + $0x10] sm:$0xf]
      %v261 = vld [vmem:[%s1 + $0x14] sm:$0xf]
      %v262 = vld [vmem:[%s1 + $0x18] sm:$0xf]
      %v263 = vld [vmem:[%s1 + $0x1c] sm:$0xf]
      %v264 = vld [vmem:[%s1 + $0x20] sm:$0xf]
      %v265 = vld [vmem:[%s1 + $0x24] sm:$0xf]
      %v266 = vld [vmem:[%s1 + $0x28] sm:$0xf]
      %v267 = vld [vmem:[%s1 + $0x2c] sm:$0xf]
      %v268 = vld [vmem:[%s1 + $0x30] sm:$0xf]
      %v269 = vld [vmem:[%s1 + $0x34] sm:$0xf]
      %v270 = vld [vmem:[%s1 + $0x38] sm:$0xf]
      %v271 = vld [vmem:[%s1 + $0x3c] sm:$0xf]
      %v272 = vld [vmem:[%s244 + $0x4] sm:$0x1]
      %v273 = vld [vmem:[%s244 + $0xc] sm:$0x1]
      %v274 = vld [vmem:[%s244 + $0x14] sm:$0x1]
      %v275 = vld [vmem:[%s244 + $0x1c] sm:$0x1]
      %v276 = vld [vmem:[%s244 + $0x24] sm:$0x1]
      %v277 = vld [vmem:[%s244 + $0x2c] sm:$0x1]
      %v278 = vld [vmem:[%s244 + $0x34] sm:$0x1]
      %v279 = vld [vmem:[%s244 + $0x3c] sm:$0x1]
      %vm280 = vsmask.f32 3328
      %vm281 = vsmask.f32 7440
      %vm282 = vmor %vm280, %vm281
      %v284 = vshrl.u32 %v248, 16
      %v286 = vrot.slane %v284, 4
      %v287 = vshll.u32 %v248, 16
      %v289 = vrot.slane %v287, 5
      %v290 = vor.u32 %v286, %v289
      %v291 = vrot.slane %v290, 4
      %v293 = vshll.u32 %v272, 16
      %v295 = vrot.slane %v293, 5
      %v296 = vsel %vm282, %v291, %v295
      %v298 = vshrl.u32 %v249, 16
      %v300 = vrot.slane %v298, 4
      %v301 = vshll.u32 %v249, 16
      %v303 = vrot.slane %v301, 5
      %v304 = vor.u32 %v300, %v303
      %v305 = vrot.slane %v304, 4
      %v307 = vshll.u32 %v273, 16
      %v309 = vrot.slane %v307, 5
      %v310 = vsel %vm282, %v305, %v309
      %v312 = vshrl.u32 %v250, 16
      %v314 = vrot.slane %v312, 4
      %v315 = vshll.u32 %v250, 16
      %v317 = vrot.slane %v315, 5
      %v318 = vor.u32 %v314, %v317
      %v319 = vrot.slane %v318, 4
      %v321 = vshll.u32 %v274, 16
      %v323 = vrot.slane %v321, 5
      %v324 = vsel %vm282, %v319, %v323
      %v326 = vshrl.u32 %v251, 16
      %v328 = vrot.slane %v326, 4
      %v329 = vshll.u32 %v251, 16
      %v331 = vrot.slane %v329, 5
      %v332 = vor.u32 %v328, %v331
      %v333 = vrot.slane %v332, 4
      %v335 = vshll.u32 %v275, 16
      %v337 = vrot.slane %v335, 5
      %v338 = vsel %vm282, %v333, %v337
      %v340 = vshrl.u32 %v252, 16
      %v342 = vrot.slane %v340, 4
      %v343 = vshll.u32 %v252, 16
      %v345 = vrot.slane %v343, 5
      %v346 = vor.u32 %v342, %v345
      %v347 = vrot.slane %v346, 4
      %v349 = vshll.u32 %v276, 16
      %v351 = vrot.slane %v349, 5
      %v352 = vsel %vm282, %v347, %v351
      %v354 = vshrl.u32 %v253, 16
      %v356 = vrot.slane %v354, 4
      %v357 = vshll.u32 %v253, 16
      %v359 = vrot.slane %v357, 5
      %v360 = vor.u32 %v356, %v359
      %v361 = vrot.slane %v360, 4
      %v363 = vshll.u32 %v277, 16
      %v365 = vrot.slane %v363, 5
      %v366 = vsel %vm282, %v361, %v365
      %v368 = vshrl.u32 %v254, 16
      %v370 = vrot.slane %v368, 4
      %v371 = vshll.u32 %v254, 16
      %v373 = vrot.slane %v371, 5
      %v374 = vor.u32 %v370, %v373
      %v375 = vrot.slane %v374, 4
      %v377 = vshll.u32 %v278, 16
      %v379 = vrot.slane %v377, 5
      %v380 = vsel %vm282, %v375, %v379
      %v382 = vshrl.u32 %v255, 16
      %v384 = vrot.slane %v382, 4
      %v385 = vshll.u32 %v255, 16
      %v387 = vrot.slane %v385, 5
      %v388 = vor.u32 %v384, %v387
      %v389 = vrot.slane %v388, 4
      %v391 = vshll.u32 %v279, 16
      %v393 = vrot.slane %v391, 5
      %v394 = vsel %vm282, %v389, %v393
      %v395 = vld [vmem:[%s1 + $0x40] sm:$0xf]
      %v396 = vld [vmem:[%s1 + $0x44] sm:$0xf]
      %v397 = vld [vmem:[%s1 + $0x48] sm:$0xf]
      %v398 = vld [vmem:[%s1 + $0x4c] sm:$0xf]
      %v399 = vld [vmem:[%s1 + $0x50] sm:$0xf]
      %v400 = vld [vmem:[%s1 + $0x54] sm:$0xf]
      %v401 = vld [vmem:[%s1 + $0x58] sm:$0xf]
      %v402 = vld [vmem:[%s1 + $0x5c] sm:$0xf]
      %v403 = vld [vmem:[%s1 + $0x60] sm:$0xf]
      %v404 = vld [vmem:[%s1 + $0x64] sm:$0xf]
      %v405 = vld [vmem:[%s1 + $0x68] sm:$0xf]
      %v406 = vld [vmem:[%s1 + $0x6c] sm:$0xf]
      %v407 = vld [vmem:[%s1 + $0x70] sm:$0xf]
      %v408 = vld [vmem:[%s1 + $0x74] sm:$0xf]
      %v409 = vld [vmem:[%s1 + $0x78] sm:$0xf]
      %v410 = vld [vmem:[%s1 + $0x7c] sm:$0xf]
      %v411 = vunpack.c.l.b16 %v296
      %v412 = vunpack.c.l.b16 %v310
      %v413 = vunpack.c.l.b16 %v324
      %v414 = vunpack.c.l.b16 %v338
      %v415 = vunpack.c.l.b16 %v352
      %v416 = vunpack.c.l.b16 %v366
      %v417 = vunpack.c.l.b16 %v380
      %v418 = vunpack.c.l.b16 %v394
      %v419 = vpack.c.b16 %v412, %v411
      %v420 = vpack.c.b16 %v414, %v413
      %v421 = vpack.c.b16 %v416, %v415
      %v422 = vpack.c.b16 %v418, %v417
      %v443 = vunpack.c.l.b16 %v395
      %v444 = vunpack.c.l.b16 %v396
      %v445 = vunpack.c.l.b16 %v397
      %v446 = vunpack.c.l.b16 %v398
      %v447 = vunpack.c.l.b16 %v399
      %v448 = vunpack.c.l.b16 %v400
      %v449 = vunpack.c.l.b16 %v401
      %v450 = vunpack.c.l.b16 %v402
      %v451 = vunpack.c.l.b16 %v403
      %v452 = vunpack.c.l.b16 %v404
      %v453 = vunpack.c.l.b16 %v405
      %v454 = vunpack.c.l.b16 %v406
      %v455 = vunpack.c.l.b16 %v407
      %v456 = vunpack.c.l.b16 %v408
      %v457 = vunpack.c.l.b16 %v409
      %v458 = vunpack.c.l.b16 %v410
      %v459 = vpack.c.b16 %v444, %v443
      %v460 = vpack.c.b16 %v446, %v445
      %v461 = vpack.c.b16 %v448, %v447
      %v462 = vpack.c.b16 %v450, %v449
      %v463 = vpack.c.b16 %v452, %v451
      %v464 = vpack.c.b16 %v454, %v453
      %v465 = vpack.c.b16 %v456, %v455
      %v466 = vpack.c.b16 %v458, %v457
      %475 = vmatpush.bf16.msra.mxu0 %v466
      %476 = vmatpush.bf16.msra.mxu0 %v465
      %477 = vmatpush.bf16.msra.mxu0 %v464
      %478 = vmatpush.bf16.msra.mxu0 %v463
      %479 = vmatpush.bf16.msra.mxu0 %v462
      %480 = vmatpush.bf16.msra.mxu0 %v461
      %481 = vmatpush.bf16.msra.mxu0 %v460
      %482 = vmatpush.bf16.msra.mxu0 %v459
      %483 = vmatmul.bf16.gmra.mxu0 %v419
      %v484 = vpop.f32.mrf.mxu0
      %v485 = vadd.f32 0.0, %v484
      %v486 = vpop.f32.mrf.mxu0
      %v487 = vadd.f32 0.0, %v486
      %488 = vmatmul.bf16.gmra.mxu0 %v420
      %v489 = vpop.f32.mrf.mxu0
      %v490 = vadd.f32 0.0, %v489
      %v491 = vpop.f32.mrf.mxu0
      %v492 = vadd.f32 0.0, %v491
      %493 = vmatmul.bf16.gmra.mxu0 %v421
      %v494 = vpop.f32.mrf.mxu0
      %v495 = vadd.f32 0.0, %v494
      %v496 = vpop.f32.mrf.mxu0
      %v497 = vadd.f32 0.0, %v496
      %498 = vmatmul.bf16.gmra.mxu0 %v422
      %v499 = vpop.f32.mrf.mxu0
      %v500 = vadd.f32 0.0, %v499
      %v501 = vpop.f32.mrf.mxu0
      %v502 = vadd.f32 0.0, %v501
      %503 = vdwg.mxu0
      %v512 = vunpack.c.l.b16 %v248
      %v513 = vunpack.c.l.b16 %v249
      %v514 = vunpack.c.l.b16 %v250
      %v515 = vunpack.c.l.b16 %v251
      %v516 = vunpack.c.l.b16 %v252
      %v517 = vunpack.c.l.b16 %v253
      %v518 = vunpack.c.l.b16 %v254
      %v519 = vunpack.c.l.b16 %v255
      %v520 = vpack.c.b16 %v513, %v512
      %v521 = vpack.c.b16 %v515, %v514
      %v522 = vpack.c.b16 %v517, %v516
      %v523 = vpack.c.b16 %v519, %v518
      %v544 = vunpack.c.l.b16 %v256
      %v545 = vunpack.c.l.b16 %v257
      %v546 = vunpack.c.l.b16 %v258
      %v547 = vunpack.c.l.b16 %v259
      %v548 = vunpack.c.l.b16 %v260
      %v549 = vunpack.c.l.b16 %v261
      %v550 = vunpack.c.l.b16 %v262
      %v551 = vunpack.c.l.b16 %v263
      %v552 = vunpack.c.l.b16 %v264
      %v553 = vunpack.c.l.b16 %v265
      %v554 = vunpack.c.l.b16 %v266
      %v555 = vunpack.c.l.b16 %v267
      %v556 = vunpack.c.l.b16 %v268
      %v557 = vunpack.c.l.b16 %v269
      %v558 = vunpack.c.l.b16 %v270
      %v559 = vunpack.c.l.b16 %v271
      %v560 = vpack.c.b16 %v545, %v544
      %v561 = vpack.c.b16 %v547, %v546
      %v562 = vpack.c.b16 %v549, %v548
      %v563 = vpack.c.b16 %v551, %v550
      %v564 = vpack.c.b16 %v553, %v552
      %v565 = vpack.c.b16 %v555, %v554
      %v566 = vpack.c.b16 %v557, %v556
      %v567 = vpack.c.b16 %v559, %v558
      %576 = vmatpush.bf16.msra.mxu0 %v567
      %577 = vmatpush.bf16.msra.mxu0 %v566
      %578 = vmatpush.bf16.msra.mxu0 %v565
      %579 = vmatpush.bf16.msra.mxu0 %v564
      %580 = vmatpush.bf16.msra.mxu0 %v563
      %581 = vmatpush.bf16.msra.mxu0 %v562
      %582 = vmatpush.bf16.msra.mxu0 %v561
      %583 = vmatpush.bf16.msra.mxu0 %v560
      %584 = vmatmul.bf16.gmra.mxu0 %v520
      %v585 = vpop.f32.mrf.mxu0
      %v586 = vadd.f32 %v485, %v585
      %v587 = vpop.f32.mrf.mxu0
      %v588 = vadd.f32 %v487, %v587
      %589 = vmatmul.bf16.gmra.mxu0 %v521
      %v590 = vpop.f32.mrf.mxu0
      %v591 = vadd.f32 %v490, %v590
      %v592 = vpop.f32.mrf.mxu0
      %v593 = vadd.f32 %v492, %v592
      %594 = vmatmul.bf16.gmra.mxu0 %v522
      %v595 = vpop.f32.mrf.mxu0
      %v596 = vadd.f32 %v495, %v595
      %v597 = vpop.f32.mrf.mxu0
      %v598 = vadd.f32 %v497, %v597
      %599 = vmatmul.bf16.gmra.mxu0 %v523
      %v600 = vpop.f32.mrf.mxu0
      %v601 = vadd.f32 %v500, %v600
      %v602 = vpop.f32.mrf.mxu0
      %v603 = vadd.f32 %v502, %v602
      %604 = vdwg.mxu0
      %v605 = vld [vmem:[%s244] sm:$0xe]
      %v606 = vld [vmem:[%s244 + $0x8] sm:$0xe]
      %v607 = vld [vmem:[%s244 + $0x10] sm:$0xe]
      %v608 = vld [vmem:[%s244 + $0x18] sm:$0xe]
      %v609 = vld [vmem:[%s244 + $0x20] sm:$0xe]
      %v610 = vld [vmem:[%s244 + $0x28] sm:$0xe]
      %v611 = vld [vmem:[%s244 + $0x30] sm:$0xe]
      %v612 = vld [vmem:[%s244 + $0x38] sm:$0xe]
      %vm629 = vcmask 1042432
      %vm630 = vcmask 1046532
      %vm631 = vmor %vm629, %vm630
      %v632 = vrot.slane %v605, 5
      %v633 = vrot.slane %v632, 4
      %v634 = vrot.slane %v272, 5
      %v635 = vsel %vm631, %v633, %v634
      %v636 = vrot.slane %v606, 5
      %v637 = vrot.slane %v636, 4
      %v638 = vrot.slane %v273, 5
      %v639 = vsel %vm631, %v637, %v638
      %v640 = vrot.slane %v607, 5
      %v641 = vrot.slane %v640, 4
      %v642 = vrot.slane %v274, 5
      %v643 = vsel %vm631, %v641, %v642
      %v644 = vrot.slane %v608, 5
      %v645 = vrot.slane %v644, 4
      %v646 = vrot.slane %v275, 5
      %v647 = vsel %vm631, %v645, %v646
      %v648 = vrot.slane %v609, 5
      %v649 = vrot.slane %v648, 4
      %v650 = vrot.slane %v276, 5
      %v651 = vsel %vm631, %v649, %v650
      %v652 = vrot.slane %v610, 5
      %v653 = vrot.slane %v652, 4
      %v654 = vrot.slane %v277, 5
      %v655 = vsel %vm631, %v653, %v654
      %v656 = vrot.slane %v611, 5
      %v657 = vrot.slane %v656, 4
      %v658 = vrot.slane %v278, 5
      %v659 = vsel %vm631, %v657, %v658
      %v660 = vrot.slane %v612, 5
      %v661 = vrot.slane %v660, 4
      %v662 = vrot.slane %v279, 5
      %v663 = vsel %vm631, %v661, %v662
      %v664 = vld [vmem:[%s1 + $0x80] sm:$0xf]
      %v665 = vld [vmem:[%s1 + $0x84] sm:$0xf]
      %v666 = vld [vmem:[%s1 + $0x88] sm:$0xf]
      %v667 = vld [vmem:[%s1 + $0x8c] sm:$0xf]
      %v668 = vld [vmem:[%s1 + $0x90] sm:$0xf]
      %v669 = vld [vmem:[%s1 + $0x94] sm:$0xf]
      %v670 = vld [vmem:[%s1 + $0x98] sm:$0xf]
      %v671 = vld [vmem:[%s1 + $0x9c] sm:$0xf]
      %v672 = vld [vmem:[%s1 + $0xa0] sm:$0xf]
      %v673 = vld [vmem:[%s1 + $0xa4] sm:$0xf]
      %v674 = vld [vmem:[%s1 + $0xa8] sm:$0xf]
      %v675 = vld [vmem:[%s1 + $0xac] sm:$0xf]
      %v676 = vld [vmem:[%s1 + $0xb0] sm:$0xf]
      %v677 = vld [vmem:[%s1 + $0xb4] sm:$0xf]
      %v678 = vld [vmem:[%s1 + $0xb8] sm:$0xf]
      %v679 = vld [vmem:[%s1 + $0xbc] sm:$0xf]
      %v680 = vunpack.c.l.b16 %v635
      %v681 = vunpack.c.l.b16 %v639
      %v682 = vunpack.c.l.b16 %v643
      %v683 = vunpack.c.l.b16 %v647
      %v684 = vunpack.c.l.b16 %v651
      %v685 = vunpack.c.l.b16 %v655
      %v686 = vunpack.c.l.b16 %v659
      %v687 = vunpack.c.l.b16 %v663
      %v688 = vpack.c.b16 %v681, %v680
      %v689 = vpack.c.b16 %v683, %v682
      %v690 = vpack.c.b16 %v685, %v684
      %v691 = vpack.c.b16 %v687, %v686
      %v712 = vunpack.c.l.b16 %v664
      %v713 = vunpack.c.l.b16 %v665
      %v714 = vunpack.c.l.b16 %v666
      %v715 = vunpack.c.l.b16 %v667
      %v716 = vunpack.c.l.b16 %v668
      %v717 = vunpack.c.l.b16 %v669
      %v718 = vunpack.c.l.b16 %v670
      %v719 = vunpack.c.l.b16 %v671
      %v720 = vunpack.c.l.b16 %v672
      %v721 = vunpack.c.l.b16 %v673
      %v722 = vunpack.c.l.b16 %v674
      %v723 = vunpack.c.l.b16 %v675
      %v724 = vunpack.c.l.b16 %v676
      %v725 = vunpack.c.l.b16 %v677
      %v726 = vunpack.c.l.b16 %v678
      %v727 = vunpack.c.l.b16 %v679
      %v728 = vpack.c.b16 %v713, %v712
      %v729 = vpack.c.b16 %v715, %v714
      %v730 = vpack.c.b16 %v717, %v716
      %v731 = vpack.c.b16 %v719, %v718
      %v732 = vpack.c.b16 %v721, %v720
      %v733 = vpack.c.b16 %v723, %v722
      %v734 = vpack.c.b16 %v725, %v724
      %v735 = vpack.c.b16 %v727, %v726
      %744 = vmatpush.bf16.msra.mxu0 %v735
      %745 = vmatpush.bf16.msra.mxu0 %v734
      %746 = vmatpush.bf16.msra.mxu0 %v733
      %747 = vmatpush.bf16.msra.mxu0 %v732
      %748 = vmatpush.bf16.msra.mxu0 %v731
      %749 = vmatpush.bf16.msra.mxu0 %v730
      %750 = vmatpush.bf16.msra.mxu0 %v729
      %751 = vmatpush.bf16.msra.mxu0 %v728
      %752 = vmatmul.bf16.gmra.mxu0 %v688
      %v753 = vpop.f32.mrf.mxu0
      %v754 = vadd.f32 0.0, %v753
      %v755 = vpop.f32.mrf.mxu0
      %v756 = vadd.f32 0.0, %v755
      %757 = vmatmul.bf16.gmra.mxu0 %v689
      %v758 = vpop.f32.mrf.mxu0
      %v759 = vadd.f32 0.0, %v758
      %v760 = vpop.f32.mrf.mxu0
      %v761 = vadd.f32 0.0, %v760
      %762 = vmatmul.bf16.gmra.mxu0 %v690
      %v763 = vpop.f32.mrf.mxu0
      %v764 = vadd.f32 0.0, %v763
      %v765 = vpop.f32.mrf.mxu0
      %v766 = vadd.f32 0.0, %v765
      %767 = vmatmul.bf16.gmra.mxu0 %v691
      %v768 = vpop.f32.mrf.mxu0
      %v769 = vadd.f32 0.0, %v768
      %v770 = vpop.f32.mrf.mxu0
      %v771 = vadd.f32 0.0, %v770
      %772 = vdwg.mxu0
      %v773 = vadd.f32 %v586, %v754
      %v774 = vadd.f32 %v588, %v756
      %v775 = vadd.f32 %v591, %v759
      %v776 = vadd.f32 %v593, %v761
      %v777 = vadd.f32 %v596, %v764
      %v778 = vadd.f32 %v598, %v766
      %v779 = vadd.f32 %v601, %v769
      %v780 = vadd.f32 %v603, %v771
      %s781 = scalar_lea.vmem %s244, 8
      %v782 = vld [vmem:[%s781] sm:$0xf]
      %v783 = vld [vmem:[%s781 + $0x8] sm:$0xf]
      %v784 = vld [vmem:[%s781 + $0x10] sm:$0xf]
      %v785 = vld [vmem:[%s781 + $0x18] sm:$0xf]
      %v786 = vld [vmem:[%s781 + $0x20] sm:$0xf]
      %v787 = vld [vmem:[%s781 + $0x28] sm:$0xf]
      %v788 = vld [vmem:[%s781 + $0x30] sm:$0xf]
      %v789 = vld [vmem:[%s781 + $0x38] sm:$0xf]
      %v790 = vld [vmem:[%s1 + $0xc0] sm:$0xf]
      %v791 = vld [vmem:[%s1 + $0xc4] sm:$0xf]
      %v792 = vld [vmem:[%s1 + $0xc8] sm:$0xf]
      %v793 = vld [vmem:[%s1 + $0xcc] sm:$0xf]
      %v794 = vld [vmem:[%s1 + $0xd0] sm:$0xf]
      %v795 = vld [vmem:[%s1 + $0xd4] sm:$0xf]
      %v796 = vld [vmem:[%s1 + $0xd8] sm:$0xf]
      %v797 = vld [vmem:[%s1 + $0xdc] sm:$0xf]
      %v798 = vld [vmem:[%s1 + $0xe0] sm:$0xf]
      %v799 = vld [vmem:[%s1 + $0xe4] sm:$0xf]
      %v800 = vld [vmem:[%s1 + $0xe8] sm:$0xf]
      %v801 = vld [vmem:[%s1 + $0xec] sm:$0xf]
      %v802 = vld [vmem:[%s1 + $0xf0] sm:$0xf]
      %v803 = vld [vmem:[%s1 + $0xf4] sm:$0xf]
      %v804 = vld [vmem:[%s1 + $0xf8] sm:$0xf]
      %v805 = vld [vmem:[%s1 + $0xfc] sm:$0xf]
      %v814 = vunpack.c.l.b16 %v782
      %v815 = vunpack.c.l.b16 %v783
      %v816 = vunpack.c.l.b16 %v784
      %v817 = vunpack.c.l.b16 %v785
      %v818 = vunpack.c.l.b16 %v786
      %v819 = vunpack.c.l.b16 %v787
      %v820 = vunpack.c.l.b16 %v788
      %v821 = vunpack.c.l.b16 %v789
      %v822 = vpack.c.b16 %v815, %v814
      %v823 = vpack.c.b16 %v817, %v816
      %v824 = vpack.c.b16 %v819, %v818
      %v825 = vpack.c.b16 %v821, %v820
      %v846 = vunpack.c.l.b16 %v790
      %v847 = vunpack.c.l.b16 %v791
      %v848 = vunpack.c.l.b16 %v792
      %v849 = vunpack.c.l.b16 %v793
      %v850 = vunpack.c.l.b16 %v794
      %v851 = vunpack.c.l.b16 %v795
      %v852 = vunpack.c.l.b16 %v796
      %v853 = vunpack.c.l.b16 %v797
      %v854 = vunpack.c.l.b16 %v798
      %v855 = vunpack.c.l.b16 %v799
      %v856 = vunpack.c.l.b16 %v800
      %v857 = vunpack.c.l.b16 %v801
      %v858 = vunpack.c.l.b16 %v802
      %v859 = vunpack.c.l.b16 %v803
      %v860 = vunpack.c.l.b16 %v804
      %v861 = vunpack.c.l.b16 %v805
      %v862 = vpack.c.b16 %v847, %v846
      %v863 = vpack.c.b16 %v849, %v848
      %v864 = vpack.c.b16 %v851, %v850
      %v865 = vpack.c.b16 %v853, %v852
      %v866 = vpack.c.b16 %v855, %v854
      %v867 = vpack.c.b16 %v857, %v856
      %v868 = vpack.c.b16 %v859, %v858
      %v869 = vpack.c.b16 %v861, %v860
      %878 = vmatpush.bf16.msra.mxu0 %v869
      %879 = vmatpush.bf16.msra.mxu0 %v868
      %880 = vmatpush.bf16.msra.mxu0 %v867
      %881 = vmatpush.bf16.msra.mxu0 %v866
      %882 = vmatpush.bf16.msra.mxu0 %v865
      %883 = vmatpush.bf16.msra.mxu0 %v864
      %884 = vmatpush.bf16.msra.mxu0 %v863
      %885 = vmatpush.bf16.msra.mxu0 %v862
      %886 = vmatmul.bf16.gmra.mxu0 %v822
      %v887 = vpop.f32.mrf.mxu0
      %v888 = vadd.f32 0.0, %v887
      %v889 = vpop.f32.mrf.mxu0
      %v890 = vadd.f32 0.0, %v889
      %891 = vmatmul.bf16.gmra.mxu0 %v823
      %v892 = vpop.f32.mrf.mxu0
      %v893 = vadd.f32 0.0, %v892
      %v894 = vpop.f32.mrf.mxu0
      %v895 = vadd.f32 0.0, %v894
      %896 = vmatmul.bf16.gmra.mxu0 %v824
      %v897 = vpop.f32.mrf.mxu0
      %v898 = vadd.f32 0.0, %v897
      %v899 = vpop.f32.mrf.mxu0
      %v900 = vadd.f32 0.0, %v899
      %901 = vmatmul.bf16.gmra.mxu0 %v825
      %v902 = vpop.f32.mrf.mxu0
      %v903 = vadd.f32 0.0, %v902
      %v904 = vpop.f32.mrf.mxu0
      %v905 = vadd.f32 0.0, %v904
      %906 = vdwg.mxu0
      %v907 = vadd.f32 %v773, %v888
      %v908 = vadd.f32 %v774, %v890
      %v909 = vadd.f32 %v775, %v893
      %v910 = vadd.f32 %v776, %v895
      %v911 = vadd.f32 %v777, %v898
      %v912 = vadd.f32 %v778, %v900
      %v913 = vadd.f32 %v779, %v903
      %v914 = vadd.f32 %v780, %v905
      %v915 = vld [vmem:[%s781] sm:$0xf]
      %v916 = vld [vmem:[%s781 + $0x4] sm:$0x1]
      %v917 = vld [vmem:[%s781 + $0x8] sm:$0xf]
      %v918 = vld [vmem:[%s781 + $0xc] sm:$0x1]
      %v919 = vld [vmem:[%s781 + $0x10] sm:$0xf]
      %v920 = vld [vmem:[%s781 + $0x14] sm:$0x1]
      %v921 = vld [vmem:[%s781 + $0x18] sm:$0xf]
      %v922 = vld [vmem:[%s781 + $0x1c] sm:$0x1]
      %v923 = vld [vmem:[%s781 + $0x20] sm:$0xf]
      %v924 = vld [vmem:[%s781 + $0x24] sm:$0x1]
      %v925 = vld [vmem:[%s781 + $0x28] sm:$0xf]
      %v926 = vld [vmem:[%s781 + $0x2c] sm:$0x1]
      %v927 = vld [vmem:[%s781 + $0x30] sm:$0xf]
      %v928 = vld [vmem:[%s781 + $0x34] sm:$0x1]
      %v929 = vld [vmem:[%s781 + $0x38] sm:$0xf]
      %v930 = vld [vmem:[%s781 + $0x3c] sm:$0x1]
      %v932 = vshrl.u32 %v915, 16
      %v934 = vrot.slane %v932, 4
      %v935 = vshll.u32 %v915, 16
      %v937 = vrot.slane %v935, 5
      %v938 = vor.u32 %v934, %v937
      %v939 = vrot.slane %v938, 4
      %v941 = vshll.u32 %v916, 16
      %v943 = vrot.slane %v941, 5
      %v944 = vsel %vm282, %v939, %v943
      %v946 = vshrl.u32 %v917, 16
      %v948 = vrot.slane %v946, 4
      %v949 = vshll.u32 %v917, 16
      %v951 = vrot.slane %v949, 5
      %v952 = vor.u32 %v948, %v951
      %v953 = vrot.slane %v952, 4
      %v955 = vshll.u32 %v918, 16
      %v957 = vrot.slane %v955, 5
      %v958 = vsel %vm282, %v953, %v957
      %v960 = vshrl.u32 %v919, 16
      %v962 = vrot.slane %v960, 4
      %v963 = vshll.u32 %v919, 16
      %v965 = vrot.slane %v963, 5
      %v966 = vor.u32 %v962, %v965
      %v967 = vrot.slane %v966, 4
      %v969 = vshll.u32 %v920, 16
      %v971 = vrot.slane %v969, 5
      %v972 = vsel %vm282, %v967, %v971
      %v974 = vshrl.u32 %v921, 16
      %v976 = vrot.slane %v974, 4
      %v977 = vshll.u32 %v921, 16
      %v979 = vrot.slane %v977, 5
      %v980 = vor.u32 %v976, %v979
      %v981 = vrot.slane %v980, 4
      %v983 = vshll.u32 %v922, 16
      %v985 = vrot.slane %v983, 5
      %v986 = vsel %vm282, %v981, %v985
      %v988 = vshrl.u32 %v923, 16
      %v990 = vrot.slane %v988, 4
      %v991 = vshll.u32 %v923, 16
      %v993 = vrot.slane %v991, 5
      %v994 = vor.u32 %v990, %v993
      %v995 = vrot.slane %v994, 4
      %v997 = vshll.u32 %v924, 16
      %v999 = vrot.slane %v997, 5
      %v1000 = vsel %vm282, %v995, %v999
      %v1002 = vshrl.u32 %v925, 16
      %v1004 = vrot.slane %v1002, 4
      %v1005 = vshll.u32 %v925, 16
      %v1007 = vrot.slane %v1005, 5
      %v1008 = vor.u32 %v1004, %v1007
      %v1009 = vrot.slane %v1008, 4
      %v1011 = vshll.u32 %v926, 16
      %v1013 = vrot.slane %v1011, 5
      %v1014 = vsel %vm282, %v1009, %v1013
      %v1016 = vshrl.u32 %v927, 16
      %v1018 = vrot.slane %v1016, 4
      %v1019 = vshll.u32 %v927, 16
      %v1021 = vrot.slane %v1019, 5
      %v1022 = vor.u32 %v1018, %v1021
      %v1023 = vrot.slane %v1022, 4
      %v1025 = vshll.u32 %v928, 16
      %v1027 = vrot.slane %v1025, 5
      %v1028 = vsel %vm282, %v1023, %v1027
      %v1030 = vshrl.u32 %v929, 16
      %v1032 = vrot.slane %v1030, 4
      %v1033 = vshll.u32 %v929, 16
      %v1035 = vrot.slane %v1033, 5
      %v1036 = vor.u32 %v1032, %v1035
      %v1037 = vrot.slane %v1036, 4
      %v1039 = vshll.u32 %v930, 16
      %v1041 = vrot.slane %v1039, 5
      %v1042 = vsel %vm282, %v1037, %v1041
      %v1043 = vld [vmem:[%s1 + $0x100] sm:$0xf]
      %v1044 = vld [vmem:[%s1 + $0x104] sm:$0xf]
      %v1045 = vld [vmem:[%s1 + $0x108] sm:$0xf]
      %v1046 = vld [vmem:[%s1 + $0x10c] sm:$0xf]
      %v1047 = vld [vmem:[%s1 + $0x110] sm:$0xf]
      %v1048 = vld [vmem:[%s1 + $0x114] sm:$0xf]
      %v1049 = vld [vmem:[%s1 + $0x118] sm:$0xf]
      %v1050 = vld [vmem:[%s1 + $0x11c] sm:$0xf]
      %v1051 = vld [vmem:[%s1 + $0x120] sm:$0xf]
      %v1052 = vld [vmem:[%s1 + $0x124] sm:$0xf]
      %v1053 = vld [vmem:[%s1 + $0x128] sm:$0xf]
      %v1054 = vld [vmem:[%s1 + $0x12c] sm:$0xf]
      %v1055 = vld [vmem:[%s1 + $0x130] sm:$0xf]
      %v1056 = vld [vmem:[%s1 + $0x134] sm:$0xf]
      %v1057 = vld [vmem:[%s1 + $0x138] sm:$0xf]
      %v1058 = vld [vmem:[%s1 + $0x13c] sm:$0xf]
      %v1059 = vunpack.c.l.b16 %v944
      %v1060 = vunpack.c.l.b16 %v958
      %v1061 = vunpack.c.l.b16 %v972
      %v1062 = vunpack.c.l.b16 %v986
      %v1063 = vunpack.c.l.b16 %v1000
      %v1064 = vunpack.c.l.b16 %v1014
      %v1065 = vunpack.c.l.b16 %v1028
      %v1066 = vunpack.c.l.b16 %v1042
      %v1067 = vpack.c.b16 %v1060, %v1059
      %v1068 = vpack.c.b16 %v1062, %v1061
      %v1069 = vpack.c.b16 %v1064, %v1063
      %v1070 = vpack.c.b16 %v1066, %v1065
      %v1091 = vunpack.c.l.b16 %v1043
      %v1092 = vunpack.c.l.b16 %v1044
      %v1093 = vunpack.c.l.b16 %v1045
      %v1094 = vunpack.c.l.b16 %v1046
      %v1095 = vunpack.c.l.b16 %v1047
      %v1096 = vunpack.c.l.b16 %v1048
      %v1097 = vunpack.c.l.b16 %v1049
      %v1098 = vunpack.c.l.b16 %v1050
      %v1099 = vunpack.c.l.b16 %v1051
      %v1100 = vunpack.c.l.b16 %v1052
      %v1101 = vunpack.c.l.b16 %v1053
      %v1102 = vunpack.c.l.b16 %v1054
      %v1103 = vunpack.c.l.b16 %v1055
      %v1104 = vunpack.c.l.b16 %v1056
      %v1105 = vunpack.c.l.b16 %v1057
      %v1106 = vunpack.c.l.b16 %v1058
      %v1107 = vpack.c.b16 %v1092, %v1091
      %v1108 = vpack.c.b16 %v1094, %v1093
      %v1109 = vpack.c.b16 %v1096, %v1095
      %v1110 = vpack.c.b16 %v1098, %v1097
      %v1111 = vpack.c.b16 %v1100, %v1099
      %v1112 = vpack.c.b16 %v1102, %v1101
      %v1113 = vpack.c.b16 %v1104, %v1103
      %v1114 = vpack.c.b16 %v1106, %v1105
      %1123 = vmatpush.bf16.msra.mxu0 %v1114
      %1124 = vmatpush.bf16.msra.mxu0 %v1113
      %1125 = vmatpush.bf16.msra.mxu0 %v1112
      %1126 = vmatpush.bf16.msra.mxu0 %v1111
      %1127 = vmatpush.bf16.msra.mxu0 %v1110
      %1128 = vmatpush.bf16.msra.mxu0 %v1109
      %1129 = vmatpush.bf16.msra.mxu0 %v1108
      %1130 = vmatpush.bf16.msra.mxu0 %v1107
      %1131 = vmatmul.bf16.gmra.mxu0 %v1067
      %v1132 = vpop.f32.mrf.mxu0
      %v1133 = vadd.f32 0.0, %v1132
      %v1134 = vpop.f32.mrf.mxu0
      %v1135 = vadd.f32 0.0, %v1134
      %1136 = vmatmul.bf16.gmra.mxu0 %v1068
      %v1137 = vpop.f32.mrf.mxu0
      %v1138 = vadd.f32 0.0, %v1137
      %v1139 = vpop.f32.mrf.mxu0
      %v1140 = vadd.f32 0.0, %v1139
      %1141 = vmatmul.bf16.gmra.mxu0 %v1069
      %v1142 = vpop.f32.mrf.mxu0
      %v1143 = vadd.f32 0.0, %v1142
      %v1144 = vpop.f32.mrf.mxu0
      %v1145 = vadd.f32 0.0, %v1144
      %1146 = vmatmul.bf16.gmra.mxu0 %v1070
      %v1147 = vpop.f32.mrf.mxu0
      %v1148 = vadd.f32 0.0, %v1147
      %v1149 = vpop.f32.mrf.mxu0
      %v1150 = vadd.f32 0.0, %v1149
      %1151 = vdwg.mxu0
      %v1152 = vadd.f32 %v907, %v1133
      %v1153 = vadd.f32 %v908, %v1135
      %v1154 = vadd.f32 %v909, %v1138
      %v1155 = vadd.f32 %v910, %v1140
      %v1156 = vadd.f32 %v911, %v1143
      %v1157 = vadd.f32 %v912, %v1145
      %v1158 = vadd.f32 %v913, %v1148
      %v1159 = vadd.f32 %v914, %v1150
      %v1160 = vld [vmem:[%s781] sm:$0xe]
      %v1161 = vld [vmem:[%s781 + $0x8] sm:$0xe]
      %v1162 = vld [vmem:[%s781 + $0x10] sm:$0xe]
      %v1163 = vld [vmem:[%s781 + $0x18] sm:$0xe]
      %v1164 = vld [vmem:[%s781 + $0x20] sm:$0xe]
      %v1165 = vld [vmem:[%s781 + $0x28] sm:$0xe]
      %v1166 = vld [vmem:[%s781 + $0x30] sm:$0xe]
      %v1167 = vld [vmem:[%s781 + $0x38] sm:$0xe]
      %v1184 = vrot.slane %v1160, 5
      %v1185 = vrot.slane %v1184, 4
      %v1186 = vrot.slane %v916, 5
      %v1187 = vsel %vm631, %v1185, %v1186
      %v1188 = vrot.slane %v1161, 5
      %v1189 = vrot.slane %v1188, 4
      %v1190 = vrot.slane %v918, 5
      %v1191 = vsel %vm631, %v1189, %v1190
      %v1192 = vrot.slane %v1162, 5
      %v1193 = vrot.slane %v1192, 4
      %v1194 = vrot.slane %v920, 5
      %v1195 = vsel %vm631, %v1193, %v1194
      %v1196 = vrot.slane %v1163, 5
      %v1197 = vrot.slane %v1196, 4
      %v1198 = vrot.slane %v922, 5
      %v1199 = vsel %vm631, %v1197, %v1198
      %v1200 = vrot.slane %v1164, 5
      %v1201 = vrot.slane %v1200, 4
      %v1202 = vrot.slane %v924, 5
      %v1203 = vsel %vm631, %v1201, %v1202
      %v1204 = vrot.slane %v1165, 5
      %v1205 = vrot.slane %v1204, 4
      %v1206 = vrot.slane %v926, 5
      %v1207 = vsel %vm631, %v1205, %v1206
      %v1208 = vrot.slane %v1166, 5
      %v1209 = vrot.slane %v1208, 4
      %v1210 = vrot.slane %v928, 5
      %v1211 = vsel %vm631, %v1209, %v1210
      %v1212 = vrot.slane %v1167, 5
      %v1213 = vrot.slane %v1212, 4
      %v1214 = vrot.slane %v930, 5
      %v1215 = vsel %vm631, %v1213, %v1214
      %v1216 = vld [vmem:[%s1 + $0x140] sm:$0xf]
      %v1217 = vld [vmem:[%s1 + $0x144] sm:$0xf]
      %v1218 = vld [vmem:[%s1 + $0x148] sm:$0xf]
      %v1219 = vld [vmem:[%s1 + $0x14c] sm:$0xf]
      %v1220 = vld [vmem:[%s1 + $0x150] sm:$0xf]
      %v1221 = vld [vmem:[%s1 + $0x154] sm:$0xf]
      %v1222 = vld [vmem:[%s1 + $0x158] sm:$0xf]
      %v1223 = vld [vmem:[%s1 + $0x15c] sm:$0xf]
      %v1224 = vld [vmem:[%s1 + $0x160] sm:$0xf]
      %v1225 = vld [vmem:[%s1 + $0x164] sm:$0xf]
      %v1226 = vld [vmem:[%s1 + $0x168] sm:$0xf]
      %v1227 = vld [vmem:[%s1 + $0x16c] sm:$0xf]
      %v1228 = vld [vmem:[%s1 + $0x170] sm:$0xf]
      %v1229 = vld [vmem:[%s1 + $0x174] sm:$0xf]
      %v1230 = vld [vmem:[%s1 + $0x178] sm:$0xf]
      %v1231 = vld [vmem:[%s1 + $0x17c] sm:$0xf]
      %v1232 = vunpack.c.l.b16 %v1187
      %v1233 = vunpack.c.l.b16 %v1191
      %v1234 = vunpack.c.l.b16 %v1195
      %v1235 = vunpack.c.l.b16 %v1199
      %v1236 = vunpack.c.l.b16 %v1203
      %v1237 = vunpack.c.l.b16 %v1207
      %v1238 = vunpack.c.l.b16 %v1211
      %v1239 = vunpack.c.l.b16 %v1215
      %v1240 = vpack.c.b16 %v1233, %v1232
      %v1241 = vpack.c.b16 %v1235, %v1234
      %v1242 = vpack.c.b16 %v1237, %v1236
      %v1243 = vpack.c.b16 %v1239, %v1238
      %v1264 = vunpack.c.l.b16 %v1216
      %v1265 = vunpack.c.l.b16 %v1217
      %v1266 = vunpack.c.l.b16 %v1218
      %v1267 = vunpack.c.l.b16 %v1219
      %v1268 = vunpack.c.l.b16 %v1220
      %v1269 = vunpack.c.l.b16 %v1221
      %v1270 = vunpack.c.l.b16 %v1222
      %v1271 = vunpack.c.l.b16 %v1223
      %v1272 = vunpack.c.l.b16 %v1224
      %v1273 = vunpack.c.l.b16 %v1225
      %v1274 = vunpack.c.l.b16 %v1226
      %v1275 = vunpack.c.l.b16 %v1227
      %v1276 = vunpack.c.l.b16 %v1228
      %v1277 = vunpack.c.l.b16 %v1229
      %v1278 = vunpack.c.l.b16 %v1230
      %v1279 = vunpack.c.l.b16 %v1231
      %v1280 = vpack.c.b16 %v1265, %v1264
      %v1281 = vpack.c.b16 %v1267, %v1266
      %v1282 = vpack.c.b16 %v1269, %v1268
      %v1283 = vpack.c.b16 %v1271, %v1270
      %v1284 = vpack.c.b16 %v1273, %v1272
      %v1285 = vpack.c.b16 %v1275, %v1274
      %v1286 = vpack.c.b16 %v1277, %v1276
      %v1287 = vpack.c.b16 %v1279, %v1278
      %1296 = vmatpush.bf16.msra.mxu0 %v1287
      %1297 = vmatpush.bf16.msra.mxu0 %v1286
      %1298 = vmatpush.bf16.msra.mxu0 %v1285
      %1299 = vmatpush.bf16.msra.mxu0 %v1284
      %1300 = vmatpush.bf16.msra.mxu0 %v1283
      %1301 = vmatpush.bf16.msra.mxu0 %v1282
      %1302 = vmatpush.bf16.msra.mxu0 %v1281
      %1303 = vmatpush.bf16.msra.mxu0 %v1280
      %1304 = vmatmul.bf16.gmra.mxu0 %v1240
      %v1305 = vpop.f32.mrf.mxu0
      %v1306 = vadd.f32 0.0, %v1305
      %v1307 = vpop.f32.mrf.mxu0
      %v1308 = vadd.f32 0.0, %v1307
      %1309 = vmatmul.bf16.gmra.mxu0 %v1241
      %v1310 = vpop.f32.mrf.mxu0
      %v1311 = vadd.f32 0.0, %v1310
      %v1312 = vpop.f32.mrf.mxu0
      %v1313 = vadd.f32 0.0, %v1312
      %1314 = vmatmul.bf16.gmra.mxu0 %v1242
      %v1315 = vpop.f32.mrf.mxu0
      %v1316 = vadd.f32 0.0, %v1315
      %v1317 = vpop.f32.mrf.mxu0
      %v1318 = vadd.f32 0.0, %v1317
      %1319 = vmatmul.bf16.gmra.mxu0 %v1243
      %v1320 = vpop.f32.mrf.mxu0
      %v1321 = vadd.f32 0.0, %v1320
      %v1322 = vpop.f32.mrf.mxu0
      %v1323 = vadd.f32 0.0, %v1322
      %1324 = vdwg.mxu0
      %v1325 = vadd.f32 %v1152, %v1306
      %v1326 = vadd.f32 %v1153, %v1308
      %v1327 = vadd.f32 %v1154, %v1311
      %v1328 = vadd.f32 %v1155, %v1313
      %v1329 = vadd.f32 %v1156, %v1316
      %v1330 = vadd.f32 %v1157, %v1318
      %v1331 = vadd.f32 %v1158, %v1321
      %v1332 = vadd.f32 %v1159, %v1323
      %s1333 = scalar_lea.vmem %s244, 16
      %v1334 = vld [vmem:[%s1333] sm:$0xf]
      %v1335 = vld [vmem:[%s1333 + $0x8] sm:$0xf]
      %v1336 = vld [vmem:[%s1333 + $0x10] sm:$0xf]
      %v1337 = vld [vmem:[%s1333 + $0x18] sm:$0xf]
      %v1338 = vld [vmem:[%s1333 + $0x20] sm:$0xf]
      %v1339 = vld [vmem:[%s1333 + $0x28] sm:$0xf]
      %v1340 = vld [vmem:[%s1333 + $0x30] sm:$0xf]
      %v1341 = vld [vmem:[%s1333 + $0x38] sm:$0xf]
      %v1342 = vld [vmem:[%s1 + $0x180] sm:$0xf]
      %v1343 = vld [vmem:[%s1 + $0x184] sm:$0xf]
      %v1344 = vld [vmem:[%s1 + $0x188] sm:$0xf]
      %v1345 = vld [vmem:[%s1 + $0x18c] sm:$0xf]
      %v1346 = vld [vmem:[%s1 + $0x190] sm:$0xf]
      %v1347 = vld [vmem:[%s1 + $0x194] sm:$0xf]
      %v1348 = vld [vmem:[%s1 + $0x198] sm:$0xf]
      %v1349 = vld [vmem:[%s1 + $0x19c] sm:$0xf]
      %v1350 = vld [vmem:[%s1 + $0x1a0] sm:$0xf]
      %v1351 = vld [vmem:[%s1 + $0x1a4] sm:$0xf]
      %v1352 = vld [vmem:[%s1 + $0x1a8] sm:$0xf]
      %v1353 = vld [vmem:[%s1 + $0x1ac] sm:$0xf]
      %v1354 = vld [vmem:[%s1 + $0x1b0] sm:$0xf]
      %v1355 = vld [vmem:[%s1 + $0x1b4] sm:$0xf]
      %v1356 = vld [vmem:[%s1 + $0x1b8] sm:$0xf]
      %v1357 = vld [vmem:[%s1 + $0x1bc] sm:$0xf]
      %v1366 = vunpack.c.l.b16 %v1334
      %v1367 = vunpack.c.l.b16 %v1335
      %v1368 = vunpack.c.l.b16 %v1336
      %v1369 = vunpack.c.l.b16 %v1337
      %v1370 = vunpack.c.l.b16 %v1338
      %v1371 = vunpack.c.l.b16 %v1339
      %v1372 = vunpack.c.l.b16 %v1340
      %v1373 = vunpack.c.l.b16 %v1341
      %v1374 = vpack.c.b16 %v1367, %v1366
      %v1375 = vpack.c.b16 %v1369, %v1368
      %v1376 = vpack.c.b16 %v1371, %v1370
      %v1377 = vpack.c.b16 %v1373, %v1372
      %v1398 = vunpack.c.l.b16 %v1342
      %v1399 = vunpack.c.l.b16 %v1343
      %v1400 = vunpack.c.l.b16 %v1344
      %v1401 = vunpack.c.l.b16 %v1345
      %v1402 = vunpack.c.l.b16 %v1346
      %v1403 = vunpack.c.l.b16 %v1347
      %v1404 = vunpack.c.l.b16 %v1348
      %v1405 = vunpack.c.l.b16 %v1349
      %v1406 = vunpack.c.l.b16 %v1350
      %v1407 = vunpack.c.l.b16 %v1351
      %v1408 = vunpack.c.l.b16 %v1352
      %v1409 = vunpack.c.l.b16 %v1353
      %v1410 = vunpack.c.l.b16 %v1354
      %v1411 = vunpack.c.l.b16 %v1355
      %v1412 = vunpack.c.l.b16 %v1356
      %v1413 = vunpack.c.l.b16 %v1357
      %v1414 = vpack.c.b16 %v1399, %v1398
      %v1415 = vpack.c.b16 %v1401, %v1400
      %v1416 = vpack.c.b16 %v1403, %v1402
      %v1417 = vpack.c.b16 %v1405, %v1404
      %v1418 = vpack.c.b16 %v1407, %v1406
      %v1419 = vpack.c.b16 %v1409, %v1408
      %v1420 = vpack.c.b16 %v1411, %v1410
      %v1421 = vpack.c.b16 %v1413, %v1412
      %1430 = vmatpush.bf16.msra.mxu0 %v1421
      %1431 = vmatpush.bf16.msra.mxu0 %v1420
      %1432 = vmatpush.bf16.msra.mxu0 %v1419
      %1433 = vmatpush.bf16.msra.mxu0 %v1418
      %1434 = vmatpush.bf16.msra.mxu0 %v1417
      %1435 = vmatpush.bf16.msra.mxu0 %v1416
      %1436 = vmatpush.bf16.msra.mxu0 %v1415
      %1437 = vmatpush.bf16.msra.mxu0 %v1414
      %1438 = vmatmul.bf16.gmra.mxu0 %v1374
      %v1439 = vpop.f32.mrf.mxu0
      %v1440 = vadd.f32 0.0, %v1439
      %v1441 = vpop.f32.mrf.mxu0
      %v1442 = vadd.f32 0.0, %v1441
      %1443 = vmatmul.bf16.gmra.mxu0 %v1375
      %v1444 = vpop.f32.mrf.mxu0
      %v1445 = vadd.f32 0.0, %v1444
      %v1446 = vpop.f32.mrf.mxu0
      %v1447 = vadd.f32 0.0, %v1446
      %1448 = vmatmul.bf16.gmra.mxu0 %v1376
      %v1449 = vpop.f32.mrf.mxu0
      %v1450 = vadd.f32 0.0, %v1449
      %v1451 = vpop.f32.mrf.mxu0
      %v1452 = vadd.f32 0.0, %v1451
      %1453 = vmatmul.bf16.gmra.mxu0 %v1377
      %v1454 = vpop.f32.mrf.mxu0
      %v1455 = vadd.f32 0.0, %v1454
      %v1456 = vpop.f32.mrf.mxu0
      %v1457 = vadd.f32 0.0, %v1456
      %1458 = vdwg.mxu0
      %v1459 = vadd.f32 %v1325, %v1440
      %v1460 = vadd.f32 %v1326, %v1442
      %v1461 = vadd.f32 %v1327, %v1445
      %v1462 = vadd.f32 %v1328, %v1447
      %v1463 = vadd.f32 %v1329, %v1450
      %v1464 = vadd.f32 %v1330, %v1452
      %v1465 = vadd.f32 %v1331, %v1455
      %v1466 = vadd.f32 %v1332, %v1457
      %v1467 = vld [vmem:[%s1333] sm:$0xf]
      %v1468 = vld [vmem:[%s1333 + $0x4] sm:$0x1]
      %v1469 = vld [vmem:[%s1333 + $0x8] sm:$0xf]
      %v1470 = vld [vmem:[%s1333 + $0xc] sm:$0x1]
      %v1471 = vld [vmem:[%s1333 + $0x10] sm:$0xf]
      %v1472 = vld [vmem:[%s1333 + $0x14] sm:$0x1]
      %v1473 = vld [vmem:[%s1333 + $0x18] sm:$0xf]
      %v1474 = vld [vmem:[%s1333 + $0x1c] sm:$0x1]
      %v1475 = vld [vmem:[%s1333 + $0x20] sm:$0xf]
      %v1476 = vld [vmem:[%s1333 + $0x24] sm:$0x1]
      %v1477 = vld [vmem:[%s1333 + $0x28] sm:$0xf]
      %v1478 = vld [vmem:[%s1333 + $0x2c] sm:$0x1]
      %v1479 = vld [vmem:[%s1333 + $0x30] sm:$0xf]
      %v1480 = vld [vmem:[%s1333 + $0x34] sm:$0x1]
      %v1481 = vld [vmem:[%s1333 + $0x38] sm:$0xf]
      %v1482 = vld [vmem:[%s1333 + $0x3c] sm:$0x1]
      %v1484 = vshrl.u32 %v1467, 16
      %v1486 = vrot.slane %v1484, 4
      %v1487 = vshll.u32 %v1467, 16
      %v1489 = vrot.slane %v1487, 5
      %v1490 = vor.u32 %v1486, %v1489
      %v1491 = vrot.slane %v1490, 4
      %v1493 = vshll.u32 %v1468, 16
      %v1495 = vrot.slane %v1493, 5
      %v1496 = vsel %vm282, %v1491, %v1495
      %v1498 = vshrl.u32 %v1469, 16
      %v1500 = vrot.slane %v1498, 4
      %v1501 = vshll.u32 %v1469, 16
      %v1503 = vrot.slane %v1501, 5
      %v1504 = vor.u32 %v1500, %v1503
      %v1505 = vrot.slane %v1504, 4
      %v1507 = vshll.u32 %v1470, 16
      %v1509 = vrot.slane %v1507, 5
      %v1510 = vsel %vm282, %v1505, %v1509
      %v1512 = vshrl.u32 %v1471, 16
      %v1514 = vrot.slane %v1512, 4
      %v1515 = vshll.u32 %v1471, 16
      %v1517 = vrot.slane %v1515, 5
      %v1518 = vor.u32 %v1514, %v1517
      %v1519 = vrot.slane %v1518, 4
      %v1521 = vshll.u32 %v1472, 16
      %v1523 = vrot.slane %v1521, 5
      %v1524 = vsel %vm282, %v1519, %v1523
      %v1526 = vshrl.u32 %v1473, 16
      %v1528 = vrot.slane %v1526, 4
      %v1529 = vshll.u32 %v1473, 16
      %v1531 = vrot.slane %v1529, 5
      %v1532 = vor.u32 %v1528, %v1531
      %v1533 = vrot.slane %v1532, 4
      %v1535 = vshll.u32 %v1474, 16
      %v1537 = vrot.slane %v1535, 5
      %v1538 = vsel %vm282, %v1533, %v1537
      %v1540 = vshrl.u32 %v1475, 16
      %v1542 = vrot.slane %v1540, 4
      %v1543 = vshll.u32 %v1475, 16
      %v1545 = vrot.slane %v1543, 5
      %v1546 = vor.u32 %v1542, %v1545
      %v1547 = vrot.slane %v1546, 4
      %v1549 = vshll.u32 %v1476, 16
      %v1551 = vrot.slane %v1549, 5
      %v1552 = vsel %vm282, %v1547, %v1551
      %v1554 = vshrl.u32 %v1477, 16
      %v1556 = vrot.slane %v1554, 4
      %v1557 = vshll.u32 %v1477, 16
      %v1559 = vrot.slane %v1557, 5
      %v1560 = vor.u32 %v1556, %v1559
      %v1561 = vrot.slane %v1560, 4
      %v1563 = vshll.u32 %v1478, 16
      %v1565 = vrot.slane %v1563, 5
      %v1566 = vsel %vm282, %v1561, %v1565
      %v1568 = vshrl.u32 %v1479, 16
      %v1570 = vrot.slane %v1568, 4
      %v1571 = vshll.u32 %v1479, 16
      %v1573 = vrot.slane %v1571, 5
      %v1574 = vor.u32 %v1570, %v1573
      %v1575 = vrot.slane %v1574, 4
      %v1577 = vshll.u32 %v1480, 16
      %v1579 = vrot.slane %v1577, 5
      %v1580 = vsel %vm282, %v1575, %v1579
      %v1582 = vshrl.u32 %v1481, 16
      %v1584 = vrot.slane %v1582, 4
      %v1585 = vshll.u32 %v1481, 16
      %v1587 = vrot.slane %v1585, 5
      %v1588 = vor.u32 %v1584, %v1587
      %v1589 = vrot.slane %v1588, 4
      %v1591 = vshll.u32 %v1482, 16
      %v1593 = vrot.slane %v1591, 5
      %v1594 = vsel %vm282, %v1589, %v1593
      %v1595 = vld [vmem:[%s1 + $0x1c0] sm:$0xf]
      %v1596 = vld [vmem:[%s1 + $0x1c4] sm:$0xf]
      %v1597 = vld [vmem:[%s1 + $0x1c8] sm:$0xf]
      %v1598 = vld [vmem:[%s1 + $0x1cc] sm:$0xf]
      %v1599 = vld [vmem:[%s1 + $0x1d0] sm:$0xf]
      %v1600 = vld [vmem:[%s1 + $0x1d4] sm:$0xf]
      %v1601 = vld [vmem:[%s1 + $0x1d8] sm:$0xf]
      %v1602 = vld [vmem:[%s1 + $0x1dc] sm:$0xf]
      %v1603 = vld [vmem:[%s1 + $0x1e0] sm:$0xf]
      %v1604 = vld [vmem:[%s1 + $0x1e4] sm:$0xf]
      %v1605 = vld [vmem:[%s1 + $0x1e8] sm:$0xf]
      %v1606 = vld [vmem:[%s1 + $0x1ec] sm:$0xf]
      %v1607 = vld [vmem:[%s1 + $0x1f0] sm:$0xf]
      %v1608 = vld [vmem:[%s1 + $0x1f4] sm:$0xf]
      %v1609 = vld [vmem:[%s1 + $0x1f8] sm:$0xf]
      %v1610 = vld [vmem:[%s1 + $0x1fc] sm:$0xf]
      %v1611 = vunpack.c.l.b16 %v1496
      %v1612 = vunpack.c.l.b16 %v1510
      %v1613 = vunpack.c.l.b16 %v1524
      %v1614 = vunpack.c.l.b16 %v1538
      %v1615 = vunpack.c.l.b16 %v1552
      %v1616 = vunpack.c.l.b16 %v1566
      %v1617 = vunpack.c.l.b16 %v1580
      %v1618 = vunpack.c.l.b16 %v1594
      %v1619 = vpack.c.b16 %v1612, %v1611
      %v1620 = vpack.c.b16 %v1614, %v1613
      %v1621 = vpack.c.b16 %v1616, %v1615
      %v1622 = vpack.c.b16 %v1618, %v1617
      %v1643 = vunpack.c.l.b16 %v1595
      %v1644 = vunpack.c.l.b16 %v1596
      %v1645 = vunpack.c.l.b16 %v1597
      %v1646 = vunpack.c.l.b16 %v1598
      %v1647 = vunpack.c.l.b16 %v1599
      %v1648 = vunpack.c.l.b16 %v1600
      %v1649 = vunpack.c.l.b16 %v1601
      %v1650 = vunpack.c.l.b16 %v1602
      %v1651 = vunpack.c.l.b16 %v1603
      %v1652 = vunpack.c.l.b16 %v1604
      %v1653 = vunpack.c.l.b16 %v1605
      %v1654 = vunpack.c.l.b16 %v1606
      %v1655 = vunpack.c.l.b16 %v1607
      %v1656 = vunpack.c.l.b16 %v1608
      %v1657 = vunpack.c.l.b16 %v1609
      %v1658 = vunpack.c.l.b16 %v1610
      %v1659 = vpack.c.b16 %v1644, %v1643
      %v1660 = vpack.c.b16 %v1646, %v1645
      %v1661 = vpack.c.b16 %v1648, %v1647
      %v1662 = vpack.c.b16 %v1650, %v1649
      %v1663 = vpack.c.b16 %v1652, %v1651
      %v1664 = vpack.c.b16 %v1654, %v1653
      %v1665 = vpack.c.b16 %v1656, %v1655
      %v1666 = vpack.c.b16 %v1658, %v1657
      %1675 = vmatpush.bf16.msra.mxu0 %v1666
      %1676 = vmatpush.bf16.msra.mxu0 %v1665
      %1677 = vmatpush.bf16.msra.mxu0 %v1664
      %1678 = vmatpush.bf16.msra.mxu0 %v1663
      %1679 = vmatpush.bf16.msra.mxu0 %v1662
      %1680 = vmatpush.bf16.msra.mxu0 %v1661
      %1681 = vmatpush.bf16.msra.mxu0 %v1660
      %1682 = vmatpush.bf16.msra.mxu0 %v1659
      %1683 = vmatmul.bf16.gmra.mxu0 %v1619
      %v1684 = vpop.f32.mrf.mxu0
      %v1685 = vadd.f32 0.0, %v1684
      %v1686 = vpop.f32.mrf.mxu0
      %v1687 = vadd.f32 0.0, %v1686
      %1688 = vmatmul.bf16.gmra.mxu0 %v1620
      %v1689 = vpop.f32.mrf.mxu0
      %v1690 = vadd.f32 0.0, %v1689
      %v1691 = vpop.f32.mrf.mxu0
      %v1692 = vadd.f32 0.0, %v1691
      %1693 = vmatmul.bf16.gmra.mxu0 %v1621
      %v1694 = vpop.f32.mrf.mxu0
      %v1695 = vadd.f32 0.0, %v1694
      %v1696 = vpop.f32.mrf.mxu0
      %v1697 = vadd.f32 0.0, %v1696
      %1698 = vmatmul.bf16.gmra.mxu0 %v1622
      %v1699 = vpop.f32.mrf.mxu0
      %v1700 = vadd.f32 0.0, %v1699
      %v1701 = vpop.f32.mrf.mxu0
      %v1702 = vadd.f32 0.0, %v1701
      %1703 = vdwg.mxu0
      %v1704 = vadd.f32 %v1459, %v1685
      %v1705 = vadd.f32 %v1460, %v1687
      %v1706 = vadd.f32 %v1461, %v1690
      %v1707 = vadd.f32 %v1462, %v1692
      %v1708 = vadd.f32 %v1463, %v1695
      %v1709 = vadd.f32 %v1464, %v1697
      %v1710 = vadd.f32 %v1465, %v1700
      %v1711 = vadd.f32 %v1466, %v1702
      %v1712 = vld [vmem:[%s1333] sm:$0xe]
      %v1713 = vld [vmem:[%s1333 + $0x8] sm:$0xe]
      %v1714 = vld [vmem:[%s1333 + $0x10] sm:$0xe]
      %v1715 = vld [vmem:[%s1333 + $0x18] sm:$0xe]
      %v1716 = vld [vmem:[%s1333 + $0x20] sm:$0xe]
      %v1717 = vld [vmem:[%s1333 + $0x28] sm:$0xe]
      %v1718 = vld [vmem:[%s1333 + $0x30] sm:$0xe]
      %v1719 = vld [vmem:[%s1333 + $0x38] sm:$0xe]
      %v1736 = vrot.slane %v1712, 5
      %v1737 = vrot.slane %v1736, 4
      %v1738 = vrot.slane %v1468, 5
      %v1739 = vsel %vm631, %v1737, %v1738
      %v1740 = vrot.slane %v1713, 5
      %v1741 = vrot.slane %v1740, 4
      %v1742 = vrot.slane %v1470, 5
      %v1743 = vsel %vm631, %v1741, %v1742
      %v1744 = vrot.slane %v1714, 5
      %v1745 = vrot.slane %v1744, 4
      %v1746 = vrot.slane %v1472, 5
      %v1747 = vsel %vm631, %v1745, %v1746
      %v1748 = vrot.slane %v1715, 5
      %v1749 = vrot.slane %v1748, 4
      %v1750 = vrot.slane %v1474, 5
      %v1751 = vsel %vm631, %v1749, %v1750
      %v1752 = vrot.slane %v1716, 5
      %v1753 = vrot.slane %v1752, 4
      %v1754 = vrot.slane %v1476, 5
      %v1755 = vsel %vm631, %v1753, %v1754
      %v1756 = vrot.slane %v1717, 5
      %v1757 = vrot.slane %v1756, 4
      %v1758 = vrot.slane %v1478, 5
      %v1759 = vsel %vm631, %v1757, %v1758
      %v1760 = vrot.slane %v1718, 5
      %v1761 = vrot.slane %v1760, 4
      %v1762 = vrot.slane %v1480, 5
      %v1763 = vsel %vm631, %v1761, %v1762
      %v1764 = vrot.slane %v1719, 5
      %v1765 = vrot.slane %v1764, 4
      %v1766 = vrot.slane %v1482, 5
      %v1767 = vsel %vm631, %v1765, %v1766
      %v1768 = vld [vmem:[%s1 + $0x200] sm:$0xf]
      %v1769 = vld [vmem:[%s1 + $0x204] sm:$0xf]
      %v1770 = vld [vmem:[%s1 + $0x208] sm:$0xf]
      %v1771 = vld [vmem:[%s1 + $0x20c] sm:$0xf]
      %v1772 = vld [vmem:[%s1 + $0x210] sm:$0xf]
      %v1773 = vld [vmem:[%s1 + $0x214] sm:$0xf]
      %v1774 = vld [vmem:[%s1 + $0x218] sm:$0xf]
      %v1775 = vld [vmem:[%s1 + $0x21c] sm:$0xf]
      %v1776 = vld [vmem:[%s1 + $0x220] sm:$0xf]
      %v1777 = vld [vmem:[%s1 + $0x224] sm:$0xf]
      %v1778 = vld [vmem:[%s1 + $0x228] sm:$0xf]
      %v1779 = vld [vmem:[%s1 + $0x22c] sm:$0xf]
      %v1780 = vld [vmem:[%s1 + $0x230] sm:$0xf]
      %v1781 = vld [vmem:[%s1 + $0x234] sm:$0xf]
      %v1782 = vld [vmem:[%s1 + $0x238] sm:$0xf]
      %v1783 = vld [vmem:[%s1 + $0x23c] sm:$0xf]
      %v1784 = vunpack.c.l.b16 %v1739
      %v1785 = vunpack.c.l.b16 %v1743
      %v1786 = vunpack.c.l.b16 %v1747
      %v1787 = vunpack.c.l.b16 %v1751
      %v1788 = vunpack.c.l.b16 %v1755
      %v1789 = vunpack.c.l.b16 %v1759
      %v1790 = vunpack.c.l.b16 %v1763
      %v1791 = vunpack.c.l.b16 %v1767
      %v1792 = vpack.c.b16 %v1785, %v1784
      %v1793 = vpack.c.b16 %v1787, %v1786
      %v1794 = vpack.c.b16 %v1789, %v1788
      %v1795 = vpack.c.b16 %v1791, %v1790
      %v1816 = vunpack.c.l.b16 %v1768
      %v1817 = vunpack.c.l.b16 %v1769
      %v1818 = vunpack.c.l.b16 %v1770
      %v1819 = vunpack.c.l.b16 %v1771
      %v1820 = vunpack.c.l.b16 %v1772
      %v1821 = vunpack.c.l.b16 %v1773
      %v1822 = vunpack.c.l.b16 %v1774
      %v1823 = vunpack.c.l.b16 %v1775
      %v1824 = vunpack.c.l.b16 %v1776
      %v1825 = vunpack.c.l.b16 %v1777
      %v1826 = vunpack.c.l.b16 %v1778
      %v1827 = vunpack.c.l.b16 %v1779
      %v1828 = vunpack.c.l.b16 %v1780
      %v1829 = vunpack.c.l.b16 %v1781
      %v1830 = vunpack.c.l.b16 %v1782
      %v1831 = vunpack.c.l.b16 %v1783
      %v1832 = vpack.c.b16 %v1817, %v1816
      %v1833 = vpack.c.b16 %v1819, %v1818
      %v1834 = vpack.c.b16 %v1821, %v1820
      %v1835 = vpack.c.b16 %v1823, %v1822
      %v1836 = vpack.c.b16 %v1825, %v1824
      %v1837 = vpack.c.b16 %v1827, %v1826
      %v1838 = vpack.c.b16 %v1829, %v1828
      %v1839 = vpack.c.b16 %v1831, %v1830
      %1848 = vmatpush.bf16.msra.mxu0 %v1839
      %1849 = vmatpush.bf16.msra.mxu0 %v1838
      %1850 = vmatpush.bf16.msra.mxu0 %v1837
      %1851 = vmatpush.bf16.msra.mxu0 %v1836
      %1852 = vmatpush.bf16.msra.mxu0 %v1835
      %1853 = vmatpush.bf16.msra.mxu0 %v1834
      %1854 = vmatpush.bf16.msra.mxu0 %v1833
      %1855 = vmatpush.bf16.msra.mxu0 %v1832
      %1856 = vmatmul.bf16.gmra.mxu0 %v1792
      %v1857 = vpop.f32.mrf.mxu0
      %v1858 = vadd.f32 0.0, %v1857
      %v1859 = vpop.f32.mrf.mxu0
      %v1860 = vadd.f32 0.0, %v1859
      %1861 = vmatmul.bf16.gmra.mxu0 %v1793
      %v1862 = vpop.f32.mrf.mxu0
      %v1863 = vadd.f32 0.0, %v1862
      %v1864 = vpop.f32.mrf.mxu0
      %v1865 = vadd.f32 0.0, %v1864
      %1866 = vmatmul.bf16.gmra.mxu0 %v1794
      %v1867 = vpop.f32.mrf.mxu0
      %v1868 = vadd.f32 0.0, %v1867
      %v1869 = vpop.f32.mrf.mxu0
      %v1870 = vadd.f32 0.0, %v1869
      %1871 = vmatmul.bf16.gmra.mxu0 %v1795
      %v1872 = vpop.f32.mrf.mxu0
      %v1873 = vadd.f32 0.0, %v1872
      %v1874 = vpop.f32.mrf.mxu0
      %v1875 = vadd.f32 0.0, %v1874
      %1876 = vdwg.mxu0
      %v1877 = vadd.f32 %v1704, %v1858
      %v1878 = vadd.f32 %v1705, %v1860
      %v1879 = vadd.f32 %v1706, %v1863
      %v1880 = vadd.f32 %v1707, %v1865
      %v1881 = vadd.f32 %v1708, %v1868
      %v1882 = vadd.f32 %v1709, %v1870
      %v1883 = vadd.f32 %v1710, %v1873
      %v1884 = vadd.f32 %v1711, %v1875
      %v1885 = vld [vmem:[%s2] sm:$0x1]
      %v1887 = vperm.slane %v1885, 0
      %v1889 = vadd.f32 %v1877, %v1887
      %v1890 = vadd.f32 %v1878, %v1887
      %v1891 = vadd.f32 %v1879, %v1887
      %v1892 = vadd.f32 %v1880, %v1887
      %v1893 = vadd.f32 %v1881, %v1887
      %v1894 = vadd.f32 %v1882, %v1887
      %v1895 = vadd.f32 %v1883, %v1887
      %v1896 = vadd.f32 %v1884, %v1887
      %v1897 = vmax.f32 %v1889, 0.0
      %v1898 = vmax.f32 %v1890, 0.0
      %v1899 = vmax.f32 %v1891, 0.0
      %v1900 = vmax.f32 %v1892, 0.0
      %v1901 = vmax.f32 %v1893, 0.0
      %v1902 = vmax.f32 %v1894, 0.0
      %v1903 = vmax.f32 %v1895, 0.0
      %v1904 = vmax.f32 %v1896, 0.0
      %v1905 = vld [vmem:[%s3] sm:$0xff]
      %v1906 = vld [vmem:[%s3 + $0x8] sm:$0xff]
      %v1907 = vld [vmem:[%s3 + $0x10] sm:$0xff]
      %v1908 = vld [vmem:[%s3 + $0x18] sm:$0xff]
      %v1909 = vld [vmem:[%s3 + $0x20] sm:$0xff]
      %v1910 = vld [vmem:[%s3 + $0x28] sm:$0xff]
      %v1911 = vld [vmem:[%s3 + $0x30] sm:$0xff]
      %v1912 = vld [vmem:[%s3 + $0x38] sm:$0xff]
      %v1913 = vadd.f32 %v1897, %v1905
      %v1914 = vadd.f32 %v1898, %v1906
      %v1915 = vadd.f32 %v1899, %v1907
      %v1916 = vadd.f32 %v1900, %v1908
      %v1917 = vadd.f32 %v1901, %v1909
      %v1918 = vadd.f32 %v1902, %v1910
      %v1919 = vadd.f32 %v1903, %v1911
      %v1920 = vadd.f32 %v1904, %v1912
      %v1921 = vpack.c.bf16 %v1914, %v1913
      %v1922 = vpack.c.bf16 %v1916, %v1915
      %v1923 = vpack.c.bf16 %v1918, %v1917
      %v1924 = vpack.c.bf16 %v1920, %v1919
      %v1925 = vld [vmem:[%s4] sm:$0xf]
      %v1926 = vld [vmem:[%s4 + $0x4] sm:$0xf]
      %v1927 = vld [vmem:[%s4 + $0x8] sm:$0xf]
      %v1928 = vld [vmem:[%s4 + $0xc] sm:$0xf]
      %v1929 = vld [vmem:[%s4 + $0x10] sm:$0xf]
      %v1930 = vld [vmem:[%s4 + $0x14] sm:$0xf]
      %v1931 = vld [vmem:[%s4 + $0x18] sm:$0xf]
      %v1932 = vld [vmem:[%s4 + $0x1c] sm:$0xf]
      %v1933 = vld [vmem:[%s4 + $0x20] sm:$0xf]
      %v1934 = vld [vmem:[%s4 + $0x24] sm:$0xf]
      %v1935 = vld [vmem:[%s4 + $0x28] sm:$0xf]
      %v1936 = vld [vmem:[%s4 + $0x2c] sm:$0xf]
      %v1937 = vld [vmem:[%s4 + $0x30] sm:$0xf]
      %v1938 = vld [vmem:[%s4 + $0x34] sm:$0xf]
      %v1939 = vld [vmem:[%s4 + $0x38] sm:$0xf]
      %v1940 = vld [vmem:[%s4 + $0x3c] sm:$0xf]
      %v1941 = vld [vmem:[%s5] sm:$0x1]
      %v1943 = vperm.slane %v1941, 0
      %v1961 = vunpack.c.l.b16 %v1925
      %v1962 = vunpack.c.l.b16 %v1926
      %v1963 = vunpack.c.l.b16 %v1927
      %v1964 = vunpack.c.l.b16 %v1928
      %v1965 = vunpack.c.l.b16 %v1929
      %v1966 = vunpack.c.l.b16 %v1930
      %v1967 = vunpack.c.l.b16 %v1931
      %v1968 = vunpack.c.l.b16 %v1932
      %v1969 = vunpack.c.l.b16 %v1933
      %v1970 = vunpack.c.l.b16 %v1934
      %v1971 = vunpack.c.l.b16 %v1935
      %v1972 = vunpack.c.l.b16 %v1936
      %v1973 = vunpack.c.l.b16 %v1937
      %v1974 = vunpack.c.l.b16 %v1938
      %v1975 = vunpack.c.l.b16 %v1939
      %v1976 = vunpack.c.l.b16 %v1940
      %v1977 = vpack.c.b16 %v1962, %v1961
      %v1978 = vpack.c.b16 %v1964, %v1963
      %v1979 = vpack.c.b16 %v1966, %v1965
      %v1980 = vpack.c.b16 %v1968, %v1967
      %v1981 = vpack.c.b16 %v1970, %v1969
      %v1982 = vpack.c.b16 %v1972, %v1971
      %v1983 = vpack.c.b16 %v1974, %v1973
      %v1984 = vpack.c.b16 %v1976, %v1975
      %1993 = vmatpush.bf16.msra.mxu0 %v1984
      %1994 = vmatpush.bf16.msra.mxu0 %v1983
      %1995 = vmatpush.bf16.msra.mxu0 %v1982
      %1996 = vmatpush.bf16.msra.mxu0 %v1981
      %1997 = vmatpush.bf16.msra.mxu0 %v1980
      %1998 = vmatpush.bf16.msra.mxu0 %v1979
      %1999 = vmatpush.bf16.msra.mxu0 %v1978
      %2000 = vmatpush.bf16.msra.mxu0 %v1977
      %2001 = vmatmul.bf16.gmra.mxu0 %v1921
      %v2002 = vpop.f32.mrf.mxu0
      %v2003 = vadd.f32 %v1943, %v2002
      %v2004 = vpop.f32.mrf.mxu0
      %v2005 = vadd.f32 %v1943, %v2004
      %2006 = vmatmul.bf16.gmra.mxu0 %v1922
      %v2007 = vpop.f32.mrf.mxu0
      %v2008 = vadd.f32 %v1943, %v2007
      %v2009 = vpop.f32.mrf.mxu0
      %v2010 = vadd.f32 %v1943, %v2009
      %2011 = vmatmul.bf16.gmra.mxu0 %v1923
      %v2012 = vpop.f32.mrf.mxu0
      %v2013 = vadd.f32 %v1943, %v2012
      %v2014 = vpop.f32.mrf.mxu0
      %v2015 = vadd.f32 %v1943, %v2014
      %2016 = vmatmul.bf16.gmra.mxu0 %v1924
      %v2017 = vpop.f32.mrf.mxu0
      %v2018 = vadd.f32 %v1943, %v2017
      %v2019 = vpop.f32.mrf.mxu0
      %v2020 = vadd.f32 %v1943, %v2019
      %2021 = vdwg.mxu0
      %vm2022 = vcmask 97368
      %v2023 = vsel %vm2022, %v2003, -inf
      %v2024 = vsel %vm2022, %v2005, -inf
      %v2025 = vsel %vm2022, %v2008, -inf
      %v2026 = vsel %vm2022, %v2010, -inf
      %v2027 = vsel %vm2022, %v2013, -inf
      %v2028 = vmax.f32 %v2023, %v2027
      %v2029 = vsel %vm2022, %v2015, -inf
      %v2030 = vmax.f32 %v2024, %v2029
      %v2031 = vsel %vm2022, %v2018, -inf
      %v2032 = vmax.f32 %v2025, %v2031
      %v2033 = vsel %vm2022, %v2020, -inf
      %v2034 = vmax.f32 %v2026, %v2033
      %v2035 = vmax.f32 %v2028, %v2030
      %v2036 = vmax.f32 %v2032, %v2034
      %v2037 = vmax.f32 %v2035, %v2036
      %v2038 = vrot.slane %v2037, 4
      %v2039 = vmax.f32 %v2037, %v2038
      %v2040 = vrot.slane %v2039, 2
      %v2041 = vmax.f32 %v2039, %v2040
      %v2042 = vrot.slane %v2041, 1
      %v2043 = vmax.f32 %v2041, %v2042
      %v2044 = vsub.f32 %v2003, %v2043
      %v2045 = vsub.f32 %v2005, %v2043
      %v2046 = vsub.f32 %v2008, %v2043
      %v2047 = vsub.f32 %v2010, %v2043
      %v2048 = vsub.f32 %v2013, %v2043
      %v2049 = vsub.f32 %v2015, %v2043
      %v2050 = vsub.f32 %v2018, %v2043
      %v2051 = vsub.f32 %v2020, %v2043
      %v2052 = vmul.f32 %v2044, 1.442695
      %v2053 = vpow.pop %v2052
      %v2054 = vmul.f32 %v2045, 1.442695
      %v2055 = vpow.pop %v2054
      %v2056 = vmul.f32 %v2046, 1.442695
      %v2057 = vpow.pop %v2056
      %v2058 = vmul.f32 %v2047, 1.442695
      %v2059 = vpow.pop %v2058
      %v2060 = vmul.f32 %v2048, 1.442695
      %v2061 = vpow.pop %v2060
      %v2062 = vmul.f32 %v2049, 1.442695
      %v2063 = vpow.pop %v2062
      %v2064 = vmul.f32 %v2050, 1.442695
      %v2065 = vpow.pop %v2064
      %v2066 = vmul.f32 %v2051, 1.442695
      %v2067 = vpow.pop %v2066
      %v2068 = vsel %vm2022, %v2053, 0.0
      %v2069 = vsel %vm2022, %v2055, 0.0
      %v2070 = vadd.f32 %v2068, %v2069
      %v2071 = vsel %vm2022, %v2057, 0.0
      %v2072 = vadd.f32 %v2070, %v2071
      %v2073 = vsel %vm2022, %v2059, 0.0
      %v2074 = vadd.f32 %v2072, %v2073
      %v2075 = vsel %vm2022, %v2061, 0.0
      %v2076 = vadd.f32 %v2074, %v2075
      %v2077 = vsel %vm2022, %v2063, 0.0
      %v2078 = vadd.f32 %v2076, %v2077
      %v2079 = vsel %vm2022, %v2065, 0.0
      %v2080 = vadd.f32 %v2078, %v2079
      %v2081 = vsel %vm2022, %v2067, 0.0
      %v2082 = vadd.f32 %v2080, %v2081
      %v2083 = vrot.slane %v2082, 4
      %v2084 = vadd.f32 %v2082, %v2083
      %v2085 = vrot.slane %v2084, 2
      %v2086 = vadd.f32 %v2084, %v2085
      %v2087 = vrot.slane %v2086, 1
      %v2088 = vadd.f32 %v2086, %v2087
      %v2089 = vrcp.pop %v2088
      %v2090 = vmul.f32 %v2088, %v2089
      %v2091 = vsub.f32 1.0, %v2090
      %v2092 = vmul.f32 %v2089, %v2091
      %v2093 = vadd.f32 %v2089, %v2092
      %vm2094 = vweird.f32 %v2088
      %vm2095 = vweird.f32 %v2089
      %vm2096 = vmor %vm2094, %vm2095
      %v2097 = vsel %vm2096, %v2089, %v2093
      %v2098 = vand.u32 2147483647, %v2088
      %vm2099 = vcmp.eq.f32.partialorder %v2098, 8.507059e+37
      %v2100 = vand.u32 %v2088, 2147483648
      %v2101 = vor.u32 1.1754944e-38, %v2100
      %v2102 = vsel %vm2099, %v2101, %v2097
      %v2103 = vmul.f32 %v2053, %v2102
      %v2104 = vmul.f32 %v2055, %v2102
      %v2105 = vmul.f32 %v2057, %v2102
      %v2106 = vmul.f32 %v2059, %v2102
      %v2107 = vmul.f32 %v2061, %v2102
      %v2108 = vmul.f32 %v2063, %v2102
      %v2109 = vmul.f32 %v2065, %v2102
      %v2110 = vmul.f32 %v2067, %v2102
      %2112 = vset.pattern.permute.xlu0 11
      %2113 = vperm.xlu0 %2112, %v2103
      %v2114 = vpop.permute.xlu0 %2113
      %2117 = vset.pattern.permute.xlu0 11
      %2118 = vperm.xlu0 %2117, %v2104
      %v2119 = vpop.permute.xlu0 %2118
      %2122 = vset.pattern.permute.xlu0 11
      %2123 = vperm.xlu0 %2122, %v2105
      %v2124 = vpop.permute.xlu0 %2123
      %2127 = vset.pattern.permute.xlu0 11
      %2128 = vperm.xlu0 %2127, %v2106
      %v2129 = vpop.permute.xlu0 %2128
      %2132 = vset.pattern.permute.xlu0 11
      %2133 = vperm.xlu0 %2132, %v2107
      %v2134 = vpop.permute.xlu0 %2133
      %2137 = vset.pattern.permute.xlu0 11
      %2138 = vperm.xlu0 %2137, %v2108
      %v2139 = vpop.permute.xlu0 %2138
      %2142 = vset.pattern.permute.xlu0 11
      %2143 = vperm.xlu0 %2142, %v2109
      %v2144 = vpop.permute.xlu0 %2143
      %2147 = vset.pattern.permute.xlu0 11
      %2148 = vperm.xlu0 %2147, %v2110
      %v2149 = vpop.permute.xlu0 %2148
      %v2151 = vmul.f32 %v2003, %v2114
      %v2152 = vmul.f32 %v2005, %v2119
      %v2153 = vmul.f32 %v2008, %v2124
      %v2154 = vmul.f32 %v2010, %v2129
      %v2155 = vmul.f32 %v2013, %v2134
      %v2156 = vmul.f32 %v2015, %v2139
      %v2157 = vmul.f32 %v2018, %v2144
      %v2158 = vmul.f32 %v2020, %v2149
      %vm2159 = vcmask 89088
      %v2160 = vsel %vm2159, %v2151, 0.0
      %v2161 = vsel %vm2159, %v2152, 0.0
      %v2162 = vadd.f32 %v2160, %v2161
      %v2163 = vsel %vm2159, %v2153, 0.0
      %v2164 = vadd.f32 %v2162, %v2163
      %v2165 = vsel %vm2159, %v2154, 0.0
      %v2166 = vadd.f32 %v2164, %v2165
      %v2167 = vsel %vm2159, %v2155, 0.0
      %v2168 = vadd.f32 %v2166, %v2167
      %v2169 = vsel %vm2159, %v2156, 0.0
      %v2170 = vadd.f32 %v2168, %v2169
      %v2171 = vsel %vm2159, %v2157, 0.0
      %v2172 = vadd.f32 %v2170, %v2171
      %v2173 = vsel %vm2159, %v2158, 0.0
      %v2174 = vadd.f32 %v2172, %v2173
      %v2175 = vrot.slane %v2174, 4
      %v2176 = vadd.f32 %v2174, %v2175
      %v2177 = vrot.slane %v2176, 2
      %v2178 = vadd.f32 %v2176, %v2177
      %v2179 = vrot.slane %v2178, 1
      %v2180 = vadd.f32 %v2178, %v2179
      %v2181 = vxor.u32 %v2180, 2147483648
      %v2182 = vmul.f32 %v2181, 1.442695
      %v2183 = vpow.pop %v2182
      %v2184 = vadd.f32 %v2183, 1.0
      %v2185 = vrcp.pop %v2184
      %v2186 = vmul.f32 %v2184, %v2185
      %v2187 = vsub.f32 1.0, %v2186
      %v2188 = vmul.f32 %v2185, %v2187
      %v2189 = vadd.f32 %v2185, %v2188
      %vm2190 = vweird.f32 %v2184
      %vm2191 = vweird.f32 %v2185
      %vm2192 = vmor %vm2190, %vm2191
      %v2193 = vsel %vm2192, %v2185, %v2189
      %v2194 = vand.u32 2147483647, %v2184
      %vm2195 = vcmp.eq.f32.partialorder %v2194, 8.507059e+37
      %v2196 = vand.u32 %v2184, 2147483648
      %v2197 = vor.u32 1.1754944e-38, %v2196
      %v2198 = vsel %vm2195, %v2197, %v2193
      %v2199 = vmul.f32 1.0, %v2198
      %v2200 = vadd.f32 %v2199, 0.01
      %v2201 = vmul.f32 %v2180, 6.2831855
      %v2202 = vmul.f32 %v2180, 5.0
      %v2203 = vtanh.pop %v2202
      %v2204 = vand.u32 2147483647, %v2201
      %vm2205 = vcmp.le.f32.partialorder %v2204, 0.7853982
      %vm2206 = vcmp.lt.s32.totalorder %v2201, 0
      %v2207 = vand.u32 %v2201, 2139095040
      %v2208 = vshrl.u32 %v2207, 23
      %v2209 = vsub.s32 %v2208, 127
      %v2210 = vand.u32 2147483647, %v2201
      %v2211 = vand.u32 %v2210, 8388607
      %v2212 = vor.u32 %v2211, 8388608
      %v2213 = vsub.s32 0, %v2212
      %v2214 = vadd.s32 %v2209, 1
      %vm2215 = vcmp.gt.s32.totalorder %v2214, 0
      %v2216 = vsel %vm2215, %v2214, 0
      %v2217 = vshrl.u32 %v2216, 5
      %v2218 = vand.u32 %v2216, 31
      %v2219 = vsub.s32 32, %v2218
      %v2220 = vshrl.u32 683565275, %v2219
      %v2221 = vshll.u32 683565275, %v2218
      %v2222 = vshrl.u32 2475754826, %v2219
      %v2223 = vor.u32 %v2221, %v2222
      %v2224 = vshll.u32 2475754826, %v2218
      %v2225 = vshrl.u32 2131351028, %v2219
      %v2226 = vor.u32 %v2224, %v2225
      %v2227 = vshll.u32 2131351028, %v2218
      %v2228 = vshrl.u32 2102212464, %v2219
      %v2229 = vor.u32 %v2227, %v2228
      %v2230 = vshll.u32 2102212464, %v2218
      %v2231 = vshrl.u32 920167782, %v2219
      %v2232 = vor.u32 %v2230, %v2231
      %v2233 = vshll.u32 920167782, %v2218
      %v2234 = vshrl.u32 1326507024, %v2219
      %v2235 = vor.u32 %v2233, %v2234
      %vm2236 = vcmp.lt.s32.totalorder %v2217, 1
      %vm2237 = vcmp.lt.s32.totalorder %v2217, 2
      %vm2238 = vcmp.lt.s32.totalorder %v2217, 3
      %vm2239 = vcmp.lt.s32.totalorder %v2217, 4
      %v2240 = vsel %vm2236, %v2220, %v2223
      %v2241 = vsel %vm2239, %v2229, 2102212464
      %v2242 = vsel %vm2238, %v2226, %v2241
      %v2243 = vsel %vm2237, %v2240, %v2242
      %v2244 = vsel %vm2236, %v2223, %v2226
      %v2245 = vsel %vm2239, %v2232, 920167782
      %v2246 = vsel %vm2238, %v2229, %v2245
      %v2247 = vsel %vm2237, %v2244, %v2246
      %v2248 = vsel %vm2236, %v2226, %v2229
      %v2249 = vsel %vm2239, %v2235, 1326507024
      %v2250 = vsel %vm2238, %v2232, %v2249
      %v2251 = vsel %vm2237, %v2248, %v2250
      %v2252 = vshll.u32 %v2212, 8
      %v2253 = vand.u32 %v2252, 65535
      %v2254 = vshrl.u32 %v2252, 16
      %v2255 = vand.u32 %v2251, 65535
      %v2256 = vshrl.u32 %v2251, 16
      %v2257 = vmul.u32 %v2253, %v2255
      %v2258 = vmul.u32 %v2253, %v2256
      %v2259 = vmul.u32 %v2254, %v2255
      %v2260 = vmul.u32 %v2254, %v2256
      %v2261 = vshll.u32 %v2258, 16
      %v2262 = vshrl.u32 %v2258, 16
      %v2263 = vshll.u32 %v2259, 16
      %v2264 = vshrl.u32 %v2259, 16
      %vm2265 = vc.u32 %v2257, %v2261
      %v2266 = vsel %vm2265, 1, 0
      %v2267 = vadd.s32 %v2257, %v2261
      %v2268 = vadd.s32 %v2260, %v2266
      %vm2269 = vc.u32 %v2267, %v2263
      %v2270 = vsel %vm2269, 1, 0
      %v2271 = vadd.s32 %v2267, %v2263
      %v2272 = vadd.s32 %v2268, %v2270
      %v2273 = vadd.s32 %v2272, %v2262
      %v2274 = vadd.s32 %v2273, %v2264
      %v2275 = vand.u32 %v2252, 65535
      %v2276 = vshrl.u32 %v2252, 16
      %v2277 = vand.u32 %v2247, 65535
      %v2278 = vshrl.u32 %v2247, 16
      %v2279 = vmul.u32 %v2275, %v2277
      %v2280 = vmul.u32 %v2275, %v2278
      %v2281 = vmul.u32 %v2276, %v2277
      %v2282 = vmul.u32 %v2276, %v2278
      %v2283 = vshll.u32 %v2280, 16
      %v2284 = vshrl.u32 %v2280, 16
      %v2285 = vshll.u32 %v2281, 16
      %v2286 = vshrl.u32 %v2281, 16
      %vm2287 = vc.u32 %v2279, %v2283
      %v2288 = vsel %vm2287, 1, 0
      %v2289 = vadd.s32 %v2279, %v2283
      %v2290 = vadd.s32 %v2282, %v2288
      %vm2291 = vc.u32 %v2289, %v2285
      %v2292 = vsel %vm2291, 1, 0
      %v2293 = vadd.s32 %v2289, %v2285
      %v2294 = vadd.s32 %v2290, %v2292
      %v2295 = vadd.s32 %v2294, %v2284
      %v2296 = vadd.s32 %v2295, %v2286
      %v2297 = vmul.u32 %v2252, %v2243
      %v2298 = vadd.s32 %v2274, %v2293
      %vm2299 = vc.u32 %v2274, %v2293
      %v2300 = vadd.s32 %v2296, 1
      %v2301 = vsel %vm2299, %v2300, %v2296
      %v2302 = vadd.s32 %v2297, %v2301
      %v2303 = vadd.s32 %v2302, 536870912
      %v2304 = vshrl.u32 %v2303, 30
      %v2305 = vshll.u32 %v2304, 30
      %v2306 = vsub.s32 %v2302, %v2305
      %vm2307 = vcmp.lt.s32.totalorder %v2306, 0
      %v2308 = vsub.s32 0, %v2306
      %v2309 = vsel %vm2307, %v2308, %v2306
      %v2310 = vclz %v2309
      %v2311 = vsub.s32 %v2310, 2
      %vm2312 = vcmp.gt.s32.totalorder 0, %v2311
      %v2313 = vsel %vm2312, 0, %v2311
      %v2314 = vsub.s32 32, %v2313
      %v2315 = vshll.u32 %v2306, %v2313
      %v2316 = vshrl.u32 %v2298, %v2314
      %v2317 = vor.u32 %v2315, %v2316
      %v2318 = vsub.s32 4294967266, %v2313
      %v2319 = vadd.s32 %v2318, 127
      %v2320 = vshll.u32 %v2319, 23
      %v2321 = vor.u32 4788187, %v2320
      %v2322 = vand.u32 2147483647, %v2321
      %v2324 = vcvt.s32.f32 %v2317
      %v2325 = vmul.f32 %v2324, %v2322
      %v2326 = vxor.u32 %v2325, 2147483648
      %v2327 = vsel %vm2206, %v2326, %v2325
      %v2328 = vsub.s32 4, %v2304
      %v2329 = vsel %vm2206, %v2328, %v2304
      %v2330 = vsel %vm2205, %v2201, %v2327
      %v2331 = vsel %vm2205, 0, %v2329
      %v2332 = vmul.f32 %v2330, %v2330
      %v2333 = vmul.f32 %v2332, -0.001358992
      %v2334 = vadd.f32 %v2333, 0.041655596
      %v2335 = vmul.f32 %v2332, %v2334
      %v2336 = vadd.f32 %v2335, -0.4999988
      %v2337 = vmul.f32 %v2332, %v2336
      %v2338 = vadd.f32 1.0, %v2337
      %v2339 = vmul.f32 %v2330, %v2330
      %v2340 = vmul.f32 %v2339, -0.00019511016
      %v2341 = vadd.f32 %v2340, 0.008332121
      %v2342 = vmul.f32 %v2339, %v2341
      %v2343 = vadd.f32 %v2342, -0.16666654
      %v2344 = vmul.f32 %v2339, %v2343
      %v2345 = vadd.f32 %v2344, 1.0
      %v2346 = vmul.f32 %v2345, %v2330
      %vm2347 = vweird.f32 %v2201
      %v2348 = vand.u32 %v2331, 3
      %vm2349 = vcmp.lt.s32.totalorder %v2348, 2
      %vm2350 = vcmp.eq.s32.totalorder %v2348, 0
      %v2351 = vxor.u32 %v2346, 2147483648
      %v2352 = vsel %vm2350, %v2338, %v2351
      %vm2353 = vcmp.eq.s32.totalorder %v2348, 2
      %v2354 = vxor.u32 %v2338, 2147483648
      %v2355 = vsel %vm2353, %v2354, %v2346
      %v2356 = vsel %vm2349, %v2352, %v2355
      %v2357 = vsel %vm2347, nan, %v2356
      %v2358 = vand.u32 2147483647, %v2201
      %vm2359 = vcmp.le.f32.partialorder %v2358, 0.7853982
      %vm2360 = vcmp.lt.s32.totalorder %v2201, 0
      %v2361 = vand.u32 %v2201, 2139095040
      %v2362 = vshrl.u32 %v2361, 23
      %v2363 = vsub.s32 %v2362, 127
      %v2364 = vand.u32 2147483647, %v2201
      %v2365 = vand.u32 %v2364, 8388607
      %v2366 = vor.u32 %v2365, 8388608
      %v2367 = vsub.s32 0, %v2366
      %v2368 = vadd.s32 %v2363, 1
      %vm2369 = vcmp.gt.s32.totalorder %v2368, 0
      %v2370 = vsel %vm2369, %v2368, 0
      %v2371 = vshrl.u32 %v2370, 5
      %v2372 = vand.u32 %v2370, 31
      %v2373 = vsub.s32 32, %v2372
      %v2374 = vshrl.u32 683565275, %v2373
      %v2375 = vshll.u32 683565275, %v2372
      %v2376 = vshrl.u32 2475754826, %v2373
      %v2377 = vor.u32 %v2375, %v2376
      %v2378 = vshll.u32 2475754826, %v2372
      %v2379 = vshrl.u32 2131351028, %v2373
      %v2380 = vor.u32 %v2378, %v2379
      %v2381 = vshll.u32 2131351028, %v2372
      %v2382 = vshrl.u32 2102212464, %v2373
      %v2383 = vor.u32 %v2381, %v2382
      %v2384 = vshll.u32 2102212464, %v2372
      %v2385 = vshrl.u32 920167782, %v2373
      %v2386 = vor.u32 %v2384, %v2385
      %v2387 = vshll.u32 920167782, %v2372
      %v2388 = vshrl.u32 1326507024, %v2373
      %v2389 = vor.u32 %v2387, %v2388
      %vm2390 = vcmp.lt.s32.totalorder %v2371, 1
      %vm2391 = vcmp.lt.s32.totalorder %v2371, 2
      %vm2392 = vcmp.lt.s32.totalorder %v2371, 3
      %vm2393 = vcmp.lt.s32.totalorder %v2371, 4
      %v2394 = vsel %vm2390, %v2374, %v2377
      %v2395 = vsel %vm2393, %v2383, 2102212464
      %v2396 = vsel %vm2392, %v2380, %v2395
      %v2397 = vsel %vm2391, %v2394, %v2396
      %v2398 = vsel %vm2390, %v2377, %v2380
      %v2399 = vsel %vm2393, %v2386, 920167782
      %v2400 = vsel %vm2392, %v2383, %v2399
      %v2401 = vsel %vm2391, %v2398, %v2400
      %v2402 = vsel %vm2390, %v2380, %v2383
      %v2403 = vsel %vm2393, %v2389, 1326507024
      %v2404 = vsel %vm2392, %v2386, %v2403
      %v2405 = vsel %vm2391, %v2402, %v2404
      %v2406 = vshll.u32 %v2366, 8
      %v2407 = vand.u32 %v2406, 65535
      %v2408 = vshrl.u32 %v2406, 16
      %v2409 = vand.u32 %v2405, 65535
      %v2410 = vshrl.u32 %v2405, 16
      %v2411 = vmul.u32 %v2407, %v2409
      %v2412 = vmul.u32 %v2407, %v2410
      %v2413 = vmul.u32 %v2408, %v2409
      %v2414 = vmul.u32 %v2408, %v2410
      %v2415 = vshll.u32 %v2412, 16
      %v2416 = vshrl.u32 %v2412, 16
      %v2417 = vshll.u32 %v2413, 16
      %v2418 = vshrl.u32 %v2413, 16
      %vm2419 = vc.u32 %v2411, %v2415
      %v2420 = vsel %vm2419, 1, 0
      %v2421 = vadd.s32 %v2411, %v2415
      %v2422 = vadd.s32 %v2414, %v2420
      %vm2423 = vc.u32 %v2421, %v2417
      %v2424 = vsel %vm2423, 1, 0
      %v2425 = vadd.s32 %v2421, %v2417
      %v2426 = vadd.s32 %v2422, %v2424
      %v2427 = vadd.s32 %v2426, %v2416
      %v2428 = vadd.s32 %v2427, %v2418
      %v2429 = vand.u32 %v2406, 65535
      %v2430 = vshrl.u32 %v2406, 16
      %v2431 = vand.u32 %v2401, 65535
      %v2432 = vshrl.u32 %v2401, 16
      %v2433 = vmul.u32 %v2429, %v2431
      %v2434 = vmul.u32 %v2429, %v2432
      %v2435 = vmul.u32 %v2430, %v2431
      %v2436 = vmul.u32 %v2430, %v2432
      %v2437 = vshll.u32 %v2434, 16
      %v2438 = vshrl.u32 %v2434, 16
      %v2439 = vshll.u32 %v2435, 16
      %v2440 = vshrl.u32 %v2435, 16
      %vm2441 = vc.u32 %v2433, %v2437
      %v2442 = vsel %vm2441, 1, 0
      %v2443 = vadd.s32 %v2433, %v2437
      %v2444 = vadd.s32 %v2436, %v2442
      %vm2445 = vc.u32 %v2443, %v2439
      %v2446 = vsel %vm2445, 1, 0
      %v2447 = vadd.s32 %v2443, %v2439
      %v2448 = vadd.s32 %v2444, %v2446
      %v2449 = vadd.s32 %v2448, %v2438
      %v2450 = vadd.s32 %v2449, %v2440
      %v2451 = vmul.u32 %v2406, %v2397
      %v2452 = vadd.s32 %v2428, %v2447
      %vm2453 = vc.u32 %v2428, %v2447
      %v2454 = vadd.s32 %v2450, 1
      %v2455 = vsel %vm2453, %v2454, %v2450
      %v2456 = vadd.s32 %v2451, %v2455
      %v2457 = vadd.s32 %v2456, 536870912
      %v2458 = vshrl.u32 %v2457, 30
      %v2459 = vshll.u32 %v2458, 30
      %v2460 = vsub.s32 %v2456, %v2459
      %vm2461 = vcmp.lt.s32.totalorder %v2460, 0
      %v2462 = vsub.s32 0, %v2460
      %v2463 = vsel %vm2461, %v2462, %v2460
      %v2464 = vclz %v2463
      %v2465 = vsub.s32 %v2464, 2
      %vm2466 = vcmp.gt.s32.totalorder 0, %v2465
      %v2467 = vsel %vm2466, 0, %v2465
      %v2468 = vsub.s32 32, %v2467
      %v2469 = vshll.u32 %v2460, %v2467
      %v2470 = vshrl.u32 %v2452, %v2468
      %v2471 = vor.u32 %v2469, %v2470
      %v2472 = vsub.s32 4294967266, %v2467
      %v2473 = vadd.s32 %v2472, 127
      %v2474 = vshll.u32 %v2473, 23
      %v2475 = vor.u32 4788187, %v2474
      %v2476 = vand.u32 2147483647, %v2475
      %v2478 = vcvt.s32.f32 %v2471
      %v2479 = vmul.f32 %v2478, %v2476
      %v2480 = vxor.u32 %v2479, 2147483648
      %v2481 = vsel %vm2360, %v2480, %v2479
      %v2482 = vsub.s32 4, %v2458
      %v2483 = vsel %vm2360, %v2482, %v2458
      %v2484 = vsel %vm2359, %v2201, %v2481
      %v2485 = vsel %vm2359, 0, %v2483
      %v2486 = vmul.f32 %v2484, %v2484
      %v2487 = vmul.f32 %v2486, -0.001358992
      %v2488 = vadd.f32 %v2487, 0.041655596
      %v2489 = vmul.f32 %v2486, %v2488
      %v2490 = vadd.f32 %v2489, -0.4999988
      %v2491 = vmul.f32 %v2486, %v2490
      %v2492 = vadd.f32 1.0, %v2491
      %v2493 = vmul.f32 %v2484, %v2484
      %v2494 = vmul.f32 %v2493, -0.00019511016
      %v2495 = vadd.f32 %v2494, 0.008332121
      %v2496 = vmul.f32 %v2493, %v2495
      %v2497 = vadd.f32 %v2496, -0.16666654
      %v2498 = vmul.f32 %v2493, %v2497
      %v2499 = vadd.f32 %v2498, 1.0
      %v2500 = vmul.f32 %v2499, %v2484
      %vm2501 = vweird.f32 %v2201
      %v2502 = vadd.s32 %v2485, 3
      %v2503 = vand.u32 %v2502, 3
      %vm2504 = vcmp.lt.s32.totalorder %v2503, 2
      %vm2505 = vcmp.eq.s32.totalorder %v2503, 0
      %v2506 = vxor.u32 %v2500, 2147483648
      %v2507 = vsel %vm2505, %v2492, %v2506
      %vm2508 = vcmp.eq.s32.totalorder %v2503, 2
      %v2509 = vxor.u32 %v2492, 2147483648
      %v2510 = vsel %vm2508, %v2509, %v2500
      %v2511 = vsel %vm2504, %v2507, %v2510
      %v2512 = vsel %vm2501, nan, %v2511
      %2514 = vrot.lane.b32.xlu0 %v2357, 126
      %v2515 = vpop.permute.xlu0 %2514
      %v2517 = vmul.f32 %v2200, %v2515
      %2519 = vrot.lane.b32.xlu0 %v2200, 2
      %v2520 = vpop.permute.xlu0 %2519
      %v2522 = vmul.f32 %v2203, %v2520
      %2524 = vrot.lane.b32.xlu0 %v2512, 1
      %v2525 = vpop.permute.xlu0 %2524
      %v2527 = vmul.f32 %v2522, %v2525
      %2529 = vrot.lane.b32.xlu0 %v2527, 125
      %v2530 = vpop.permute.xlu0 %2529
      %v2532 = vadd.f32 %v2517, %v2530
      %v2533 = vsub.f32 0.0, %v2200
      %2534 = vrot.lane.b32.xlu0 %v2512, 126
      %v2535 = vpop.permute.xlu0 %2534
      %v2537 = vmul.f32 %v2533, %v2535
      %2538 = vrot.lane.b32.xlu0 %v2357, 1
      %v2539 = vpop.permute.xlu0 %2538
      %v2541 = vmul.f32 %v2522, %v2539
      %2543 = vrot.lane.b32.xlu0 %v2541, 125
      %v2544 = vpop.permute.xlu0 %2543
      %v2546 = vadd.f32 %v2537, %v2544
      %2547 = vrot.lane.b32.xlu0 %v2512, 127
      %v2548 = vpop.permute.xlu0 %2547
      %v2550 = vmul.f32 %v2200, %v2548
      %2551 = vrot.lane.b32.xlu0 %v2357, 127
      %v2552 = vpop.permute.xlu0 %2551
      %v2554 = vmul.f32 %v2200, %v2552
      %2556 = vrot.lane.b32.xlu0 %v2546, 1
      %v2557 = vpop.permute.xlu0 %2556
      %2560 = vrot.lane.b32.xlu0 %v2203, 126
      %v2561 = vpop.permute.xlu0 %2560
      %2564 = vrot.lane.b32.xlu0 %v2550, 2
      %v2565 = vpop.permute.xlu0 %2564
      %2568 = vrot.lane.b32.xlu0 %v2554, 3
      %v2569 = vpop.permute.xlu0 %2568
      %vm2571 = vcmask 7168
      %v2572 = vsel %vm2571, %v2532, %v2557
      %vm2573 = vcmask 15360
      %v2574 = vsel %vm2573, %v2572, %v2561
      %vm2575 = vcmask 23552
      %v2576 = vsel %vm2575, %v2574, %v2565
      %vm2577 = vcmask 31744
      %v2578 = vsel %vm2577, %v2576, %v2569
      %vm2579 = vcmask 39936
      %v2580 = vsel %vm2579, %v2578, %v2203
      %vm2581 = vcmask 48128
      %v2582 = vsel %vm2581, %v2580, %v2199
      %vm2583 = vcmask 56320
      %v2584 = vsel %vm2583, %v2582, %v2180
      %v2585 = vsel %vm2159, %v2584, 0.0
      %vm2586 = vcmask 195768
      %v2587 = vsel %vm2586, %v2003, -inf
      %v2588 = vsel %vm2586, %v2005, -inf
      %v2589 = vsel %vm2586, %v2008, -inf
      %v2590 = vsel %vm2586, %v2010, -inf
      %v2591 = vsel %vm2586, %v2013, -inf
      %v2592 = vmax.f32 %v2587, %v2591
      %v2593 = vsel %vm2586, %v2015, -inf
      %v2594 = vmax.f32 %v2588, %v2593
      %v2595 = vsel %vm2586, %v2018, -inf
      %v2596 = vmax.f32 %v2589, %v2595
      %v2597 = vsel %vm2586, %v2020, -inf
      %v2598 = vmax.f32 %v2590, %v2597
      %v2599 = vmax.f32 %v2592, %v2594
      %v2600 = vmax.f32 %v2596, %v2598
      %v2601 = vmax.f32 %v2599, %v2600
      %v2602 = vrot.slane %v2601, 4
      %v2603 = vmax.f32 %v2601, %v2602
      %v2604 = vrot.slane %v2603, 2
      %v2605 = vmax.f32 %v2603, %v2604
      %v2606 = vrot.slane %v2605, 1
      %v2607 = vmax.f32 %v2605, %v2606
      %v2608 = vsub.f32 %v2003, %v2607
      %v2609 = vsub.f32 %v2005, %v2607
      %v2610 = vsub.f32 %v2008, %v2607
      %v2611 = vsub.f32 %v2010, %v2607
      %v2612 = vsub.f32 %v2013, %v2607
      %v2613 = vsub.f32 %v2015, %v2607
      %v2614 = vsub.f32 %v2018, %v2607
      %v2615 = vsub.f32 %v2020, %v2607
      %v2616 = vmul.f32 %v2608, 1.442695
      %v2617 = vpow.pop %v2616
      %v2618 = vmul.f32 %v2609, 1.442695
      %v2619 = vpow.pop %v2618
      %v2620 = vmul.f32 %v2610, 1.442695
      %v2621 = vpow.pop %v2620
      %v2622 = vmul.f32 %v2611, 1.442695
      %v2623 = vpow.pop %v2622
      %v2624 = vmul.f32 %v2612, 1.442695
      %v2625 = vpow.pop %v2624
      %v2626 = vmul.f32 %v2613, 1.442695
      %v2627 = vpow.pop %v2626
      %v2628 = vmul.f32 %v2614, 1.442695
      %v2629 = vpow.pop %v2628
      %v2630 = vmul.f32 %v2615, 1.442695
      %v2631 = vpow.pop %v2630
      %v2632 = vsel %vm2586, %v2617, 0.0
      %v2633 = vsel %vm2586, %v2619, 0.0
      %v2634 = vadd.f32 %v2632, %v2633
      %v2635 = vsel %vm2586, %v2621, 0.0
      %v2636 = vadd.f32 %v2634, %v2635
      %v2637 = vsel %vm2586, %v2623, 0.0
      %v2638 = vadd.f32 %v2636, %v2637
      %v2639 = vsel %vm2586, %v2625, 0.0
      %v2640 = vadd.f32 %v2638, %v2639
      %v2641 = vsel %vm2586, %v2627, 0.0
      %v2642 = vadd.f32 %v2640, %v2641
      %v2643 = vsel %vm2586, %v2629, 0.0
      %v2644 = vadd.f32 %v2642, %v2643
      %v2645 = vsel %vm2586, %v2631, 0.0
      %v2646 = vadd.f32 %v2644, %v2645
      %v2647 = vrot.slane %v2646, 4
      %v2648 = vadd.f32 %v2646, %v2647
      %v2649 = vrot.slane %v2648, 2
      %v2650 = vadd.f32 %v2648, %v2649
      %v2651 = vrot.slane %v2650, 1
      %v2652 = vadd.f32 %v2650, %v2651
      %v2653 = vrcp.pop %v2652
      %v2654 = vmul.f32 %v2652, %v2653
      %v2655 = vsub.f32 1.0, %v2654
      %v2656 = vmul.f32 %v2653, %v2655
      %v2657 = vadd.f32 %v2653, %v2656
      %vm2658 = vweird.f32 %v2652
      %vm2659 = vweird.f32 %v2653
      %vm2660 = vmor %vm2658, %vm2659
      %v2661 = vsel %vm2660, %v2653, %v2657
      %v2662 = vand.u32 2147483647, %v2652
      %vm2663 = vcmp.eq.f32.partialorder %v2662, 8.507059e+37
      %v2664 = vand.u32 %v2652, 2147483648
      %v2665 = vor.u32 1.1754944e-38, %v2664
      %v2666 = vsel %vm2663, %v2665, %v2661
      %v2667 = vmul.f32 %v2617, %v2666
      %v2668 = vmul.f32 %v2619, %v2666
      %v2669 = vmul.f32 %v2621, %v2666
      %v2670 = vmul.f32 %v2623, %v2666
      %v2671 = vmul.f32 %v2625, %v2666
      %v2672 = vmul.f32 %v2627, %v2666
      %v2673 = vmul.f32 %v2629, %v2666
      %v2674 = vmul.f32 %v2631, %v2666
      %2676 = vset.pattern.permute.xlu0 23
      %2677 = vperm.xlu0 %2676, %v2667
      %v2678 = vpop.permute.xlu0 %2677
      %2681 = vset.pattern.permute.xlu0 23
      %2682 = vperm.xlu0 %2681, %v2668
      %v2683 = vpop.permute.xlu0 %2682
      %2686 = vset.pattern.permute.xlu0 23
      %2687 = vperm.xlu0 %2686, %v2669
      %v2688 = vpop.permute.xlu0 %2687
      %2691 = vset.pattern.permute.xlu0 23
      %2692 = vperm.xlu0 %2691, %v2670
      %v2693 = vpop.permute.xlu0 %2692
      %2696 = vset.pattern.permute.xlu0 23
      %2697 = vperm.xlu0 %2696, %v2671
      %v2698 = vpop.permute.xlu0 %2697
      %2701 = vset.pattern.permute.xlu0 23
      %2702 = vperm.xlu0 %2701, %v2672
      %v2703 = vpop.permute.xlu0 %2702
      %2706 = vset.pattern.permute.xlu0 23
      %2707 = vperm.xlu0 %2706, %v2673
      %v2708 = vpop.permute.xlu0 %2707
      %2711 = vset.pattern.permute.xlu0 23
      %2712 = vperm.xlu0 %2711, %v2674
      %v2713 = vpop.permute.xlu0 %2712
      %v2715 = vmul.f32 %v2003, %v2678
      %v2716 = vmul.f32 %v2005, %v2683
      %v2717 = vmul.f32 %v2008, %v2688
      %v2718 = vmul.f32 %v2010, %v2693
      %v2719 = vmul.f32 %v2013, %v2698
      %v2720 = vmul.f32 %v2015, %v2703
      %v2721 = vmul.f32 %v2018, %v2708
      %v2722 = vmul.f32 %v2020, %v2713
      %vm2723 = vcmask 187488
      %v2724 = vsel %vm2723, %v2715, 0.0
      %v2725 = vsel %vm2723, %v2716, 0.0
      %v2726 = vadd.f32 %v2724, %v2725
      %v2727 = vsel %vm2723, %v2717, 0.0
      %v2728 = vadd.f32 %v2726, %v2727
      %v2729 = vsel %vm2723, %v2718, 0.0
      %v2730 = vadd.f32 %v2728, %v2729
      %v2731 = vsel %vm2723, %v2719, 0.0
      %v2732 = vadd.f32 %v2730, %v2731
      %v2733 = vsel %vm2723, %v2720, 0.0
      %v2734 = vadd.f32 %v2732, %v2733
      %v2735 = vsel %vm2723, %v2721, 0.0
      %v2736 = vadd.f32 %v2734, %v2735
      %v2737 = vsel %vm2723, %v2722, 0.0
      %v2738 = vadd.f32 %v2736, %v2737
      %v2739 = vrot.slane %v2738, 4
      %v2740 = vadd.f32 %v2738, %v2739
      %v2741 = vrot.slane %v2740, 2
      %v2742 = vadd.f32 %v2740, %v2741
      %v2743 = vrot.slane %v2742, 1
      %v2744 = vadd.f32 %v2742, %v2743
      %v2745 = vxor.u32 %v2744, 2147483648
      %v2746 = vmul.f32 %v2745, 1.442695
      %v2747 = vpow.pop %v2746
      %v2748 = vadd.f32 %v2747, 1.0
      %v2749 = vrcp.pop %v2748
      %v2750 = vmul.f32 %v2748, %v2749
      %v2751 = vsub.f32 1.0, %v2750
      %v2752 = vmul.f32 %v2749, %v2751
      %v2753 = vadd.f32 %v2749, %v2752
      %vm2754 = vweird.f32 %v2748
      %vm2755 = vweird.f32 %v2749
      %vm2756 = vmor %vm2754, %vm2755
      %v2757 = vsel %vm2756, %v2749, %v2753
      %v2758 = vand.u32 2147483647, %v2748
      %vm2759 = vcmp.eq.f32.partialorder %v2758, 8.507059e+37
      %v2760 = vand.u32 %v2748, 2147483648
      %v2761 = vor.u32 1.1754944e-38, %v2760
      %v2762 = vsel %vm2759, %v2761, %v2757
      %v2763 = vmul.f32 1.0, %v2762
      %v2764 = vadd.f32 %v2763, 0.01
      %v2765 = vmul.f32 %v2744, 6.2831855
      %v2766 = vmul.f32 %v2744, 5.0
      %v2767 = vtanh.pop %v2766
      %v2768 = vand.u32 2147483647, %v2765
      %vm2769 = vcmp.le.f32.partialorder %v2768, 0.7853982
      %vm2770 = vcmp.lt.s32.totalorder %v2765, 0
      %v2771 = vand.u32 %v2765, 2139095040
      %v2772 = vshrl.u32 %v2771, 23
      %v2773 = vsub.s32 %v2772, 127
      %v2774 = vand.u32 2147483647, %v2765
      %v2775 = vand.u32 %v2774, 8388607
      %v2776 = vor.u32 %v2775, 8388608
      %v2777 = vsub.s32 0, %v2776
      %v2778 = vadd.s32 %v2773, 1
      %vm2779 = vcmp.gt.s32.totalorder %v2778, 0
      %v2780 = vsel %vm2779, %v2778, 0
      %v2781 = vshrl.u32 %v2780, 5
      %v2782 = vand.u32 %v2780, 31
      %v2783 = vsub.s32 32, %v2782
      %v2784 = vshrl.u32 683565275, %v2783
      %v2785 = vshll.u32 683565275, %v2782
      %v2786 = vshrl.u32 2475754826, %v2783
      %v2787 = vor.u32 %v2785, %v2786
      %v2788 = vshll.u32 2475754826, %v2782
      %v2789 = vshrl.u32 2131351028, %v2783
      %v2790 = vor.u32 %v2788, %v2789
      %v2791 = vshll.u32 2131351028, %v2782
      %v2792 = vshrl.u32 2102212464, %v2783
      %v2793 = vor.u32 %v2791, %v2792
      %v2794 = vshll.u32 2102212464, %v2782
      %v2795 = vshrl.u32 920167782, %v2783
      %v2796 = vor.u32 %v2794, %v2795
      %v2797 = vshll.u32 920167782, %v2782
      %v2798 = vshrl.u32 1326507024, %v2783
      %v2799 = vor.u32 %v2797, %v2798
      %vm2800 = vcmp.lt.s32.totalorder %v2781, 1
      %vm2801 = vcmp.lt.s32.totalorder %v2781, 2
      %vm2802 = vcmp.lt.s32.totalorder %v2781, 3
      %vm2803 = vcmp.lt.s32.totalorder %v2781, 4
      %v2804 = vsel %vm2800, %v2784, %v2787
      %v2805 = vsel %vm2803, %v2793, 2102212464
      %v2806 = vsel %vm2802, %v2790, %v2805
      %v2807 = vsel %vm2801, %v2804, %v2806
      %v2808 = vsel %vm2800, %v2787, %v2790
      %v2809 = vsel %vm2803, %v2796, 920167782
      %v2810 = vsel %vm2802, %v2793, %v2809
      %v2811 = vsel %vm2801, %v2808, %v2810
      %v2812 = vsel %vm2800, %v2790, %v2793
      %v2813 = vsel %vm2803, %v2799, 1326507024
      %v2814 = vsel %vm2802, %v2796, %v2813
      %v2815 = vsel %vm2801, %v2812, %v2814
      %v2816 = vshll.u32 %v2776, 8
      %v2817 = vand.u32 %v2816, 65535
      %v2818 = vshrl.u32 %v2816, 16
      %v2819 = vand.u32 %v2815, 65535
      %v2820 = vshrl.u32 %v2815, 16
      %v2821 = vmul.u32 %v2817, %v2819
      %v2822 = vmul.u32 %v2817, %v2820
      %v2823 = vmul.u32 %v2818, %v2819
      %v2824 = vmul.u32 %v2818, %v2820
      %v2825 = vshll.u32 %v2822, 16
      %v2826 = vshrl.u32 %v2822, 16
      %v2827 = vshll.u32 %v2823, 16
      %v2828 = vshrl.u32 %v2823, 16
      %vm2829 = vc.u32 %v2821, %v2825
      %v2830 = vsel %vm2829, 1, 0
      %v2831 = vadd.s32 %v2821, %v2825
      %v2832 = vadd.s32 %v2824, %v2830
      %vm2833 = vc.u32 %v2831, %v2827
      %v2834 = vsel %vm2833, 1, 0
      %v2835 = vadd.s32 %v2831, %v2827
      %v2836 = vadd.s32 %v2832, %v2834
      %v2837 = vadd.s32 %v2836, %v2826
      %v2838 = vadd.s32 %v2837, %v2828
      %v2839 = vand.u32 %v2816, 65535
      %v2840 = vshrl.u32 %v2816, 16
      %v2841 = vand.u32 %v2811, 65535
      %v2842 = vshrl.u32 %v2811, 16
      %v2843 = vmul.u32 %v2839, %v2841
      %v2844 = vmul.u32 %v2839, %v2842
      %v2845 = vmul.u32 %v2840, %v2841
      %v2846 = vmul.u32 %v2840, %v2842
      %v2847 = vshll.u32 %v2844, 16
      %v2848 = vshrl.u32 %v2844, 16
      %v2849 = vshll.u32 %v2845, 16
      %v2850 = vshrl.u32 %v2845, 16
      %vm2851 = vc.u32 %v2843, %v2847
      %v2852 = vsel %vm2851, 1, 0
      %v2853 = vadd.s32 %v2843, %v2847
      %v2854 = vadd.s32 %v2846, %v2852
      %vm2855 = vc.u32 %v2853, %v2849
      %v2856 = vsel %vm2855, 1, 0
      %v2857 = vadd.s32 %v2853, %v2849
      %v2858 = vadd.s32 %v2854, %v2856
      %v2859 = vadd.s32 %v2858, %v2848
      %v2860 = vadd.s32 %v2859, %v2850
      %v2861 = vmul.u32 %v2816, %v2807
      %v2862 = vadd.s32 %v2838, %v2857
      %vm2863 = vc.u32 %v2838, %v2857
      %v2864 = vadd.s32 %v2860, 1
      %v2865 = vsel %vm2863, %v2864, %v2860
      %v2866 = vadd.s32 %v2861, %v2865
      %v2867 = vadd.s32 %v2866, 536870912
      %v2868 = vshrl.u32 %v2867, 30
      %v2869 = vshll.u32 %v2868, 30
      %v2870 = vsub.s32 %v2866, %v2869
      %vm2871 = vcmp.lt.s32.totalorder %v2870, 0
      %v2872 = vsub.s32 0, %v2870
      %v2873 = vsel %vm2871, %v2872, %v2870
      %v2874 = vclz %v2873
      %v2875 = vsub.s32 %v2874, 2
      %vm2876 = vcmp.gt.s32.totalorder 0, %v2875
      %v2877 = vsel %vm2876, 0, %v2875
      %v2878 = vsub.s32 32, %v2877
      %v2879 = vshll.u32 %v2870, %v2877
      %v2880 = vshrl.u32 %v2862, %v2878
      %v2881 = vor.u32 %v2879, %v2880
      %v2882 = vsub.s32 4294967266, %v2877
      %v2883 = vadd.s32 %v2882, 127
      %v2884 = vshll.u32 %v2883, 23
      %v2885 = vor.u32 4788187, %v2884
      %v2886 = vand.u32 2147483647, %v2885
      %v2888 = vcvt.s32.f32 %v2881
      %v2889 = vmul.f32 %v2888, %v2886
      %v2890 = vxor.u32 %v2889, 2147483648
      %v2891 = vsel %vm2770, %v2890, %v2889
      %v2892 = vsub.s32 4, %v2868
      %v2893 = vsel %vm2770, %v2892, %v2868
      %v2894 = vsel %vm2769, %v2765, %v2891
      %v2895 = vsel %vm2769, 0, %v2893
      %v2896 = vmul.f32 %v2894, %v2894
      %v2897 = vmul.f32 %v2896, -0.001358992
      %v2898 = vadd.f32 %v2897, 0.041655596
      %v2899 = vmul.f32 %v2896, %v2898
      %v2900 = vadd.f32 %v2899, -0.4999988
      %v2901 = vmul.f32 %v2896, %v2900
      %v2902 = vadd.f32 1.0, %v2901
      %v2903 = vmul.f32 %v2894, %v2894
      %v2904 = vmul.f32 %v2903, -0.00019511016
      %v2905 = vadd.f32 %v2904, 0.008332121
      %v2906 = vmul.f32 %v2903, %v2905
      %v2907 = vadd.f32 %v2906, -0.16666654
      %v2908 = vmul.f32 %v2903, %v2907
      %v2909 = vadd.f32 %v2908, 1.0
      %v2910 = vmul.f32 %v2909, %v2894
      %vm2911 = vweird.f32 %v2765
      %v2912 = vand.u32 %v2895, 3
      %vm2913 = vcmp.lt.s32.totalorder %v2912, 2
      %vm2914 = vcmp.eq.s32.totalorder %v2912, 0
      %v2915 = vxor.u32 %v2910, 2147483648
      %v2916 = vsel %vm2914, %v2902, %v2915
      %vm2917 = vcmp.eq.s32.totalorder %v2912, 2
      %v2918 = vxor.u32 %v2902, 2147483648
      %v2919 = vsel %vm2917, %v2918, %v2910
      %v2920 = vsel %vm2913, %v2916, %v2919
      %v2921 = vsel %vm2911, nan, %v2920
      %v2922 = vand.u32 2147483647, %v2765
      %vm2923 = vcmp.le.f32.partialorder %v2922, 0.7853982
      %vm2924 = vcmp.lt.s32.totalorder %v2765, 0
      %v2925 = vand.u32 %v2765, 2139095040
      %v2926 = vshrl.u32 %v2925, 23
      %v2927 = vsub.s32 %v2926, 127
      %v2928 = vand.u32 2147483647, %v2765
      %v2929 = vand.u32 %v2928, 8388607
      %v2930 = vor.u32 %v2929, 8388608
      %v2931 = vsub.s32 0, %v2930
      %v2932 = vadd.s32 %v2927, 1
      %vm2933 = vcmp.gt.s32.totalorder %v2932, 0
      %v2934 = vsel %vm2933, %v2932, 0
      %v2935 = vshrl.u32 %v2934, 5
      %v2936 = vand.u32 %v2934, 31
      %v2937 = vsub.s32 32, %v2936
      %v2938 = vshrl.u32 683565275, %v2937
      %v2939 = vshll.u32 683565275, %v2936
      %v2940 = vshrl.u32 2475754826, %v2937
      %v2941 = vor.u32 %v2939, %v2940
      %v2942 = vshll.u32 2475754826, %v2936
      %v2943 = vshrl.u32 2131351028, %v2937
      %v2944 = vor.u32 %v2942, %v2943
      %v2945 = vshll.u32 2131351028, %v2936
      %v2946 = vshrl.u32 2102212464, %v2937
      %v2947 = vor.u32 %v2945, %v2946
      %v2948 = vshll.u32 2102212464, %v2936
      %v2949 = vshrl.u32 920167782, %v2937
      %v2950 = vor.u32 %v2948, %v2949
      %v2951 = vshll.u32 920167782, %v2936
      %v2952 = vshrl.u32 1326507024, %v2937
      %v2953 = vor.u32 %v2951, %v2952
      %vm2954 = vcmp.lt.s32.totalorder %v2935, 1
      %vm2955 = vcmp.lt.s32.totalorder %v2935, 2
      %vm2956 = vcmp.lt.s32.totalorder %v2935, 3
      %vm2957 = vcmp.lt.s32.totalorder %v2935, 4
      %v2958 = vsel %vm2954, %v2938, %v2941
      %v2959 = vsel %vm2957, %v2947, 2102212464
      %v2960 = vsel %vm2956, %v2944, %v2959
      %v2961 = vsel %vm2955, %v2958, %v2960
      %v2962 = vsel %vm2954, %v2941, %v2944
      %v2963 = vsel %vm2957, %v2950, 920167782
      %v2964 = vsel %vm2956, %v2947, %v2963
      %v2965 = vsel %vm2955, %v2962, %v2964
      %v2966 = vsel %vm2954, %v2944, %v2947
      %v2967 = vsel %vm2957, %v2953, 1326507024
      %v2968 = vsel %vm2956, %v2950, %v2967
      %v2969 = vsel %vm2955, %v2966, %v2968
      %v2970 = vshll.u32 %v2930, 8
      %v2971 = vand.u32 %v2970, 65535
      %v2972 = vshrl.u32 %v2970, 16
      %v2973 = vand.u32 %v2969, 65535
      %v2974 = vshrl.u32 %v2969, 16
      %v2975 = vmul.u32 %v2971, %v2973
      %v2976 = vmul.u32 %v2971, %v2974
      %v2977 = vmul.u32 %v2972, %v2973
      %v2978 = vmul.u32 %v2972, %v2974
      %v2979 = vshll.u32 %v2976, 16
      %v2980 = vshrl.u32 %v2976, 16
      %v2981 = vshll.u32 %v2977, 16
      %v2982 = vshrl.u32 %v2977, 16
      %vm2983 = vc.u32 %v2975, %v2979
      %v2984 = vsel %vm2983, 1, 0
      %v2985 = vadd.s32 %v2975, %v2979
      %v2986 = vadd.s32 %v2978, %v2984
      %vm2987 = vc.u32 %v2985, %v2981
      %v2988 = vsel %vm2987, 1, 0
      %v2989 = vadd.s32 %v2985, %v2981
      %v2990 = vadd.s32 %v2986, %v2988
      %v2991 = vadd.s32 %v2990, %v2980
      %v2992 = vadd.s32 %v2991, %v2982
      %v2993 = vand.u32 %v2970, 65535
      %v2994 = vshrl.u32 %v2970, 16
      %v2995 = vand.u32 %v2965, 65535
      %v2996 = vshrl.u32 %v2965, 16
      %v2997 = vmul.u32 %v2993, %v2995
      %v2998 = vmul.u32 %v2993, %v2996
      %v2999 = vmul.u32 %v2994, %v2995
      %v3000 = vmul.u32 %v2994, %v2996
      %v3001 = vshll.u32 %v2998, 16
      %v3002 = vshrl.u32 %v2998, 16
      %v3003 = vshll.u32 %v2999, 16
      %v3004 = vshrl.u32 %v2999, 16
      %vm3005 = vc.u32 %v2997, %v3001
      %v3006 = vsel %vm3005, 1, 0
      %v3007 = vadd.s32 %v2997, %v3001
      %v3008 = vadd.s32 %v3000, %v3006
      %vm3009 = vc.u32 %v3007, %v3003
      %v3010 = vsel %vm3009, 1, 0
      %v3011 = vadd.s32 %v3007, %v3003
      %v3012 = vadd.s32 %v3008, %v3010
      %v3013 = vadd.s32 %v3012, %v3002
      %v3014 = vadd.s32 %v3013, %v3004
      %v3015 = vmul.u32 %v2970, %v2961
      %v3016 = vadd.s32 %v2992, %v3011
      %vm3017 = vc.u32 %v2992, %v3011
      %v3018 = vadd.s32 %v3014, 1
      %v3019 = vsel %vm3017, %v3018, %v3014
      %v3020 = vadd.s32 %v3015, %v3019
      %v3021 = vadd.s32 %v3020, 536870912
      %v3022 = vshrl.u32 %v3021, 30
      %v3023 = vshll.u32 %v3022, 30
      %v3024 = vsub.s32 %v3020, %v3023
      %vm3025 = vcmp.lt.s32.totalorder %v3024, 0
      %v3026 = vsub.s32 0, %v3024
      %v3027 = vsel %vm3025, %v3026, %v3024
      %v3028 = vclz %v3027
      %v3029 = vsub.s32 %v3028, 2
      %vm3030 = vcmp.gt.s32.totalorder 0, %v3029
      %v3031 = vsel %vm3030, 0, %v3029
      %v3032 = vsub.s32 32, %v3031
      %v3033 = vshll.u32 %v3024, %v3031
      %v3034 = vshrl.u32 %v3016, %v3032
      %v3035 = vor.u32 %v3033, %v3034
      %v3036 = vsub.s32 4294967266, %v3031
      %v3037 = vadd.s32 %v3036, 127
      %v3038 = vshll.u32 %v3037, 23
      %v3039 = vor.u32 4788187, %v3038
      %v3040 = vand.u32 2147483647, %v3039
      %v3042 = vcvt.s32.f32 %v3035
      %v3043 = vmul.f32 %v3042, %v3040
      %v3044 = vxor.u32 %v3043, 2147483648
      %v3045 = vsel %vm2924, %v3044, %v3043
      %v3046 = vsub.s32 4, %v3022
      %v3047 = vsel %vm2924, %v3046, %v3022
      %v3048 = vsel %vm2923, %v2765, %v3045
      %v3049 = vsel %vm2923, 0, %v3047
      %v3050 = vmul.f32 %v3048, %v3048
      %v3051 = vmul.f32 %v3050, -0.001358992
      %v3052 = vadd.f32 %v3051, 0.041655596
      %v3053 = vmul.f32 %v3050, %v3052
      %v3054 = vadd.f32 %v3053, -0.4999988
      %v3055 = vmul.f32 %v3050, %v3054
      %v3056 = vadd.f32 1.0, %v3055
      %v3057 = vmul.f32 %v3048, %v3048
      %v3058 = vmul.f32 %v3057, -0.00019511016
      %v3059 = vadd.f32 %v3058, 0.008332121
      %v3060 = vmul.f32 %v3057, %v3059
      %v3061 = vadd.f32 %v3060, -0.16666654
      %v3062 = vmul.f32 %v3057, %v3061
      %v3063 = vadd.f32 %v3062, 1.0
      %v3064 = vmul.f32 %v3063, %v3048
      %vm3065 = vweird.f32 %v2765
      %v3066 = vadd.s32 %v3049, 3
      %v3067 = vand.u32 %v3066, 3
      %vm3068 = vcmp.lt.s32.totalorder %v3067, 2
      %vm3069 = vcmp.eq.s32.totalorder %v3067, 0
      %v3070 = vxor.u32 %v3064, 2147483648
      %v3071 = vsel %vm3069, %v3056, %v3070
      %vm3072 = vcmp.eq.s32.totalorder %v3067, 2
      %v3073 = vxor.u32 %v3056, 2147483648
      %v3074 = vsel %vm3072, %v3073, %v3064
      %v3075 = vsel %vm3068, %v3071, %v3074
      %v3076 = vsel %vm3065, nan, %v3075
      %3078 = vrot.lane.b32.xlu0 %v2921, 126
      %v3079 = vpop.permute.xlu0 %3078
      %v3081 = vmul.f32 %v2764, %v3079
      %3083 = vrot.lane.b32.xlu0 %v2764, 2
      %v3084 = vpop.permute.xlu0 %3083
      %v3086 = vmul.f32 %v2767, %v3084
      %3088 = vrot.lane.b32.xlu0 %v3076, 1
      %v3089 = vpop.permute.xlu0 %3088
      %v3091 = vmul.f32 %v3086, %v3089
      %3093 = vrot.lane.b32.xlu0 %v3091, 125
      %v3094 = vpop.permute.xlu0 %3093
      %v3096 = vadd.f32 %v3081, %v3094
      %v3097 = vsub.f32 0.0, %v2764
      %3098 = vrot.lane.b32.xlu0 %v3076, 126
      %v3099 = vpop.permute.xlu0 %3098
      %v3101 = vmul.f32 %v3097, %v3099
      %3102 = vrot.lane.b32.xlu0 %v2921, 1
      %v3103 = vpop.permute.xlu0 %3102
      %v3105 = vmul.f32 %v3086, %v3103
      %3107 = vrot.lane.b32.xlu0 %v3105, 125
      %v3108 = vpop.permute.xlu0 %3107
      %v3110 = vadd.f32 %v3101, %v3108
      %3111 = vrot.lane.b32.xlu0 %v3076, 127
      %v3112 = vpop.permute.xlu0 %3111
      %v3114 = vmul.f32 %v2764, %v3112
      %3115 = vrot.lane.b32.xlu0 %v2921, 127
      %v3116 = vpop.permute.xlu0 %3115
      %v3118 = vmul.f32 %v2764, %v3116
      %3120 = vrot.lane.b32.xlu0 %v3096, 116
      %v3121 = vpop.permute.xlu0 %3120
      %3124 = vrot.lane.b32.xlu0 %v3110, 117
      %v3125 = vpop.permute.xlu0 %3124
      %3128 = vrot.lane.b32.xlu0 %v2767, 114
      %v3129 = vpop.permute.xlu0 %3128
      %3132 = vrot.lane.b32.xlu0 %v3114, 118
      %v3133 = vpop.permute.xlu0 %3132
      %3136 = vrot.lane.b32.xlu0 %v3118, 119
      %v3137 = vpop.permute.xlu0 %3136
      %3139 = vrot.lane.b32.xlu0 %v2767, 116
      %v3140 = vpop.permute.xlu0 %3139
      %v3142 = vsel %vm2571, %v3121, %v3125
      %v3143 = vsel %vm2573, %v3142, %v3129
      %v3144 = vsel %vm2575, %v3143, %v3133
      %v3145 = vsel %vm2577, %v3144, %v3137
      %v3146 = vsel %vm2579, %v3145, %v3140
      %3148 = vrot.lane.b32.xlu0 %v2763, 116
      %v3149 = vpop.permute.xlu0 %3148
      %3152 = vrot.lane.b32.xlu0 %v2744, 116
      %v3153 = vpop.permute.xlu0 %3152
      %v3155 = vsel %vm2581, %v3146, %v3149
      %v3156 = vsel %vm2583, %v3155, %v3153
      %v3157 = vsel %vm2159, %v3156, 0.0
      %vm3158 = vcmask 294168
      %v3159 = vsel %vm3158, %v2003, -inf
      %v3160 = vsel %vm3158, %v2005, -inf
      %v3161 = vsel %vm3158, %v2008, -inf
      %v3162 = vsel %vm3158, %v2010, -inf
      %v3163 = vsel %vm3158, %v2013, -inf
      %v3164 = vmax.f32 %v3159, %v3163
      %v3165 = vsel %vm3158, %v2015, -inf
      %v3166 = vmax.f32 %v3160, %v3165
      %v3167 = vsel %vm3158, %v2018, -inf
      %v3168 = vmax.f32 %v3161, %v3167
      %v3169 = vsel %vm3158, %v2020, -inf
      %v3170 = vmax.f32 %v3162, %v3169
      %v3171 = vmax.f32 %v3164, %v3166
      %v3172 = vmax.f32 %v3168, %v3170
      %v3173 = vmax.f32 %v3171, %v3172
      %v3174 = vrot.slane %v3173, 4
      %v3175 = vmax.f32 %v3173, %v3174
      %v3176 = vrot.slane %v3175, 2
      %v3177 = vmax.f32 %v3175, %v3176
      %v3178 = vrot.slane %v3177, 1
      %v3179 = vmax.f32 %v3177, %v3178
      %v3180 = vsub.f32 %v2003, %v3179
      %v3181 = vsub.f32 %v2005, %v3179
      %v3182 = vsub.f32 %v2008, %v3179
      %v3183 = vsub.f32 %v2010, %v3179
      %v3184 = vsub.f32 %v2013, %v3179
      %v3185 = vsub.f32 %v2015, %v3179
      %v3186 = vsub.f32 %v2018, %v3179
      %v3187 = vsub.f32 %v2020, %v3179
      %v3188 = vmul.f32 %v3180, 1.442695
      %v3189 = vpow.pop %v3188
      %v3190 = vmul.f32 %v3181, 1.442695
      %v3191 = vpow.pop %v3190
      %v3192 = vmul.f32 %v3182, 1.442695
      %v3193 = vpow.pop %v3192
      %v3194 = vmul.f32 %v3183, 1.442695
      %v3195 = vpow.pop %v3194
      %v3196 = vmul.f32 %v3184, 1.442695
      %v3197 = vpow.pop %v3196
      %v3198 = vmul.f32 %v3185, 1.442695
      %v3199 = vpow.pop %v3198
      %v3200 = vmul.f32 %v3186, 1.442695
      %v3201 = vpow.pop %v3200
      %v3202 = vmul.f32 %v3187, 1.442695
      %v3203 = vpow.pop %v3202
      %v3204 = vsel %vm3158, %v3189, 0.0
      %v3205 = vsel %vm3158, %v3191, 0.0
      %v3206 = vadd.f32 %v3204, %v3205
      %v3207 = vsel %vm3158, %v3193, 0.0
      %v3208 = vadd.f32 %v3206, %v3207
      %v3209 = vsel %vm3158, %v3195, 0.0
      %v3210 = vadd.f32 %v3208, %v3209
      %v3211 = vsel %vm3158, %v3197, 0.0
      %v3212 = vadd.f32 %v3210, %v3211
      %v3213 = vsel %vm3158, %v3199, 0.0
      %v3214 = vadd.f32 %v3212, %v3213
      %v3215 = vsel %vm3158, %v3201, 0.0
      %v3216 = vadd.f32 %v3214, %v3215
      %v3217 = vsel %vm3158, %v3203, 0.0
      %v3218 = vadd.f32 %v3216, %v3217
      %v3219 = vrot.slane %v3218, 4
      %v3220 = vadd.f32 %v3218, %v3219
      %v3221 = vrot.slane %v3220, 2
      %v3222 = vadd.f32 %v3220, %v3221
      %v3223 = vrot.slane %v3222, 1
      %v3224 = vadd.f32 %v3222, %v3223
      %v3225 = vrcp.pop %v3224
      %v3226 = vmul.f32 %v3224, %v3225
      %v3227 = vsub.f32 1.0, %v3226
      %v3228 = vmul.f32 %v3225, %v3227
      %v3229 = vadd.f32 %v3225, %v3228
      %vm3230 = vweird.f32 %v3224
      %vm3231 = vweird.f32 %v3225
      %vm3232 = vmor %vm3230, %vm3231
      %v3233 = vsel %vm3232, %v3225, %v3229
      %v3234 = vand.u32 2147483647, %v3224
      %vm3235 = vcmp.eq.f32.partialorder %v3234, 8.507059e+37
      %v3236 = vand.u32 %v3224, 2147483648
      %v3237 = vor.u32 1.1754944e-38, %v3236
      %v3238 = vsel %vm3235, %v3237, %v3233
      %v3239 = vmul.f32 %v3189, %v3238
      %v3240 = vmul.f32 %v3191, %v3238
      %v3241 = vmul.f32 %v3193, %v3238
      %v3242 = vmul.f32 %v3195, %v3238
      %v3243 = vmul.f32 %v3197, %v3238
      %v3244 = vmul.f32 %v3199, %v3238
      %v3245 = vmul.f32 %v3201, %v3238
      %v3246 = vmul.f32 %v3203, %v3238
      %3248 = vset.pattern.permute.xlu0 35
      %3249 = vperm.xlu0 %3248, %v3239
      %v3250 = vpop.permute.xlu0 %3249
      %3253 = vset.pattern.permute.xlu0 35
      %3254 = vperm.xlu0 %3253, %v3240
      %v3255 = vpop.permute.xlu0 %3254
      %3258 = vset.pattern.permute.xlu0 35
      %3259 = vperm.xlu0 %3258, %v3241
      %v3260 = vpop.permute.xlu0 %3259
      %3263 = vset.pattern.permute.xlu0 35
      %3264 = vperm.xlu0 %3263, %v3242
      %v3265 = vpop.permute.xlu0 %3264
      %3268 = vset.pattern.permute.xlu0 35
      %3269 = vperm.xlu0 %3268, %v3243
      %v3270 = vpop.permute.xlu0 %3269
      %3273 = vset.pattern.permute.xlu0 35
      %3274 = vperm.xlu0 %3273, %v3244
      %v3275 = vpop.permute.xlu0 %3274
      %3278 = vset.pattern.permute.xlu0 35
      %3279 = vperm.xlu0 %3278, %v3245
      %v3280 = vpop.permute.xlu0 %3279
      %3283 = vset.pattern.permute.xlu0 35
      %3284 = vperm.xlu0 %3283, %v3246
      %v3285 = vpop.permute.xlu0 %3284
      %v3287 = vmul.f32 %v2003, %v3250
      %v3288 = vmul.f32 %v2005, %v3255
      %v3289 = vmul.f32 %v2008, %v3260
      %v3290 = vmul.f32 %v2010, %v3265
      %v3291 = vmul.f32 %v2013, %v3270
      %v3292 = vmul.f32 %v2015, %v3275
      %v3293 = vmul.f32 %v2018, %v3280
      %v3294 = vmul.f32 %v2020, %v3285
      %vm3295 = vcmask 285888
      %v3296 = vsel %vm3295, %v3287, 0.0
      %v3297 = vsel %vm3295, %v3288, 0.0
      %v3298 = vadd.f32 %v3296, %v3297
      %v3299 = vsel %vm3295, %v3289, 0.0
      %v3300 = vadd.f32 %v3298, %v3299
      %v3301 = vsel %vm3295, %v3290, 0.0
      %v3302 = vadd.f32 %v3300, %v3301
      %v3303 = vsel %vm3295, %v3291, 0.0
      %v3304 = vadd.f32 %v3302, %v3303
      %v3305 = vsel %vm3295, %v3292, 0.0
      %v3306 = vadd.f32 %v3304, %v3305
      %v3307 = vsel %vm3295, %v3293, 0.0
      %v3308 = vadd.f32 %v3306, %v3307
      %v3309 = vsel %vm3295, %v3294, 0.0
      %v3310 = vadd.f32 %v3308, %v3309
      %v3311 = vrot.slane %v3310, 4
      %v3312 = vadd.f32 %v3310, %v3311
      %v3313 = vrot.slane %v3312, 2
      %v3314 = vadd.f32 %v3312, %v3313
      %v3315 = vrot.slane %v3314, 1
      %v3316 = vadd.f32 %v3314, %v3315
      %v3317 = vxor.u32 %v3316, 2147483648
      %v3318 = vmul.f32 %v3317, 1.442695
      %v3319 = vpow.pop %v3318
      %v3320 = vadd.f32 %v3319, 1.0
      %v3321 = vrcp.pop %v3320
      %v3322 = vmul.f32 %v3320, %v3321
      %v3323 = vsub.f32 1.0, %v3322
      %v3324 = vmul.f32 %v3321, %v3323
      %v3325 = vadd.f32 %v3321, %v3324
      %vm3326 = vweird.f32 %v3320
      %vm3327 = vweird.f32 %v3321
      %vm3328 = vmor %vm3326, %vm3327
      %v3329 = vsel %vm3328, %v3321, %v3325
      %v3330 = vand.u32 2147483647, %v3320
      %vm3331 = vcmp.eq.f32.partialorder %v3330, 8.507059e+37
      %v3332 = vand.u32 %v3320, 2147483648
      %v3333 = vor.u32 1.1754944e-38, %v3332
      %v3334 = vsel %vm3331, %v3333, %v3329
      %v3335 = vmul.f32 1.0, %v3334
      %v3336 = vadd.f32 %v3335, 0.01
      %v3337 = vmul.f32 %v3316, 6.2831855
      %v3338 = vmul.f32 %v3316, 5.0
      %v3339 = vtanh.pop %v3338
      %v3340 = vand.u32 2147483647, %v3337
      %vm3341 = vcmp.le.f32.partialorder %v3340, 0.7853982
      %vm3342 = vcmp.lt.s32.totalorder %v3337, 0
      %v3343 = vand.u32 %v3337, 2139095040
      %v3344 = vshrl.u32 %v3343, 23
      %v3345 = vsub.s32 %v3344, 127
      %v3346 = vand.u32 2147483647, %v3337
      %v3347 = vand.u32 %v3346, 8388607
      %v3348 = vor.u32 %v3347, 8388608
      %v3349 = vsub.s32 0, %v3348
      %v3350 = vadd.s32 %v3345, 1
      %vm3351 = vcmp.gt.s32.totalorder %v3350, 0
      %v3352 = vsel %vm3351, %v3350, 0
      %v3353 = vshrl.u32 %v3352, 5
      %v3354 = vand.u32 %v3352, 31
      %v3355 = vsub.s32 32, %v3354
      %v3356 = vshrl.u32 683565275, %v3355
      %v3357 = vshll.u32 683565275, %v3354
      %v3358 = vshrl.u32 2475754826, %v3355
      %v3359 = vor.u32 %v3357, %v3358
      %v3360 = vshll.u32 2475754826, %v3354
      %v3361 = vshrl.u32 2131351028, %v3355
      %v3362 = vor.u32 %v3360, %v3361
      %v3363 = vshll.u32 2131351028, %v3354
      %v3364 = vshrl.u32 2102212464, %v3355
      %v3365 = vor.u32 %v3363, %v3364
      %v3366 = vshll.u32 2102212464, %v3354
      %v3367 = vshrl.u32 920167782, %v3355
      %v3368 = vor.u32 %v3366, %v3367
      %v3369 = vshll.u32 920167782, %v3354
      %v3370 = vshrl.u32 1326507024, %v3355
      %v3371 = vor.u32 %v3369, %v3370
      %vm3372 = vcmp.lt.s32.totalorder %v3353, 1
      %vm3373 = vcmp.lt.s32.totalorder %v3353, 2
      %vm3374 = vcmp.lt.s32.totalorder %v3353, 3
      %vm3375 = vcmp.lt.s32.totalorder %v3353, 4
      %v3376 = vsel %vm3372, %v3356, %v3359
      %v3377 = vsel %vm3375, %v3365, 2102212464
      %v3378 = vsel %vm3374, %v3362, %v3377
      %v3379 = vsel %vm3373, %v3376, %v3378
      %v3380 = vsel %vm3372, %v3359, %v3362
      %v3381 = vsel %vm3375, %v3368, 920167782
      %v3382 = vsel %vm3374, %v3365, %v3381
      %v3383 = vsel %vm3373, %v3380, %v3382
      %v3384 = vsel %vm3372, %v3362, %v3365
      %v3385 = vsel %vm3375, %v3371, 1326507024
      %v3386 = vsel %vm3374, %v3368, %v3385
      %v3387 = vsel %vm3373, %v3384, %v3386
      %v3388 = vshll.u32 %v3348, 8
      %v3389 = vand.u32 %v3388, 65535
      %v3390 = vshrl.u32 %v3388, 16
      %v3391 = vand.u32 %v3387, 65535
      %v3392 = vshrl.u32 %v3387, 16
      %v3393 = vmul.u32 %v3389, %v3391
      %v3394 = vmul.u32 %v3389, %v3392
      %v3395 = vmul.u32 %v3390, %v3391
      %v3396 = vmul.u32 %v3390, %v3392
      %v3397 = vshll.u32 %v3394, 16
      %v3398 = vshrl.u32 %v3394, 16
      %v3399 = vshll.u32 %v3395, 16
      %v3400 = vshrl.u32 %v3395, 16
      %vm3401 = vc.u32 %v3393, %v3397
      %v3402 = vsel %vm3401, 1, 0
      %v3403 = vadd.s32 %v3393, %v3397
      %v3404 = vadd.s32 %v3396, %v3402
      %vm3405 = vc.u32 %v3403, %v3399
      %v3406 = vsel %vm3405, 1, 0
      %v3407 = vadd.s32 %v3403, %v3399
      %v3408 = vadd.s32 %v3404, %v3406
      %v3409 = vadd.s32 %v3408, %v3398
      %v3410 = vadd.s32 %v3409, %v3400
      %v3411 = vand.u32 %v3388, 65535
      %v3412 = vshrl.u32 %v3388, 16
      %v3413 = vand.u32 %v3383, 65535
      %v3414 = vshrl.u32 %v3383, 16
      %v3415 = vmul.u32 %v3411, %v3413
      %v3416 = vmul.u32 %v3411, %v3414
      %v3417 = vmul.u32 %v3412, %v3413
      %v3418 = vmul.u32 %v3412, %v3414
      %v3419 = vshll.u32 %v3416, 16
      %v3420 = vshrl.u32 %v3416, 16
      %v3421 = vshll.u32 %v3417, 16
      %v3422 = vshrl.u32 %v3417, 16
      %vm3423 = vc.u32 %v3415, %v3419
      %v3424 = vsel %vm3423, 1, 0
      %v3425 = vadd.s32 %v3415, %v3419
      %v3426 = vadd.s32 %v3418, %v3424
      %vm3427 = vc.u32 %v3425, %v3421
      %v3428 = vsel %vm3427, 1, 0
      %v3429 = vadd.s32 %v3425, %v3421
      %v3430 = vadd.s32 %v3426, %v3428
      %v3431 = vadd.s32 %v3430, %v3420
      %v3432 = vadd.s32 %v3431, %v3422
      %v3433 = vmul.u32 %v3388, %v3379
      %v3434 = vadd.s32 %v3410, %v3429
      %vm3435 = vc.u32 %v3410, %v3429
      %v3436 = vadd.s32 %v3432, 1
      %v3437 = vsel %vm3435, %v3436, %v3432
      %v3438 = vadd.s32 %v3433, %v3437
      %v3439 = vadd.s32 %v3438, 536870912
      %v3440 = vshrl.u32 %v3439, 30
      %v3441 = vshll.u32 %v3440, 30
      %v3442 = vsub.s32 %v3438, %v3441
      %vm3443 = vcmp.lt.s32.totalorder %v3442, 0
      %v3444 = vsub.s32 0, %v3442
      %v3445 = vsel %vm3443, %v3444, %v3442
      %v3446 = vclz %v3445
      %v3447 = vsub.s32 %v3446, 2
      %vm3448 = vcmp.gt.s32.totalorder 0, %v3447
      %v3449 = vsel %vm3448, 0, %v3447
      %v3450 = vsub.s32 32, %v3449
      %v3451 = vshll.u32 %v3442, %v3449
      %v3452 = vshrl.u32 %v3434, %v3450
      %v3453 = vor.u32 %v3451, %v3452
      %v3454 = vsub.s32 4294967266, %v3449
      %v3455 = vadd.s32 %v3454, 127
      %v3456 = vshll.u32 %v3455, 23
      %v3457 = vor.u32 4788187, %v3456
      %v3458 = vand.u32 2147483647, %v3457
      %v3460 = vcvt.s32.f32 %v3453
      %v3461 = vmul.f32 %v3460, %v3458
      %v3462 = vxor.u32 %v3461, 2147483648
      %v3463 = vsel %vm3342, %v3462, %v3461
      %v3464 = vsub.s32 4, %v3440
      %v3465 = vsel %vm3342, %v3464, %v3440
      %v3466 = vsel %vm3341, %v3337, %v3463
      %v3467 = vsel %vm3341, 0, %v3465
      %v3468 = vmul.f32 %v3466, %v3466
      %v3469 = vmul.f32 %v3468, -0.001358992
      %v3470 = vadd.f32 %v3469, 0.041655596
      %v3471 = vmul.f32 %v3468, %v3470
      %v3472 = vadd.f32 %v3471, -0.4999988
      %v3473 = vmul.f32 %v3468, %v3472
      %v3474 = vadd.f32 1.0, %v3473
      %v3475 = vmul.f32 %v3466, %v3466
      %v3476 = vmul.f32 %v3475, -0.00019511016
      %v3477 = vadd.f32 %v3476, 0.008332121
      %v3478 = vmul.f32 %v3475, %v3477
      %v3479 = vadd.f32 %v3478, -0.16666654
      %v3480 = vmul.f32 %v3475, %v3479
      %v3481 = vadd.f32 %v3480, 1.0
      %v3482 = vmul.f32 %v3481, %v3466
      %vm3483 = vweird.f32 %v3337
      %v3484 = vand.u32 %v3467, 3
      %vm3485 = vcmp.lt.s32.totalorder %v3484, 2
      %vm3486 = vcmp.eq.s32.totalorder %v3484, 0
      %v3487 = vxor.u32 %v3482, 2147483648
      %v3488 = vsel %vm3486, %v3474, %v3487
      %vm3489 = vcmp.eq.s32.totalorder %v3484, 2
      %v3490 = vxor.u32 %v3474, 2147483648
      %v3491 = vsel %vm3489, %v3490, %v3482
      %v3492 = vsel %vm3485, %v3488, %v3491
      %v3493 = vsel %vm3483, nan, %v3492
      %v3494 = vand.u32 2147483647, %v3337
      %vm3495 = vcmp.le.f32.partialorder %v3494, 0.7853982
      %vm3496 = vcmp.lt.s32.totalorder %v3337, 0
      %v3497 = vand.u32 %v3337, 2139095040
      %v3498 = vshrl.u32 %v3497, 23
      %v3499 = vsub.s32 %v3498, 127
      %v3500 = vand.u32 2147483647, %v3337
      %v3501 = vand.u32 %v3500, 8388607
      %v3502 = vor.u32 %v3501, 8388608
      %v3503 = vsub.s32 0, %v3502
      %v3504 = vadd.s32 %v3499, 1
      %vm3505 = vcmp.gt.s32.totalorder %v3504, 0
      %v3506 = vsel %vm3505, %v3504, 0
      %v3507 = vshrl.u32 %v3506, 5
      %v3508 = vand.u32 %v3506, 31
      %v3509 = vsub.s32 32, %v3508
      %v3510 = vshrl.u32 683565275, %v3509
      %v3511 = vshll.u32 683565275, %v3508
      %v3512 = vshrl.u32 2475754826, %v3509
      %v3513 = vor.u32 %v3511, %v3512
      %v3514 = vshll.u32 2475754826, %v3508
      %v3515 = vshrl.u32 2131351028, %v3509
      %v3516 = vor.u32 %v3514, %v3515
      %v3517 = vshll.u32 2131351028, %v3508
      %v3518 = vshrl.u32 2102212464, %v3509
      %v3519 = vor.u32 %v3517, %v3518
      %v3520 = vshll.u32 2102212464, %v3508
      %v3521 = vshrl.u32 920167782, %v3509
      %v3522 = vor.u32 %v3520, %v3521
      %v3523 = vshll.u32 920167782, %v3508
      %v3524 = vshrl.u32 1326507024, %v3509
      %v3525 = vor.u32 %v3523, %v3524
      %vm3526 = vcmp.lt.s32.totalorder %v3507, 1
      %vm3527 = vcmp.lt.s32.totalorder %v3507, 2
      %vm3528 = vcmp.lt.s32.totalorder %v3507, 3
      %vm3529 = vcmp.lt.s32.totalorder %v3507, 4
      %v3530 = vsel %vm3526, %v3510, %v3513
      %v3531 = vsel %vm3529, %v3519, 2102212464
      %v3532 = vsel %vm3528, %v3516, %v3531
      %v3533 = vsel %vm3527, %v3530, %v3532
      %v3534 = vsel %vm3526, %v3513, %v3516
      %v3535 = vsel %vm3529, %v3522, 920167782
      %v3536 = vsel %vm3528, %v3519, %v3535
      %v3537 = vsel %vm3527, %v3534, %v3536
      %v3538 = vsel %vm3526, %v3516, %v3519
      %v3539 = vsel %vm3529, %v3525, 1326507024
      %v3540 = vsel %vm3528, %v3522, %v3539
      %v3541 = vsel %vm3527, %v3538, %v3540
      %v3542 = vshll.u32 %v3502, 8
      %v3543 = vand.u32 %v3542, 65535
      %v3544 = vshrl.u32 %v3542, 16
      %v3545 = vand.u32 %v3541, 65535
      %v3546 = vshrl.u32 %v3541, 16
      %v3547 = vmul.u32 %v3543, %v3545
      %v3548 = vmul.u32 %v3543, %v3546
      %v3549 = vmul.u32 %v3544, %v3545
      %v3550 = vmul.u32 %v3544, %v3546
      %v3551 = vshll.u32 %v3548, 16
      %v3552 = vshrl.u32 %v3548, 16
      %v3553 = vshll.u32 %v3549, 16
      %v3554 = vshrl.u32 %v3549, 16
      %vm3555 = vc.u32 %v3547, %v3551
      %v3556 = vsel %vm3555, 1, 0
      %v3557 = vadd.s32 %v3547, %v3551
      %v3558 = vadd.s32 %v3550, %v3556
      %vm3559 = vc.u32 %v3557, %v3553
      %v3560 = vsel %vm3559, 1, 0
      %v3561 = vadd.s32 %v3557, %v3553
      %v3562 = vadd.s32 %v3558, %v3560
      %v3563 = vadd.s32 %v3562, %v3552
      %v3564 = vadd.s32 %v3563, %v3554
      %v3565 = vand.u32 %v3542, 65535
      %v3566 = vshrl.u32 %v3542, 16
      %v3567 = vand.u32 %v3537, 65535
      %v3568 = vshrl.u32 %v3537, 16
      %v3569 = vmul.u32 %v3565, %v3567
      %v3570 = vmul.u32 %v3565, %v3568
      %v3571 = vmul.u32 %v3566, %v3567
      %v3572 = vmul.u32 %v3566, %v3568
      %v3573 = vshll.u32 %v3570, 16
      %v3574 = vshrl.u32 %v3570, 16
      %v3575 = vshll.u32 %v3571, 16
      %v3576 = vshrl.u32 %v3571, 16
      %vm3577 = vc.u32 %v3569, %v3573
      %v3578 = vsel %vm3577, 1, 0
      %v3579 = vadd.s32 %v3569, %v3573
      %v3580 = vadd.s32 %v3572, %v3578
      %vm3581 = vc.u32 %v3579, %v3575
      %v3582 = vsel %vm3581, 1, 0
      %v3583 = vadd.s32 %v3579, %v3575
      %v3584 = vadd.s32 %v3580, %v3582
      %v3585 = vadd.s32 %v3584, %v3574
      %v3586 = vadd.s32 %v3585, %v3576
      %v3587 = vmul.u32 %v3542, %v3533
      %v3588 = vadd.s32 %v3564, %v3583
      %vm3589 = vc.u32 %v3564, %v3583
      %v3590 = vadd.s32 %v3586, 1
      %v3591 = vsel %vm3589, %v3590, %v3586
      %v3592 = vadd.s32 %v3587, %v3591
      %v3593 = vadd.s32 %v3592, 536870912
      %v3594 = vshrl.u32 %v3593, 30
      %v3595 = vshll.u32 %v3594, 30
      %v3596 = vsub.s32 %v3592, %v3595
      %vm3597 = vcmp.lt.s32.totalorder %v3596, 0
      %v3598 = vsub.s32 0, %v3596
      %v3599 = vsel %vm3597, %v3598, %v3596
      %v3600 = vclz %v3599
      %v3601 = vsub.s32 %v3600, 2
      %vm3602 = vcmp.gt.s32.totalorder 0, %v3601
      %v3603 = vsel %vm3602, 0, %v3601
      %v3604 = vsub.s32 32, %v3603
      %v3605 = vshll.u32 %v3596, %v3603
      %v3606 = vshrl.u32 %v3588, %v3604
      %v3607 = vor.u32 %v3605, %v3606
      %v3608 = vsub.s32 4294967266, %v3603
      %v3609 = vadd.s32 %v3608, 127
      %v3610 = vshll.u32 %v3609, 23
      %v3611 = vor.u32 4788187, %v3610
      %v3612 = vand.u32 2147483647, %v3611
      %v3614 = vcvt.s32.f32 %v3607
      %v3615 = vmul.f32 %v3614, %v3612
      %v3616 = vxor.u32 %v3615, 2147483648
      %v3617 = vsel %vm3496, %v3616, %v3615
      %v3618 = vsub.s32 4, %v3594
      %v3619 = vsel %vm3496, %v3618, %v3594
      %v3620 = vsel %vm3495, %v3337, %v3617
      %v3621 = vsel %vm3495, 0, %v3619
      %v3622 = vmul.f32 %v3620, %v3620
      %v3623 = vmul.f32 %v3622, -0.001358992
      %v3624 = vadd.f32 %v3623, 0.041655596
      %v3625 = vmul.f32 %v3622, %v3624
      %v3626 = vadd.f32 %v3625, -0.4999988
      %v3627 = vmul.f32 %v3622, %v3626
      %v3628 = vadd.f32 1.0, %v3627
      %v3629 = vmul.f32 %v3620, %v3620
      %v3630 = vmul.f32 %v3629, -0.00019511016
      %v3631 = vadd.f32 %v3630, 0.008332121
      %v3632 = vmul.f32 %v3629, %v3631
      %v3633 = vadd.f32 %v3632, -0.16666654
      %v3634 = vmul.f32 %v3629, %v3633
      %v3635 = vadd.f32 %v3634, 1.0
      %v3636 = vmul.f32 %v3635, %v3620
      %vm3637 = vweird.f32 %v3337
      %v3638 = vadd.s32 %v3621, 3
      %v3639 = vand.u32 %v3638, 3
      %vm3640 = vcmp.lt.s32.totalorder %v3639, 2
      %vm3641 = vcmp.eq.s32.totalorder %v3639, 0
      %v3642 = vxor.u32 %v3636, 2147483648
      %v3643 = vsel %vm3641, %v3628, %v3642
      %vm3644 = vcmp.eq.s32.totalorder %v3639, 2
      %v3645 = vxor.u32 %v3628, 2147483648
      %v3646 = vsel %vm3644, %v3645, %v3636
      %v3647 = vsel %vm3640, %v3643, %v3646
      %v3648 = vsel %vm3637, nan, %v3647
      %3650 = vrot.lane.b32.xlu0 %v3493, 126
      %v3651 = vpop.permute.xlu0 %3650
      %v3653 = vmul.f32 %v3336, %v3651
      %3655 = vrot.lane.b32.xlu0 %v3336, 2
      %v3656 = vpop.permute.xlu0 %3655
      %v3658 = vmul.f32 %v3339, %v3656
      %3660 = vrot.lane.b32.xlu0 %v3648, 1
      %v3661 = vpop.permute.xlu0 %3660
      %v3663 = vmul.f32 %v3658, %v3661
      %3665 = vrot.lane.b32.xlu0 %v3663, 125
      %v3666 = vpop.permute.xlu0 %3665
      %v3668 = vadd.f32 %v3653, %v3666
      %v3669 = vsub.f32 0.0, %v3336
      %3670 = vrot.lane.b32.xlu0 %v3648, 126
      %v3671 = vpop.permute.xlu0 %3670
      %v3673 = vmul.f32 %v3669, %v3671
      %3674 = vrot.lane.b32.xlu0 %v3493, 1
      %v3675 = vpop.permute.xlu0 %3674
      %v3677 = vmul.f32 %v3658, %v3675
      %3679 = vrot.lane.b32.xlu0 %v3677, 125
      %v3680 = vpop.permute.xlu0 %3679
      %v3682 = vadd.f32 %v3673, %v3680
      %3683 = vrot.lane.b32.xlu0 %v3648, 127
      %v3684 = vpop.permute.xlu0 %3683
      %v3686 = vmul.f32 %v3336, %v3684
      %3687 = vrot.lane.b32.xlu0 %v3493, 127
      %v3688 = vpop.permute.xlu0 %3687
      %v3690 = vmul.f32 %v3336, %v3688
      %3692 = vrot.lane.b32.xlu0 %v3668, 104
      %v3693 = vpop.permute.xlu0 %3692
      %3696 = vrot.lane.b32.xlu0 %v3682, 105
      %v3697 = vpop.permute.xlu0 %3696
      %3700 = vrot.lane.b32.xlu0 %v3339, 102
      %v3701 = vpop.permute.xlu0 %3700
      %3704 = vrot.lane.b32.xlu0 %v3686, 106
      %v3705 = vpop.permute.xlu0 %3704
      %3708 = vrot.lane.b32.xlu0 %v3690, 107
      %v3709 = vpop.permute.xlu0 %3708
      %3711 = vrot.lane.b32.xlu0 %v3339, 104
      %v3712 = vpop.permute.xlu0 %3711
      %v3714 = vsel %vm2571, %v3693, %v3697
      %v3715 = vsel %vm2573, %v3714, %v3701
      %v3716 = vsel %vm2575, %v3715, %v3705
      %v3717 = vsel %vm2577, %v3716, %v3709
      %v3718 = vsel %vm2579, %v3717, %v3712
      %3720 = vrot.lane.b32.xlu0 %v3335, 104
      %v3721 = vpop.permute.xlu0 %3720
      %3724 = vrot.lane.b32.xlu0 %v3316, 104
      %v3725 = vpop.permute.xlu0 %3724
      %v3727 = vsel %vm2581, %v3718, %v3721
      %v3728 = vsel %vm2583, %v3727, %v3725
      %v3729 = vsel %vm2159, %v3728, 0.0
      %vm3730 = vcmask 392568
      %v3731 = vsel %vm3730, %v2003, -inf
      %v3732 = vsel %vm3730, %v2005, -inf
      %v3733 = vsel %vm3730, %v2008, -inf
      %v3734 = vsel %vm3730, %v2010, -inf
      %v3735 = vsel %vm3730, %v2013, -inf
      %v3736 = vmax.f32 %v3731, %v3735
      %v3737 = vsel %vm3730, %v2015, -inf
      %v3738 = vmax.f32 %v3732, %v3737
      %v3739 = vsel %vm3730, %v2018, -inf
      %v3740 = vmax.f32 %v3733, %v3739
      %v3741 = vsel %vm3730, %v2020, -inf
      %v3742 = vmax.f32 %v3734, %v3741
      %v3743 = vmax.f32 %v3736, %v3738
      %v3744 = vmax.f32 %v3740, %v3742
      %v3745 = vmax.f32 %v3743, %v3744
      %v3746 = vrot.slane %v3745, 4
      %v3747 = vmax.f32 %v3745, %v3746
      %v3748 = vrot.slane %v3747, 2
      %v3749 = vmax.f32 %v3747, %v3748
      %v3750 = vrot.slane %v3749, 1
      %v3751 = vmax.f32 %v3749, %v3750
      %v3752 = vsub.f32 %v2003, %v3751
      %v3753 = vsub.f32 %v2005, %v3751
      %v3754 = vsub.f32 %v2008, %v3751
      %v3755 = vsub.f32 %v2010, %v3751
      %v3756 = vsub.f32 %v2013, %v3751
      %v3757 = vsub.f32 %v2015, %v3751
      %v3758 = vsub.f32 %v2018, %v3751
      %v3759 = vsub.f32 %v2020, %v3751
      %v3760 = vmul.f32 %v3752, 1.442695
      %v3761 = vpow.pop %v3760
      %v3762 = vmul.f32 %v3753, 1.442695
      %v3763 = vpow.pop %v3762
      %v3764 = vmul.f32 %v3754, 1.442695
      %v3765 = vpow.pop %v3764
      %v3766 = vmul.f32 %v3755, 1.442695
      %v3767 = vpow.pop %v3766
      %v3768 = vmul.f32 %v3756, 1.442695
      %v3769 = vpow.pop %v3768
      %v3770 = vmul.f32 %v3757, 1.442695
      %v3771 = vpow.pop %v3770
      %v3772 = vmul.f32 %v3758, 1.442695
      %v3773 = vpow.pop %v3772
      %v3774 = vmul.f32 %v3759, 1.442695
      %v3775 = vpow.pop %v3774
      %v3776 = vsel %vm3730, %v3761, 0.0
      %v3777 = vsel %vm3730, %v3763, 0.0
      %v3778 = vadd.f32 %v3776, %v3777
      %v3779 = vsel %vm3730, %v3765, 0.0
      %v3780 = vadd.f32 %v3778, %v3779
      %v3781 = vsel %vm3730, %v3767, 0.0
      %v3782 = vadd.f32 %v3780, %v3781
      %v3783 = vsel %vm3730, %v3769, 0.0
      %v3784 = vadd.f32 %v3782, %v3783
      %v3785 = vsel %vm3730, %v3771, 0.0
      %v3786 = vadd.f32 %v3784, %v3785
      %v3787 = vsel %vm3730, %v3773, 0.0
      %v3788 = vadd.f32 %v3786, %v3787
      %v3789 = vsel %vm3730, %v3775, 0.0
      %v3790 = vadd.f32 %v3788, %v3789
      %v3791 = vrot.slane %v3790, 4
      %v3792 = vadd.f32 %v3790, %v3791
      %v3793 = vrot.slane %v3792, 2
      %v3794 = vadd.f32 %v3792, %v3793
      %v3795 = vrot.slane %v3794, 1
      %v3796 = vadd.f32 %v3794, %v3795
      %v3797 = vrcp.pop %v3796
      %v3798 = vmul.f32 %v3796, %v3797
      %v3799 = vsub.f32 1.0, %v3798
      %v3800 = vmul.f32 %v3797, %v3799
      %v3801 = vadd.f32 %v3797, %v3800
      %vm3802 = vweird.f32 %v3796
      %vm3803 = vweird.f32 %v3797
      %vm3804 = vmor %vm3802, %vm3803
      %v3805 = vsel %vm3804, %v3797, %v3801
      %v3806 = vand.u32 2147483647, %v3796
      %vm3807 = vcmp.eq.f32.partialorder %v3806, 8.507059e+37
      %v3808 = vand.u32 %v3796, 2147483648
      %v3809 = vor.u32 1.1754944e-38, %v3808
      %v3810 = vsel %vm3807, %v3809, %v3805
      %v3811 = vmul.f32 %v3761, %v3810
      %v3812 = vmul.f32 %v3763, %v3810
      %v3813 = vmul.f32 %v3765, %v3810
      %v3814 = vmul.f32 %v3767, %v3810
      %v3815 = vmul.f32 %v3769, %v3810
      %v3816 = vmul.f32 %v3771, %v3810
      %v3817 = vmul.f32 %v3773, %v3810
      %v3818 = vmul.f32 %v3775, %v3810
      %3820 = vset.pattern.permute.xlu0 47
      %3821 = vperm.xlu0 %3820, %v3811
      %v3822 = vpop.permute.xlu0 %3821
      %3825 = vset.pattern.permute.xlu0 47
      %3826 = vperm.xlu0 %3825, %v3812
      %v3827 = vpop.permute.xlu0 %3826
      %3830 = vset.pattern.permute.xlu0 47
      %3831 = vperm.xlu0 %3830, %v3813
      %v3832 = vpop.permute.xlu0 %3831
      %3835 = vset.pattern.permute.xlu0 47
      %3836 = vperm.xlu0 %3835, %v3814
      %v3837 = vpop.permute.xlu0 %3836
      %3840 = vset.pattern.permute.xlu0 47
      %3841 = vperm.xlu0 %3840, %v3815
      %v3842 = vpop.permute.xlu0 %3841
      %3845 = vset.pattern.permute.xlu0 47
      %3846 = vperm.xlu0 %3845, %v3816
      %v3847 = vpop.permute.xlu0 %3846
      %3850 = vset.pattern.permute.xlu0 47
      %3851 = vperm.xlu0 %3850, %v3817
      %v3852 = vpop.permute.xlu0 %3851
      %3855 = vset.pattern.permute.xlu0 47
      %3856 = vperm.xlu0 %3855, %v3818
      %v3857 = vpop.permute.xlu0 %3856
      %v3859 = vmul.f32 %v2003, %v3822
      %v3860 = vmul.f32 %v2005, %v3827
      %v3861 = vmul.f32 %v2008, %v3832
      %v3862 = vmul.f32 %v2010, %v3837
      %v3863 = vmul.f32 %v2013, %v3842
      %v3864 = vmul.f32 %v2015, %v3847
      %v3865 = vmul.f32 %v2018, %v3852
      %v3866 = vmul.f32 %v2020, %v3857
      %vm3867 = vcmask 384288
      %v3868 = vsel %vm3867, %v3859, 0.0
      %v3869 = vsel %vm3867, %v3860, 0.0
      %v3870 = vadd.f32 %v3868, %v3869
      %v3871 = vsel %vm3867, %v3861, 0.0
      %v3872 = vadd.f32 %v3870, %v3871
      %v3873 = vsel %vm3867, %v3862, 0.0
      %v3874 = vadd.f32 %v3872, %v3873
      %v3875 = vsel %vm3867, %v3863, 0.0
      %v3876 = vadd.f32 %v3874, %v3875
      %v3877 = vsel %vm3867, %v3864, 0.0
      %v3878 = vadd.f32 %v3876, %v3877
      %v3879 = vsel %vm3867, %v3865, 0.0
      %v3880 = vadd.f32 %v3878, %v3879
      %v3881 = vsel %vm3867, %v3866, 0.0
      %v3882 = vadd.f32 %v3880, %v3881
      %v3883 = vrot.slane %v3882, 4
      %v3884 = vadd.f32 %v3882, %v3883
      %v3885 = vrot.slane %v3884, 2
      %v3886 = vadd.f32 %v3884, %v3885
      %v3887 = vrot.slane %v3886, 1
      %v3888 = vadd.f32 %v3886, %v3887
      %v3889 = vxor.u32 %v3888, 2147483648
      %v3890 = vmul.f32 %v3889, 1.442695
      %v3891 = vpow.pop %v3890
      %v3892 = vadd.f32 %v3891, 1.0
      %v3893 = vrcp.pop %v3892
      %v3894 = vmul.f32 %v3892, %v3893
      %v3895 = vsub.f32 1.0, %v3894
      %v3896 = vmul.f32 %v3893, %v3895
      %v3897 = vadd.f32 %v3893, %v3896
      %vm3898 = vweird.f32 %v3892
      %vm3899 = vweird.f32 %v3893
      %vm3900 = vmor %vm3898, %vm3899
      %v3901 = vsel %vm3900, %v3893, %v3897
      %v3902 = vand.u32 2147483647, %v3892
      %vm3903 = vcmp.eq.f32.partialorder %v3902, 8.507059e+37
      %v3904 = vand.u32 %v3892, 2147483648
      %v3905 = vor.u32 1.1754944e-38, %v3904
      %v3906 = vsel %vm3903, %v3905, %v3901
      %v3907 = vmul.f32 1.0, %v3906
      %v3908 = vadd.f32 %v3907, 0.01
      %v3909 = vmul.f32 %v3888, 6.2831855
      %v3910 = vmul.f32 %v3888, 5.0
      %v3911 = vtanh.pop %v3910
      %v3912 = vand.u32 2147483647, %v3909
      %vm3913 = vcmp.le.f32.partialorder %v3912, 0.7853982
      %vm3914 = vcmp.lt.s32.totalorder %v3909, 0
      %v3915 = vand.u32 %v3909, 2139095040
      %v3916 = vshrl.u32 %v3915, 23
      %v3917 = vsub.s32 %v3916, 127
      %v3918 = vand.u32 2147483647, %v3909
      %v3919 = vand.u32 %v3918, 8388607
      %v3920 = vor.u32 %v3919, 8388608
      %v3921 = vsub.s32 0, %v3920
      %v3922 = vadd.s32 %v3917, 1
      %vm3923 = vcmp.gt.s32.totalorder %v3922, 0
      %v3924 = vsel %vm3923, %v3922, 0
      %v3925 = vshrl.u32 %v3924, 5
      %v3926 = vand.u32 %v3924, 31
      %v3927 = vsub.s32 32, %v3926
      %v3928 = vshrl.u32 683565275, %v3927
      %v3929 = vshll.u32 683565275, %v3926
      %v3930 = vshrl.u32 2475754826, %v3927
      %v3931 = vor.u32 %v3929, %v3930
      %v3932 = vshll.u32 2475754826, %v3926
      %v3933 = vshrl.u32 2131351028, %v3927
      %v3934 = vor.u32 %v3932, %v3933
      %v3935 = vshll.u32 2131351028, %v3926
      %v3936 = vshrl.u32 2102212464, %v3927
      %v3937 = vor.u32 %v3935, %v3936
      %v3938 = vshll.u32 2102212464, %v3926
      %v3939 = vshrl.u32 920167782, %v3927
      %v3940 = vor.u32 %v3938, %v3939
      %v3941 = vshll.u32 920167782, %v3926
      %v3942 = vshrl.u32 1326507024, %v3927
      %v3943 = vor.u32 %v3941, %v3942
      %vm3944 = vcmp.lt.s32.totalorder %v3925, 1
      %vm3945 = vcmp.lt.s32.totalorder %v3925, 2
      %vm3946 = vcmp.lt.s32.totalorder %v3925, 3
      %vm3947 = vcmp.lt.s32.totalorder %v3925, 4
      %v3948 = vsel %vm3944, %v3928, %v3931
      %v3949 = vsel %vm3947, %v3937, 2102212464
      %v3950 = vsel %vm3946, %v3934, %v3949
      %v3951 = vsel %vm3945, %v3948, %v3950
      %v3952 = vsel %vm3944, %v3931, %v3934
      %v3953 = vsel %vm3947, %v3940, 920167782
      %v3954 = vsel %vm3946, %v3937, %v3953
      %v3955 = vsel %vm3945, %v3952, %v3954
      %v3956 = vsel %vm3944, %v3934, %v3937
      %v3957 = vsel %vm3947, %v3943, 1326507024
      %v3958 = vsel %vm3946, %v3940, %v3957
      %v3959 = vsel %vm3945, %v3956, %v3958
      %v3960 = vshll.u32 %v3920, 8
      %v3961 = vand.u32 %v3960, 65535
      %v3962 = vshrl.u32 %v3960, 16
      %v3963 = vand.u32 %v3959, 65535
      %v3964 = vshrl.u32 %v3959, 16
      %v3965 = vmul.u32 %v3961, %v3963
      %v3966 = vmul.u32 %v3961, %v3964
      %v3967 = vmul.u32 %v3962, %v3963
      %v3968 = vmul.u32 %v3962, %v3964
      %v3969 = vshll.u32 %v3966, 16
      %v3970 = vshrl.u32 %v3966, 16
      %v3971 = vshll.u32 %v3967, 16
      %v3972 = vshrl.u32 %v3967, 16
      %vm3973 = vc.u32 %v3965, %v3969
      %v3974 = vsel %vm3973, 1, 0
      %v3975 = vadd.s32 %v3965, %v3969
      %v3976 = vadd.s32 %v3968, %v3974
      %vm3977 = vc.u32 %v3975, %v3971
      %v3978 = vsel %vm3977, 1, 0
      %v3979 = vadd.s32 %v3975, %v3971
      %v3980 = vadd.s32 %v3976, %v3978
      %v3981 = vadd.s32 %v3980, %v3970
      %v3982 = vadd.s32 %v3981, %v3972
      %v3983 = vand.u32 %v3960, 65535
      %v3984 = vshrl.u32 %v3960, 16
      %v3985 = vand.u32 %v3955, 65535
      %v3986 = vshrl.u32 %v3955, 16
      %v3987 = vmul.u32 %v3983, %v3985
      %v3988 = vmul.u32 %v3983, %v3986
      %v3989 = vmul.u32 %v3984, %v3985
      %v3990 = vmul.u32 %v3984, %v3986
      %v3991 = vshll.u32 %v3988, 16
      %v3992 = vshrl.u32 %v3988, 16
      %v3993 = vshll.u32 %v3989, 16
      %v3994 = vshrl.u32 %v3989, 16
      %vm3995 = vc.u32 %v3987, %v3991
      %v3996 = vsel %vm3995, 1, 0
      %v3997 = vadd.s32 %v3987, %v3991
      %v3998 = vadd.s32 %v3990, %v3996
      %vm3999 = vc.u32 %v3997, %v3993
      %v4000 = vsel %vm3999, 1, 0
      %v4001 = vadd.s32 %v3997, %v3993
      %v4002 = vadd.s32 %v3998, %v4000
      %v4003 = vadd.s32 %v4002, %v3992
      %v4004 = vadd.s32 %v4003, %v3994
      %v4005 = vmul.u32 %v3960, %v3951
      %v4006 = vadd.s32 %v3982, %v4001
      %vm4007 = vc.u32 %v3982, %v4001
      %v4008 = vadd.s32 %v4004, 1
      %v4009 = vsel %vm4007, %v4008, %v4004
      %v4010 = vadd.s32 %v4005, %v4009
      %v4011 = vadd.s32 %v4010, 536870912
      %v4012 = vshrl.u32 %v4011, 30
      %v4013 = vshll.u32 %v4012, 30
      %v4014 = vsub.s32 %v4010, %v4013
      %vm4015 = vcmp.lt.s32.totalorder %v4014, 0
      %v4016 = vsub.s32 0, %v4014
      %v4017 = vsel %vm4015, %v4016, %v4014
      %v4018 = vclz %v4017
      %v4019 = vsub.s32 %v4018, 2
      %vm4020 = vcmp.gt.s32.totalorder 0, %v4019
      %v4021 = vsel %vm4020, 0, %v4019
      %v4022 = vsub.s32 32, %v4021
      %v4023 = vshll.u32 %v4014, %v4021
      %v4024 = vshrl.u32 %v4006, %v4022
      %v4025 = vor.u32 %v4023, %v4024
      %v4026 = vsub.s32 4294967266, %v4021
      %v4027 = vadd.s32 %v4026, 127
      %v4028 = vshll.u32 %v4027, 23
      %v4029 = vor.u32 4788187, %v4028
      %v4030 = vand.u32 2147483647, %v4029
      %v4032 = vcvt.s32.f32 %v4025
      %v4033 = vmul.f32 %v4032, %v4030
      %v4034 = vxor.u32 %v4033, 2147483648
      %v4035 = vsel %vm3914, %v4034, %v4033
      %v4036 = vsub.s32 4, %v4012
      %v4037 = vsel %vm3914, %v4036, %v4012
      %v4038 = vsel %vm3913, %v3909, %v4035
      %v4039 = vsel %vm3913, 0, %v4037
      %v4040 = vmul.f32 %v4038, %v4038
      %v4041 = vmul.f32 %v4040, -0.001358992
      %v4042 = vadd.f32 %v4041, 0.041655596
      %v4043 = vmul.f32 %v4040, %v4042
      %v4044 = vadd.f32 %v4043, -0.4999988
      %v4045 = vmul.f32 %v4040, %v4044
      %v4046 = vadd.f32 1.0, %v4045
      %v4047 = vmul.f32 %v4038, %v4038
      %v4048 = vmul.f32 %v4047, -0.00019511016
      %v4049 = vadd.f32 %v4048, 0.008332121
      %v4050 = vmul.f32 %v4047, %v4049
      %v4051 = vadd.f32 %v4050, -0.16666654
      %v4052 = vmul.f32 %v4047, %v4051
      %v4053 = vadd.f32 %v4052, 1.0
      %v4054 = vmul.f32 %v4053, %v4038
      %vm4055 = vweird.f32 %v3909
      %v4056 = vand.u32 %v4039, 3
      %vm4057 = vcmp.lt.s32.totalorder %v4056, 2
      %vm4058 = vcmp.eq.s32.totalorder %v4056, 0
      %v4059 = vxor.u32 %v4054, 2147483648
      %v4060 = vsel %vm4058, %v4046, %v4059
      %vm4061 = vcmp.eq.s32.totalorder %v4056, 2
      %v4062 = vxor.u32 %v4046, 2147483648
      %v4063 = vsel %vm4061, %v4062, %v4054
      %v4064 = vsel %vm4057, %v4060, %v4063
      %v4065 = vsel %vm4055, nan, %v4064
      %v4066 = vand.u32 2147483647, %v3909
      %vm4067 = vcmp.le.f32.partialorder %v4066, 0.7853982
      %vm4068 = vcmp.lt.s32.totalorder %v3909, 0
      %v4069 = vand.u32 %v3909, 2139095040
      %v4070 = vshrl.u32 %v4069, 23
      %v4071 = vsub.s32 %v4070, 127
      %v4072 = vand.u32 2147483647, %v3909
      %v4073 = vand.u32 %v4072, 8388607
      %v4074 = vor.u32 %v4073, 8388608
      %v4075 = vsub.s32 0, %v4074
      %v4076 = vadd.s32 %v4071, 1
      %vm4077 = vcmp.gt.s32.totalorder %v4076, 0
      %v4078 = vsel %vm4077, %v4076, 0
      %v4079 = vshrl.u32 %v4078, 5
      %v4080 = vand.u32 %v4078, 31
      %v4081 = vsub.s32 32, %v4080
      %v4082 = vshrl.u32 683565275, %v4081
      %v4083 = vshll.u32 683565275, %v4080
      %v4084 = vshrl.u32 2475754826, %v4081
      %v4085 = vor.u32 %v4083, %v4084
      %v4086 = vshll.u32 2475754826, %v4080
      %v4087 = vshrl.u32 2131351028, %v4081
      %v4088 = vor.u32 %v4086, %v4087
      %v4089 = vshll.u32 2131351028, %v4080
      %v4090 = vshrl.u32 2102212464, %v4081
      %v4091 = vor.u32 %v4089, %v4090
      %v4092 = vshll.u32 2102212464, %v4080
      %v4093 = vshrl.u32 920167782, %v4081
      %v4094 = vor.u32 %v4092, %v4093
      %v4095 = vshll.u32 920167782, %v4080
      %v4096 = vshrl.u32 1326507024, %v4081
      %v4097 = vor.u32 %v4095, %v4096
      %vm4098 = vcmp.lt.s32.totalorder %v4079, 1
      %vm4099 = vcmp.lt.s32.totalorder %v4079, 2
      %vm4100 = vcmp.lt.s32.totalorder %v4079, 3
      %vm4101 = vcmp.lt.s32.totalorder %v4079, 4
      %v4102 = vsel %vm4098, %v4082, %v4085
      %v4103 = vsel %vm4101, %v4091, 2102212464
      %v4104 = vsel %vm4100, %v4088, %v4103
      %v4105 = vsel %vm4099, %v4102, %v4104
      %v4106 = vsel %vm4098, %v4085, %v4088
      %v4107 = vsel %vm4101, %v4094, 920167782
      %v4108 = vsel %vm4100, %v4091, %v4107
      %v4109 = vsel %vm4099, %v4106, %v4108
      %v4110 = vsel %vm4098, %v4088, %v4091
      %v4111 = vsel %vm4101, %v4097, 1326507024
      %v4112 = vsel %vm4100, %v4094, %v4111
      %v4113 = vsel %vm4099, %v4110, %v4112
      %v4114 = vshll.u32 %v4074, 8
      %v4115 = vand.u32 %v4114, 65535
      %v4116 = vshrl.u32 %v4114, 16
      %v4117 = vand.u32 %v4113, 65535
      %v4118 = vshrl.u32 %v4113, 16
      %v4119 = vmul.u32 %v4115, %v4117
      %v4120 = vmul.u32 %v4115, %v4118
      %v4121 = vmul.u32 %v4116, %v4117
      %v4122 = vmul.u32 %v4116, %v4118
      %v4123 = vshll.u32 %v4120, 16
      %v4124 = vshrl.u32 %v4120, 16
      %v4125 = vshll.u32 %v4121, 16
      %v4126 = vshrl.u32 %v4121, 16
      %vm4127 = vc.u32 %v4119, %v4123
      %v4128 = vsel %vm4127, 1, 0
      %v4129 = vadd.s32 %v4119, %v4123
      %v4130 = vadd.s32 %v4122, %v4128
      %vm4131 = vc.u32 %v4129, %v4125
      %v4132 = vsel %vm4131, 1, 0
      %v4133 = vadd.s32 %v4129, %v4125
      %v4134 = vadd.s32 %v4130, %v4132
      %v4135 = vadd.s32 %v4134, %v4124
      %v4136 = vadd.s32 %v4135, %v4126
      %v4137 = vand.u32 %v4114, 65535
      %v4138 = vshrl.u32 %v4114, 16
      %v4139 = vand.u32 %v4109, 65535
      %v4140 = vshrl.u32 %v4109, 16
      %v4141 = vmul.u32 %v4137, %v4139
      %v4142 = vmul.u32 %v4137, %v4140
      %v4143 = vmul.u32 %v4138, %v4139
      %v4144 = vmul.u32 %v4138, %v4140
      %v4145 = vshll.u32 %v4142, 16
      %v4146 = vshrl.u32 %v4142, 16
      %v4147 = vshll.u32 %v4143, 16
      %v4148 = vshrl.u32 %v4143, 16
      %vm4149 = vc.u32 %v4141, %v4145
      %v4150 = vsel %vm4149, 1, 0
      %v4151 = vadd.s32 %v4141, %v4145
      %v4152 = vadd.s32 %v4144, %v4150
      %vm4153 = vc.u32 %v4151, %v4147
      %v4154 = vsel %vm4153, 1, 0
      %v4155 = vadd.s32 %v4151, %v4147
      %v4156 = vadd.s32 %v4152, %v4154
      %v4157 = vadd.s32 %v4156, %v4146
      %v4158 = vadd.s32 %v4157, %v4148
      %v4159 = vmul.u32 %v4114, %v4105
      %v4160 = vadd.s32 %v4136, %v4155
      %vm4161 = vc.u32 %v4136, %v4155
      %v4162 = vadd.s32 %v4158, 1
      %v4163 = vsel %vm4161, %v4162, %v4158
      %v4164 = vadd.s32 %v4159, %v4163
      %v4165 = vadd.s32 %v4164, 536870912
      %v4166 = vshrl.u32 %v4165, 30
      %v4167 = vshll.u32 %v4166, 30
      %v4168 = vsub.s32 %v4164, %v4167
      %vm4169 = vcmp.lt.s32.totalorder %v4168, 0
      %v4170 = vsub.s32 0, %v4168
      %v4171 = vsel %vm4169, %v4170, %v4168
      %v4172 = vclz %v4171
      %v4173 = vsub.s32 %v4172, 2
      %vm4174 = vcmp.gt.s32.totalorder 0, %v4173
      %v4175 = vsel %vm4174, 0, %v4173
      %v4176 = vsub.s32 32, %v4175
      %v4177 = vshll.u32 %v4168, %v4175
      %v4178 = vshrl.u32 %v4160, %v4176
      %v4179 = vor.u32 %v4177, %v4178
      %v4180 = vsub.s32 4294967266, %v4175
      %v4181 = vadd.s32 %v4180, 127
      %v4182 = vshll.u32 %v4181, 23
      %v4183 = vor.u32 4788187, %v4182
      %v4184 = vand.u32 2147483647, %v4183
      %v4186 = vcvt.s32.f32 %v4179
      %v4187 = vmul.f32 %v4186, %v4184
      %v4188 = vxor.u32 %v4187, 2147483648
      %v4189 = vsel %vm4068, %v4188, %v4187
      %v4190 = vsub.s32 4, %v4166
      %v4191 = vsel %vm4068, %v4190, %v4166
      %v4192 = vsel %vm4067, %v3909, %v4189
      %v4193 = vsel %vm4067, 0, %v4191
      %v4194 = vmul.f32 %v4192, %v4192
      %v4195 = vmul.f32 %v4194, -0.001358992
      %v4196 = vadd.f32 %v4195, 0.041655596
      %v4197 = vmul.f32 %v4194, %v4196
      %v4198 = vadd.f32 %v4197, -0.4999988
      %v4199 = vmul.f32 %v4194, %v4198
      %v4200 = vadd.f32 1.0, %v4199
      %v4201 = vmul.f32 %v4192, %v4192
      %v4202 = vmul.f32 %v4201, -0.00019511016
      %v4203 = vadd.f32 %v4202, 0.008332121
      %v4204 = vmul.f32 %v4201, %v4203
      %v4205 = vadd.f32 %v4204, -0.16666654
      %v4206 = vmul.f32 %v4201, %v4205
      %v4207 = vadd.f32 %v4206, 1.0
      %v4208 = vmul.f32 %v4207, %v4192
      %vm4209 = vweird.f32 %v3909
      %v4210 = vadd.s32 %v4193, 3
      %v4211 = vand.u32 %v4210, 3
      %vm4212 = vcmp.lt.s32.totalorder %v4211, 2
      %vm4213 = vcmp.eq.s32.totalorder %v4211, 0
      %v4214 = vxor.u32 %v4208, 2147483648
      %v4215 = vsel %vm4213, %v4200, %v4214
      %vm4216 = vcmp.eq.s32.totalorder %v4211, 2
      %v4217 = vxor.u32 %v4200, 2147483648
      %v4218 = vsel %vm4216, %v4217, %v4208
      %v4219 = vsel %vm4212, %v4215, %v4218
      %v4220 = vsel %vm4209, nan, %v4219
      %4222 = vrot.lane.b32.xlu0 %v4065, 126
      %v4223 = vpop.permute.xlu0 %4222
      %v4225 = vmul.f32 %v3908, %v4223
      %4227 = vrot.lane.b32.xlu0 %v3908, 2
      %v4228 = vpop.permute.xlu0 %4227
      %v4230 = vmul.f32 %v3911, %v4228
      %4232 = vrot.lane.b32.xlu0 %v4220, 1
      %v4233 = vpop.permute.xlu0 %4232
      %v4235 = vmul.f32 %v4230, %v4233
      %4237 = vrot.lane.b32.xlu0 %v4235, 125
      %v4238 = vpop.permute.xlu0 %4237
      %v4240 = vadd.f32 %v4225, %v4238
      %v4241 = vsub.f32 0.0, %v3908
      %4242 = vrot.lane.b32.xlu0 %v4220, 126
      %v4243 = vpop.permute.xlu0 %4242
      %v4245 = vmul.f32 %v4241, %v4243
      %4246 = vrot.lane.b32.xlu0 %v4065, 1
      %v4247 = vpop.permute.xlu0 %4246
      %v4249 = vmul.f32 %v4230, %v4247
      %4251 = vrot.lane.b32.xlu0 %v4249, 125
      %v4252 = vpop.permute.xlu0 %4251
      %v4254 = vadd.f32 %v4245, %v4252
      %4255 = vrot.lane.b32.xlu0 %v4220, 127
      %v4256 = vpop.permute.xlu0 %4255
      %v4258 = vmul.f32 %v3908, %v4256
      %4259 = vrot.lane.b32.xlu0 %v4065, 127
      %v4260 = vpop.permute.xlu0 %4259
      %v4262 = vmul.f32 %v3908, %v4260
      %4264 = vrot.lane.b32.xlu0 %v4240, 92
      %v4265 = vpop.permute.xlu0 %4264
      %4268 = vrot.lane.b32.xlu0 %v4254, 93
      %v4269 = vpop.permute.xlu0 %4268
      %4272 = vrot.lane.b32.xlu0 %v3911, 90
      %v4273 = vpop.permute.xlu0 %4272
      %4276 = vrot.lane.b32.xlu0 %v4258, 94
      %v4277 = vpop.permute.xlu0 %4276
      %4280 = vrot.lane.b32.xlu0 %v4262, 95
      %v4281 = vpop.permute.xlu0 %4280
      %4283 = vrot.lane.b32.xlu0 %v3911, 92
      %v4284 = vpop.permute.xlu0 %4283
      %v4286 = vsel %vm2571, %v4265, %v4269
      %v4287 = vsel %vm2573, %v4286, %v4273
      %v4288 = vsel %vm2575, %v4287, %v4277
      %v4289 = vsel %vm2577, %v4288, %v4281
      %v4290 = vsel %vm2579, %v4289, %v4284
      %4292 = vrot.lane.b32.xlu0 %v3907, 92
      %v4293 = vpop.permute.xlu0 %4292
      %4296 = vrot.lane.b32.xlu0 %v3888, 92
      %v4297 = vpop.permute.xlu0 %4296
      %v4299 = vsel %vm2581, %v4290, %v4293
      %v4300 = vsel %vm2583, %v4299, %v4297
      %v4301 = vsel %vm2159, %v4300, 0.0
      %vm4302 = vcmask 490968
      %v4303 = vsel %vm4302, %v2003, -inf
      %v4304 = vsel %vm4302, %v2005, -inf
      %v4305 = vsel %vm4302, %v2008, -inf
      %v4306 = vsel %vm4302, %v2010, -inf
      %v4307 = vsel %vm4302, %v2013, -inf
      %v4308 = vmax.f32 %v4303, %v4307
      %v4309 = vsel %vm4302, %v2015, -inf
      %v4310 = vmax.f32 %v4304, %v4309
      %v4311 = vsel %vm4302, %v2018, -inf
      %v4312 = vmax.f32 %v4305, %v4311
      %v4313 = vsel %vm4302, %v2020, -inf
      %v4314 = vmax.f32 %v4306, %v4313
      %v4315 = vmax.f32 %v4308, %v4310
      %v4316 = vmax.f32 %v4312, %v4314
      %v4317 = vmax.f32 %v4315, %v4316
      %v4318 = vrot.slane %v4317, 4
      %v4319 = vmax.f32 %v4317, %v4318
      %v4320 = vrot.slane %v4319, 2
      %v4321 = vmax.f32 %v4319, %v4320
      %v4322 = vrot.slane %v4321, 1
      %v4323 = vmax.f32 %v4321, %v4322
      %v4324 = vsub.f32 %v2003, %v4323
      %v4325 = vsub.f32 %v2005, %v4323
      %v4326 = vsub.f32 %v2008, %v4323
      %v4327 = vsub.f32 %v2010, %v4323
      %v4328 = vsub.f32 %v2013, %v4323
      %v4329 = vsub.f32 %v2015, %v4323
      %v4330 = vsub.f32 %v2018, %v4323
      %v4331 = vsub.f32 %v2020, %v4323
      %v4332 = vmul.f32 %v4324, 1.442695
      %v4333 = vpow.pop %v4332
      %v4334 = vmul.f32 %v4325, 1.442695
      %v4335 = vpow.pop %v4334
      %v4336 = vmul.f32 %v4326, 1.442695
      %v4337 = vpow.pop %v4336
      %v4338 = vmul.f32 %v4327, 1.442695
      %v4339 = vpow.pop %v4338
      %v4340 = vmul.f32 %v4328, 1.442695
      %v4341 = vpow.pop %v4340
      %v4342 = vmul.f32 %v4329, 1.442695
      %v4343 = vpow.pop %v4342
      %v4344 = vmul.f32 %v4330, 1.442695
      %v4345 = vpow.pop %v4344
      %v4346 = vmul.f32 %v4331, 1.442695
      %v4347 = vpow.pop %v4346
      %v4348 = vsel %vm4302, %v4333, 0.0
      %v4349 = vsel %vm4302, %v4335, 0.0
      %v4350 = vadd.f32 %v4348, %v4349
      %v4351 = vsel %vm4302, %v4337, 0.0
      %v4352 = vadd.f32 %v4350, %v4351
      %v4353 = vsel %vm4302, %v4339, 0.0
      %v4354 = vadd.f32 %v4352, %v4353
      %v4355 = vsel %vm4302, %v4341, 0.0
      %v4356 = vadd.f32 %v4354, %v4355
      %v4357 = vsel %vm4302, %v4343, 0.0
      %v4358 = vadd.f32 %v4356, %v4357
      %v4359 = vsel %vm4302, %v4345, 0.0
      %v4360 = vadd.f32 %v4358, %v4359
      %v4361 = vsel %vm4302, %v4347, 0.0
      %v4362 = vadd.f32 %v4360, %v4361
      %v4363 = vrot.slane %v4362, 4
      %v4364 = vadd.f32 %v4362, %v4363
      %v4365 = vrot.slane %v4364, 2
      %v4366 = vadd.f32 %v4364, %v4365
      %v4367 = vrot.slane %v4366, 1
      %v4368 = vadd.f32 %v4366, %v4367
      %v4369 = vrcp.pop %v4368
      %v4370 = vmul.f32 %v4368, %v4369
      %v4371 = vsub.f32 1.0, %v4370
      %v4372 = vmul.f32 %v4369, %v4371
      %v4373 = vadd.f32 %v4369, %v4372
      %vm4374 = vweird.f32 %v4368
      %vm4375 = vweird.f32 %v4369
      %vm4376 = vmor %vm4374, %vm4375
      %v4377 = vsel %vm4376, %v4369, %v4373
      %v4378 = vand.u32 2147483647, %v4368
      %vm4379 = vcmp.eq.f32.partialorder %v4378, 8.507059e+37
      %v4380 = vand.u32 %v4368, 2147483648
      %v4381 = vor.u32 1.1754944e-38, %v4380
      %v4382 = vsel %vm4379, %v4381, %v4377
      %v4383 = vmul.f32 %v4333, %v4382
      %v4384 = vmul.f32 %v4335, %v4382
      %v4385 = vmul.f32 %v4337, %v4382
      %v4386 = vmul.f32 %v4339, %v4382
      %v4387 = vmul.f32 %v4341, %v4382
      %v4388 = vmul.f32 %v4343, %v4382
      %v4389 = vmul.f32 %v4345, %v4382
      %v4390 = vmul.f32 %v4347, %v4382
      %4392 = vset.pattern.permute.xlu0 59
      %4393 = vperm.xlu0 %4392, %v4383
      %v4394 = vpop.permute.xlu0 %4393
      %4397 = vset.pattern.permute.xlu0 59
      %4398 = vperm.xlu0 %4397, %v4384
      %v4399 = vpop.permute.xlu0 %4398
      %4402 = vset.pattern.permute.xlu0 59
      %4403 = vperm.xlu0 %4402, %v4385
      %v4404 = vpop.permute.xlu0 %4403
      %4407 = vset.pattern.permute.xlu0 59
      %4408 = vperm.xlu0 %4407, %v4386
      %v4409 = vpop.permute.xlu0 %4408
      %4412 = vset.pattern.permute.xlu0 59
      %4413 = vperm.xlu0 %4412, %v4387
      %v4414 = vpop.permute.xlu0 %4413
      %4417 = vset.pattern.permute.xlu0 59
      %4418 = vperm.xlu0 %4417, %v4388
      %v4419 = vpop.permute.xlu0 %4418
      %4422 = vset.pattern.permute.xlu0 59
      %4423 = vperm.xlu0 %4422, %v4389
      %v4424 = vpop.permute.xlu0 %4423
      %4427 = vset.pattern.permute.xlu0 59
      %4428 = vperm.xlu0 %4427, %v4390
      %v4429 = vpop.permute.xlu0 %4428
      %v4431 = vmul.f32 %v2003, %v4394
      %v4432 = vmul.f32 %v2005, %v4399
      %v4433 = vmul.f32 %v2008, %v4404
      %v4434 = vmul.f32 %v2010, %v4409
      %v4435 = vmul.f32 %v2013, %v4414
      %v4436 = vmul.f32 %v2015, %v4419
      %v4437 = vmul.f32 %v2018, %v4424
      %v4438 = vmul.f32 %v2020, %v4429
      %vm4439 = vcmask 482688
      %v4440 = vsel %vm4439, %v4431, 0.0
      %v4441 = vsel %vm4439, %v4432, 0.0
      %v4442 = vadd.f32 %v4440, %v4441
      %v4443 = vsel %vm4439, %v4433, 0.0
      %v4444 = vadd.f32 %v4442, %v4443
      %v4445 = vsel %vm4439, %v4434, 0.0
      %v4446 = vadd.f32 %v4444, %v4445
      %v4447 = vsel %vm4439, %v4435, 0.0
      %v4448 = vadd.f32 %v4446, %v4447
      %v4449 = vsel %vm4439, %v4436, 0.0
      %v4450 = vadd.f32 %v4448, %v4449
      %v4451 = vsel %vm4439, %v4437, 0.0
      %v4452 = vadd.f32 %v4450, %v4451
      %v4453 = vsel %vm4439, %v4438, 0.0
      %v4454 = vadd.f32 %v4452, %v4453
      %v4455 = vrot.slane %v4454, 4
      %v4456 = vadd.f32 %v4454, %v4455
      %v4457 = vrot.slane %v4456, 2
      %v4458 = vadd.f32 %v4456, %v4457
      %v4459 = vrot.slane %v4458, 1
      %v4460 = vadd.f32 %v4458, %v4459
      %v4461 = vxor.u32 %v4460, 2147483648
      %v4462 = vmul.f32 %v4461, 1.442695
      %v4463 = vpow.pop %v4462
      %v4464 = vadd.f32 %v4463, 1.0
      %v4465 = vrcp.pop %v4464
      %v4466 = vmul.f32 %v4464, %v4465
      %v4467 = vsub.f32 1.0, %v4466
      %v4468 = vmul.f32 %v4465, %v4467
      %v4469 = vadd.f32 %v4465, %v4468
      %vm4470 = vweird.f32 %v4464
      %vm4471 = vweird.f32 %v4465
      %vm4472 = vmor %vm4470, %vm4471
      %v4473 = vsel %vm4472, %v4465, %v4469
      %v4474 = vand.u32 2147483647, %v4464
      %vm4475 = vcmp.eq.f32.partialorder %v4474, 8.507059e+37
      %v4476 = vand.u32 %v4464, 2147483648
      %v4477 = vor.u32 1.1754944e-38, %v4476
      %v4478 = vsel %vm4475, %v4477, %v4473
      %v4479 = vmul.f32 1.0, %v4478
      %v4480 = vadd.f32 %v4479, 0.01
      %v4481 = vmul.f32 %v4460, 6.2831855
      %v4482 = vmul.f32 %v4460, 5.0
      %v4483 = vtanh.pop %v4482
      %v4484 = vand.u32 2147483647, %v4481
      %vm4485 = vcmp.le.f32.partialorder %v4484, 0.7853982
      %vm4486 = vcmp.lt.s32.totalorder %v4481, 0
      %v4487 = vand.u32 %v4481, 2139095040
      %v4488 = vshrl.u32 %v4487, 23
      %v4489 = vsub.s32 %v4488, 127
      %v4490 = vand.u32 2147483647, %v4481
      %v4491 = vand.u32 %v4490, 8388607
      %v4492 = vor.u32 %v4491, 8388608
      %v4493 = vsub.s32 0, %v4492
      %v4494 = vadd.s32 %v4489, 1
      %vm4495 = vcmp.gt.s32.totalorder %v4494, 0
      %v4496 = vsel %vm4495, %v4494, 0
      %v4497 = vshrl.u32 %v4496, 5
      %v4498 = vand.u32 %v4496, 31
      %v4499 = vsub.s32 32, %v4498
      %v4500 = vshrl.u32 683565275, %v4499
      %v4501 = vshll.u32 683565275, %v4498
      %v4502 = vshrl.u32 2475754826, %v4499
      %v4503 = vor.u32 %v4501, %v4502
      %v4504 = vshll.u32 2475754826, %v4498
      %v4505 = vshrl.u32 2131351028, %v4499
      %v4506 = vor.u32 %v4504, %v4505
      %v4507 = vshll.u32 2131351028, %v4498
      %v4508 = vshrl.u32 2102212464, %v4499
      %v4509 = vor.u32 %v4507, %v4508
      %v4510 = vshll.u32 2102212464, %v4498
      %v4511 = vshrl.u32 920167782, %v4499
      %v4512 = vor.u32 %v4510, %v4511
      %v4513 = vshll.u32 920167782, %v4498
      %v4514 = vshrl.u32 1326507024, %v4499
      %v4515 = vor.u32 %v4513, %v4514
      %vm4516 = vcmp.lt.s32.totalorder %v4497, 1
      %vm4517 = vcmp.lt.s32.totalorder %v4497, 2
      %vm4518 = vcmp.lt.s32.totalorder %v4497, 3
      %vm4519 = vcmp.lt.s32.totalorder %v4497, 4
      %v4520 = vsel %vm4516, %v4500, %v4503
      %v4521 = vsel %vm4519, %v4509, 2102212464
      %v4522 = vsel %vm4518, %v4506, %v4521
      %v4523 = vsel %vm4517, %v4520, %v4522
      %v4524 = vsel %vm4516, %v4503, %v4506
      %v4525 = vsel %vm4519, %v4512, 920167782
      %v4526 = vsel %vm4518, %v4509, %v4525
      %v4527 = vsel %vm4517, %v4524, %v4526
      %v4528 = vsel %vm4516, %v4506, %v4509
      %v4529 = vsel %vm4519, %v4515, 1326507024
      %v4530 = vsel %vm4518, %v4512, %v4529
      %v4531 = vsel %vm4517, %v4528, %v4530
      %v4532 = vshll.u32 %v4492, 8
      %v4533 = vand.u32 %v4532, 65535
      %v4534 = vshrl.u32 %v4532, 16
      %v4535 = vand.u32 %v4531, 65535
      %v4536 = vshrl.u32 %v4531, 16
      %v4537 = vmul.u32 %v4533, %v4535
      %v4538 = vmul.u32 %v4533, %v4536
      %v4539 = vmul.u32 %v4534, %v4535
      %v4540 = vmul.u32 %v4534, %v4536
      %v4541 = vshll.u32 %v4538, 16
      %v4542 = vshrl.u32 %v4538, 16
      %v4543 = vshll.u32 %v4539, 16
      %v4544 = vshrl.u32 %v4539, 16
      %vm4545 = vc.u32 %v4537, %v4541
      %v4546 = vsel %vm4545, 1, 0
      %v4547 = vadd.s32 %v4537, %v4541
      %v4548 = vadd.s32 %v4540, %v4546
      %vm4549 = vc.u32 %v4547, %v4543
      %v4550 = vsel %vm4549, 1, 0
      %v4551 = vadd.s32 %v4547, %v4543
      %v4552 = vadd.s32 %v4548, %v4550
      %v4553 = vadd.s32 %v4552, %v4542
      %v4554 = vadd.s32 %v4553, %v4544
      %v4555 = vand.u32 %v4532, 65535
      %v4556 = vshrl.u32 %v4532, 16
      %v4557 = vand.u32 %v4527, 65535
      %v4558 = vshrl.u32 %v4527, 16
      %v4559 = vmul.u32 %v4555, %v4557
      %v4560 = vmul.u32 %v4555, %v4558
      %v4561 = vmul.u32 %v4556, %v4557
      %v4562 = vmul.u32 %v4556, %v4558
      %v4563 = vshll.u32 %v4560, 16
      %v4564 = vshrl.u32 %v4560, 16
      %v4565 = vshll.u32 %v4561, 16
      %v4566 = vshrl.u32 %v4561, 16
      %vm4567 = vc.u32 %v4559, %v4563
      %v4568 = vsel %vm4567, 1, 0
      %v4569 = vadd.s32 %v4559, %v4563
      %v4570 = vadd.s32 %v4562, %v4568
      %vm4571 = vc.u32 %v4569, %v4565
      %v4572 = vsel %vm4571, 1, 0
      %v4573 = vadd.s32 %v4569, %v4565
      %v4574 = vadd.s32 %v4570, %v4572
      %v4575 = vadd.s32 %v4574, %v4564
      %v4576 = vadd.s32 %v4575, %v4566
      %v4577 = vmul.u32 %v4532, %v4523
      %v4578 = vadd.s32 %v4554, %v4573
      %vm4579 = vc.u32 %v4554, %v4573
      %v4580 = vadd.s32 %v4576, 1
      %v4581 = vsel %vm4579, %v4580, %v4576
      %v4582 = vadd.s32 %v4577, %v4581
      %v4583 = vadd.s32 %v4582, 536870912
      %v4584 = vshrl.u32 %v4583, 30
      %v4585 = vshll.u32 %v4584, 30
      %v4586 = vsub.s32 %v4582, %v4585
      %vm4587 = vcmp.lt.s32.totalorder %v4586, 0
      %v4588 = vsub.s32 0, %v4586
      %v4589 = vsel %vm4587, %v4588, %v4586
      %v4590 = vclz %v4589
      %v4591 = vsub.s32 %v4590, 2
      %vm4592 = vcmp.gt.s32.totalorder 0, %v4591
      %v4593 = vsel %vm4592, 0, %v4591
      %v4594 = vsub.s32 32, %v4593
      %v4595 = vshll.u32 %v4586, %v4593
      %v4596 = vshrl.u32 %v4578, %v4594
      %v4597 = vor.u32 %v4595, %v4596
      %v4598 = vsub.s32 4294967266, %v4593
      %v4599 = vadd.s32 %v4598, 127
      %v4600 = vshll.u32 %v4599, 23
      %v4601 = vor.u32 4788187, %v4600
      %v4602 = vand.u32 2147483647, %v4601
      %v4604 = vcvt.s32.f32 %v4597
      %v4605 = vmul.f32 %v4604, %v4602
      %v4606 = vxor.u32 %v4605, 2147483648
      %v4607 = vsel %vm4486, %v4606, %v4605
      %v4608 = vsub.s32 4, %v4584
      %v4609 = vsel %vm4486, %v4608, %v4584
      %v4610 = vsel %vm4485, %v4481, %v4607
      %v4611 = vsel %vm4485, 0, %v4609
      %v4612 = vmul.f32 %v4610, %v4610
      %v4613 = vmul.f32 %v4612, -0.001358992
      %v4614 = vadd.f32 %v4613, 0.041655596
      %v4615 = vmul.f32 %v4612, %v4614
      %v4616 = vadd.f32 %v4615, -0.4999988
      %v4617 = vmul.f32 %v4612, %v4616
      %v4618 = vadd.f32 1.0, %v4617
      %v4619 = vmul.f32 %v4610, %v4610
      %v4620 = vmul.f32 %v4619, -0.00019511016
      %v4621 = vadd.f32 %v4620, 0.008332121
      %v4622 = vmul.f32 %v4619, %v4621
      %v4623 = vadd.f32 %v4622, -0.16666654
      %v4624 = vmul.f32 %v4619, %v4623
      %v4625 = vadd.f32 %v4624, 1.0
      %v4626 = vmul.f32 %v4625, %v4610
      %vm4627 = vweird.f32 %v4481
      %v4628 = vand.u32 %v4611, 3
      %vm4629 = vcmp.lt.s32.totalorder %v4628, 2
      %vm4630 = vcmp.eq.s32.totalorder %v4628, 0
      %v4631 = vxor.u32 %v4626, 2147483648
      %v4632 = vsel %vm4630, %v4618, %v4631
      %vm4633 = vcmp.eq.s32.totalorder %v4628, 2
      %v4634 = vxor.u32 %v4618, 2147483648
      %v4635 = vsel %vm4633, %v4634, %v4626
      %v4636 = vsel %vm4629, %v4632, %v4635
      %v4637 = vsel %vm4627, nan, %v4636
      %v4638 = vand.u32 2147483647, %v4481
      %vm4639 = vcmp.le.f32.partialorder %v4638, 0.7853982
      %vm4640 = vcmp.lt.s32.totalorder %v4481, 0
      %v4641 = vand.u32 %v4481, 2139095040
      %v4642 = vshrl.u32 %v4641, 23
      %v4643 = vsub.s32 %v4642, 127
      %v4644 = vand.u32 2147483647, %v4481
      %v4645 = vand.u32 %v4644, 8388607
      %v4646 = vor.u32 %v4645, 8388608
      %v4647 = vsub.s32 0, %v4646
      %v4648 = vadd.s32 %v4643, 1
      %vm4649 = vcmp.gt.s32.totalorder %v4648, 0
      %v4650 = vsel %vm4649, %v4648, 0
      %v4651 = vshrl.u32 %v4650, 5
      %v4652 = vand.u32 %v4650, 31
      %v4653 = vsub.s32 32, %v4652
      %v4654 = vshrl.u32 683565275, %v4653
      %v4655 = vshll.u32 683565275, %v4652
      %v4656 = vshrl.u32 2475754826, %v4653
      %v4657 = vor.u32 %v4655, %v4656
      %v4658 = vshll.u32 2475754826, %v4652
      %v4659 = vshrl.u32 2131351028, %v4653
      %v4660 = vor.u32 %v4658, %v4659
      %v4661 = vshll.u32 2131351028, %v4652
      %v4662 = vshrl.u32 2102212464, %v4653
      %v4663 = vor.u32 %v4661, %v4662
      %v4664 = vshll.u32 2102212464, %v4652
      %v4665 = vshrl.u32 920167782, %v4653
      %v4666 = vor.u32 %v4664, %v4665
      %v4667 = vshll.u32 920167782, %v4652
      %v4668 = vshrl.u32 1326507024, %v4653
      %v4669 = vor.u32 %v4667, %v4668
      %vm4670 = vcmp.lt.s32.totalorder %v4651, 1
      %vm4671 = vcmp.lt.s32.totalorder %v4651, 2
      %vm4672 = vcmp.lt.s32.totalorder %v4651, 3
      %vm4673 = vcmp.lt.s32.totalorder %v4651, 4
      %v4674 = vsel %vm4670, %v4654, %v4657
      %v4675 = vsel %vm4673, %v4663, 2102212464
      %v4676 = vsel %vm4672, %v4660, %v4675
      %v4677 = vsel %vm4671, %v4674, %v4676
      %v4678 = vsel %vm4670, %v4657, %v4660
      %v4679 = vsel %vm4673, %v4666, 920167782
      %v4680 = vsel %vm4672, %v4663, %v4679
      %v4681 = vsel %vm4671, %v4678, %v4680
      %v4682 = vsel %vm4670, %v4660, %v4663
      %v4683 = vsel %vm4673, %v4669, 1326507024
      %v4684 = vsel %vm4672, %v4666, %v4683
      %v4685 = vsel %vm4671, %v4682, %v4684
      %v4686 = vshll.u32 %v4646, 8
      %v4687 = vand.u32 %v4686, 65535
      %v4688 = vshrl.u32 %v4686, 16
      %v4689 = vand.u32 %v4685, 65535
      %v4690 = vshrl.u32 %v4685, 16
      %v4691 = vmul.u32 %v4687, %v4689
      %v4692 = vmul.u32 %v4687, %v4690
      %v4693 = vmul.u32 %v4688, %v4689
      %v4694 = vmul.u32 %v4688, %v4690
      %v4695 = vshll.u32 %v4692, 16
      %v4696 = vshrl.u32 %v4692, 16
      %v4697 = vshll.u32 %v4693, 16
      %v4698 = vshrl.u32 %v4693, 16
      %vm4699 = vc.u32 %v4691, %v4695
      %v4700 = vsel %vm4699, 1, 0
      %v4701 = vadd.s32 %v4691, %v4695
      %v4702 = vadd.s32 %v4694, %v4700
      %vm4703 = vc.u32 %v4701, %v4697
      %v4704 = vsel %vm4703, 1, 0
      %v4705 = vadd.s32 %v4701, %v4697
      %v4706 = vadd.s32 %v4702, %v4704
      %v4707 = vadd.s32 %v4706, %v4696
      %v4708 = vadd.s32 %v4707, %v4698
      %v4709 = vand.u32 %v4686, 65535
      %v4710 = vshrl.u32 %v4686, 16
      %v4711 = vand.u32 %v4681, 65535
      %v4712 = vshrl.u32 %v4681, 16
      %v4713 = vmul.u32 %v4709, %v4711
      %v4714 = vmul.u32 %v4709, %v4712
      %v4715 = vmul.u32 %v4710, %v4711
      %v4716 = vmul.u32 %v4710, %v4712
      %v4717 = vshll.u32 %v4714, 16
      %v4718 = vshrl.u32 %v4714, 16
      %v4719 = vshll.u32 %v4715, 16
      %v4720 = vshrl.u32 %v4715, 16
      %vm4721 = vc.u32 %v4713, %v4717
      %v4722 = vsel %vm4721, 1, 0
      %v4723 = vadd.s32 %v4713, %v4717
      %v4724 = vadd.s32 %v4716, %v4722
      %vm4725 = vc.u32 %v4723, %v4719
      %v4726 = vsel %vm4725, 1, 0
      %v4727 = vadd.s32 %v4723, %v4719
      %v4728 = vadd.s32 %v4724, %v4726
      %v4729 = vadd.s32 %v4728, %v4718
      %v4730 = vadd.s32 %v4729, %v4720
      %v4731 = vmul.u32 %v4686, %v4677
      %v4732 = vadd.s32 %v4708, %v4727
      %vm4733 = vc.u32 %v4708, %v4727
      %v4734 = vadd.s32 %v4730, 1
      %v4735 = vsel %vm4733, %v4734, %v4730
      %v4736 = vadd.s32 %v4731, %v4735
      %v4737 = vadd.s32 %v4736, 536870912
      %v4738 = vshrl.u32 %v4737, 30
      %v4739 = vshll.u32 %v4738, 30
      %v4740 = vsub.s32 %v4736, %v4739
      %vm4741 = vcmp.lt.s32.totalorder %v4740, 0
      %v4742 = vsub.s32 0, %v4740
      %v4743 = vsel %vm4741, %v4742, %v4740
      %v4744 = vclz %v4743
      %v4745 = vsub.s32 %v4744, 2
      %vm4746 = vcmp.gt.s32.totalorder 0, %v4745
      %v4747 = vsel %vm4746, 0, %v4745
      %v4748 = vsub.s32 32, %v4747
      %v4749 = vshll.u32 %v4740, %v4747
      %v4750 = vshrl.u32 %v4732, %v4748
      %v4751 = vor.u32 %v4749, %v4750
      %v4752 = vsub.s32 4294967266, %v4747
      %v4753 = vadd.s32 %v4752, 127
      %v4754 = vshll.u32 %v4753, 23
      %v4755 = vor.u32 4788187, %v4754
      %v4756 = vand.u32 2147483647, %v4755
      %v4758 = vcvt.s32.f32 %v4751
      %v4759 = vmul.f32 %v4758, %v4756
      %v4760 = vxor.u32 %v4759, 2147483648
      %v4761 = vsel %vm4640, %v4760, %v4759
      %v4762 = vsub.s32 4, %v4738
      %v4763 = vsel %vm4640, %v4762, %v4738
      %v4764 = vsel %vm4639, %v4481, %v4761
      %v4765 = vsel %vm4639, 0, %v4763
      %v4766 = vmul.f32 %v4764, %v4764
      %v4767 = vmul.f32 %v4766, -0.001358992
      %v4768 = vadd.f32 %v4767, 0.041655596
      %v4769 = vmul.f32 %v4766, %v4768
      %v4770 = vadd.f32 %v4769, -0.4999988
      %v4771 = vmul.f32 %v4766, %v4770
      %v4772 = vadd.f32 1.0, %v4771
      %v4773 = vmul.f32 %v4764, %v4764
      %v4774 = vmul.f32 %v4773, -0.00019511016
      %v4775 = vadd.f32 %v4774, 0.008332121
      %v4776 = vmul.f32 %v4773, %v4775
      %v4777 = vadd.f32 %v4776, -0.16666654
      %v4778 = vmul.f32 %v4773, %v4777
      %v4779 = vadd.f32 %v4778, 1.0
      %v4780 = vmul.f32 %v4779, %v4764
      %vm4781 = vweird.f32 %v4481
      %v4782 = vadd.s32 %v4765, 3
      %v4783 = vand.u32 %v4782, 3
      %vm4784 = vcmp.lt.s32.totalorder %v4783, 2
      %vm4785 = vcmp.eq.s32.totalorder %v4783, 0
      %v4786 = vxor.u32 %v4780, 2147483648
      %v4787 = vsel %vm4785, %v4772, %v4786
      %vm4788 = vcmp.eq.s32.totalorder %v4783, 2
      %v4789 = vxor.u32 %v4772, 2147483648
      %v4790 = vsel %vm4788, %v4789, %v4780
      %v4791 = vsel %vm4784, %v4787, %v4790
      %v4792 = vsel %vm4781, nan, %v4791
      %4794 = vrot.lane.b32.xlu0 %v4637, 126
      %v4795 = vpop.permute.xlu0 %4794
      %v4797 = vmul.f32 %v4480, %v4795
      %4799 = vrot.lane.b32.xlu0 %v4480, 2
      %v4800 = vpop.permute.xlu0 %4799
      %v4802 = vmul.f32 %v4483, %v4800
      %4804 = vrot.lane.b32.xlu0 %v4792, 1
      %v4805 = vpop.permute.xlu0 %4804
      %v4807 = vmul.f32 %v4802, %v4805
      %4809 = vrot.lane.b32.xlu0 %v4807, 125
      %v4810 = vpop.permute.xlu0 %4809
      %v4812 = vadd.f32 %v4797, %v4810
      %v4813 = vsub.f32 0.0, %v4480
      %4814 = vrot.lane.b32.xlu0 %v4792, 126
      %v4815 = vpop.permute.xlu0 %4814
      %v4817 = vmul.f32 %v4813, %v4815
      %4818 = vrot.lane.b32.xlu0 %v4637, 1
      %v4819 = vpop.permute.xlu0 %4818
      %v4821 = vmul.f32 %v4802, %v4819
      %4823 = vrot.lane.b32.xlu0 %v4821, 125
      %v4824 = vpop.permute.xlu0 %4823
      %v4826 = vadd.f32 %v4817, %v4824
      %4827 = vrot.lane.b32.xlu0 %v4792, 127
      %v4828 = vpop.permute.xlu0 %4827
      %v4830 = vmul.f32 %v4480, %v4828
      %4831 = vrot.lane.b32.xlu0 %v4637, 127
      %v4832 = vpop.permute.xlu0 %4831
      %v4834 = vmul.f32 %v4480, %v4832
      %4836 = vrot.lane.b32.xlu0 %v4812, 80
      %v4837 = vpop.permute.xlu0 %4836
      %4840 = vrot.lane.b32.xlu0 %v4826, 81
      %v4841 = vpop.permute.xlu0 %4840
      %4844 = vrot.lane.b32.xlu0 %v4483, 78
      %v4845 = vpop.permute.xlu0 %4844
      %4848 = vrot.lane.b32.xlu0 %v4830, 82
      %v4849 = vpop.permute.xlu0 %4848
      %4852 = vrot.lane.b32.xlu0 %v4834, 83
      %v4853 = vpop.permute.xlu0 %4852
      %4855 = vrot.lane.b32.xlu0 %v4483, 80
      %v4856 = vpop.permute.xlu0 %4855
      %v4858 = vsel %vm2571, %v4837, %v4841
      %v4859 = vsel %vm2573, %v4858, %v4845
      %v4860 = vsel %vm2575, %v4859, %v4849
      %v4861 = vsel %vm2577, %v4860, %v4853
      %v4862 = vsel %vm2579, %v4861, %v4856
      %4864 = vrot.lane.b32.xlu0 %v4479, 80
      %v4865 = vpop.permute.xlu0 %4864
      %4868 = vrot.lane.b32.xlu0 %v4460, 80
      %v4869 = vpop.permute.xlu0 %4868
      %v4871 = vsel %vm2581, %v4862, %v4865
      %v4872 = vsel %vm2583, %v4871, %v4869
      %v4873 = vsel %vm2159, %v4872, 0.0
      %vm4874 = vcmask 589368
      %v4875 = vsel %vm4874, %v2003, -inf
      %v4876 = vsel %vm4874, %v2005, -inf
      %v4877 = vsel %vm4874, %v2008, -inf
      %v4878 = vsel %vm4874, %v2010, -inf
      %v4879 = vsel %vm4874, %v2013, -inf
      %v4880 = vmax.f32 %v4875, %v4879
      %v4881 = vsel %vm4874, %v2015, -inf
      %v4882 = vmax.f32 %v4876, %v4881
      %v4883 = vsel %vm4874, %v2018, -inf
      %v4884 = vmax.f32 %v4877, %v4883
      %v4885 = vsel %vm4874, %v2020, -inf
      %v4886 = vmax.f32 %v4878, %v4885
      %v4887 = vmax.f32 %v4880, %v4882
      %v4888 = vmax.f32 %v4884, %v4886
      %v4889 = vmax.f32 %v4887, %v4888
      %v4890 = vrot.slane %v4889, 4
      %v4891 = vmax.f32 %v4889, %v4890
      %v4892 = vrot.slane %v4891, 2
      %v4893 = vmax.f32 %v4891, %v4892
      %v4894 = vrot.slane %v4893, 1
      %v4895 = vmax.f32 %v4893, %v4894
      %v4896 = vsub.f32 %v2003, %v4895
      %v4897 = vsub.f32 %v2005, %v4895
      %v4898 = vsub.f32 %v2008, %v4895
      %v4899 = vsub.f32 %v2010, %v4895
      %v4900 = vsub.f32 %v2013, %v4895
      %v4901 = vsub.f32 %v2015, %v4895
      %v4902 = vsub.f32 %v2018, %v4895
      %v4903 = vsub.f32 %v2020, %v4895
      %v4904 = vmul.f32 %v4896, 1.442695
      %v4905 = vpow.pop %v4904
      %v4906 = vmul.f32 %v4897, 1.442695
      %v4907 = vpow.pop %v4906
      %v4908 = vmul.f32 %v4898, 1.442695
      %v4909 = vpow.pop %v4908
      %v4910 = vmul.f32 %v4899, 1.442695
      %v4911 = vpow.pop %v4910
      %v4912 = vmul.f32 %v4900, 1.442695
      %v4913 = vpow.pop %v4912
      %v4914 = vmul.f32 %v4901, 1.442695
      %v4915 = vpow.pop %v4914
      %v4916 = vmul.f32 %v4902, 1.442695
      %v4917 = vpow.pop %v4916
      %v4918 = vmul.f32 %v4903, 1.442695
      %v4919 = vpow.pop %v4918
      %v4920 = vsel %vm4874, %v4905, 0.0
      %v4921 = vsel %vm4874, %v4907, 0.0
      %v4922 = vadd.f32 %v4920, %v4921
      %v4923 = vsel %vm4874, %v4909, 0.0
      %v4924 = vadd.f32 %v4922, %v4923
      %v4925 = vsel %vm4874, %v4911, 0.0
      %v4926 = vadd.f32 %v4924, %v4925
      %v4927 = vsel %vm4874, %v4913, 0.0
      %v4928 = vadd.f32 %v4926, %v4927
      %v4929 = vsel %vm4874, %v4915, 0.0
      %v4930 = vadd.f32 %v4928, %v4929
      %v4931 = vsel %vm4874, %v4917, 0.0
      %v4932 = vadd.f32 %v4930, %v4931
      %v4933 = vsel %vm4874, %v4919, 0.0
      %v4934 = vadd.f32 %v4932, %v4933
      %v4935 = vrot.slane %v4934, 4
      %v4936 = vadd.f32 %v4934, %v4935
      %v4937 = vrot.slane %v4936, 2
      %v4938 = vadd.f32 %v4936, %v4937
      %v4939 = vrot.slane %v4938, 1
      %v4940 = vadd.f32 %v4938, %v4939
      %v4941 = vrcp.pop %v4940
      %v4942 = vmul.f32 %v4940, %v4941
      %v4943 = vsub.f32 1.0, %v4942
      %v4944 = vmul.f32 %v4941, %v4943
      %v4945 = vadd.f32 %v4941, %v4944
      %vm4946 = vweird.f32 %v4940
      %vm4947 = vweird.f32 %v4941
      %vm4948 = vmor %vm4946, %vm4947
      %v4949 = vsel %vm4948, %v4941, %v4945
      %v4950 = vand.u32 2147483647, %v4940
      %vm4951 = vcmp.eq.f32.partialorder %v4950, 8.507059e+37
      %v4952 = vand.u32 %v4940, 2147483648
      %v4953 = vor.u32 1.1754944e-38, %v4952
      %v4954 = vsel %vm4951, %v4953, %v4949
      %v4955 = vmul.f32 %v4905, %v4954
      %v4956 = vmul.f32 %v4907, %v4954
      %v4957 = vmul.f32 %v4909, %v4954
      %v4958 = vmul.f32 %v4911, %v4954
      %v4959 = vmul.f32 %v4913, %v4954
      %v4960 = vmul.f32 %v4915, %v4954
      %v4961 = vmul.f32 %v4917, %v4954
      %v4962 = vmul.f32 %v4919, %v4954
      %4964 = vset.pattern.permute.xlu0 71
      %4965 = vperm.xlu0 %4964, %v4955
      %v4966 = vpop.permute.xlu0 %4965
      %4969 = vset.pattern.permute.xlu0 71
      %4970 = vperm.xlu0 %4969, %v4956
      %v4971 = vpop.permute.xlu0 %4970
      %4974 = vset.pattern.permute.xlu0 71
      %4975 = vperm.xlu0 %4974, %v4957
      %v4976 = vpop.permute.xlu0 %4975
      %4979 = vset.pattern.permute.xlu0 71
      %4980 = vperm.xlu0 %4979, %v4958
      %v4981 = vpop.permute.xlu0 %4980
      %4984 = vset.pattern.permute.xlu0 71
      %4985 = vperm.xlu0 %4984, %v4959
      %v4986 = vpop.permute.xlu0 %4985
      %4989 = vset.pattern.permute.xlu0 71
      %4990 = vperm.xlu0 %4989, %v4960
      %v4991 = vpop.permute.xlu0 %4990
      %4994 = vset.pattern.permute.xlu0 71
      %4995 = vperm.xlu0 %4994, %v4961
      %v4996 = vpop.permute.xlu0 %4995
      %4999 = vset.pattern.permute.xlu0 71
      %5000 = vperm.xlu0 %4999, %v4962
      %v5001 = vpop.permute.xlu0 %5000
      %v5003 = vmul.f32 %v2003, %v4966
      %v5004 = vmul.f32 %v2005, %v4971
      %v5005 = vmul.f32 %v2008, %v4976
      %v5006 = vmul.f32 %v2010, %v4981
      %v5007 = vmul.f32 %v2013, %v4986
      %v5008 = vmul.f32 %v2015, %v4991
      %v5009 = vmul.f32 %v2018, %v4996
      %v5010 = vmul.f32 %v2020, %v5001
      %vm5011 = vcmask 581088
      %v5012 = vsel %vm5011, %v5003, 0.0
      %v5013 = vsel %vm5011, %v5004, 0.0
      %v5014 = vadd.f32 %v5012, %v5013
      %v5015 = vsel %vm5011, %v5005, 0.0
      %v5016 = vadd.f32 %v5014, %v5015
      %v5017 = vsel %vm5011, %v5006, 0.0
      %v5018 = vadd.f32 %v5016, %v5017
      %v5019 = vsel %vm5011, %v5007, 0.0
      %v5020 = vadd.f32 %v5018, %v5019
      %v5021 = vsel %vm5011, %v5008, 0.0
      %v5022 = vadd.f32 %v5020, %v5021
      %v5023 = vsel %vm5011, %v5009, 0.0
      %v5024 = vadd.f32 %v5022, %v5023
      %v5025 = vsel %vm5011, %v5010, 0.0
      %v5026 = vadd.f32 %v5024, %v5025
      %v5027 = vrot.slane %v5026, 4
      %v5028 = vadd.f32 %v5026, %v5027
      %v5029 = vrot.slane %v5028, 2
      %v5030 = vadd.f32 %v5028, %v5029
      %v5031 = vrot.slane %v5030, 1
      %v5032 = vadd.f32 %v5030, %v5031
      %v5033 = vxor.u32 %v5032, 2147483648
      %v5034 = vmul.f32 %v5033, 1.442695
      %v5035 = vpow.pop %v5034
      %v5036 = vadd.f32 %v5035, 1.0
      %v5037 = vrcp.pop %v5036
      %v5038 = vmul.f32 %v5036, %v5037
      %v5039 = vsub.f32 1.0, %v5038
      %v5040 = vmul.f32 %v5037, %v5039
      %v5041 = vadd.f32 %v5037, %v5040
      %vm5042 = vweird.f32 %v5036
      %vm5043 = vweird.f32 %v5037
      %vm5044 = vmor %vm5042, %vm5043
      %v5045 = vsel %vm5044, %v5037, %v5041
      %v5046 = vand.u32 2147483647, %v5036
      %vm5047 = vcmp.eq.f32.partialorder %v5046, 8.507059e+37
      %v5048 = vand.u32 %v5036, 2147483648
      %v5049 = vor.u32 1.1754944e-38, %v5048
      %v5050 = vsel %vm5047, %v5049, %v5045
      %v5051 = vmul.f32 1.0, %v5050
      %v5052 = vadd.f32 %v5051, 0.01
      %v5053 = vmul.f32 %v5032, 6.2831855
      %v5054 = vmul.f32 %v5032, 5.0
      %v5055 = vtanh.pop %v5054
      %v5056 = vand.u32 2147483647, %v5053
      %vm5057 = vcmp.le.f32.partialorder %v5056, 0.7853982
      %vm5058 = vcmp.lt.s32.totalorder %v5053, 0
      %v5059 = vand.u32 %v5053, 2139095040
      %v5060 = vshrl.u32 %v5059, 23
      %v5061 = vsub.s32 %v5060, 127
      %v5062 = vand.u32 2147483647, %v5053
      %v5063 = vand.u32 %v5062, 8388607
      %v5064 = vor.u32 %v5063, 8388608
      %v5065 = vsub.s32 0, %v5064
      %v5066 = vadd.s32 %v5061, 1
      %vm5067 = vcmp.gt.s32.totalorder %v5066, 0
      %v5068 = vsel %vm5067, %v5066, 0
      %v5069 = vshrl.u32 %v5068, 5
      %v5070 = vand.u32 %v5068, 31
      %v5071 = vsub.s32 32, %v5070
      %v5072 = vshrl.u32 683565275, %v5071
      %v5073 = vshll.u32 683565275, %v5070
      %v5074 = vshrl.u32 2475754826, %v5071
      %v5075 = vor.u32 %v5073, %v5074
      %v5076 = vshll.u32 2475754826, %v5070
      %v5077 = vshrl.u32 2131351028, %v5071
      %v5078 = vor.u32 %v5076, %v5077
      %v5079 = vshll.u32 2131351028, %v5070
      %v5080 = vshrl.u32 2102212464, %v5071
      %v5081 = vor.u32 %v5079, %v5080
      %v5082 = vshll.u32 2102212464, %v5070
      %v5083 = vshrl.u32 920167782, %v5071
      %v5084 = vor.u32 %v5082, %v5083
      %v5085 = vshll.u32 920167782, %v5070
      %v5086 = vshrl.u32 1326507024, %v5071
      %v5087 = vor.u32 %v5085, %v5086
      %vm5088 = vcmp.lt.s32.totalorder %v5069, 1
      %vm5089 = vcmp.lt.s32.totalorder %v5069, 2
      %vm5090 = vcmp.lt.s32.totalorder %v5069, 3
      %vm5091 = vcmp.lt.s32.totalorder %v5069, 4
      %v5092 = vsel %vm5088, %v5072, %v5075
      %v5093 = vsel %vm5091, %v5081, 2102212464
      %v5094 = vsel %vm5090, %v5078, %v5093
      %v5095 = vsel %vm5089, %v5092, %v5094
      %v5096 = vsel %vm5088, %v5075, %v5078
      %v5097 = vsel %vm5091, %v5084, 920167782
      %v5098 = vsel %vm5090, %v5081, %v5097
      %v5099 = vsel %vm5089, %v5096, %v5098
      %v5100 = vsel %vm5088, %v5078, %v5081
      %v5101 = vsel %vm5091, %v5087, 1326507024
      %v5102 = vsel %vm5090, %v5084, %v5101
      %v5103 = vsel %vm5089, %v5100, %v5102
      %v5104 = vshll.u32 %v5064, 8
      %v5105 = vand.u32 %v5104, 65535
      %v5106 = vshrl.u32 %v5104, 16
      %v5107 = vand.u32 %v5103, 65535
      %v5108 = vshrl.u32 %v5103, 16
      %v5109 = vmul.u32 %v5105, %v5107
      %v5110 = vmul.u32 %v5105, %v5108
      %v5111 = vmul.u32 %v5106, %v5107
      %v5112 = vmul.u32 %v5106, %v5108
      %v5113 = vshll.u32 %v5110, 16
      %v5114 = vshrl.u32 %v5110, 16
      %v5115 = vshll.u32 %v5111, 16
      %v5116 = vshrl.u32 %v5111, 16
      %vm5117 = vc.u32 %v5109, %v5113
      %v5118 = vsel %vm5117, 1, 0
      %v5119 = vadd.s32 %v5109, %v5113
      %v5120 = vadd.s32 %v5112, %v5118
      %vm5121 = vc.u32 %v5119, %v5115
      %v5122 = vsel %vm5121, 1, 0
      %v5123 = vadd.s32 %v5119, %v5115
      %v5124 = vadd.s32 %v5120, %v5122
      %v5125 = vadd.s32 %v5124, %v5114
      %v5126 = vadd.s32 %v5125, %v5116
      %v5127 = vand.u32 %v5104, 65535
      %v5128 = vshrl.u32 %v5104, 16
      %v5129 = vand.u32 %v5099, 65535
      %v5130 = vshrl.u32 %v5099, 16
      %v5131 = vmul.u32 %v5127, %v5129
      %v5132 = vmul.u32 %v5127, %v5130
      %v5133 = vmul.u32 %v5128, %v5129
      %v5134 = vmul.u32 %v5128, %v5130
      %v5135 = vshll.u32 %v5132, 16
      %v5136 = vshrl.u32 %v5132, 16
      %v5137 = vshll.u32 %v5133, 16
      %v5138 = vshrl.u32 %v5133, 16
      %vm5139 = vc.u32 %v5131, %v5135
      %v5140 = vsel %vm5139, 1, 0
      %v5141 = vadd.s32 %v5131, %v5135
      %v5142 = vadd.s32 %v5134, %v5140
      %vm5143 = vc.u32 %v5141, %v5137
      %v5144 = vsel %vm5143, 1, 0
      %v5145 = vadd.s32 %v5141, %v5137
      %v5146 = vadd.s32 %v5142, %v5144
      %v5147 = vadd.s32 %v5146, %v5136
      %v5148 = vadd.s32 %v5147, %v5138
      %v5149 = vmul.u32 %v5104, %v5095
      %v5150 = vadd.s32 %v5126, %v5145
      %vm5151 = vc.u32 %v5126, %v5145
      %v5152 = vadd.s32 %v5148, 1
      %v5153 = vsel %vm5151, %v5152, %v5148
      %v5154 = vadd.s32 %v5149, %v5153
      %v5155 = vadd.s32 %v5154, 536870912
      %v5156 = vshrl.u32 %v5155, 30
      %v5157 = vshll.u32 %v5156, 30
      %v5158 = vsub.s32 %v5154, %v5157
      %vm5159 = vcmp.lt.s32.totalorder %v5158, 0
      %v5160 = vsub.s32 0, %v5158
      %v5161 = vsel %vm5159, %v5160, %v5158
      %v5162 = vclz %v5161
      %v5163 = vsub.s32 %v5162, 2
      %vm5164 = vcmp.gt.s32.totalorder 0, %v5163
      %v5165 = vsel %vm5164, 0, %v5163
      %v5166 = vsub.s32 32, %v5165
      %v5167 = vshll.u32 %v5158, %v5165
      %v5168 = vshrl.u32 %v5150, %v5166
      %v5169 = vor.u32 %v5167, %v5168
      %v5170 = vsub.s32 4294967266, %v5165
      %v5171 = vadd.s32 %v5170, 127
      %v5172 = vshll.u32 %v5171, 23
      %v5173 = vor.u32 4788187, %v5172
      %v5174 = vand.u32 2147483647, %v5173
      %v5176 = vcvt.s32.f32 %v5169
      %v5177 = vmul.f32 %v5176, %v5174
      %v5178 = vxor.u32 %v5177, 2147483648
      %v5179 = vsel %vm5058, %v5178, %v5177
      %v5180 = vsub.s32 4, %v5156
      %v5181 = vsel %vm5058, %v5180, %v5156
      %v5182 = vsel %vm5057, %v5053, %v5179
      %v5183 = vsel %vm5057, 0, %v5181
      %v5184 = vmul.f32 %v5182, %v5182
      %v5185 = vmul.f32 %v5184, -0.001358992
      %v5186 = vadd.f32 %v5185, 0.041655596
      %v5187 = vmul.f32 %v5184, %v5186
      %v5188 = vadd.f32 %v5187, -0.4999988
      %v5189 = vmul.f32 %v5184, %v5188
      %v5190 = vadd.f32 1.0, %v5189
      %v5191 = vmul.f32 %v5182, %v5182
      %v5192 = vmul.f32 %v5191, -0.00019511016
      %v5193 = vadd.f32 %v5192, 0.008332121
      %v5194 = vmul.f32 %v5191, %v5193
      %v5195 = vadd.f32 %v5194, -0.16666654
      %v5196 = vmul.f32 %v5191, %v5195
      %v5197 = vadd.f32 %v5196, 1.0
      %v5198 = vmul.f32 %v5197, %v5182
      %vm5199 = vweird.f32 %v5053
      %v5200 = vand.u32 %v5183, 3
      %vm5201 = vcmp.lt.s32.totalorder %v5200, 2
      %vm5202 = vcmp.eq.s32.totalorder %v5200, 0
      %v5203 = vxor.u32 %v5198, 2147483648
      %v5204 = vsel %vm5202, %v5190, %v5203
      %vm5205 = vcmp.eq.s32.totalorder %v5200, 2
      %v5206 = vxor.u32 %v5190, 2147483648
      %v5207 = vsel %vm5205, %v5206, %v5198
      %v5208 = vsel %vm5201, %v5204, %v5207
      %v5209 = vsel %vm5199, nan, %v5208
      %v5210 = vand.u32 2147483647, %v5053
      %vm5211 = vcmp.le.f32.partialorder %v5210, 0.7853982
      %vm5212 = vcmp.lt.s32.totalorder %v5053, 0
      %v5213 = vand.u32 %v5053, 2139095040
      %v5214 = vshrl.u32 %v5213, 23
      %v5215 = vsub.s32 %v5214, 127
      %v5216 = vand.u32 2147483647, %v5053
      %v5217 = vand.u32 %v5216, 8388607
      %v5218 = vor.u32 %v5217, 8388608
      %v5219 = vsub.s32 0, %v5218
      %v5220 = vadd.s32 %v5215, 1
      %vm5221 = vcmp.gt.s32.totalorder %v5220, 0
      %v5222 = vsel %vm5221, %v5220, 0
      %v5223 = vshrl.u32 %v5222, 5
      %v5224 = vand.u32 %v5222, 31
      %v5225 = vsub.s32 32, %v5224
      %v5226 = vshrl.u32 683565275, %v5225
      %v5227 = vshll.u32 683565275, %v5224
      %v5228 = vshrl.u32 2475754826, %v5225
      %v5229 = vor.u32 %v5227, %v5228
      %v5230 = vshll.u32 2475754826, %v5224
      %v5231 = vshrl.u32 2131351028, %v5225
      %v5232 = vor.u32 %v5230, %v5231
      %v5233 = vshll.u32 2131351028, %v5224
      %v5234 = vshrl.u32 2102212464, %v5225
      %v5235 = vor.u32 %v5233, %v5234
      %v5236 = vshll.u32 2102212464, %v5224
      %v5237 = vshrl.u32 920167782, %v5225
      %v5238 = vor.u32 %v5236, %v5237
      %v5239 = vshll.u32 920167782, %v5224
      %v5240 = vshrl.u32 1326507024, %v5225
      %v5241 = vor.u32 %v5239, %v5240
      %vm5242 = vcmp.lt.s32.totalorder %v5223, 1
      %vm5243 = vcmp.lt.s32.totalorder %v5223, 2
      %vm5244 = vcmp.lt.s32.totalorder %v5223, 3
      %vm5245 = vcmp.lt.s32.totalorder %v5223, 4
      %v5246 = vsel %vm5242, %v5226, %v5229
      %v5247 = vsel %vm5245, %v5235, 2102212464
      %v5248 = vsel %vm5244, %v5232, %v5247
      %v5249 = vsel %vm5243, %v5246, %v5248
      %v5250 = vsel %vm5242, %v5229, %v5232
      %v5251 = vsel %vm5245, %v5238, 920167782
      %v5252 = vsel %vm5244, %v5235, %v5251
      %v5253 = vsel %vm5243, %v5250, %v5252
      %v5254 = vsel %vm5242, %v5232, %v5235
      %v5255 = vsel %vm5245, %v5241, 1326507024
      %v5256 = vsel %vm5244, %v5238, %v5255
      %v5257 = vsel %vm5243, %v5254, %v5256
      %v5258 = vshll.u32 %v5218, 8
      %v5259 = vand.u32 %v5258, 65535
      %v5260 = vshrl.u32 %v5258, 16
      %v5261 = vand.u32 %v5257, 65535
      %v5262 = vshrl.u32 %v5257, 16
      %v5263 = vmul.u32 %v5259, %v5261
      %v5264 = vmul.u32 %v5259, %v5262
      %v5265 = vmul.u32 %v5260, %v5261
      %v5266 = vmul.u32 %v5260, %v5262
      %v5267 = vshll.u32 %v5264, 16
      %v5268 = vshrl.u32 %v5264, 16
      %v5269 = vshll.u32 %v5265, 16
      %v5270 = vshrl.u32 %v5265, 16
      %vm5271 = vc.u32 %v5263, %v5267
      %v5272 = vsel %vm5271, 1, 0
      %v5273 = vadd.s32 %v5263, %v5267
      %v5274 = vadd.s32 %v5266, %v5272
      %vm5275 = vc.u32 %v5273, %v5269
      %v5276 = vsel %vm5275, 1, 0
      %v5277 = vadd.s32 %v5273, %v5269
      %v5278 = vadd.s32 %v5274, %v5276
      %v5279 = vadd.s32 %v5278, %v5268
      %v5280 = vadd.s32 %v5279, %v5270
      %v5281 = vand.u32 %v5258, 65535
      %v5282 = vshrl.u32 %v5258, 16
      %v5283 = vand.u32 %v5253, 65535
      %v5284 = vshrl.u32 %v5253, 16
      %v5285 = vmul.u32 %v5281, %v5283
      %v5286 = vmul.u32 %v5281, %v5284
      %v5287 = vmul.u32 %v5282, %v5283
      %v5288 = vmul.u32 %v5282, %v5284
      %v5289 = vshll.u32 %v5286, 16
      %v5290 = vshrl.u32 %v5286, 16
      %v5291 = vshll.u32 %v5287, 16
      %v5292 = vshrl.u32 %v5287, 16
      %vm5293 = vc.u32 %v5285, %v5289
      %v5294 = vsel %vm5293, 1, 0
      %v5295 = vadd.s32 %v5285, %v5289
      %v5296 = vadd.s32 %v5288, %v5294
      %vm5297 = vc.u32 %v5295, %v5291
      %v5298 = vsel %vm5297, 1, 0
      %v5299 = vadd.s32 %v5295, %v5291
      %v5300 = vadd.s32 %v5296, %v5298
      %v5301 = vadd.s32 %v5300, %v5290
      %v5302 = vadd.s32 %v5301, %v5292
      %v5303 = vmul.u32 %v5258, %v5249
      %v5304 = vadd.s32 %v5280, %v5299
      %vm5305 = vc.u32 %v5280, %v5299
      %v5306 = vadd.s32 %v5302, 1
      %v5307 = vsel %vm5305, %v5306, %v5302
      %v5308 = vadd.s32 %v5303, %v5307
      %v5309 = vadd.s32 %v5308, 536870912
      %v5310 = vshrl.u32 %v5309, 30
      %v5311 = vshll.u32 %v5310, 30
      %v5312 = vsub.s32 %v5308, %v5311
      %vm5313 = vcmp.lt.s32.totalorder %v5312, 0
      %v5314 = vsub.s32 0, %v5312
      %v5315 = vsel %vm5313, %v5314, %v5312
      %v5316 = vclz %v5315
      %v5317 = vsub.s32 %v5316, 2
      %vm5318 = vcmp.gt.s32.totalorder 0, %v5317
      %v5319 = vsel %vm5318, 0, %v5317
      %v5320 = vsub.s32 32, %v5319
      %v5321 = vshll.u32 %v5312, %v5319
      %v5322 = vshrl.u32 %v5304, %v5320
      %v5323 = vor.u32 %v5321, %v5322
      %v5324 = vsub.s32 4294967266, %v5319
      %v5325 = vadd.s32 %v5324, 127
      %v5326 = vshll.u32 %v5325, 23
      %v5327 = vor.u32 4788187, %v5326
      %v5328 = vand.u32 2147483647, %v5327
      %v5330 = vcvt.s32.f32 %v5323
      %v5331 = vmul.f32 %v5330, %v5328
      %v5332 = vxor.u32 %v5331, 2147483648
      %v5333 = vsel %vm5212, %v5332, %v5331
      %v5334 = vsub.s32 4, %v5310
      %v5335 = vsel %vm5212, %v5334, %v5310
      %v5336 = vsel %vm5211, %v5053, %v5333
      %v5337 = vsel %vm5211, 0, %v5335
      %v5338 = vmul.f32 %v5336, %v5336
      %v5339 = vmul.f32 %v5338, -0.001358992
      %v5340 = vadd.f32 %v5339, 0.041655596
      %v5341 = vmul.f32 %v5338, %v5340
      %v5342 = vadd.f32 %v5341, -0.4999988
      %v5343 = vmul.f32 %v5338, %v5342
      %v5344 = vadd.f32 1.0, %v5343
      %v5345 = vmul.f32 %v5336, %v5336
      %v5346 = vmul.f32 %v5345, -0.00019511016
      %v5347 = vadd.f32 %v5346, 0.008332121
      %v5348 = vmul.f32 %v5345, %v5347
      %v5349 = vadd.f32 %v5348, -0.16666654
      %v5350 = vmul.f32 %v5345, %v5349
      %v5351 = vadd.f32 %v5350, 1.0
      %v5352 = vmul.f32 %v5351, %v5336
      %vm5353 = vweird.f32 %v5053
      %v5354 = vadd.s32 %v5337, 3
      %v5355 = vand.u32 %v5354, 3
      %vm5356 = vcmp.lt.s32.totalorder %v5355, 2
      %vm5357 = vcmp.eq.s32.totalorder %v5355, 0
      %v5358 = vxor.u32 %v5352, 2147483648
      %v5359 = vsel %vm5357, %v5344, %v5358
      %vm5360 = vcmp.eq.s32.totalorder %v5355, 2
      %v5361 = vxor.u32 %v5344, 2147483648
      %v5362 = vsel %vm5360, %v5361, %v5352
      %v5363 = vsel %vm5356, %v5359, %v5362
      %v5364 = vsel %vm5353, nan, %v5363
      %5366 = vrot.lane.b32.xlu0 %v5209, 126
      %v5367 = vpop.permute.xlu0 %5366
      %v5369 = vmul.f32 %v5052, %v5367
      %5371 = vrot.lane.b32.xlu0 %v5052, 2
      %v5372 = vpop.permute.xlu0 %5371
      %v5374 = vmul.f32 %v5055, %v5372
      %5376 = vrot.lane.b32.xlu0 %v5364, 1
      %v5377 = vpop.permute.xlu0 %5376
      %v5379 = vmul.f32 %v5374, %v5377
      %5381 = vrot.lane.b32.xlu0 %v5379, 125
      %v5382 = vpop.permute.xlu0 %5381
      %v5384 = vadd.f32 %v5369, %v5382
      %v5385 = vsub.f32 0.0, %v5052
      %5386 = vrot.lane.b32.xlu0 %v5364, 126
      %v5387 = vpop.permute.xlu0 %5386
      %v5389 = vmul.f32 %v5385, %v5387
      %5390 = vrot.lane.b32.xlu0 %v5209, 1
      %v5391 = vpop.permute.xlu0 %5390
      %v5393 = vmul.f32 %v5374, %v5391
      %5395 = vrot.lane.b32.xlu0 %v5393, 125
      %v5396 = vpop.permute.xlu0 %5395
      %v5398 = vadd.f32 %v5389, %v5396
      %5399 = vrot.lane.b32.xlu0 %v5364, 127
      %v5400 = vpop.permute.xlu0 %5399
      %v5402 = vmul.f32 %v5052, %v5400
      %5403 = vrot.lane.b32.xlu0 %v5209, 127
      %v5404 = vpop.permute.xlu0 %5403
      %v5406 = vmul.f32 %v5052, %v5404
      %5408 = vrot.lane.b32.xlu0 %v5384, 68
      %v5409 = vpop.permute.xlu0 %5408
      %5412 = vrot.lane.b32.xlu0 %v5398, 69
      %v5413 = vpop.permute.xlu0 %5412
      %5416 = vrot.lane.b32.xlu0 %v5055, 66
      %v5417 = vpop.permute.xlu0 %5416
      %5420 = vrot.lane.b32.xlu0 %v5402, 70
      %v5421 = vpop.permute.xlu0 %5420
      %5424 = vrot.lane.b32.xlu0 %v5406, 71
      %v5425 = vpop.permute.xlu0 %5424
      %5427 = vrot.lane.b32.xlu0 %v5055, 68
      %v5428 = vpop.permute.xlu0 %5427
      %v5430 = vsel %vm2571, %v5409, %v5413
      %v5431 = vsel %vm2573, %v5430, %v5417
      %v5432 = vsel %vm2575, %v5431, %v5421
      %v5433 = vsel %vm2577, %v5432, %v5425
      %v5434 = vsel %vm2579, %v5433, %v5428
      %5436 = vrot.lane.b32.xlu0 %v5051, 68
      %v5437 = vpop.permute.xlu0 %5436
      %5440 = vrot.lane.b32.xlu0 %v5032, 68
      %v5441 = vpop.permute.xlu0 %5440
      %v5443 = vsel %vm2581, %v5434, %v5437
      %v5444 = vsel %vm2583, %v5443, %v5441
      %v5445 = vsel %vm2159, %v5444, 0.0
      %vm5446 = vcmask 687768
      %v5447 = vsel %vm5446, %v2003, -inf
      %v5448 = vsel %vm5446, %v2005, -inf
      %v5449 = vsel %vm5446, %v2008, -inf
      %v5450 = vsel %vm5446, %v2010, -inf
      %v5451 = vsel %vm5446, %v2013, -inf
      %v5452 = vmax.f32 %v5447, %v5451
      %v5453 = vsel %vm5446, %v2015, -inf
      %v5454 = vmax.f32 %v5448, %v5453
      %v5455 = vsel %vm5446, %v2018, -inf
      %v5456 = vmax.f32 %v5449, %v5455
      %v5457 = vsel %vm5446, %v2020, -inf
      %v5458 = vmax.f32 %v5450, %v5457
      %v5459 = vmax.f32 %v5452, %v5454
      %v5460 = vmax.f32 %v5456, %v5458
      %v5461 = vmax.f32 %v5459, %v5460
      %v5462 = vrot.slane %v5461, 4
      %v5463 = vmax.f32 %v5461, %v5462
      %v5464 = vrot.slane %v5463, 2
      %v5465 = vmax.f32 %v5463, %v5464
      %v5466 = vrot.slane %v5465, 1
      %v5467 = vmax.f32 %v5465, %v5466
      %v5468 = vsub.f32 %v2003, %v5467
      %v5469 = vsub.f32 %v2005, %v5467
      %v5470 = vsub.f32 %v2008, %v5467
      %v5471 = vsub.f32 %v2010, %v5467
      %v5472 = vsub.f32 %v2013, %v5467
      %v5473 = vsub.f32 %v2015, %v5467
      %v5474 = vsub.f32 %v2018, %v5467
      %v5475 = vsub.f32 %v2020, %v5467
      %v5476 = vmul.f32 %v5468, 1.442695
      %v5477 = vpow.pop %v5476
      %v5478 = vmul.f32 %v5469, 1.442695
      %v5479 = vpow.pop %v5478
      %v5480 = vmul.f32 %v5470, 1.442695
      %v5481 = vpow.pop %v5480
      %v5482 = vmul.f32 %v5471, 1.442695
      %v5483 = vpow.pop %v5482
      %v5484 = vmul.f32 %v5472, 1.442695
      %v5485 = vpow.pop %v5484
      %v5486 = vmul.f32 %v5473, 1.442695
      %v5487 = vpow.pop %v5486
      %v5488 = vmul.f32 %v5474, 1.442695
      %v5489 = vpow.pop %v5488
      %v5490 = vmul.f32 %v5475, 1.442695
      %v5491 = vpow.pop %v5490
      %v5492 = vsel %vm5446, %v5477, 0.0
      %v5493 = vsel %vm5446, %v5479, 0.0
      %v5494 = vadd.f32 %v5492, %v5493
      %v5495 = vsel %vm5446, %v5481, 0.0
      %v5496 = vadd.f32 %v5494, %v5495
      %v5497 = vsel %vm5446, %v5483, 0.0
      %v5498 = vadd.f32 %v5496, %v5497
      %v5499 = vsel %vm5446, %v5485, 0.0
      %v5500 = vadd.f32 %v5498, %v5499
      %v5501 = vsel %vm5446, %v5487, 0.0
      %v5502 = vadd.f32 %v5500, %v5501
      %v5503 = vsel %vm5446, %v5489, 0.0
      %v5504 = vadd.f32 %v5502, %v5503
      %v5505 = vsel %vm5446, %v5491, 0.0
      %v5506 = vadd.f32 %v5504, %v5505
      %v5507 = vrot.slane %v5506, 4
      %v5508 = vadd.f32 %v5506, %v5507
      %v5509 = vrot.slane %v5508, 2
      %v5510 = vadd.f32 %v5508, %v5509
      %v5511 = vrot.slane %v5510, 1
      %v5512 = vadd.f32 %v5510, %v5511
      %v5513 = vrcp.pop %v5512
      %v5514 = vmul.f32 %v5512, %v5513
      %v5515 = vsub.f32 1.0, %v5514
      %v5516 = vmul.f32 %v5513, %v5515
      %v5517 = vadd.f32 %v5513, %v5516
      %vm5518 = vweird.f32 %v5512
      %vm5519 = vweird.f32 %v5513
      %vm5520 = vmor %vm5518, %vm5519
      %v5521 = vsel %vm5520, %v5513, %v5517
      %v5522 = vand.u32 2147483647, %v5512
      %vm5523 = vcmp.eq.f32.partialorder %v5522, 8.507059e+37
      %v5524 = vand.u32 %v5512, 2147483648
      %v5525 = vor.u32 1.1754944e-38, %v5524
      %v5526 = vsel %vm5523, %v5525, %v5521
      %v5527 = vmul.f32 %v5477, %v5526
      %v5528 = vmul.f32 %v5479, %v5526
      %v5529 = vmul.f32 %v5481, %v5526
      %v5530 = vmul.f32 %v5483, %v5526
      %v5531 = vmul.f32 %v5485, %v5526
      %v5532 = vmul.f32 %v5487, %v5526
      %v5533 = vmul.f32 %v5489, %v5526
      %v5534 = vmul.f32 %v5491, %v5526
      %5536 = vset.pattern.permute.xlu0 83
      %5537 = vperm.xlu0 %5536, %v5527
      %v5538 = vpop.permute.xlu0 %5537
      %5541 = vset.pattern.permute.xlu0 83
      %5542 = vperm.xlu0 %5541, %v5528
      %v5543 = vpop.permute.xlu0 %5542
      %5546 = vset.pattern.permute.xlu0 83
      %5547 = vperm.xlu0 %5546, %v5529
      %v5548 = vpop.permute.xlu0 %5547
      %5551 = vset.pattern.permute.xlu0 83
      %5552 = vperm.xlu0 %5551, %v5530
      %v5553 = vpop.permute.xlu0 %5552
      %5556 = vset.pattern.permute.xlu0 83
      %5557 = vperm.xlu0 %5556, %v5531
      %v5558 = vpop.permute.xlu0 %5557
      %5561 = vset.pattern.permute.xlu0 83
      %5562 = vperm.xlu0 %5561, %v5532
      %v5563 = vpop.permute.xlu0 %5562
      %5566 = vset.pattern.permute.xlu0 83
      %5567 = vperm.xlu0 %5566, %v5533
      %v5568 = vpop.permute.xlu0 %5567
      %5571 = vset.pattern.permute.xlu0 83
      %5572 = vperm.xlu0 %5571, %v5534
      %v5573 = vpop.permute.xlu0 %5572
      %v5575 = vmul.f32 %v2003, %v5538
      %v5576 = vmul.f32 %v2005, %v5543
      %v5577 = vmul.f32 %v2008, %v5548
      %v5578 = vmul.f32 %v2010, %v5553
      %v5579 = vmul.f32 %v2013, %v5558
      %v5580 = vmul.f32 %v2015, %v5563
      %v5581 = vmul.f32 %v2018, %v5568
      %v5582 = vmul.f32 %v2020, %v5573
      %vm5583 = vcmask 679488
      %v5584 = vsel %vm5583, %v5575, 0.0
      %v5585 = vsel %vm5583, %v5576, 0.0
      %v5586 = vadd.f32 %v5584, %v5585
      %v5587 = vsel %vm5583, %v5577, 0.0
      %v5588 = vadd.f32 %v5586, %v5587
      %v5589 = vsel %vm5583, %v5578, 0.0
      %v5590 = vadd.f32 %v5588, %v5589
      %v5591 = vsel %vm5583, %v5579, 0.0
      %v5592 = vadd.f32 %v5590, %v5591
      %v5593 = vsel %vm5583, %v5580, 0.0
      %v5594 = vadd.f32 %v5592, %v5593
      %v5595 = vsel %vm5583, %v5581, 0.0
      %v5596 = vadd.f32 %v5594, %v5595
      %v5597 = vsel %vm5583, %v5582, 0.0
      %v5598 = vadd.f32 %v5596, %v5597
      %v5599 = vrot.slane %v5598, 4
      %v5600 = vadd.f32 %v5598, %v5599
      %v5601 = vrot.slane %v5600, 2
      %v5602 = vadd.f32 %v5600, %v5601
      %v5603 = vrot.slane %v5602, 1
      %v5604 = vadd.f32 %v5602, %v5603
      %v5605 = vxor.u32 %v5604, 2147483648
      %v5606 = vmul.f32 %v5605, 1.442695
      %v5607 = vpow.pop %v5606
      %v5608 = vadd.f32 %v5607, 1.0
      %v5609 = vrcp.pop %v5608
      %v5610 = vmul.f32 %v5608, %v5609
      %v5611 = vsub.f32 1.0, %v5610
      %v5612 = vmul.f32 %v5609, %v5611
      %v5613 = vadd.f32 %v5609, %v5612
      %vm5614 = vweird.f32 %v5608
      %vm5615 = vweird.f32 %v5609
      %vm5616 = vmor %vm5614, %vm5615
      %v5617 = vsel %vm5616, %v5609, %v5613
      %v5618 = vand.u32 2147483647, %v5608
      %vm5619 = vcmp.eq.f32.partialorder %v5618, 8.507059e+37
      %v5620 = vand.u32 %v5608, 2147483648
      %v5621 = vor.u32 1.1754944e-38, %v5620
      %v5622 = vsel %vm5619, %v5621, %v5617
      %v5623 = vmul.f32 1.0, %v5622
      %v5624 = vadd.f32 %v5623, 0.01
      %v5625 = vmul.f32 %v5604, 6.2831855
      %v5626 = vmul.f32 %v5604, 5.0
      %v5627 = vtanh.pop %v5626
      %v5628 = vand.u32 2147483647, %v5625
      %vm5629 = vcmp.le.f32.partialorder %v5628, 0.7853982
      %vm5630 = vcmp.lt.s32.totalorder %v5625, 0
      %v5631 = vand.u32 %v5625, 2139095040
      %v5632 = vshrl.u32 %v5631, 23
      %v5633 = vsub.s32 %v5632, 127
      %v5634 = vand.u32 2147483647, %v5625
      %v5635 = vand.u32 %v5634, 8388607
      %v5636 = vor.u32 %v5635, 8388608
      %v5637 = vsub.s32 0, %v5636
      %v5638 = vadd.s32 %v5633, 1
      %vm5639 = vcmp.gt.s32.totalorder %v5638, 0
      %v5640 = vsel %vm5639, %v5638, 0
      %v5641 = vshrl.u32 %v5640, 5
      %v5642 = vand.u32 %v5640, 31
      %v5643 = vsub.s32 32, %v5642
      %v5644 = vshrl.u32 683565275, %v5643
      %v5645 = vshll.u32 683565275, %v5642
      %v5646 = vshrl.u32 2475754826, %v5643
      %v5647 = vor.u32 %v5645, %v5646
      %v5648 = vshll.u32 2475754826, %v5642
      %v5649 = vshrl.u32 2131351028, %v5643
      %v5650 = vor.u32 %v5648, %v5649
      %v5651 = vshll.u32 2131351028, %v5642
      %v5652 = vshrl.u32 2102212464, %v5643
      %v5653 = vor.u32 %v5651, %v5652
      %v5654 = vshll.u32 2102212464, %v5642
      %v5655 = vshrl.u32 920167782, %v5643
      %v5656 = vor.u32 %v5654, %v5655
      %v5657 = vshll.u32 920167782, %v5642
      %v5658 = vshrl.u32 1326507024, %v5643
      %v5659 = vor.u32 %v5657, %v5658
      %vm5660 = vcmp.lt.s32.totalorder %v5641, 1
      %vm5661 = vcmp.lt.s32.totalorder %v5641, 2
      %vm5662 = vcmp.lt.s32.totalorder %v5641, 3
      %vm5663 = vcmp.lt.s32.totalorder %v5641, 4
      %v5664 = vsel %vm5660, %v5644, %v5647
      %v5665 = vsel %vm5663, %v5653, 2102212464
      %v5666 = vsel %vm5662, %v5650, %v5665
      %v5667 = vsel %vm5661, %v5664, %v5666
      %v5668 = vsel %vm5660, %v5647, %v5650
      %v5669 = vsel %vm5663, %v5656, 920167782
      %v5670 = vsel %vm5662, %v5653, %v5669
      %v5671 = vsel %vm5661, %v5668, %v5670
      %v5672 = vsel %vm5660, %v5650, %v5653
      %v5673 = vsel %vm5663, %v5659, 1326507024
      %v5674 = vsel %vm5662, %v5656, %v5673
      %v5675 = vsel %vm5661, %v5672, %v5674
      %v5676 = vshll.u32 %v5636, 8
      %v5677 = vand.u32 %v5676, 65535
      %v5678 = vshrl.u32 %v5676, 16
      %v5679 = vand.u32 %v5675, 65535
      %v5680 = vshrl.u32 %v5675, 16
      %v5681 = vmul.u32 %v5677, %v5679
      %v5682 = vmul.u32 %v5677, %v5680
      %v5683 = vmul.u32 %v5678, %v5679
      %v5684 = vmul.u32 %v5678, %v5680
      %v5685 = vshll.u32 %v5682, 16
      %v5686 = vshrl.u32 %v5682, 16
      %v5687 = vshll.u32 %v5683, 16
      %v5688 = vshrl.u32 %v5683, 16
      %vm5689 = vc.u32 %v5681, %v5685
      %v5690 = vsel %vm5689, 1, 0
      %v5691 = vadd.s32 %v5681, %v5685
      %v5692 = vadd.s32 %v5684, %v5690
      %vm5693 = vc.u32 %v5691, %v5687
      %v5694 = vsel %vm5693, 1, 0
      %v5695 = vadd.s32 %v5691, %v5687
      %v5696 = vadd.s32 %v5692, %v5694
      %v5697 = vadd.s32 %v5696, %v5686
      %v5698 = vadd.s32 %v5697, %v5688
      %v5699 = vand.u32 %v5676, 65535
      %v5700 = vshrl.u32 %v5676, 16
      %v5701 = vand.u32 %v5671, 65535
      %v5702 = vshrl.u32 %v5671, 16
      %v5703 = vmul.u32 %v5699, %v5701
      %v5704 = vmul.u32 %v5699, %v5702
      %v5705 = vmul.u32 %v5700, %v5701
      %v5706 = vmul.u32 %v5700, %v5702
      %v5707 = vshll.u32 %v5704, 16
      %v5708 = vshrl.u32 %v5704, 16
      %v5709 = vshll.u32 %v5705, 16
      %v5710 = vshrl.u32 %v5705, 16
      %vm5711 = vc.u32 %v5703, %v5707
      %v5712 = vsel %vm5711, 1, 0
      %v5713 = vadd.s32 %v5703, %v5707
      %v5714 = vadd.s32 %v5706, %v5712
      %vm5715 = vc.u32 %v5713, %v5709
      %v5716 = vsel %vm5715, 1, 0
      %v5717 = vadd.s32 %v5713, %v5709
      %v5718 = vadd.s32 %v5714, %v5716
      %v5719 = vadd.s32 %v5718, %v5708
      %v5720 = vadd.s32 %v5719, %v5710
      %v5721 = vmul.u32 %v5676, %v5667
      %v5722 = vadd.s32 %v5698, %v5717
      %vm5723 = vc.u32 %v5698, %v5717
      %v5724 = vadd.s32 %v5720, 1
      %v5725 = vsel %vm5723, %v5724, %v5720
      %v5726 = vadd.s32 %v5721, %v5725
      %v5727 = vadd.s32 %v5726, 536870912
      %v5728 = vshrl.u32 %v5727, 30
      %v5729 = vshll.u32 %v5728, 30
      %v5730 = vsub.s32 %v5726, %v5729
      %vm5731 = vcmp.lt.s32.totalorder %v5730, 0
      %v5732 = vsub.s32 0, %v5730
      %v5733 = vsel %vm5731, %v5732, %v5730
      %v5734 = vclz %v5733
      %v5735 = vsub.s32 %v5734, 2
      %vm5736 = vcmp.gt.s32.totalorder 0, %v5735
      %v5737 = vsel %vm5736, 0, %v5735
      %v5738 = vsub.s32 32, %v5737
      %v5739 = vshll.u32 %v5730, %v5737
      %v5740 = vshrl.u32 %v5722, %v5738
      %v5741 = vor.u32 %v5739, %v5740
      %v5742 = vsub.s32 4294967266, %v5737
      %v5743 = vadd.s32 %v5742, 127
      %v5744 = vshll.u32 %v5743, 23
      %v5745 = vor.u32 4788187, %v5744
      %v5746 = vand.u32 2147483647, %v5745
      %v5748 = vcvt.s32.f32 %v5741
      %v5749 = vmul.f32 %v5748, %v5746
      %v5750 = vxor.u32 %v5749, 2147483648
      %v5751 = vsel %vm5630, %v5750, %v5749
      %v5752 = vsub.s32 4, %v5728
      %v5753 = vsel %vm5630, %v5752, %v5728
      %v5754 = vsel %vm5629, %v5625, %v5751
      %v5755 = vsel %vm5629, 0, %v5753
      %v5756 = vmul.f32 %v5754, %v5754
      %v5757 = vmul.f32 %v5756, -0.001358992
      %v5758 = vadd.f32 %v5757, 0.041655596
      %v5759 = vmul.f32 %v5756, %v5758
      %v5760 = vadd.f32 %v5759, -0.4999988
      %v5761 = vmul.f32 %v5756, %v5760
      %v5762 = vadd.f32 1.0, %v5761
      %v5763 = vmul.f32 %v5754, %v5754
      %v5764 = vmul.f32 %v5763, -0.00019511016
      %v5765 = vadd.f32 %v5764, 0.008332121
      %v5766 = vmul.f32 %v5763, %v5765
      %v5767 = vadd.f32 %v5766, -0.16666654
      %v5768 = vmul.f32 %v5763, %v5767
      %v5769 = vadd.f32 %v5768, 1.0
      %v5770 = vmul.f32 %v5769, %v5754
      %vm5771 = vweird.f32 %v5625
      %v5772 = vand.u32 %v5755, 3
      %vm5773 = vcmp.lt.s32.totalorder %v5772, 2
      %vm5774 = vcmp.eq.s32.totalorder %v5772, 0
      %v5775 = vxor.u32 %v5770, 2147483648
      %v5776 = vsel %vm5774, %v5762, %v5775
      %vm5777 = vcmp.eq.s32.totalorder %v5772, 2
      %v5778 = vxor.u32 %v5762, 2147483648
      %v5779 = vsel %vm5777, %v5778, %v5770
      %v5780 = vsel %vm5773, %v5776, %v5779
      %v5781 = vsel %vm5771, nan, %v5780
      %v5782 = vand.u32 2147483647, %v5625
      %vm5783 = vcmp.le.f32.partialorder %v5782, 0.7853982
      %vm5784 = vcmp.lt.s32.totalorder %v5625, 0
      %v5785 = vand.u32 %v5625, 2139095040
      %v5786 = vshrl.u32 %v5785, 23
      %v5787 = vsub.s32 %v5786, 127
      %v5788 = vand.u32 2147483647, %v5625
      %v5789 = vand.u32 %v5788, 8388607
      %v5790 = vor.u32 %v5789, 8388608
      %v5791 = vsub.s32 0, %v5790
      %v5792 = vadd.s32 %v5787, 1
      %vm5793 = vcmp.gt.s32.totalorder %v5792, 0
      %v5794 = vsel %vm5793, %v5792, 0
      %v5795 = vshrl.u32 %v5794, 5
      %v5796 = vand.u32 %v5794, 31
      %v5797 = vsub.s32 32, %v5796
      %v5798 = vshrl.u32 683565275, %v5797
      %v5799 = vshll.u32 683565275, %v5796
      %v5800 = vshrl.u32 2475754826, %v5797
      %v5801 = vor.u32 %v5799, %v5800
      %v5802 = vshll.u32 2475754826, %v5796
      %v5803 = vshrl.u32 2131351028, %v5797
      %v5804 = vor.u32 %v5802, %v5803
      %v5805 = vshll.u32 2131351028, %v5796
      %v5806 = vshrl.u32 2102212464, %v5797
      %v5807 = vor.u32 %v5805, %v5806
      %v5808 = vshll.u32 2102212464, %v5796
      %v5809 = vshrl.u32 920167782, %v5797
      %v5810 = vor.u32 %v5808, %v5809
      %v5811 = vshll.u32 920167782, %v5796
      %v5812 = vshrl.u32 1326507024, %v5797
      %v5813 = vor.u32 %v5811, %v5812
      %vm5814 = vcmp.lt.s32.totalorder %v5795, 1
      %vm5815 = vcmp.lt.s32.totalorder %v5795, 2
      %vm5816 = vcmp.lt.s32.totalorder %v5795, 3
      %vm5817 = vcmp.lt.s32.totalorder %v5795, 4
      %v5818 = vsel %vm5814, %v5798, %v5801
      %v5819 = vsel %vm5817, %v5807, 2102212464
      %v5820 = vsel %vm5816, %v5804, %v5819
      %v5821 = vsel %vm5815, %v5818, %v5820
      %v5822 = vsel %vm5814, %v5801, %v5804
      %v5823 = vsel %vm5817, %v5810, 920167782
      %v5824 = vsel %vm5816, %v5807, %v5823
      %v5825 = vsel %vm5815, %v5822, %v5824
      %v5826 = vsel %vm5814, %v5804, %v5807
      %v5827 = vsel %vm5817, %v5813, 1326507024
      %v5828 = vsel %vm5816, %v5810, %v5827
      %v5829 = vsel %vm5815, %v5826, %v5828
      %v5830 = vshll.u32 %v5790, 8
      %v5831 = vand.u32 %v5830, 65535
      %v5832 = vshrl.u32 %v5830, 16
      %v5833 = vand.u32 %v5829, 65535
      %v5834 = vshrl.u32 %v5829, 16
      %v5835 = vmul.u32 %v5831, %v5833
      %v5836 = vmul.u32 %v5831, %v5834
      %v5837 = vmul.u32 %v5832, %v5833
      %v5838 = vmul.u32 %v5832, %v5834
      %v5839 = vshll.u32 %v5836, 16
      %v5840 = vshrl.u32 %v5836, 16
      %v5841 = vshll.u32 %v5837, 16
      %v5842 = vshrl.u32 %v5837, 16
      %vm5843 = vc.u32 %v5835, %v5839
      %v5844 = vsel %vm5843, 1, 0
      %v5845 = vadd.s32 %v5835, %v5839
      %v5846 = vadd.s32 %v5838, %v5844
      %vm5847 = vc.u32 %v5845, %v5841
      %v5848 = vsel %vm5847, 1, 0
      %v5849 = vadd.s32 %v5845, %v5841
      %v5850 = vadd.s32 %v5846, %v5848
      %v5851 = vadd.s32 %v5850, %v5840
      %v5852 = vadd.s32 %v5851, %v5842
      %v5853 = vand.u32 %v5830, 65535
      %v5854 = vshrl.u32 %v5830, 16
      %v5855 = vand.u32 %v5825, 65535
      %v5856 = vshrl.u32 %v5825, 16
      %v5857 = vmul.u32 %v5853, %v5855
      %v5858 = vmul.u32 %v5853, %v5856
      %v5859 = vmul.u32 %v5854, %v5855
      %v5860 = vmul.u32 %v5854, %v5856
      %v5861 = vshll.u32 %v5858, 16
      %v5862 = vshrl.u32 %v5858, 16
      %v5863 = vshll.u32 %v5859, 16
      %v5864 = vshrl.u32 %v5859, 16
      %vm5865 = vc.u32 %v5857, %v5861
      %v5866 = vsel %vm5865, 1, 0
      %v5867 = vadd.s32 %v5857, %v5861
      %v5868 = vadd.s32 %v5860, %v5866
      %vm5869 = vc.u32 %v5867, %v5863
      %v5870 = vsel %vm5869, 1, 0
      %v5871 = vadd.s32 %v5867, %v5863
      %v5872 = vadd.s32 %v5868, %v5870
      %v5873 = vadd.s32 %v5872, %v5862
      %v5874 = vadd.s32 %v5873, %v5864
      %v5875 = vmul.u32 %v5830, %v5821
      %v5876 = vadd.s32 %v5852, %v5871
      %vm5877 = vc.u32 %v5852, %v5871
      %v5878 = vadd.s32 %v5874, 1
      %v5879 = vsel %vm5877, %v5878, %v5874
      %v5880 = vadd.s32 %v5875, %v5879
      %v5881 = vadd.s32 %v5880, 536870912
      %v5882 = vshrl.u32 %v5881, 30
      %v5883 = vshll.u32 %v5882, 30
      %v5884 = vsub.s32 %v5880, %v5883
      %vm5885 = vcmp.lt.s32.totalorder %v5884, 0
      %v5886 = vsub.s32 0, %v5884
      %v5887 = vsel %vm5885, %v5886, %v5884
      %v5888 = vclz %v5887
      %v5889 = vsub.s32 %v5888, 2
      %vm5890 = vcmp.gt.s32.totalorder 0, %v5889
      %v5891 = vsel %vm5890, 0, %v5889
      %v5892 = vsub.s32 32, %v5891
      %v5893 = vshll.u32 %v5884, %v5891
      %v5894 = vshrl.u32 %v5876, %v5892
      %v5895 = vor.u32 %v5893, %v5894
      %v5896 = vsub.s32 4294967266, %v5891
      %v5897 = vadd.s32 %v5896, 127
      %v5898 = vshll.u32 %v5897, 23
      %v5899 = vor.u32 4788187, %v5898
      %v5900 = vand.u32 2147483647, %v5899
      %v5902 = vcvt.s32.f32 %v5895
      %v5903 = vmul.f32 %v5902, %v5900
      %v5904 = vxor.u32 %v5903, 2147483648
      %v5905 = vsel %vm5784, %v5904, %v5903
      %v5906 = vsub.s32 4, %v5882
      %v5907 = vsel %vm5784, %v5906, %v5882
      %v5908 = vsel %vm5783, %v5625, %v5905
      %v5909 = vsel %vm5783, 0, %v5907
      %v5910 = vmul.f32 %v5908, %v5908
      %v5911 = vmul.f32 %v5910, -0.001358992
      %v5912 = vadd.f32 %v5911, 0.041655596
      %v5913 = vmul.f32 %v5910, %v5912
      %v5914 = vadd.f32 %v5913, -0.4999988
      %v5915 = vmul.f32 %v5910, %v5914
      %v5916 = vadd.f32 1.0, %v5915
      %v5917 = vmul.f32 %v5908, %v5908
      %v5918 = vmul.f32 %v5917, -0.00019511016
      %v5919 = vadd.f32 %v5918, 0.008332121
      %v5920 = vmul.f32 %v5917, %v5919
      %v5921 = vadd.f32 %v5920, -0.16666654
      %v5922 = vmul.f32 %v5917, %v5921
      %v5923 = vadd.f32 %v5922, 1.0
      %v5924 = vmul.f32 %v5923, %v5908
      %vm5925 = vweird.f32 %v5625
      %v5926 = vadd.s32 %v5909, 3
      %v5927 = vand.u32 %v5926, 3
      %vm5928 = vcmp.lt.s32.totalorder %v5927, 2
      %vm5929 = vcmp.eq.s32.totalorder %v5927, 0
      %v5930 = vxor.u32 %v5924, 2147483648
      %v5931 = vsel %vm5929, %v5916, %v5930
      %vm5932 = vcmp.eq.s32.totalorder %v5927, 2
      %v5933 = vxor.u32 %v5916, 2147483648
      %v5934 = vsel %vm5932, %v5933, %v5924
      %v5935 = vsel %vm5928, %v5931, %v5934
      %v5936 = vsel %vm5925, nan, %v5935
      %5938 = vrot.lane.b32.xlu0 %v5781, 126
      %v5939 = vpop.permute.xlu0 %5938
      %v5941 = vmul.f32 %v5624, %v5939
      %5943 = vrot.lane.b32.xlu0 %v5624, 2
      %v5944 = vpop.permute.xlu0 %5943
      %v5946 = vmul.f32 %v5627, %v5944
      %5948 = vrot.lane.b32.xlu0 %v5936, 1
      %v5949 = vpop.permute.xlu0 %5948
      %v5951 = vmul.f32 %v5946, %v5949
      %5953 = vrot.lane.b32.xlu0 %v5951, 125
      %v5954 = vpop.permute.xlu0 %5953
      %v5956 = vadd.f32 %v5941, %v5954
      %v5957 = vsub.f32 0.0, %v5624
      %5958 = vrot.lane.b32.xlu0 %v5936, 126
      %v5959 = vpop.permute.xlu0 %5958
      %v5961 = vmul.f32 %v5957, %v5959
      %5962 = vrot.lane.b32.xlu0 %v5781, 1
      %v5963 = vpop.permute.xlu0 %5962
      %v5965 = vmul.f32 %v5946, %v5963
      %5967 = vrot.lane.b32.xlu0 %v5965, 125
      %v5968 = vpop.permute.xlu0 %5967
      %v5970 = vadd.f32 %v5961, %v5968
      %5971 = vrot.lane.b32.xlu0 %v5936, 127
      %v5972 = vpop.permute.xlu0 %5971
      %v5974 = vmul.f32 %v5624, %v5972
      %5975 = vrot.lane.b32.xlu0 %v5781, 127
      %v5976 = vpop.permute.xlu0 %5975
      %v5978 = vmul.f32 %v5624, %v5976
      %5980 = vrot.lane.b32.xlu0 %v5956, 56
      %v5981 = vpop.permute.xlu0 %5980
      %5984 = vrot.lane.b32.xlu0 %v5970, 57
      %v5985 = vpop.permute.xlu0 %5984
      %5988 = vrot.lane.b32.xlu0 %v5627, 54
      %v5989 = vpop.permute.xlu0 %5988
      %5992 = vrot.lane.b32.xlu0 %v5974, 58
      %v5993 = vpop.permute.xlu0 %5992
      %5996 = vrot.lane.b32.xlu0 %v5978, 59
      %v5997 = vpop.permute.xlu0 %5996
      %5999 = vrot.lane.b32.xlu0 %v5627, 56
      %v6000 = vpop.permute.xlu0 %5999
      %v6002 = vsel %vm2571, %v5981, %v5985
      %v6003 = vsel %vm2573, %v6002, %v5989
      %v6004 = vsel %vm2575, %v6003, %v5993
      %v6005 = vsel %vm2577, %v6004, %v5997
      %v6006 = vsel %vm2579, %v6005, %v6000
      %6008 = vrot.lane.b32.xlu0 %v5623, 56
      %v6009 = vpop.permute.xlu0 %6008
      %6012 = vrot.lane.b32.xlu0 %v5604, 56
      %v6013 = vpop.permute.xlu0 %6012
      %v6015 = vsel %vm2581, %v6006, %v6009
      %v6016 = vsel %vm2583, %v6015, %v6013
      %v6017 = vsel %vm2159, %v6016, 0.0
      %vm6018 = vcmask 786168
      %v6019 = vsel %vm6018, %v2003, -inf
      %v6020 = vsel %vm6018, %v2005, -inf
      %v6021 = vsel %vm6018, %v2008, -inf
      %v6022 = vsel %vm6018, %v2010, -inf
      %v6023 = vsel %vm6018, %v2013, -inf
      %v6024 = vmax.f32 %v6019, %v6023
      %v6025 = vsel %vm6018, %v2015, -inf
      %v6026 = vmax.f32 %v6020, %v6025
      %v6027 = vsel %vm6018, %v2018, -inf
      %v6028 = vmax.f32 %v6021, %v6027
      %v6029 = vsel %vm6018, %v2020, -inf
      %v6030 = vmax.f32 %v6022, %v6029
      %v6031 = vmax.f32 %v6024, %v6026
      %v6032 = vmax.f32 %v6028, %v6030
      %v6033 = vmax.f32 %v6031, %v6032
      %v6034 = vrot.slane %v6033, 4
      %v6035 = vmax.f32 %v6033, %v6034
      %v6036 = vrot.slane %v6035, 2
      %v6037 = vmax.f32 %v6035, %v6036
      %v6038 = vrot.slane %v6037, 1
      %v6039 = vmax.f32 %v6037, %v6038
      %v6040 = vsub.f32 %v2003, %v6039
      %v6041 = vsub.f32 %v2005, %v6039
      %v6042 = vsub.f32 %v2008, %v6039
      %v6043 = vsub.f32 %v2010, %v6039
      %v6044 = vsub.f32 %v2013, %v6039
      %v6045 = vsub.f32 %v2015, %v6039
      %v6046 = vsub.f32 %v2018, %v6039
      %v6047 = vsub.f32 %v2020, %v6039
      %v6048 = vmul.f32 %v6040, 1.442695
      %v6049 = vpow.pop %v6048
      %v6050 = vmul.f32 %v6041, 1.442695
      %v6051 = vpow.pop %v6050
      %v6052 = vmul.f32 %v6042, 1.442695
      %v6053 = vpow.pop %v6052
      %v6054 = vmul.f32 %v6043, 1.442695
      %v6055 = vpow.pop %v6054
      %v6056 = vmul.f32 %v6044, 1.442695
      %v6057 = vpow.pop %v6056
      %v6058 = vmul.f32 %v6045, 1.442695
      %v6059 = vpow.pop %v6058
      %v6060 = vmul.f32 %v6046, 1.442695
      %v6061 = vpow.pop %v6060
      %v6062 = vmul.f32 %v6047, 1.442695
      %v6063 = vpow.pop %v6062
      %v6064 = vsel %vm6018, %v6049, 0.0
      %v6065 = vsel %vm6018, %v6051, 0.0
      %v6066 = vadd.f32 %v6064, %v6065
      %v6067 = vsel %vm6018, %v6053, 0.0
      %v6068 = vadd.f32 %v6066, %v6067
      %v6069 = vsel %vm6018, %v6055, 0.0
      %v6070 = vadd.f32 %v6068, %v6069
      %v6071 = vsel %vm6018, %v6057, 0.0
      %v6072 = vadd.f32 %v6070, %v6071
      %v6073 = vsel %vm6018, %v6059, 0.0
      %v6074 = vadd.f32 %v6072, %v6073
      %v6075 = vsel %vm6018, %v6061, 0.0
      %v6076 = vadd.f32 %v6074, %v6075
      %v6077 = vsel %vm6018, %v6063, 0.0
      %v6078 = vadd.f32 %v6076, %v6077
      %v6079 = vrot.slane %v6078, 4
      %v6080 = vadd.f32 %v6078, %v6079
      %v6081 = vrot.slane %v6080, 2
      %v6082 = vadd.f32 %v6080, %v6081
      %v6083 = vrot.slane %v6082, 1
      %v6084 = vadd.f32 %v6082, %v6083
      %v6085 = vrcp.pop %v6084
      %v6086 = vmul.f32 %v6084, %v6085
      %v6087 = vsub.f32 1.0, %v6086
      %v6088 = vmul.f32 %v6085, %v6087
      %v6089 = vadd.f32 %v6085, %v6088
      %vm6090 = vweird.f32 %v6084
      %vm6091 = vweird.f32 %v6085
      %vm6092 = vmor %vm6090, %vm6091
      %v6093 = vsel %vm6092, %v6085, %v6089
      %v6094 = vand.u32 2147483647, %v6084
      %vm6095 = vcmp.eq.f32.partialorder %v6094, 8.507059e+37
      %v6096 = vand.u32 %v6084, 2147483648
      %v6097 = vor.u32 1.1754944e-38, %v6096
      %v6098 = vsel %vm6095, %v6097, %v6093
      %v6099 = vmul.f32 %v6049, %v6098
      %v6100 = vmul.f32 %v6051, %v6098
      %v6101 = vmul.f32 %v6053, %v6098
      %v6102 = vmul.f32 %v6055, %v6098
      %v6103 = vmul.f32 %v6057, %v6098
      %v6104 = vmul.f32 %v6059, %v6098
      %v6105 = vmul.f32 %v6061, %v6098
      %v6106 = vmul.f32 %v6063, %v6098
      %6108 = vset.pattern.permute.xlu0 95
      %6109 = vperm.xlu0 %6108, %v6099
      %v6110 = vpop.permute.xlu0 %6109
      %6113 = vset.pattern.permute.xlu0 95
      %6114 = vperm.xlu0 %6113, %v6100
      %v6115 = vpop.permute.xlu0 %6114
      %6118 = vset.pattern.permute.xlu0 95
      %6119 = vperm.xlu0 %6118, %v6101
      %v6120 = vpop.permute.xlu0 %6119
      %6123 = vset.pattern.permute.xlu0 95
      %6124 = vperm.xlu0 %6123, %v6102
      %v6125 = vpop.permute.xlu0 %6124
      %6128 = vset.pattern.permute.xlu0 95
      %6129 = vperm.xlu0 %6128, %v6103
      %v6130 = vpop.permute.xlu0 %6129
      %6133 = vset.pattern.permute.xlu0 95
      %6134 = vperm.xlu0 %6133, %v6104
      %v6135 = vpop.permute.xlu0 %6134
      %6138 = vset.pattern.permute.xlu0 95
      %6139 = vperm.xlu0 %6138, %v6105
      %v6140 = vpop.permute.xlu0 %6139
      %6143 = vset.pattern.permute.xlu0 95
      %6144 = vperm.xlu0 %6143, %v6106
      %v6145 = vpop.permute.xlu0 %6144
      %v6147 = vmul.f32 %v2003, %v6110
      %v6148 = vmul.f32 %v2005, %v6115
      %v6149 = vmul.f32 %v2008, %v6120
      %v6150 = vmul.f32 %v2010, %v6125
      %v6151 = vmul.f32 %v2013, %v6130
      %v6152 = vmul.f32 %v2015, %v6135
      %v6153 = vmul.f32 %v2018, %v6140
      %v6154 = vmul.f32 %v2020, %v6145
      %vm6155 = vcmask 777888
      %v6156 = vsel %vm6155, %v6147, 0.0
      %v6157 = vsel %vm6155, %v6148, 0.0
      %v6158 = vadd.f32 %v6156, %v6157
      %v6159 = vsel %vm6155, %v6149, 0.0
      %v6160 = vadd.f32 %v6158, %v6159
      %v6161 = vsel %vm6155, %v6150, 0.0
      %v6162 = vadd.f32 %v6160, %v6161
      %v6163 = vsel %vm6155, %v6151, 0.0
      %v6164 = vadd.f32 %v6162, %v6163
      %v6165 = vsel %vm6155, %v6152, 0.0
      %v6166 = vadd.f32 %v6164, %v6165
      %v6167 = vsel %vm6155, %v6153, 0.0
      %v6168 = vadd.f32 %v6166, %v6167
      %v6169 = vsel %vm6155, %v6154, 0.0
      %v6170 = vadd.f32 %v6168, %v6169
      %v6171 = vrot.slane %v6170, 4
      %v6172 = vadd.f32 %v6170, %v6171
      %v6173 = vrot.slane %v6172, 2
      %v6174 = vadd.f32 %v6172, %v6173
      %v6175 = vrot.slane %v6174, 1
      %v6176 = vadd.f32 %v6174, %v6175
      %v6177 = vxor.u32 %v6176, 2147483648
      %v6178 = vmul.f32 %v6177, 1.442695
      %v6179 = vpow.pop %v6178
      %v6180 = vadd.f32 %v6179, 1.0
      %v6181 = vrcp.pop %v6180
      %v6182 = vmul.f32 %v6180, %v6181
      %v6183 = vsub.f32 1.0, %v6182
      %v6184 = vmul.f32 %v6181, %v6183
      %v6185 = vadd.f32 %v6181, %v6184
      %vm6186 = vweird.f32 %v6180
      %vm6187 = vweird.f32 %v6181
      %vm6188 = vmor %vm6186, %vm6187
      %v6189 = vsel %vm6188, %v6181, %v6185
      %v6190 = vand.u32 2147483647, %v6180
      %vm6191 = vcmp.eq.f32.partialorder %v6190, 8.507059e+37
      %v6192 = vand.u32 %v6180, 2147483648
      %v6193 = vor.u32 1.1754944e-38, %v6192
      %v6194 = vsel %vm6191, %v6193, %v6189
      %v6195 = vmul.f32 1.0, %v6194
      %v6196 = vadd.f32 %v6195, 0.01
      %v6197 = vmul.f32 %v6176, 6.2831855
      %v6198 = vmul.f32 %v6176, 5.0
      %v6199 = vtanh.pop %v6198
      %v6200 = vand.u32 2147483647, %v6197
      %vm6201 = vcmp.le.f32.partialorder %v6200, 0.7853982
      %vm6202 = vcmp.lt.s32.totalorder %v6197, 0
      %v6203 = vand.u32 %v6197, 2139095040
      %v6204 = vshrl.u32 %v6203, 23
      %v6205 = vsub.s32 %v6204, 127
      %v6206 = vand.u32 2147483647, %v6197
      %v6207 = vand.u32 %v6206, 8388607
      %v6208 = vor.u32 %v6207, 8388608
      %v6209 = vsub.s32 0, %v6208
      %v6210 = vadd.s32 %v6205, 1
      %vm6211 = vcmp.gt.s32.totalorder %v6210, 0
      %v6212 = vsel %vm6211, %v6210, 0
      %v6213 = vshrl.u32 %v6212, 5
      %v6214 = vand.u32 %v6212, 31
      %v6215 = vsub.s32 32, %v6214
      %v6216 = vshrl.u32 683565275, %v6215
      %v6217 = vshll.u32 683565275, %v6214
      %v6218 = vshrl.u32 2475754826, %v6215
      %v6219 = vor.u32 %v6217, %v6218
      %v6220 = vshll.u32 2475754826, %v6214
      %v6221 = vshrl.u32 2131351028, %v6215
      %v6222 = vor.u32 %v6220, %v6221
      %v6223 = vshll.u32 2131351028, %v6214
      %v6224 = vshrl.u32 2102212464, %v6215
      %v6225 = vor.u32 %v6223, %v6224
      %v6226 = vshll.u32 2102212464, %v6214
      %v6227 = vshrl.u32 920167782, %v6215
      %v6228 = vor.u32 %v6226, %v6227
      %v6229 = vshll.u32 920167782, %v6214
      %v6230 = vshrl.u32 1326507024, %v6215
      %v6231 = vor.u32 %v6229, %v6230
      %vm6232 = vcmp.lt.s32.totalorder %v6213, 1
      %vm6233 = vcmp.lt.s32.totalorder %v6213, 2
      %vm6234 = vcmp.lt.s32.totalorder %v6213, 3
      %vm6235 = vcmp.lt.s32.totalorder %v6213, 4
      %v6236 = vsel %vm6232, %v6216, %v6219
      %v6237 = vsel %vm6235, %v6225, 2102212464
      %v6238 = vsel %vm6234, %v6222, %v6237
      %v6239 = vsel %vm6233, %v6236, %v6238
      %v6240 = vsel %vm6232, %v6219, %v6222
      %v6241 = vsel %vm6235, %v6228, 920167782
      %v6242 = vsel %vm6234, %v6225, %v6241
      %v6243 = vsel %vm6233, %v6240, %v6242
      %v6244 = vsel %vm6232, %v6222, %v6225
      %v6245 = vsel %vm6235, %v6231, 1326507024
      %v6246 = vsel %vm6234, %v6228, %v6245
      %v6247 = vsel %vm6233, %v6244, %v6246
      %v6248 = vshll.u32 %v6208, 8
      %v6249 = vand.u32 %v6248, 65535
      %v6250 = vshrl.u32 %v6248, 16
      %v6251 = vand.u32 %v6247, 65535
      %v6252 = vshrl.u32 %v6247, 16
      %v6253 = vmul.u32 %v6249, %v6251
      %v6254 = vmul.u32 %v6249, %v6252
      %v6255 = vmul.u32 %v6250, %v6251
      %v6256 = vmul.u32 %v6250, %v6252
      %v6257 = vshll.u32 %v6254, 16
      %v6258 = vshrl.u32 %v6254, 16
      %v6259 = vshll.u32 %v6255, 16
      %v6260 = vshrl.u32 %v6255, 16
      %vm6261 = vc.u32 %v6253, %v6257
      %v6262 = vsel %vm6261, 1, 0
      %v6263 = vadd.s32 %v6253, %v6257
      %v6264 = vadd.s32 %v6256, %v6262
      %vm6265 = vc.u32 %v6263, %v6259
      %v6266 = vsel %vm6265, 1, 0
      %v6267 = vadd.s32 %v6263, %v6259
      %v6268 = vadd.s32 %v6264, %v6266
      %v6269 = vadd.s32 %v6268, %v6258
      %v6270 = vadd.s32 %v6269, %v6260
      %v6271 = vand.u32 %v6248, 65535
      %v6272 = vshrl.u32 %v6248, 16
      %v6273 = vand.u32 %v6243, 65535
      %v6274 = vshrl.u32 %v6243, 16
      %v6275 = vmul.u32 %v6271, %v6273
      %v6276 = vmul.u32 %v6271, %v6274
      %v6277 = vmul.u32 %v6272, %v6273
      %v6278 = vmul.u32 %v6272, %v6274
      %v6279 = vshll.u32 %v6276, 16
      %v6280 = vshrl.u32 %v6276, 16
      %v6281 = vshll.u32 %v6277, 16
      %v6282 = vshrl.u32 %v6277, 16
      %vm6283 = vc.u32 %v6275, %v6279
      %v6284 = vsel %vm6283, 1, 0
      %v6285 = vadd.s32 %v6275, %v6279
      %v6286 = vadd.s32 %v6278, %v6284
      %vm6287 = vc.u32 %v6285, %v6281
      %v6288 = vsel %vm6287, 1, 0
      %v6289 = vadd.s32 %v6285, %v6281
      %v6290 = vadd.s32 %v6286, %v6288
      %v6291 = vadd.s32 %v6290, %v6280
      %v6292 = vadd.s32 %v6291, %v6282
      %v6293 = vmul.u32 %v6248, %v6239
      %v6294 = vadd.s32 %v6270, %v6289
      %vm6295 = vc.u32 %v6270, %v6289
      %v6296 = vadd.s32 %v6292, 1
      %v6297 = vsel %vm6295, %v6296, %v6292
      %v6298 = vadd.s32 %v6293, %v6297
      %v6299 = vadd.s32 %v6298, 536870912
      %v6300 = vshrl.u32 %v6299, 30
      %v6301 = vshll.u32 %v6300, 30
      %v6302 = vsub.s32 %v6298, %v6301
      %vm6303 = vcmp.lt.s32.totalorder %v6302, 0
      %v6304 = vsub.s32 0, %v6302
      %v6305 = vsel %vm6303, %v6304, %v6302
      %v6306 = vclz %v6305
      %v6307 = vsub.s32 %v6306, 2
      %vm6308 = vcmp.gt.s32.totalorder 0, %v6307
      %v6309 = vsel %vm6308, 0, %v6307
      %v6310 = vsub.s32 32, %v6309
      %v6311 = vshll.u32 %v6302, %v6309
      %v6312 = vshrl.u32 %v6294, %v6310
      %v6313 = vor.u32 %v6311, %v6312
      %v6314 = vsub.s32 4294967266, %v6309
      %v6315 = vadd.s32 %v6314, 127
      %v6316 = vshll.u32 %v6315, 23
      %v6317 = vor.u32 4788187, %v6316
      %v6318 = vand.u32 2147483647, %v6317
      %v6320 = vcvt.s32.f32 %v6313
      %v6321 = vmul.f32 %v6320, %v6318
      %v6322 = vxor.u32 %v6321, 2147483648
      %v6323 = vsel %vm6202, %v6322, %v6321
      %v6324 = vsub.s32 4, %v6300
      %v6325 = vsel %vm6202, %v6324, %v6300
      %v6326 = vsel %vm6201, %v6197, %v6323
      %v6327 = vsel %vm6201, 0, %v6325
      %v6328 = vmul.f32 %v6326, %v6326
      %v6329 = vmul.f32 %v6328, -0.001358992
      %v6330 = vadd.f32 %v6329, 0.041655596
      %v6331 = vmul.f32 %v6328, %v6330
      %v6332 = vadd.f32 %v6331, -0.4999988
      %v6333 = vmul.f32 %v6328, %v6332
      %v6334 = vadd.f32 1.0, %v6333
      %v6335 = vmul.f32 %v6326, %v6326
      %v6336 = vmul.f32 %v6335, -0.00019511016
      %v6337 = vadd.f32 %v6336, 0.008332121
      %v6338 = vmul.f32 %v6335, %v6337
      %v6339 = vadd.f32 %v6338, -0.16666654
      %v6340 = vmul.f32 %v6335, %v6339
      %v6341 = vadd.f32 %v6340, 1.0
      %v6342 = vmul.f32 %v6341, %v6326
      %vm6343 = vweird.f32 %v6197
      %v6344 = vand.u32 %v6327, 3
      %vm6345 = vcmp.lt.s32.totalorder %v6344, 2
      %vm6346 = vcmp.eq.s32.totalorder %v6344, 0
      %v6347 = vxor.u32 %v6342, 2147483648
      %v6348 = vsel %vm6346, %v6334, %v6347
      %vm6349 = vcmp.eq.s32.totalorder %v6344, 2
      %v6350 = vxor.u32 %v6334, 2147483648
      %v6351 = vsel %vm6349, %v6350, %v6342
      %v6352 = vsel %vm6345, %v6348, %v6351
      %v6353 = vsel %vm6343, nan, %v6352
      %v6354 = vand.u32 2147483647, %v6197
      %vm6355 = vcmp.le.f32.partialorder %v6354, 0.7853982
      %vm6356 = vcmp.lt.s32.totalorder %v6197, 0
      %v6357 = vand.u32 %v6197, 2139095040
      %v6358 = vshrl.u32 %v6357, 23
      %v6359 = vsub.s32 %v6358, 127
      %v6360 = vand.u32 2147483647, %v6197
      %v6361 = vand.u32 %v6360, 8388607
      %v6362 = vor.u32 %v6361, 8388608
      %v6363 = vsub.s32 0, %v6362
      %v6364 = vadd.s32 %v6359, 1
      %vm6365 = vcmp.gt.s32.totalorder %v6364, 0
      %v6366 = vsel %vm6365, %v6364, 0
      %v6367 = vshrl.u32 %v6366, 5
      %v6368 = vand.u32 %v6366, 31
      %v6369 = vsub.s32 32, %v6368
      %v6370 = vshrl.u32 683565275, %v6369
      %v6371 = vshll.u32 683565275, %v6368
      %v6372 = vshrl.u32 2475754826, %v6369
      %v6373 = vor.u32 %v6371, %v6372
      %v6374 = vshll.u32 2475754826, %v6368
      %v6375 = vshrl.u32 2131351028, %v6369
      %v6376 = vor.u32 %v6374, %v6375
      %v6377 = vshll.u32 2131351028, %v6368
      %v6378 = vshrl.u32 2102212464, %v6369
      %v6379 = vor.u32 %v6377, %v6378
      %v6380 = vshll.u32 2102212464, %v6368
      %v6381 = vshrl.u32 920167782, %v6369
      %v6382 = vor.u32 %v6380, %v6381
      %v6383 = vshll.u32 920167782, %v6368
      %v6384 = vshrl.u32 1326507024, %v6369
      %v6385 = vor.u32 %v6383, %v6384
      %vm6386 = vcmp.lt.s32.totalorder %v6367, 1
      %vm6387 = vcmp.lt.s32.totalorder %v6367, 2
      %vm6388 = vcmp.lt.s32.totalorder %v6367, 3
      %vm6389 = vcmp.lt.s32.totalorder %v6367, 4
      %v6390 = vsel %vm6386, %v6370, %v6373
      %v6391 = vsel %vm6389, %v6379, 2102212464
      %v6392 = vsel %vm6388, %v6376, %v6391
      %v6393 = vsel %vm6387, %v6390, %v6392
      %v6394 = vsel %vm6386, %v6373, %v6376
      %v6395 = vsel %vm6389, %v6382, 920167782
      %v6396 = vsel %vm6388, %v6379, %v6395
      %v6397 = vsel %vm6387, %v6394, %v6396
      %v6398 = vsel %vm6386, %v6376, %v6379
      %v6399 = vsel %vm6389, %v6385, 1326507024
      %v6400 = vsel %vm6388, %v6382, %v6399
      %v6401 = vsel %vm6387, %v6398, %v6400
      %v6402 = vshll.u32 %v6362, 8
      %v6403 = vand.u32 %v6402, 65535
      %v6404 = vshrl.u32 %v6402, 16
      %v6405 = vand.u32 %v6401, 65535
      %v6406 = vshrl.u32 %v6401, 16
      %v6407 = vmul.u32 %v6403, %v6405
      %v6408 = vmul.u32 %v6403, %v6406
      %v6409 = vmul.u32 %v6404, %v6405
      %v6410 = vmul.u32 %v6404, %v6406
      %v6411 = vshll.u32 %v6408, 16
      %v6412 = vshrl.u32 %v6408, 16
      %v6413 = vshll.u32 %v6409, 16
      %v6414 = vshrl.u32 %v6409, 16
      %vm6415 = vc.u32 %v6407, %v6411
      %v6416 = vsel %vm6415, 1, 0
      %v6417 = vadd.s32 %v6407, %v6411
      %v6418 = vadd.s32 %v6410, %v6416
      %vm6419 = vc.u32 %v6417, %v6413
      %v6420 = vsel %vm6419, 1, 0
      %v6421 = vadd.s32 %v6417, %v6413
      %v6422 = vadd.s32 %v6418, %v6420
      %v6423 = vadd.s32 %v6422, %v6412
      %v6424 = vadd.s32 %v6423, %v6414
      %v6425 = vand.u32 %v6402, 65535
      %v6426 = vshrl.u32 %v6402, 16
      %v6427 = vand.u32 %v6397, 65535
      %v6428 = vshrl.u32 %v6397, 16
      %v6429 = vmul.u32 %v6425, %v6427
      %v6430 = vmul.u32 %v6425, %v6428
      %v6431 = vmul.u32 %v6426, %v6427
      %v6432 = vmul.u32 %v6426, %v6428
      %v6433 = vshll.u32 %v6430, 16
      %v6434 = vshrl.u32 %v6430, 16
      %v6435 = vshll.u32 %v6431, 16
      %v6436 = vshrl.u32 %v6431, 16
      %vm6437 = vc.u32 %v6429, %v6433
      %v6438 = vsel %vm6437, 1, 0
      %v6439 = vadd.s32 %v6429, %v6433
      %v6440 = vadd.s32 %v6432, %v6438
      %vm6441 = vc.u32 %v6439, %v6435
      %v6442 = vsel %vm6441, 1, 0
      %v6443 = vadd.s32 %v6439, %v6435
      %v6444 = vadd.s32 %v6440, %v6442
      %v6445 = vadd.s32 %v6444, %v6434
      %v6446 = vadd.s32 %v6445, %v6436
      %v6447 = vmul.u32 %v6402, %v6393
      %v6448 = vadd.s32 %v6424, %v6443
      %vm6449 = vc.u32 %v6424, %v6443
      %v6450 = vadd.s32 %v6446, 1
      %v6451 = vsel %vm6449, %v6450, %v6446
      %v6452 = vadd.s32 %v6447, %v6451
      %v6453 = vadd.s32 %v6452, 536870912
      %v6454 = vshrl.u32 %v6453, 30
      %v6455 = vshll.u32 %v6454, 30
      %v6456 = vsub.s32 %v6452, %v6455
      %vm6457 = vcmp.lt.s32.totalorder %v6456, 0
      %v6458 = vsub.s32 0, %v6456
      %v6459 = vsel %vm6457, %v6458, %v6456
      %v6460 = vclz %v6459
      %v6461 = vsub.s32 %v6460, 2
      %vm6462 = vcmp.gt.s32.totalorder 0, %v6461
      %v6463 = vsel %vm6462, 0, %v6461
      %v6464 = vsub.s32 32, %v6463
      %v6465 = vshll.u32 %v6456, %v6463
      %v6466 = vshrl.u32 %v6448, %v6464
      %v6467 = vor.u32 %v6465, %v6466
      %v6468 = vsub.s32 4294967266, %v6463
      %v6469 = vadd.s32 %v6468, 127
      %v6470 = vshll.u32 %v6469, 23
      %v6471 = vor.u32 4788187, %v6470
      %v6472 = vand.u32 2147483647, %v6471
      %v6474 = vcvt.s32.f32 %v6467
      %v6475 = vmul.f32 %v6474, %v6472
      %v6476 = vxor.u32 %v6475, 2147483648
      %v6477 = vsel %vm6356, %v6476, %v6475
      %v6478 = vsub.s32 4, %v6454
      %v6479 = vsel %vm6356, %v6478, %v6454
      %v6480 = vsel %vm6355, %v6197, %v6477
      %v6481 = vsel %vm6355, 0, %v6479
      %v6482 = vmul.f32 %v6480, %v6480
      %v6483 = vmul.f32 %v6482, -0.001358992
      %v6484 = vadd.f32 %v6483, 0.041655596
      %v6485 = vmul.f32 %v6482, %v6484
      %v6486 = vadd.f32 %v6485, -0.4999988
      %v6487 = vmul.f32 %v6482, %v6486
      %v6488 = vadd.f32 1.0, %v6487
      %v6489 = vmul.f32 %v6480, %v6480
      %v6490 = vmul.f32 %v6489, -0.00019511016
      %v6491 = vadd.f32 %v6490, 0.008332121
      %v6492 = vmul.f32 %v6489, %v6491
      %v6493 = vadd.f32 %v6492, -0.16666654
      %v6494 = vmul.f32 %v6489, %v6493
      %v6495 = vadd.f32 %v6494, 1.0
      %v6496 = vmul.f32 %v6495, %v6480
      %vm6497 = vweird.f32 %v6197
      %v6498 = vadd.s32 %v6481, 3
      %v6499 = vand.u32 %v6498, 3
      %vm6500 = vcmp.lt.s32.totalorder %v6499, 2
      %vm6501 = vcmp.eq.s32.totalorder %v6499, 0
      %v6502 = vxor.u32 %v6496, 2147483648
      %v6503 = vsel %vm6501, %v6488, %v6502
      %vm6504 = vcmp.eq.s32.totalorder %v6499, 2
      %v6505 = vxor.u32 %v6488, 2147483648
      %v6506 = vsel %vm6504, %v6505, %v6496
      %v6507 = vsel %vm6500, %v6503, %v6506
      %v6508 = vsel %vm6497, nan, %v6507
      %6510 = vrot.lane.b32.xlu0 %v6353, 126
      %v6511 = vpop.permute.xlu0 %6510
      %v6513 = vmul.f32 %v6196, %v6511
      %6515 = vrot.lane.b32.xlu0 %v6196, 2
      %v6516 = vpop.permute.xlu0 %6515
      %v6518 = vmul.f32 %v6199, %v6516
      %6520 = vrot.lane.b32.xlu0 %v6508, 1
      %v6521 = vpop.permute.xlu0 %6520
      %v6523 = vmul.f32 %v6518, %v6521
      %6525 = vrot.lane.b32.xlu0 %v6523, 125
      %v6526 = vpop.permute.xlu0 %6525
      %v6528 = vadd.f32 %v6513, %v6526
      %v6529 = vsub.f32 0.0, %v6196
      %6530 = vrot.lane.b32.xlu0 %v6508, 126
      %v6531 = vpop.permute.xlu0 %6530
      %v6533 = vmul.f32 %v6529, %v6531
      %6534 = vrot.lane.b32.xlu0 %v6353, 1
      %v6535 = vpop.permute.xlu0 %6534
      %v6537 = vmul.f32 %v6518, %v6535
      %6539 = vrot.lane.b32.xlu0 %v6537, 125
      %v6540 = vpop.permute.xlu0 %6539
      %v6542 = vadd.f32 %v6533, %v6540
      %6543 = vrot.lane.b32.xlu0 %v6508, 127
      %v6544 = vpop.permute.xlu0 %6543
      %v6546 = vmul.f32 %v6196, %v6544
      %6547 = vrot.lane.b32.xlu0 %v6353, 127
      %v6548 = vpop.permute.xlu0 %6547
      %v6550 = vmul.f32 %v6196, %v6548
      %6552 = vrot.lane.b32.xlu0 %v6528, 44
      %v6553 = vpop.permute.xlu0 %6552
      %6556 = vrot.lane.b32.xlu0 %v6542, 45
      %v6557 = vpop.permute.xlu0 %6556
      %6560 = vrot.lane.b32.xlu0 %v6199, 42
      %v6561 = vpop.permute.xlu0 %6560
      %6564 = vrot.lane.b32.xlu0 %v6546, 46
      %v6565 = vpop.permute.xlu0 %6564
      %6568 = vrot.lane.b32.xlu0 %v6550, 47
      %v6569 = vpop.permute.xlu0 %6568
      %6571 = vrot.lane.b32.xlu0 %v6199, 44
      %v6572 = vpop.permute.xlu0 %6571
      %v6574 = vsel %vm2571, %v6553, %v6557
      %v6575 = vsel %vm2573, %v6574, %v6561
      %v6576 = vsel %vm2575, %v6575, %v6565
      %v6577 = vsel %vm2577, %v6576, %v6569
      %v6578 = vsel %vm2579, %v6577, %v6572
      %6580 = vrot.lane.b32.xlu0 %v6195, 44
      %v6581 = vpop.permute.xlu0 %6580
      %6584 = vrot.lane.b32.xlu0 %v6176, 44
      %v6585 = vpop.permute.xlu0 %6584
      %v6587 = vsel %vm2581, %v6578, %v6581
      %v6588 = vsel %vm2583, %v6587, %v6585
      %v6589 = vsel %vm2159, %v6588, 0.0
      %6591 = vrot.lane.b32.xlu0 %v3157, 16
      %v6592 = vpop.permute.xlu0 %6591
      %6595 = vrot.lane.b32.xlu0 %v3729, 32
      %v6596 = vpop.permute.xlu0 %6595
      %6599 = vrot.lane.b32.xlu0 %v4301, 48
      %v6600 = vpop.permute.xlu0 %6599
      %6603 = vrot.lane.b32.xlu0 %v4873, 64
      %v6604 = vpop.permute.xlu0 %6603
      %6607 = vrot.lane.b32.xlu0 %v5445, 80
      %v6608 = vpop.permute.xlu0 %6607
      %6611 = vrot.lane.b32.xlu0 %v6017, 96
      %v6612 = vpop.permute.xlu0 %6611
      %6615 = vrot.lane.b32.xlu0 %v6589, 112
      %v6616 = vpop.permute.xlu0 %6615
      %vm6618 = vcmask 130048
      %v6619 = vsel %vm6618, %v2585, %v6592
      %vm6620 = vcmask 261120
      %v6621 = vsel %vm6620, %v6619, %v6596
      %vm6622 = vcmask 392192
      %v6623 = vsel %vm6622, %v6621, %v6600
      %vm6624 = vcmask 523264
      %v6625 = vsel %vm6624, %v6623, %v6604
      %vm6626 = vcmask 654336
      %v6627 = vsel %vm6626, %v6625, %v6608
      %vm6628 = vcmask 785408
      %v6629 = vsel %vm6628, %v6627, %v6612
      %vm6630 = vcmask 916480
      %v6631 = vsel %vm6630, %v6629, %v6616
      %6632 = vst [vmem:[%s247] sm:$0x1] %v6631
      %p6633 = scmp.lt.s32.totalorder %s17, 1
      %s6634 = scalar_select %p6633, %s17, 1
      %s6635 = scalar_lea.vmem %s6, %s6634
      // Predicated region
      $region45: #{_lambda_.3} parent=43 // pred_check
        %p6636 = pneg %p166
      $region46: #{_lambda_.3} parent=43 // pred_check_branch
        %6638 = sbr.rel (%p6636) target = $region48
      $region47: #{_lambda_.3} parent=43 // pred_region
        _
      $region48: #{_lambda_.3} parent=43 // pred_fallthru
        _
    $region44: #{_lambda_.3} parent=5 // pred_fallthru
      _
    %p6639 = scmp.le.s32.totalorder 2, %s12
    // Predicated region
    $region49: #{_lambda_.3} parent=5 // pred_check
      %p6640 = pneg %p6639
    $region50: #{_lambda_.3} parent=5 // pred_check_branch
      %6642 = sbr.rel (%p6640) target = $region52
    $region51: #{_lambda_.3} parent=5 // pred_region
      %s6643 = ssub.s32 %s12, 2
      // Predicated region
      $region53: #{_lambda_.3} parent=51 // pred_check
        %p6644 = pneg %p172
      $region54: #{_lambda_.3} parent=51 // pred_check_branch
        %6646 = sbr.rel (%p6644) target = $region56
      $region55: #{_lambda_.3} parent=51 // pred_region
        %p6647 = scmp.lt.s32.totalorder %s18, 1
        %s6648 = scalar_select %p6647, %s18, 1
        %s6649 = scalar_lea.vmem %s6, %s6648
      $region56: #{_lambda_.3} parent=51 // pred_fallthru
        _
    $region52: #{_lambda_.3} parent=5 // pred_fallthru
      _
  $region6: #{_lambda_.3} parent=0 // loop_footer
    %s16 = sadd.s32 1, %s12
  $region7: #{_lambda_.3} parent=0 // loop_footer_branch
    %11 = sbr.rel target = $region3
  $region8: #{_lambda_.3} parent=0 // loop_exit
    _

</llo_original>
